<compile_context>
chip_gen: v6e
topology: v6e:2x2x1
jax: 0.10.0
libtpu: 0.0.40
codegen_flags: <defaults>
</compile_context>

<pallas_src>
import math
from functools import partial

import jax
import jax.numpy as jnp
import numpy as np
from jax.experimental import pallas as pl
from jax.experimental.pallas import tpu as pltpu

FEATURE_DIM = 3
HIDDEN_SIZE = 256

_F_PAD = 8      # feature dim padded to one sublane tile
_B_PAD = 8      # minimum batch padding (sublane tile)
_H2_PAD = 128   # linear2 output lanes (64 -> 128)
_OUT_PAD = 128  # logits lanes (num_cate -> 128)


def _elu(v):
    # ELU with alpha=1 (matches F.elu default); clamp before exp for safety.
    return jnp.where(v > 0, v, jnp.exp(jnp.minimum(v, 0.0)) - 1.0)


def lstm_net_kernel(x_ref,          # (T*Bp, Fp)  f32, time-major, zero-padded
                    wih_ref,        # (Fp, 8H)    f32, [W_ih_fwd | W_ih_bwd]
                    b_ref,          # (1, 8H)     f32, [b_fwd | b_bwd] (ih+hh folded)
                    whh_f_ref,      # (H, 4H)
                    whh_b_ref,      # (H, 4H)
                    w1_ref, b1_ref,  # (2H, 256), (1, 256)
                    w2_ref, b2_ref,  # (256, 128pad), (1, 128pad)
                    w3_ref, b3_ref,  # (128pad, 128pad), (1, 128pad)
                    out_ref,        # (Bp, 128pad)
                    g_ref,          # scratch: (T*Bp, 8H) f32 precomputed gates
                    *, T, Bp, H):
    f32 = jnp.float32
    bf16 = jnp.bfloat16

    # ---- 1. Input projection hoisted out of the recurrence (one matmul). ----
    # Both directions + both biases in one well-shaped (T*Bp, Fp)x(Fp, 8H) dot.
    g_ref[...] = (jnp.dot(x_ref[...].astype(bf16), wih_ref[...].astype(bf16),
                          preferred_element_type=f32)
                  + b_ref[...])

    whh_f = whh_f_ref[...].astype(bf16)
    whh_b = whh_b_ref[...].astype(bf16)

    def gate_math(gates, c):
        # PyTorch gate order: i, f, g, o.  H=256 -> slices are 128-lane aligned.
        i = jax.nn.sigmoid(gates[:, 0 * H:1 * H])
        f = jax.nn.sigmoid(gates[:, 1 * H:2 * H])
        g = jnp.tanh(gates[:, 2 * H:3 * H])
        o = jax.nn.sigmoid(gates[:, 3 * H:4 * H])
        c_new = f * c + i * g
        h_new = o * jnp.tanh(c_new)
        return h_new, c_new

    # ---- 2. Fused fwd/bwd recurrence, fully unrolled. ----
    def step(t, carry):
        h_f, c_f, h_b, c_b = carry
        rf = pl.multiple_of(t * Bp, Bp)                # forward reads step t
        rb = pl.multiple_of((T - 1 - t) * Bp, Bp)      # backward reads step T-1-t
        gx_f = g_ref[pl.ds(rf, Bp), 0 * H:4 * H]
        gx_b = g_ref[pl.ds(rb, Bp), 4 * H:8 * H]
        gates_f = gx_f + jnp.dot(h_f.astype(bf16), whh_f,
                                 preferred_element_type=f32)
        gates_b = gx_b + jnp.dot(h_b.astype(bf16), whh_b,
                                 preferred_element_type=f32)
        h_f, c_f = gate_math(gates_f, c_f)
        h_b, c_b = gate_math(gates_b, c_b)
        return h_f, c_f, h_b, c_b

    zeros = jnp.zeros((Bp, H), f32)
    h_f, _, h_b, _ = jax.lax.fori_loop(0, T, step, (zeros, zeros, zeros, zeros),
                                       unroll=True)

    # ---- 3. MLP head (lane-dense, bf16 operands, f32 accumulate). ----
    feat = jnp.concatenate([h_f, h_b], axis=1)          # (Bp, 2H)
    z1 = _elu(jnp.dot(feat.astype(bf16), w1_ref[...].astype(bf16),
                      preferred_element_type=f32) + b1_ref[...])
    z2 = _elu(jnp.dot(z1.astype(bf16), w2_ref[...].astype(bf16),
                      preferred_element_type=f32) + b2_ref[...])
    out_ref[...] = (jnp.dot(z2.astype(bf16), w3_ref[...].astype(bf16),
                            preferred_element_type=f32) + b3_ref[...])


def lstm_net_forward(x, params, num_cate):
    """x: (B, T, FEATURE_DIM) float32, batch_first like the PyTorch module."""
    B, T, F = x.shape
    assert F == FEATURE_DIM
    H = HIDDEN_SIZE
    Bp = max(_B_PAD, -(-B // 8) * 8)
    Fp = _F_PAD

    # Time-major, batch/feature zero-padded, flattened to (T*Bp, Fp).
    x_tm = jnp.transpose(x, (1, 0, 2))                              # (T, B, F)
    x_tm = jnp.pad(x_tm, ((0, 0), (0, Bp - B), (0, Fp - F)))
    x2d = x_tm.reshape(T * Bp, Fp)

    # Concatenate the two directions' input weights / biases on the output dim.
    wih = jnp.concatenate([params["wih_f"], params["wih_b"]], axis=1)  # (F, 8H)
    wih = jnp.pad(wih, ((0, Fp - F), (0, 0)))                          # (Fp, 8H)
    b_in = jnp.concatenate([params["b_f"], params["b_b"]], axis=1)     # (1, 8H)

    # Lane-pad the MLP head so every matmul/store is 128-lane dense.
    w2 = jnp.pad(params["w2"], ((0, 0), (0, _H2_PAD - 64)))
    b2 = jnp.pad(params["b2"], ((0, 0), (0, _H2_PAD - 64)))
    w3 = jnp.pad(params["w3"], ((0, _H2_PAD - 64), (0, _OUT_PAD - num_cate)))
    b3 = jnp.pad(params["b3"], ((0, 0), (0, _OUT_PAD - num_cate)))

    args = (x2d, wih, b_in,
            params["whh_f"], params["whh_b"],
            params["w1"], params["b1"], w2, b2, w3, b3)

    in_specs = [pl.BlockSpec(memory_space=pltpu.MemorySpace.VMEM) for _ in args]
    out_specs = pl.BlockSpec(memory_space=pltpu.MemorySpace.VMEM)

    # Advisory cost estimate (matmul flops + gate/ELU transcendentals).
    flops = (2 * (T * Bp) * Fp * (8 * H)                    # input projection
             + 2 * T * 2 * Bp * H * (4 * H)                 # recurrence
             + 2 * Bp * (2 * H * 256 + 256 * _H2_PAD + _H2_PAD * _OUT_PAD))
    transcendentals = T * 2 * Bp * 5 * H + Bp * (256 + _H2_PAD)
    bytes_accessed = int(sum(a.size for a in args) * 4 + Bp * _OUT_PAD * 4)

    out = pl.pallas_call(
        partial(lstm_net_kernel, T=T, Bp=Bp, H=H),
        out_shape=jax.ShapeDtypeStruct((Bp, _OUT_PAD), jnp.float32),
        in_specs=in_specs,
        out_specs=out_specs,
        scratch_shapes=[pltpu.VMEM((T * Bp, 8 * H), jnp.float32)],
        cost_estimate=pl.CostEstimate(flops=flops,
                                      transcendentals=transcendentals,
                                      bytes_accessed=bytes_accessed),
    )(*args)

    return out[:B, :num_cate]


def init_params(key, num_cate):
    """Deterministic init mirroring the module's shapes.

    LSTM params: PyTorch default uniform(-1/sqrt(H), 1/sqrt(H)).
    Linear params: weights_init -> xavier-uniform weights, zero biases.
    Weights are stored transposed as (in_features, out_features).
    """
    H = HIDDEN_SIZE
    keys = jax.random.split(key, 16)

    def unif(k, shape, bound):
        return jax.random.uniform(k, shape, jnp.float32, -bound, bound)

    kb = 1.0 / math.sqrt(H)
    params = {
        # forward direction
        "wih_f": unif(keys[0], (FEATURE_DIM, 4 * H), kb),
        "whh_f": unif(keys[1], (H, 4 * H), kb),
        "b_f":   unif(keys[2], (1, 4 * H), kb) + unif(keys[3], (1, 4 * H), kb),
        # reverse direction
        "wih_b": unif(keys[4], (FEATURE_DIM, 4 * H), kb),
        "whh_b": unif(keys[5], (H, 4 * H), kb),
        "b_b":   unif(keys[6], (1, 4 * H), kb) + unif(keys[7], (1, 4 * H), kb),
    }

    def xavier(k, fan_in, fan_out):
        b = math.sqrt(6.0 / (fan_in + fan_out))
        return unif(k, (fan_in, fan_out), b)

    params["w1"] = xavier(keys[8], 2 * H, 256)
    params["b1"] = jnp.zeros((1, 256), jnp.float32)
    params["w2"] = xavier(keys[9], 256, 64)
    params["b2"] = jnp.zeros((1, 64), jnp.float32)
    params["w3"] = xavier(keys[10], 64, num_cate)
    params["b3"] = jnp.zeros((1, num_cate), jnp.float32)
    return params


def reference_forward(x, params, num_cate):
    """Pure-JAX f32 reference with the module's math, for correctness checking."""
    H = HIDDEN_SIZE
    B, T, _ = x.shape

    def run_dir(wih, whh, b, reverse):
        h = jnp.zeros((B, H), jnp.float32)
        c = jnp.zeros((B, H), jnp.float32)
        ts = range(T - 1, -1, -1) if reverse else range(T)
        for t in ts:
            gates = x[:, t, :] @ wih + h @ whh + b
            i = jax.nn.sigmoid(gates[:, 0 * H:1 * H])
            f = jax.nn.sigmoid(gates[:, 1 * H:2 * H])
            g = jnp.tanh(gates[:, 2 * H:3 * H])
            o = jax.nn.sigmoid(gates[:, 3 * H:4 * H])
            c = f * c + i * g
            h = o * jnp.tanh(c)
        return h

    h_f = run_dir(params["wih_f"], params["whh_f"], params["b_f"], False)
    h_b = run_dir(params["wih_b"], params["whh_b"], params["b_b"], True)
    feat = jnp.concatenate([h_f, h_b], axis=1)
    z1 = _elu(feat @ params["w1"] + params["b1"])
    z2 = _elu(z1 @ params["w2"] + params["b2"])
    return z2 @ params["w3"] + params["b3"]


if __name__ == "__main__":
    B, T, NUM_CATE = 2, 8, 5
    key = jax.random.PRNGKey(0)
    kx, kp = jax.random.split(key)

    x = jax.random.normal(kx, (B, T, FEATURE_DIM), dtype=jnp.float32)
    params = init_params(kp, NUM_CATE)

    logits = jax.block_until_ready(lstm_net_forward(x, params, NUM_CATE))
    ref = jax.block_until_ready(reference_forward(x, params, NUM_CATE))

    np.testing.assert_allclose(np.asarray(logits), np.asarray(ref),
                               rtol=2e-2, atol=2e-2)
    assert logits.shape == (B, NUM_CATE)
    print("KERNEL_OK")
</pallas_src>

<mosaic_0001>
module attributes {stable_mosaic.version = 11 : i64} {
  func.func @lstm_net_kernel(%arg0: memref<64x8xf32, #tpu.memory_space<vmem>>, %arg1: memref<8x2048xf32, #tpu.memory_space<vmem>>, %arg2: memref<1x2048xf32, #tpu.memory_space<vmem>>, %arg3: memref<256x1024xf32, #tpu.memory_space<vmem>>, %arg4: memref<256x1024xf32, #tpu.memory_space<vmem>>, %arg5: memref<512x256xf32, #tpu.memory_space<vmem>>, %arg6: memref<1x256xf32, #tpu.memory_space<vmem>>, %arg7: memref<256x128xf32, #tpu.memory_space<vmem>>, %arg8: memref<1x128xf32, #tpu.memory_space<vmem>>, %arg9: memref<128x128xf32, #tpu.memory_space<vmem>>, %arg10: memref<1x128xf32, #tpu.memory_space<vmem>>, %arg11: memref<8x128xf32, #tpu.memory_space<vmem>>, %arg12: memref<64x2048xf32, #tpu.memory_space<vmem>>) attributes {dimension_semantics = [], scalar_prefetch = 0 : i64, scratch_operands = 1 : i64, tpu.core_type = #tpu.core_type<tc>} {
    %c0 = arith.constant 0 : index
    %c0_0 = arith.constant 0 : index
    %0 = vector.load %arg0[%c0, %c0_0] : memref<64x8xf32, #tpu.memory_space<vmem>>, vector<64x8xf32>
    %1 = arith.truncf %0 : vector<64x8xf32> to vector<64x8xbf16>
    %c0_1 = arith.constant 0 : index
    %c0_2 = arith.constant 0 : index
    %2 = vector.load %arg1[%c0_1, %c0_2] : memref<8x2048xf32, #tpu.memory_space<vmem>>, vector<8x2048xf32>
    %3 = arith.truncf %2 : vector<8x2048xf32> to vector<8x2048xbf16>
    %cst = arith.constant dense<0.000000e+00> : vector<64x2048xf32>
    %4 = tpu.matmul %1, %3, %cst {dimension_numbers = #tpu.dot_dimension_numbers<[1], [0], [0], [1], [0, 0, 1, 1], [], []>} : vector<64x8xbf16>, vector<8x2048xbf16>, vector<64x2048xf32> -> vector<64x2048xf32>
    %c0_3 = arith.constant 0 : index
    %c0_4 = arith.constant 0 : index
    %5 = vector.load %arg2[%c0_3, %c0_4] : memref<1x2048xf32, #tpu.memory_space<vmem>>, vector<1x2048xf32>
    %6 = vector.broadcast %5 : vector<1x2048xf32> to vector<64x2048xf32>
    %7 = arith.addf %4, %6 : vector<64x2048xf32>
    %c0_5 = arith.constant 0 : index
    %c0_6 = arith.constant 0 : index
    %8 = vector.load %arg12[%c0_5, %c0_6] : memref<64x2048xf32, #tpu.memory_space<vmem>>, vector<64x2048xf32>
    tpu.vector_store %arg12[%c0_5, %c0_6], %7 {strides = array<i32>} : memref<64x2048xf32, #tpu.memory_space<vmem>>, vector<64x2048xf32>,
    %c0_7 = arith.constant 0 : index
    %c0_8 = arith.constant 0 : index
    %9 = vector.load %arg3[%c0_7, %c0_8] : memref<256x1024xf32, #tpu.memory_space<vmem>>, vector<256x1024xf32>
    %10 = arith.truncf %9 : vector<256x1024xf32> to vector<256x1024xbf16>
    %c0_9 = arith.constant 0 : index
    %c0_10 = arith.constant 0 : index
    %11 = vector.load %arg4[%c0_9, %c0_10] : memref<256x1024xf32, #tpu.memory_space<vmem>>, vector<256x1024xf32>
    %12 = arith.truncf %11 : vector<256x1024xf32> to vector<256x1024xbf16>
    %cst_11 = arith.constant 0.000000e+00 : f32
    %13 = vector.broadcast %cst_11 : f32 to vector<8x256xf32>
    %c0_i32 = arith.constant 0 : i32
    %c8_i32 = arith.constant 8 : i32
    %14 = arith.muli %c0_i32, %c8_i32 : i32
    %15 = tpu.assume_multiple %14, 8 : i32
    %c7_i32 = arith.constant 7 : i32
    %16 = arith.subi %c7_i32, %c0_i32 : i32
    %c8_i32_12 = arith.constant 8 : i32
    %17 = arith.muli %16, %c8_i32_12 : i32
    %18 = tpu.assume_multiple %17, 8 : i32
    %19 = arith.index_cast %15 : i32 to index
    %c0_13 = arith.constant 0 : index
    %20 = vector.load %arg12[%19, %c0_13] : memref<64x2048xf32, #tpu.memory_space<vmem>>, vector<8x1024xf32>
    %21 = arith.index_cast %18 : i32 to index
    %c1024 = arith.constant 1024 : index
    %22 = vector.load %arg12[%21, %c1024] : memref<64x2048xf32, #tpu.memory_space<vmem>>, vector<8x1024xf32>
    %23 = arith.truncf %13 : vector<8x256xf32> to vector<8x256xbf16>
    %cst_14 = arith.constant dense<0.000000e+00> : vector<8x1024xf32>
    %24 = tpu.matmul %23, %10, %cst_14 {dimension_numbers = #tpu.dot_dimension_numbers<[1], [0], [0], [1], [0, 0, 1, 1], [], []>} : vector<8x256xbf16>, vector<256x1024xbf16>, vector<8x1024xf32> -> vector<8x1024xf32>
    %25 = arith.addf %20, %24 : vector<8x1024xf32>
    %26 = arith.truncf %13 : vector<8x256xf32> to vector<8x256xbf16>
    %cst_15 = arith.constant dense<0.000000e+00> : vector<8x1024xf32>
    %27 = tpu.matmul %26, %12, %cst_15 {dimension_numbers = #tpu.dot_dimension_numbers<[1], [0], [0], [1], [0, 0, 1, 1], [], []>} : vector<8x256xbf16>, vector<256x1024xbf16>, vector<8x1024xf32> -> vector<8x1024xf32>
    %28 = arith.addf %22, %27 : vector<8x1024xf32>
    %29 = vector.extract_strided_slice %25 {offsets = [0, 0], sizes = [8, 256], strides = [1, 1]} : vector<8x1024xf32> to vector<8x256xf32>
    %30 = arith.negf %29 : vector<8x256xf32>
    %31 = math.exp %30 : vector<8x256xf32>
    %cst_16 = arith.constant 1.000000e+00 : f32
    %32 = vector.broadcast %cst_16 : f32 to vector<8x256xf32>
    %33 = arith.addf %32, %31 : vector<8x256xf32>
    %34 = arith.divf %32, %33 : vector<8x256xf32>
    %35 = vector.extract_strided_slice %25 {offsets = [0, 256], sizes = [8, 256], strides = [1, 1]} : vector<8x1024xf32> to vector<8x256xf32>
    %36 = arith.negf %35 : vector<8x256xf32>
    %37 = math.exp %36 : vector<8x256xf32>
    %cst_17 = arith.constant 1.000000e+00 : f32
    %38 = vector.broadcast %cst_17 : f32 to vector<8x256xf32>
    %39 = arith.addf %38, %37 : vector<8x256xf32>
    %40 = arith.divf %38, %39 : vector<8x256xf32>
    %41 = vector.extract_strided_slice %25 {offsets = [0, 512], sizes = [8, 256], strides = [1, 1]} : vector<8x1024xf32> to vector<8x256xf32>
    %42 = math.tanh %41 : vector<8x256xf32>
    %43 = vector.extract_strided_slice %25 {offsets = [0, 768], sizes = [8, 256], strides = [1, 1]} : vector<8x1024xf32> to vector<8x256xf32>
    %44 = arith.negf %43 : vector<8x256xf32>
    %45 = math.exp %44 : vector<8x256xf32>
    %cst_18 = arith.constant 1.000000e+00 : f32
    %46 = vector.broadcast %cst_18 : f32 to vector<8x256xf32>
    %47 = arith.addf %46, %45 : vector<8x256xf32>
    %48 = arith.divf %46, %47 : vector<8x256xf32>
    %49 = arith.mulf %40, %13 : vector<8x256xf32>
    %50 = arith.mulf %34, %42 : vector<8x256xf32>
    %51 = arith.addf %49, %50 : vector<8x256xf32>
    %52 = math.tanh %51 : vector<8x256xf32>
    %53 = arith.mulf %48, %52 : vector<8x256xf32>
    %54 = vector.extract_strided_slice %28 {offsets = [0, 0], sizes = [8, 256], strides = [1, 1]} : vector<8x1024xf32> to vector<8x256xf32>
    %55 = arith.negf %54 : vector<8x256xf32>
    %56 = math.exp %55 : vector<8x256xf32>
    %cst_19 = arith.constant 1.000000e+00 : f32
    %57 = vector.broadcast %cst_19 : f32 to vector<8x256xf32>
    %58 = arith.addf %57, %56 : vector<8x256xf32>
    %59 = arith.divf %57, %58 : vector<8x256xf32>
    %60 = vector.extract_strided_slice %28 {offsets = [0, 256], sizes = [8, 256], strides = [1, 1]} : vector<8x1024xf32> to vector<8x256xf32>
    %61 = arith.negf %60 : vector<8x256xf32>
    %62 = math.exp %61 : vector<8x256xf32>
    %cst_20 = arith.constant 1.000000e+00 : f32
    %63 = vector.broadcast %cst_20 : f32 to vector<8x256xf32>
    %64 = arith.addf %63, %62 : vector<8x256xf32>
    %65 = arith.divf %63, %64 : vector<8x256xf32>
    %66 = vector.extract_strided_slice %28 {offsets = [0, 512], sizes = [8, 256], strides = [1, 1]} : vector<8x1024xf32> to vector<8x256xf32>
    %67 = math.tanh %66 : vector<8x256xf32>
    %68 = vector.extract_strided_slice %28 {offsets = [0, 768], sizes = [8, 256], strides = [1, 1]} : vector<8x1024xf32> to vector<8x256xf32>
    %69 = arith.negf %68 : vector<8x256xf32>
    %70 = math.exp %69 : vector<8x256xf32>
    %cst_21 = arith.constant 1.000000e+00 : f32
    %71 = vector.broadcast %cst_21 : f32 to vector<8x256xf32>
    %72 = arith.addf %71, %70 : vector<8x256xf32>
    %73 = arith.divf %71, %72 : vector<8x256xf32>
    %74 = arith.mulf %65, %13 : vector<8x256xf32>
    %75 = arith.mulf %59, %67 : vector<8x256xf32>
    %76 = arith.addf %74, %75 : vector<8x256xf32>
    %77 = math.tanh %76 : vector<8x256xf32>
    %78 = arith.mulf %73, %77 : vector<8x256xf32>
    %c1_i32 = arith.constant 1 : i32
    %c8_i32_22 = arith.constant 8 : i32
    %79 = arith.muli %c1_i32, %c8_i32_22 : i32
    %80 = tpu.assume_multiple %79, 8 : i32
    %c7_i32_23 = arith.constant 7 : i32
    %81 = arith.subi %c7_i32_23, %c1_i32 : i32
    %c8_i32_24 = arith.constant 8 : i32
    %82 = arith.muli %81, %c8_i32_24 : i32
    %83 = tpu.assume_multiple %82, 8 : i32
    %84 = arith.index_cast %80 : i32 to index
    %c0_25 = arith.constant 0 : index
    %85 = vector.load %arg12[%84, %c0_25] : memref<64x2048xf32, #tpu.memory_space<vmem>>, vector<8x1024xf32>
    %86 = arith.index_cast %83 : i32 to index
    %c1024_26 = arith.constant 1024 : index
    %87 = vector.load %arg12[%86, %c1024_26] : memref<64x2048xf32, #tpu.memory_space<vmem>>, vector<8x1024xf32>
    %88 = arith.truncf %53 : vector<8x256xf32> to vector<8x256xbf16>
    %cst_27 = arith.constant dense<0.000000e+00> : vector<8x1024xf32>
    %89 = tpu.matmul %88, %10, %cst_27 {dimension_numbers = #tpu.dot_dimension_numbers<[1], [0], [0], [1], [0, 0, 1, 1], [], []>} : vector<8x256xbf16>, vector<256x1024xbf16>, vector<8x1024xf32> -> vector<8x1024xf32>
    %90 = arith.addf %85, %89 : vector<8x1024xf32>
    %91 = arith.truncf %78 : vector<8x256xf32> to vector<8x256xbf16>
    %cst_28 = arith.constant dense<0.000000e+00> : vector<8x1024xf32>
    %92 = tpu.matmul %91, %12, %cst_28 {dimension_numbers = #tpu.dot_dimension_numbers<[1], [0], [0], [1], [0, 0, 1, 1], [], []>} : vector<8x256xbf16>, vector<256x1024xbf16>, vector<8x1024xf32> -> vector<8x1024xf32>
    %93 = arith.addf %87, %92 : vector<8x1024xf32>
    %94 = vector.extract_strided_slice %90 {offsets = [0, 0], sizes = [8, 256], strides = [1, 1]} : vector<8x1024xf32> to vector<8x256xf32>
    %95 = arith.negf %94 : vector<8x256xf32>
    %96 = math.exp %95 : vector<8x256xf32>
    %cst_29 = arith.constant 1.000000e+00 : f32
    %97 = vector.broadcast %cst_29 : f32 to vector<8x256xf32>
    %98 = arith.addf %97, %96 : vector<8x256xf32>
    %99 = arith.divf %97, %98 : vector<8x256xf32>
    %100 = vector.extract_strided_slice %90 {offsets = [0, 256], sizes = [8, 256], strides = [1, 1]} : vector<8x1024xf32> to vector<8x256xf32>
    %101 = arith.negf %100 : vector<8x256xf32>
    %102 = math.exp %101 : vector<8x256xf32>
    %cst_30 = arith.constant 1.000000e+00 : f32
    %103 = vector.broadcast %cst_30 : f32 to vector<8x256xf32>
    %104 = arith.addf %103, %102 : vector<8x256xf32>
    %105 = arith.divf %103, %104 : vector<8x256xf32>
    %106 = vector.extract_strided_slice %90 {offsets = [0, 512], sizes = [8, 256], strides = [1, 1]} : vector<8x1024xf32> to vector<8x256xf32>
    %107 = math.tanh %106 : vector<8x256xf32>
    %108 = vector.extract_strided_slice %90 {offsets = [0, 768], sizes = [8, 256], strides = [1, 1]} : vector<8x1024xf32> to vector<8x256xf32>
    %109 = arith.negf %108 : vector<8x256xf32>
    %110 = math.exp %109 : vector<8x256xf32>
    %cst_31 = arith.constant 1.000000e+00 : f32
    %111 = vector.broadcast %cst_31 : f32 to vector<8x256xf32>
    %112 = arith.addf %111, %110 : vector<8x256xf32>
    %113 = arith.divf %111, %112 : vector<8x256xf32>
    %114 = arith.mulf %105, %51 : vector<8x256xf32>
    %115 = arith.mulf %99, %107 : vector<8x256xf32>
    %116 = arith.addf %114, %115 : vector<8x256xf32>
    %117 = math.tanh %116 : vector<8x256xf32>
    %118 = arith.mulf %113, %117 : vector<8x256xf32>
    %119 = vector.extract_strided_slice %93 {offsets = [0, 0], sizes = [8, 256], strides = [1, 1]} : vector<8x1024xf32> to vector<8x256xf32>
    %120 = arith.negf %119 : vector<8x256xf32>
    %121 = math.exp %120 : vector<8x256xf32>
    %cst_32 = arith.constant 1.000000e+00 : f32
    %122 = vector.broadcast %cst_32 : f32 to vector<8x256xf32>
    %123 = arith.addf %122, %121 : vector<8x256xf32>
    %124 = arith.divf %122, %123 : vector<8x256xf32>
    %125 = vector.extract_strided_slice %93 {offsets = [0, 256], sizes = [8, 256], strides = [1, 1]} : vector<8x1024xf32> to vector<8x256xf32>
    %126 = arith.negf %125 : vector<8x256xf32>
    %127 = math.exp %126 : vector<8x256xf32>
    %cst_33 = arith.constant 1.000000e+00 : f32
    %128 = vector.broadcast %cst_33 : f32 to vector<8x256xf32>
    %129 = arith.addf %128, %127 : vector<8x256xf32>
    %130 = arith.divf %128, %129 : vector<8x256xf32>
    %131 = vector.extract_strided_slice %93 {offsets = [0, 512], sizes = [8, 256], strides = [1, 1]} : vector<8x1024xf32> to vector<8x256xf32>
    %132 = math.tanh %131 : vector<8x256xf32>
    %133 = vector.extract_strided_slice %93 {offsets = [0, 768], sizes = [8, 256], strides = [1, 1]} : vector<8x1024xf32> to vector<8x256xf32>
    %134 = arith.negf %133 : vector<8x256xf32>
    %135 = math.exp %134 : vector<8x256xf32>
    %cst_34 = arith.constant 1.000000e+00 : f32
    %136 = vector.broadcast %cst_34 : f32 to vector<8x256xf32>
    %137 = arith.addf %136, %135 : vector<8x256xf32>
    %138 = arith.divf %136, %137 : vector<8x256xf32>
    %139 = arith.mulf %130, %76 : vector<8x256xf32>
    %140 = arith.mulf %124, %132 : vector<8x256xf32>
    %141 = arith.addf %139, %140 : vector<8x256xf32>
    %142 = math.tanh %141 : vector<8x256xf32>
    %143 = arith.mulf %138, %142 : vector<8x256xf32>
    %c2_i32 = arith.constant 2 : i32
    %c8_i32_35 = arith.constant 8 : i32
    %144 = arith.muli %c2_i32, %c8_i32_35 : i32
    %145 = tpu.assume_multiple %144, 8 : i32
    %c7_i32_36 = arith.constant 7 : i32
    %146 = arith.subi %c7_i32_36, %c2_i32 : i32
    %c8_i32_37 = arith.constant 8 : i32
    %147 = arith.muli %146, %c8_i32_37 : i32
    %148 = tpu.assume_multiple %147, 8 : i32
    %149 = arith.index_cast %145 : i32 to index
    %c0_38 = arith.constant 0 : index
    %150 = vector.load %arg12[%149, %c0_38] : memref<64x2048xf32, #tpu.memory_space<vmem>>, vector<8x1024xf32>
    %151 = arith.index_cast %148 : i32 to index
    %c1024_39 = arith.constant 1024 : index
    %152 = vector.load %arg12[%151, %c1024_39] : memref<64x2048xf32, #tpu.memory_space<vmem>>, vector<8x1024xf32>
    %153 = arith.truncf %118 : vector<8x256xf32> to vector<8x256xbf16>
    %cst_40 = arith.constant dense<0.000000e+00> : vector<8x1024xf32>
    %154 = tpu.matmul %153, %10, %cst_40 {dimension_numbers = #tpu.dot_dimension_numbers<[1], [0], [0], [1], [0, 0, 1, 1], [], []>} : vector<8x256xbf16>, vector<256x1024xbf16>, vector<8x1024xf32> -> vector<8x1024xf32>
    %155 = arith.addf %150, %154 : vector<8x1024xf32>
    %156 = arith.truncf %143 : vector<8x256xf32> to vector<8x256xbf16>
    %cst_41 = arith.constant dense<0.000000e+00> : vector<8x1024xf32>
    %157 = tpu.matmul %156, %12, %cst_41 {dimension_numbers = #tpu.dot_dimension_numbers<[1], [0], [0], [1], [0, 0, 1, 1], [], []>} : vector<8x256xbf16>, vector<256x1024xbf16>, vector<8x1024xf32> -> vector<8x1024xf32>
    %158 = arith.addf %152, %157 : vector<8x1024xf32>
    %159 = vector.extract_strided_slice %155 {offsets = [0, 0], sizes = [8, 256], strides = [1, 1]} : vector<8x1024xf32> to vector<8x256xf32>
    %160 = arith.negf %159 : vector<8x256xf32>
    %161 = math.exp %160 : vector<8x256xf32>
    %cst_42 = arith.constant 1.000000e+00 : f32
    %162 = vector.broadcast %cst_42 : f32 to vector<8x256xf32>
    %163 = arith.addf %162, %161 : vector<8x256xf32>
    %164 = arith.divf %162, %163 : vector<8x256xf32>
    %165 = vector.extract_strided_slice %155 {offsets = [0, 256], sizes = [8, 256], strides = [1, 1]} : vector<8x1024xf32> to vector<8x256xf32>
    %166 = arith.negf %165 : vector<8x256xf32>
    %167 = math.exp %166 : vector<8x256xf32>
    %cst_43 = arith.constant 1.000000e+00 : f32
    %168 = vector.broadcast %cst_43 : f32 to vector<8x256xf32>
    %169 = arith.addf %168, %167 : vector<8x256xf32>
    %170 = arith.divf %168, %169 : vector<8x256xf32>
    %171 = vector.extract_strided_slice %155 {offsets = [0, 512], sizes = [8, 256], strides = [1, 1]} : vector<8x1024xf32> to vector<8x256xf32>
    %172 = math.tanh %171 : vector<8x256xf32>
    %173 = vector.extract_strided_slice %155 {offsets = [0, 768], sizes = [8, 256], strides = [1, 1]} : vector<8x1024xf32> to vector<8x256xf32>
    %174 = arith.negf %173 : vector<8x256xf32>
    %175 = math.exp %174 : vector<8x256xf32>
    %cst_44 = arith.constant 1.000000e+00 : f32
    %176 = vector.broadcast %cst_44 : f32 to vector<8x256xf32>
    %177 = arith.addf %176, %175 : vector<8x256xf32>
    %178 = arith.divf %176, %177 : vector<8x256xf32>
    %179 = arith.mulf %170, %116 : vector<8x256xf32>
    %180 = arith.mulf %164, %172 : vector<8x256xf32>
    %181 = arith.addf %179, %180 : vector<8x256xf32>
    %182 = math.tanh %181 : vector<8x256xf32>
    %183 = arith.mulf %178, %182 : vector<8x256xf32>
    %184 = vector.extract_strided_slice %158 {offsets = [0, 0], sizes = [8, 256], strides = [1, 1]} : vector<8x1024xf32> to vector<8x256xf32>
    %185 = arith.negf %184 : vector<8x256xf32>
    %186 = math.exp %185 : vector<8x256xf32>
    %cst_45 = arith.constant 1.000000e+00 : f32
    %187 = vector.broadcast %cst_45 : f32 to vector<8x256xf32>
    %188 = arith.addf %187, %186 : vector<8x256xf32>
    %189 = arith.divf %187, %188 : vector<8x256xf32>
    %190 = vector.extract_strided_slice %158 {offsets = [0, 256], sizes = [8, 256], strides = [1, 1]} : vector<8x1024xf32> to vector<8x256xf32>
    %191 = arith.negf %190 : vector<8x256xf32>
    %192 = math.exp %191 : vector<8x256xf32>
    %cst_46 = arith.constant 1.000000e+00 : f32
    %193 = vector.broadcast %cst_46 : f32 to vector<8x256xf32>
    %194 = arith.addf %193, %192 : vector<8x256xf32>
    %195 = arith.divf %193, %194 : vector<8x256xf32>
    %196 = vector.extract_strided_slice %158 {offsets = [0, 512], sizes = [8, 256], strides = [1, 1]} : vector<8x1024xf32> to vector<8x256xf32>
    %197 = math.tanh %196 : vector<8x256xf32>
    %198 = vector.extract_strided_slice %158 {offsets = [0, 768], sizes = [8, 256], strides = [1, 1]} : vector<8x1024xf32> to vector<8x256xf32>
    %199 = arith.negf %198 : vector<8x256xf32>
    %200 = math.exp %199 : vector<8x256xf32>
    %cst_47 = arith.constant 1.000000e+00 : f32
    %201 = vector.broadcast %cst_47 : f32 to vector<8x256xf32>
    %202 = arith.addf %201, %200 : vector<8x256xf32>
    %203 = arith.divf %201, %202 : vector<8x256xf32>
    %204 = arith.mulf %195, %141 : vector<8x256xf32>
    %205 = arith.mulf %189, %197 : vector<8x256xf32>
    %206 = arith.addf %204, %205 : vector<8x256xf32>
    %207 = math.tanh %206 : vector<8x256xf32>
    %208 = arith.mulf %203, %207 : vector<8x256xf32>
    %c3_i32 = arith.constant 3 : i32
    %c8_i32_48 = arith.constant 8 : i32
    %209 = arith.muli %c3_i32, %c8_i32_48 : i32
    %210 = tpu.assume_multiple %209, 8 : i32
    %c7_i32_49 = arith.constant 7 : i32
    %211 = arith.subi %c7_i32_49, %c3_i32 : i32
    %c8_i32_50 = arith.constant 8 : i32
    %212 = arith.muli %211, %c8_i32_50 : i32
    %213 = tpu.assume_multiple %212, 8 : i32
    %214 = arith.index_cast %210 : i32 to index
    %c0_51 = arith.constant 0 : index
    %215 = vector.load %arg12[%214, %c0_51] : memref<64x2048xf32, #tpu.memory_space<vmem>>, vector<8x1024xf32>
    %216 = arith.index_cast %213 : i32 to index
    %c1024_52 = arith.constant 1024 : index
    %217 = vector.load %arg12[%216, %c1024_52] : memref<64x2048xf32, #tpu.memory_space<vmem>>, vector<8x1024xf32>
    %218 = arith.truncf %183 : vector<8x256xf32> to vector<8x256xbf16>
    %cst_53 = arith.constant dense<0.000000e+00> : vector<8x1024xf32>
    %219 = tpu.matmul %218, %10, %cst_53 {dimension_numbers = #tpu.dot_dimension_numbers<[1], [0], [0], [1], [0, 0, 1, 1], [], []>} : vector<8x256xbf16>, vector<256x1024xbf16>, vector<8x1024xf32> -> vector<8x1024xf32>
    %220 = arith.addf %215, %219 : vector<8x1024xf32>
    %221 = arith.truncf %208 : vector<8x256xf32> to vector<8x256xbf16>
    %cst_54 = arith.constant dense<0.000000e+00> : vector<8x1024xf32>
    %222 = tpu.matmul %221, %12, %cst_54 {dimension_numbers = #tpu.dot_dimension_numbers<[1], [0], [0], [1], [0, 0, 1, 1], [], []>} : vector<8x256xbf16>, vector<256x1024xbf16>, vector<8x1024xf32> -> vector<8x1024xf32>
    %223 = arith.addf %217, %222 : vector<8x1024xf32>
    %224 = vector.extract_strided_slice %220 {offsets = [0, 0], sizes = [8, 256], strides = [1, 1]} : vector<8x1024xf32> to vector<8x256xf32>
    %225 = arith.negf %224 : vector<8x256xf32>
    %226 = math.exp %225 : vector<8x256xf32>
    %cst_55 = arith.constant 1.000000e+00 : f32
    %227 = vector.broadcast %cst_55 : f32 to vector<8x256xf32>
    %228 = arith.addf %227, %226 : vector<8x256xf32>
    %229 = arith.divf %227, %228 : vector<8x256xf32>
    %230 = vector.extract_strided_slice %220 {offsets = [0, 256], sizes = [8, 256], strides = [1, 1]} : vector<8x1024xf32> to vector<8x256xf32>
    %231 = arith.negf %230 : vector<8x256xf32>
    %232 = math.exp %231 : vector<8x256xf32>
    %cst_56 = arith.constant 1.000000e+00 : f32
    %233 = vector.broadcast %cst_56 : f32 to vector<8x256xf32>
    %234 = arith.addf %233, %232 : vector<8x256xf32>
    %235 = arith.divf %233, %234 : vector<8x256xf32>
    %236 = vector.extract_strided_slice %220 {offsets = [0, 512], sizes = [8, 256], strides = [1, 1]} : vector<8x1024xf32> to vector<8x256xf32>
    %237 = math.tanh %236 : vector<8x256xf32>
    %238 = vector.extract_strided_slice %220 {offsets = [0, 768], sizes = [8, 256], strides = [1, 1]} : vector<8x1024xf32> to vector<8x256xf32>
    %239 = arith.negf %238 : vector<8x256xf32>
    %240 = math.exp %239 : vector<8x256xf32>
    %cst_57 = arith.constant 1.000000e+00 : f32
    %241 = vector.broadcast %cst_57 : f32 to vector<8x256xf32>
    %242 = arith.addf %241, %240 : vector<8x256xf32>
    %243 = arith.divf %241, %242 : vector<8x256xf32>
    %244 = arith.mulf %235, %181 : vector<8x256xf32>
    %245 = arith.mulf %229, %237 : vector<8x256xf32>
    %246 = arith.addf %244, %245 : vector<8x256xf32>
    %247 = math.tanh %246 : vector<8x256xf32>
    %248 = arith.mulf %243, %247 : vector<8x256xf32>
    %249 = vector.extract_strided_slice %223 {offsets = [0, 0], sizes = [8, 256], strides = [1, 1]} : vector<8x1024xf32> to vector<8x256xf32>
    %250 = arith.negf %249 : vector<8x256xf32>
    %251 = math.exp %250 : vector<8x256xf32>
    %cst_58 = arith.constant 1.000000e+00 : f32
    %252 = vector.broadcast %cst_58 : f32 to vector<8x256xf32>
    %253 = arith.addf %252, %251 : vector<8x256xf32>
    %254 = arith.divf %252, %253 : vector<8x256xf32>
    %255 = vector.extract_strided_slice %223 {offsets = [0, 256], sizes = [8, 256], strides = [1, 1]} : vector<8x1024xf32> to vector<8x256xf32>
    %256 = arith.negf %255 : vector<8x256xf32>
    %257 = math.exp %256 : vector<8x256xf32>
    %cst_59 = arith.constant 1.000000e+00 : f32
    %258 = vector.broadcast %cst_59 : f32 to vector<8x256xf32>
    %259 = arith.addf %258, %257 : vector<8x256xf32>
    %260 = arith.divf %258, %259 : vector<8x256xf32>
    %261 = vector.extract_strided_slice %223 {offsets = [0, 512], sizes = [8, 256], strides = [1, 1]} : vector<8x1024xf32> to vector<8x256xf32>
    %262 = math.tanh %261 : vector<8x256xf32>
    %263 = vector.extract_strided_slice %223 {offsets = [0, 768], sizes = [8, 256], strides = [1, 1]} : vector<8x1024xf32> to vector<8x256xf32>
    %264 = arith.negf %263 : vector<8x256xf32>
    %265 = math.exp %264 : vector<8x256xf32>
    %cst_60 = arith.constant 1.000000e+00 : f32
    %266 = vector.broadcast %cst_60 : f32 to vector<8x256xf32>
    %267 = arith.addf %266, %265 : vector<8x256xf32>
    %268 = arith.divf %266, %267 : vector<8x256xf32>
    %269 = arith.mulf %260, %206 : vector<8x256xf32>
    %270 = arith.mulf %254, %262 : vector<8x256xf32>
    %271 = arith.addf %269, %270 : vector<8x256xf32>
    %272 = math.tanh %271 : vector<8x256xf32>
    %273 = arith.mulf %268, %272 : vector<8x256xf32>
    %c4_i32 = arith.constant 4 : i32
    %c8_i32_61 = arith.constant 8 : i32
    %274 = arith.muli %c4_i32, %c8_i32_61 : i32
    %275 = tpu.assume_multiple %274, 8 : i32
    %c7_i32_62 = arith.constant 7 : i32
    %276 = arith.subi %c7_i32_62, %c4_i32 : i32
    %c8_i32_63 = arith.constant 8 : i32
    %277 = arith.muli %276, %c8_i32_63 : i32
    %278 = tpu.assume_multiple %277, 8 : i32
    %279 = arith.index_cast %275 : i32 to index
    %c0_64 = arith.constant 0 : index
    %280 = vector.load %arg12[%279, %c0_64] : memref<64x2048xf32, #tpu.memory_space<vmem>>, vector<8x1024xf32>
    %281 = arith.index_cast %278 : i32 to index
    %c1024_65 = arith.constant 1024 : index
    %282 = vector.load %arg12[%281, %c1024_65] : memref<64x2048xf32, #tpu.memory_space<vmem>>, vector<8x1024xf32>
    %283 = arith.truncf %248 : vector<8x256xf32> to vector<8x256xbf16>
    %cst_66 = arith.constant dense<0.000000e+00> : vector<8x1024xf32>
    %284 = tpu.matmul %283, %10, %cst_66 {dimension_numbers = #tpu.dot_dimension_numbers<[1], [0], [0], [1], [0, 0, 1, 1], [], []>} : vector<8x256xbf16>, vector<256x1024xbf16>, vector<8x1024xf32> -> vector<8x1024xf32>
    %285 = arith.addf %280, %284 : vector<8x1024xf32>
    %286 = arith.truncf %273 : vector<8x256xf32> to vector<8x256xbf16>
    %cst_67 = arith.constant dense<0.000000e+00> : vector<8x1024xf32>
    %287 = tpu.matmul %286, %12, %cst_67 {dimension_numbers = #tpu.dot_dimension_numbers<[1], [0], [0], [1], [0, 0, 1, 1], [], []>} : vector<8x256xbf16>, vector<256x1024xbf16>, vector<8x1024xf32> -> vector<8x1024xf32>
    %288 = arith.addf %282, %287 : vector<8x1024xf32>
    %289 = vector.extract_strided_slice %285 {offsets = [0, 0], sizes = [8, 256], strides = [1, 1]} : vector<8x1024xf32> to vector<8x256xf32>
    %290 = arith.negf %289 : vector<8x256xf32>
    %291 = math.exp %290 : vector<8x256xf32>
    %cst_68 = arith.constant 1.000000e+00 : f32
    %292 = vector.broadcast %cst_68 : f32 to vector<8x256xf32>
    %293 = arith.addf %292, %291 : vector<8x256xf32>
    %294 = arith.divf %292, %293 : vector<8x256xf32>
    %295 = vector.extract_strided_slice %285 {offsets = [0, 256], sizes = [8, 256], strides = [1, 1]} : vector<8x1024xf32> to vector<8x256xf32>
    %296 = arith.negf %295 : vector<8x256xf32>
    %297 = math.exp %296 : vector<8x256xf32>
    %cst_69 = arith.constant 1.000000e+00 : f32
    %298 = vector.broadcast %cst_69 : f32 to vector<8x256xf32>
    %299 = arith.addf %298, %297 : vector<8x256xf32>
    %300 = arith.divf %298, %299 : vector<8x256xf32>
    %301 = vector.extract_strided_slice %285 {offsets = [0, 512], sizes = [8, 256], strides = [1, 1]} : vector<8x1024xf32> to vector<8x256xf32>
    %302 = math.tanh %301 : vector<8x256xf32>
    %303 = vector.extract_strided_slice %285 {offsets = [0, 768], sizes = [8, 256], strides = [1, 1]} : vector<8x1024xf32> to vector<8x256xf32>
    %304 = arith.negf %303 : vector<8x256xf32>
    %305 = math.exp %304 : vector<8x256xf32>
    %cst_70 = arith.constant 1.000000e+00 : f32
    %306 = vector.broadcast %cst_70 : f32 to vector<8x256xf32>
    %307 = arith.addf %306, %305 : vector<8x256xf32>
    %308 = arith.divf %306, %307 : vector<8x256xf32>
    %309 = arith.mulf %300, %246 : vector<8x256xf32>
    %310 = arith.mulf %294, %302 : vector<8x256xf32>
    %311 = arith.addf %309, %310 : vector<8x256xf32>
    %312 = math.tanh %311 : vector<8x256xf32>
    %313 = arith.mulf %308, %312 : vector<8x256xf32>
    %314 = vector.extract_strided_slice %288 {offsets = [0, 0], sizes = [8, 256], strides = [1, 1]} : vector<8x1024xf32> to vector<8x256xf32>
    %315 = arith.negf %314 : vector<8x256xf32>
    %316 = math.exp %315 : vector<8x256xf32>
    %cst_71 = arith.constant 1.000000e+00 : f32
    %317 = vector.broadcast %cst_71 : f32 to vector<8x256xf32>
    %318 = arith.addf %317, %316 : vector<8x256xf32>
    %319 = arith.divf %317, %318 : vector<8x256xf32>
    %320 = vector.extract_strided_slice %288 {offsets = [0, 256], sizes = [8, 256], strides = [1, 1]} : vector<8x1024xf32> to vector<8x256xf32>
    %321 = arith.negf %320 : vector<8x256xf32>
    %322 = math.exp %321 : vector<8x256xf32>
    %cst_72 = arith.constant 1.000000e+00 : f32
    %323 = vector.broadcast %cst_72 : f32 to vector<8x256xf32>
    %324 = arith.addf %323, %322 : vector<8x256xf32>
    %325 = arith.divf %323, %324 : vector<8x256xf32>
    %326 = vector.extract_strided_slice %288 {offsets = [0, 512], sizes = [8, 256], strides = [1, 1]} : vector<8x1024xf32> to vector<8x256xf32>
    %327 = math.tanh %326 : vector<8x256xf32>
    %328 = vector.extract_strided_slice %288 {offsets = [0, 768], sizes = [8, 256], strides = [1, 1]} : vector<8x1024xf32> to vector<8x256xf32>
    %329 = arith.negf %328 : vector<8x256xf32>
    %330 = math.exp %329 : vector<8x256xf32>
    %cst_73 = arith.constant 1.000000e+00 : f32
    %331 = vector.broadcast %cst_73 : f32 to vector<8x256xf32>
    %332 = arith.addf %331, %330 : vector<8x256xf32>
    %333 = arith.divf %331, %332 : vector<8x256xf32>
    %334 = arith.mulf %325, %271 : vector<8x256xf32>
    %335 = arith.mulf %319, %327 : vector<8x256xf32>
    %336 = arith.addf %334, %335 : vector<8x256xf32>
    %337 = math.tanh %336 : vector<8x256xf32>
    %338 = arith.mulf %333, %337 : vector<8x256xf32>
    %c5_i32 = arith.constant 5 : i32
    %c8_i32_74 = arith.constant 8 : i32
    %339 = arith.muli %c5_i32, %c8_i32_74 : i32
    %340 = tpu.assume_multiple %339, 8 : i32
    %c7_i32_75 = arith.constant 7 : i32
    %341 = arith.subi %c7_i32_75, %c5_i32 : i32
    %c8_i32_76 = arith.constant 8 : i32
    %342 = arith.muli %341, %c8_i32_76 : i32
    %343 = tpu.assume_multiple %342, 8 : i32
    %344 = arith.index_cast %340 : i32 to index
    %c0_77 = arith.constant 0 : index
    %345 = vector.load %arg12[%344, %c0_77] : memref<64x2048xf32, #tpu.memory_space<vmem>>, vector<8x1024xf32>
    %346 = arith.index_cast %343 : i32 to index
    %c1024_78 = arith.constant 1024 : index
    %347 = vector.load %arg12[%346, %c1024_78] : memref<64x2048xf32, #tpu.memory_space<vmem>>, vector<8x1024xf32>
    %348 = arith.truncf %313 : vector<8x256xf32> to vector<8x256xbf16>
    %cst_79 = arith.constant dense<0.000000e+00> : vector<8x1024xf32>
    %349 = tpu.matmul %348, %10, %cst_79 {dimension_numbers = #tpu.dot_dimension_numbers<[1], [0], [0], [1], [0, 0, 1, 1], [], []>} : vector<8x256xbf16>, vector<256x1024xbf16>, vector<8x1024xf32> -> vector<8x1024xf32>
    %350 = arith.addf %345, %349 : vector<8x1024xf32>
    %351 = arith.truncf %338 : vector<8x256xf32> to vector<8x256xbf16>
    %cst_80 = arith.constant dense<0.000000e+00> : vector<8x1024xf32>
    %352 = tpu.matmul %351, %12, %cst_80 {dimension_numbers = #tpu.dot_dimension_numbers<[1], [0], [0], [1], [0, 0, 1, 1], [], []>} : vector<8x256xbf16>, vector<256x1024xbf16>, vector<8x1024xf32> -> vector<8x1024xf32>
    %353 = arith.addf %347, %352 : vector<8x1024xf32>
    %354 = vector.extract_strided_slice %350 {offsets = [0, 0], sizes = [8, 256], strides = [1, 1]} : vector<8x1024xf32> to vector<8x256xf32>
    %355 = arith.negf %354 : vector<8x256xf32>
    %356 = math.exp %355 : vector<8x256xf32>
    %cst_81 = arith.constant 1.000000e+00 : f32
    %357 = vector.broadcast %cst_81 : f32 to vector<8x256xf32>
    %358 = arith.addf %357, %356 : vector<8x256xf32>
    %359 = arith.divf %357, %358 : vector<8x256xf32>
    %360 = vector.extract_strided_slice %350 {offsets = [0, 256], sizes = [8, 256], strides = [1, 1]} : vector<8x1024xf32> to vector<8x256xf32>
    %361 = arith.negf %360 : vector<8x256xf32>
    %362 = math.exp %361 : vector<8x256xf32>
    %cst_82 = arith.constant 1.000000e+00 : f32
    %363 = vector.broadcast %cst_82 : f32 to vector<8x256xf32>
    %364 = arith.addf %363, %362 : vector<8x256xf32>
    %365 = arith.divf %363, %364 : vector<8x256xf32>
    %366 = vector.extract_strided_slice %350 {offsets = [0, 512], sizes = [8, 256], strides = [1, 1]} : vector<8x1024xf32> to vector<8x256xf32>
    %367 = math.tanh %366 : vector<8x256xf32>
    %368 = vector.extract_strided_slice %350 {offsets = [0, 768], sizes = [8, 256], strides = [1, 1]} : vector<8x1024xf32> to vector<8x256xf32>
    %369 = arith.negf %368 : vector<8x256xf32>
    %370 = math.exp %369 : vector<8x256xf32>
    %cst_83 = arith.constant 1.000000e+00 : f32
    %371 = vector.broadcast %cst_83 : f32 to vector<8x256xf32>
    %372 = arith.addf %371, %370 : vector<8x256xf32>
    %373 = arith.divf %371, %372 : vector<8x256xf32>
    %374 = arith.mulf %365, %311 : vector<8x256xf32>
    %375 = arith.mulf %359, %367 : vector<8x256xf32>
    %376 = arith.addf %374, %375 : vector<8x256xf32>
    %377 = math.tanh %376 : vector<8x256xf32>
    %378 = arith.mulf %373, %377 : vector<8x256xf32>
    %379 = vector.extract_strided_slice %353 {offsets = [0, 0], sizes = [8, 256], strides = [1, 1]} : vector<8x1024xf32> to vector<8x256xf32>
    %380 = arith.negf %379 : vector<8x256xf32>
    %381 = math.exp %380 : vector<8x256xf32>
    %cst_84 = arith.constant 1.000000e+00 : f32
    %382 = vector.broadcast %cst_84 : f32 to vector<8x256xf32>
    %383 = arith.addf %382, %381 : vector<8x256xf32>
    %384 = arith.divf %382, %383 : vector<8x256xf32>
    %385 = vector.extract_strided_slice %353 {offsets = [0, 256], sizes = [8, 256], strides = [1, 1]} : vector<8x1024xf32> to vector<8x256xf32>
    %386 = arith.negf %385 : vector<8x256xf32>
    %387 = math.exp %386 : vector<8x256xf32>
    %cst_85 = arith.constant 1.000000e+00 : f32
    %388 = vector.broadcast %cst_85 : f32 to vector<8x256xf32>
    %389 = arith.addf %388, %387 : vector<8x256xf32>
    %390 = arith.divf %388, %389 : vector<8x256xf32>
    %391 = vector.extract_strided_slice %353 {offsets = [0, 512], sizes = [8, 256], strides = [1, 1]} : vector<8x1024xf32> to vector<8x256xf32>
    %392 = math.tanh %391 : vector<8x256xf32>
    %393 = vector.extract_strided_slice %353 {offsets = [0, 768], sizes = [8, 256], strides = [1, 1]} : vector<8x1024xf32> to vector<8x256xf32>
    %394 = arith.negf %393 : vector<8x256xf32>
    %395 = math.exp %394 : vector<8x256xf32>
    %cst_86 = arith.constant 1.000000e+00 : f32
    %396 = vector.broadcast %cst_86 : f32 to vector<8x256xf32>
    %397 = arith.addf %396, %395 : vector<8x256xf32>
    %398 = arith.divf %396, %397 : vector<8x256xf32>
    %399 = arith.mulf %390, %336 : vector<8x256xf32>
    %400 = arith.mulf %384, %392 : vector<8x256xf32>
    %401 = arith.addf %399, %400 : vector<8x256xf32>
    %402 = math.tanh %401 : vector<8x256xf32>
    %403 = arith.mulf %398, %402 : vector<8x256xf32>
    %c6_i32 = arith.constant 6 : i32
    %c8_i32_87 = arith.constant 8 : i32
    %404 = arith.muli %c6_i32, %c8_i32_87 : i32
    %405 = tpu.assume_multiple %404, 8 : i32
    %c7_i32_88 = arith.constant 7 : i32
    %406 = arith.subi %c7_i32_88, %c6_i32 : i32
    %c8_i32_89 = arith.constant 8 : i32
    %407 = arith.muli %406, %c8_i32_89 : i32
    %408 = tpu.assume_multiple %407, 8 : i32
    %409 = arith.index_cast %405 : i32 to index
    %c0_90 = arith.constant 0 : index
    %410 = vector.load %arg12[%409, %c0_90] : memref<64x2048xf32, #tpu.memory_space<vmem>>, vector<8x1024xf32>
    %411 = arith.index_cast %408 : i32 to index
    %c1024_91 = arith.constant 1024 : index
    %412 = vector.load %arg12[%411, %c1024_91] : memref<64x2048xf32, #tpu.memory_space<vmem>>, vector<8x1024xf32>
    %413 = arith.truncf %378 : vector<8x256xf32> to vector<8x256xbf16>
    %cst_92 = arith.constant dense<0.000000e+00> : vector<8x1024xf32>
    %414 = tpu.matmul %413, %10, %cst_92 {dimension_numbers = #tpu.dot_dimension_numbers<[1], [0], [0], [1], [0, 0, 1, 1], [], []>} : vector<8x256xbf16>, vector<256x1024xbf16>, vector<8x1024xf32> -> vector<8x1024xf32>
    %415 = arith.addf %410, %414 : vector<8x1024xf32>
    %416 = arith.truncf %403 : vector<8x256xf32> to vector<8x256xbf16>
    %cst_93 = arith.constant dense<0.000000e+00> : vector<8x1024xf32>
    %417 = tpu.matmul %416, %12, %cst_93 {dimension_numbers = #tpu.dot_dimension_numbers<[1], [0], [0], [1], [0, 0, 1, 1], [], []>} : vector<8x256xbf16>, vector<256x1024xbf16>, vector<8x1024xf32> -> vector<8x1024xf32>
    %418 = arith.addf %412, %417 : vector<8x1024xf32>
    %419 = vector.extract_strided_slice %415 {offsets = [0, 0], sizes = [8, 256], strides = [1, 1]} : vector<8x1024xf32> to vector<8x256xf32>
    %420 = arith.negf %419 : vector<8x256xf32>
    %421 = math.exp %420 : vector<8x256xf32>
    %cst_94 = arith.constant 1.000000e+00 : f32
    %422 = vector.broadcast %cst_94 : f32 to vector<8x256xf32>
    %423 = arith.addf %422, %421 : vector<8x256xf32>
    %424 = arith.divf %422, %423 : vector<8x256xf32>
    %425 = vector.extract_strided_slice %415 {offsets = [0, 256], sizes = [8, 256], strides = [1, 1]} : vector<8x1024xf32> to vector<8x256xf32>
    %426 = arith.negf %425 : vector<8x256xf32>
    %427 = math.exp %426 : vector<8x256xf32>
    %cst_95 = arith.constant 1.000000e+00 : f32
    %428 = vector.broadcast %cst_95 : f32 to vector<8x256xf32>
    %429 = arith.addf %428, %427 : vector<8x256xf32>
    %430 = arith.divf %428, %429 : vector<8x256xf32>
    %431 = vector.extract_strided_slice %415 {offsets = [0, 512], sizes = [8, 256], strides = [1, 1]} : vector<8x1024xf32> to vector<8x256xf32>
    %432 = math.tanh %431 : vector<8x256xf32>
    %433 = vector.extract_strided_slice %415 {offsets = [0, 768], sizes = [8, 256], strides = [1, 1]} : vector<8x1024xf32> to vector<8x256xf32>
    %434 = arith.negf %433 : vector<8x256xf32>
    %435 = math.exp %434 : vector<8x256xf32>
    %cst_96 = arith.constant 1.000000e+00 : f32
    %436 = vector.broadcast %cst_96 : f32 to vector<8x256xf32>
    %437 = arith.addf %436, %435 : vector<8x256xf32>
    %438 = arith.divf %436, %437 : vector<8x256xf32>
    %439 = arith.mulf %430, %376 : vector<8x256xf32>
    %440 = arith.mulf %424, %432 : vector<8x256xf32>
    %441 = arith.addf %439, %440 : vector<8x256xf32>
    %442 = math.tanh %441 : vector<8x256xf32>
    %443 = arith.mulf %438, %442 : vector<8x256xf32>
    %444 = vector.extract_strided_slice %418 {offsets = [0, 0], sizes = [8, 256], strides = [1, 1]} : vector<8x1024xf32> to vector<8x256xf32>
    %445 = arith.negf %444 : vector<8x256xf32>
    %446 = math.exp %445 : vector<8x256xf32>
    %cst_97 = arith.constant 1.000000e+00 : f32
    %447 = vector.broadcast %cst_97 : f32 to vector<8x256xf32>
    %448 = arith.addf %447, %446 : vector<8x256xf32>
    %449 = arith.divf %447, %448 : vector<8x256xf32>
    %450 = vector.extract_strided_slice %418 {offsets = [0, 256], sizes = [8, 256], strides = [1, 1]} : vector<8x1024xf32> to vector<8x256xf32>
    %451 = arith.negf %450 : vector<8x256xf32>
    %452 = math.exp %451 : vector<8x256xf32>
    %cst_98 = arith.constant 1.000000e+00 : f32
    %453 = vector.broadcast %cst_98 : f32 to vector<8x256xf32>
    %454 = arith.addf %453, %452 : vector<8x256xf32>
    %455 = arith.divf %453, %454 : vector<8x256xf32>
    %456 = vector.extract_strided_slice %418 {offsets = [0, 512], sizes = [8, 256], strides = [1, 1]} : vector<8x1024xf32> to vector<8x256xf32>
    %457 = math.tanh %456 : vector<8x256xf32>
    %458 = vector.extract_strided_slice %418 {offsets = [0, 768], sizes = [8, 256], strides = [1, 1]} : vector<8x1024xf32> to vector<8x256xf32>
    %459 = arith.negf %458 : vector<8x256xf32>
    %460 = math.exp %459 : vector<8x256xf32>
    %cst_99 = arith.constant 1.000000e+00 : f32
    %461 = vector.broadcast %cst_99 : f32 to vector<8x256xf32>
    %462 = arith.addf %461, %460 : vector<8x256xf32>
    %463 = arith.divf %461, %462 : vector<8x256xf32>
    %464 = arith.mulf %455, %401 : vector<8x256xf32>
    %465 = arith.mulf %449, %457 : vector<8x256xf32>
    %466 = arith.addf %464, %465 : vector<8x256xf32>
    %467 = math.tanh %466 : vector<8x256xf32>
    %468 = arith.mulf %463, %467 : vector<8x256xf32>
    %c7_i32_100 = arith.constant 7 : i32
    %c8_i32_101 = arith.constant 8 : i32
    %469 = arith.muli %c7_i32_100, %c8_i32_101 : i32
    %470 = tpu.assume_multiple %469, 8 : i32
    %c7_i32_102 = arith.constant 7 : i32
    %471 = arith.subi %c7_i32_102, %c7_i32_100 : i32
    %c8_i32_103 = arith.constant 8 : i32
    %472 = arith.muli %471, %c8_i32_103 : i32
    %473 = tpu.assume_multiple %472, 8 : i32
    %474 = arith.index_cast %470 : i32 to index
    %c0_104 = arith.constant 0 : index
    %475 = vector.load %arg12[%474, %c0_104] : memref<64x2048xf32, #tpu.memory_space<vmem>>, vector<8x1024xf32>
    %476 = arith.index_cast %473 : i32 to index
    %c1024_105 = arith.constant 1024 : index
    %477 = vector.load %arg12[%476, %c1024_105] : memref<64x2048xf32, #tpu.memory_space<vmem>>, vector<8x1024xf32>
    %478 = arith.truncf %443 : vector<8x256xf32> to vector<8x256xbf16>
    %cst_106 = arith.constant dense<0.000000e+00> : vector<8x1024xf32>
    %479 = tpu.matmul %478, %10, %cst_106 {dimension_numbers = #tpu.dot_dimension_numbers<[1], [0], [0], [1], [0, 0, 1, 1], [], []>} : vector<8x256xbf16>, vector<256x1024xbf16>, vector<8x1024xf32> -> vector<8x1024xf32>
    %480 = arith.addf %475, %479 : vector<8x1024xf32>
    %481 = arith.truncf %468 : vector<8x256xf32> to vector<8x256xbf16>
    %cst_107 = arith.constant dense<0.000000e+00> : vector<8x1024xf32>
    %482 = tpu.matmul %481, %12, %cst_107 {dimension_numbers = #tpu.dot_dimension_numbers<[1], [0], [0], [1], [0, 0, 1, 1], [], []>} : vector<8x256xbf16>, vector<256x1024xbf16>, vector<8x1024xf32> -> vector<8x1024xf32>
    %483 = arith.addf %477, %482 : vector<8x1024xf32>
    %484 = vector.extract_strided_slice %480 {offsets = [0, 0], sizes = [8, 256], strides = [1, 1]} : vector<8x1024xf32> to vector<8x256xf32>
    %485 = arith.negf %484 : vector<8x256xf32>
    %486 = math.exp %485 : vector<8x256xf32>
    %cst_108 = arith.constant 1.000000e+00 : f32
    %487 = vector.broadcast %cst_108 : f32 to vector<8x256xf32>
    %488 = arith.addf %487, %486 : vector<8x256xf32>
    %489 = arith.divf %487, %488 : vector<8x256xf32>
    %490 = vector.extract_strided_slice %480 {offsets = [0, 256], sizes = [8, 256], strides = [1, 1]} : vector<8x1024xf32> to vector<8x256xf32>
    %491 = arith.negf %490 : vector<8x256xf32>
    %492 = math.exp %491 : vector<8x256xf32>
    %cst_109 = arith.constant 1.000000e+00 : f32
    %493 = vector.broadcast %cst_109 : f32 to vector<8x256xf32>
    %494 = arith.addf %493, %492 : vector<8x256xf32>
    %495 = arith.divf %493, %494 : vector<8x256xf32>
    %496 = vector.extract_strided_slice %480 {offsets = [0, 512], sizes = [8, 256], strides = [1, 1]} : vector<8x1024xf32> to vector<8x256xf32>
    %497 = math.tanh %496 : vector<8x256xf32>
    %498 = vector.extract_strided_slice %480 {offsets = [0, 768], sizes = [8, 256], strides = [1, 1]} : vector<8x1024xf32> to vector<8x256xf32>
    %499 = arith.negf %498 : vector<8x256xf32>
    %500 = math.exp %499 : vector<8x256xf32>
    %cst_110 = arith.constant 1.000000e+00 : f32
    %501 = vector.broadcast %cst_110 : f32 to vector<8x256xf32>
    %502 = arith.addf %501, %500 : vector<8x256xf32>
    %503 = arith.divf %501, %502 : vector<8x256xf32>
    %504 = arith.mulf %495, %441 : vector<8x256xf32>
    %505 = arith.mulf %489, %497 : vector<8x256xf32>
    %506 = arith.addf %504, %505 : vector<8x256xf32>
    %507 = math.tanh %506 : vector<8x256xf32>
    %508 = arith.mulf %503, %507 : vector<8x256xf32>
    %509 = vector.extract_strided_slice %483 {offsets = [0, 0], sizes = [8, 256], strides = [1, 1]} : vector<8x1024xf32> to vector<8x256xf32>
    %510 = arith.negf %509 : vector<8x256xf32>
    %511 = math.exp %510 : vector<8x256xf32>
    %cst_111 = arith.constant 1.000000e+00 : f32
    %512 = vector.broadcast %cst_111 : f32 to vector<8x256xf32>
    %513 = arith.addf %512, %511 : vector<8x256xf32>
    %514 = arith.divf %512, %513 : vector<8x256xf32>
    %515 = vector.extract_strided_slice %483 {offsets = [0, 256], sizes = [8, 256], strides = [1, 1]} : vector<8x1024xf32> to vector<8x256xf32>
    %516 = arith.negf %515 : vector<8x256xf32>
    %517 = math.exp %516 : vector<8x256xf32>
    %cst_112 = arith.constant 1.000000e+00 : f32
    %518 = vector.broadcast %cst_112 : f32 to vector<8x256xf32>
    %519 = arith.addf %518, %517 : vector<8x256xf32>
    %520 = arith.divf %518, %519 : vector<8x256xf32>
    %521 = vector.extract_strided_slice %483 {offsets = [0, 512], sizes = [8, 256], strides = [1, 1]} : vector<8x1024xf32> to vector<8x256xf32>
    %522 = math.tanh %521 : vector<8x256xf32>
    %523 = vector.extract_strided_slice %483 {offsets = [0, 768], sizes = [8, 256], strides = [1, 1]} : vector<8x1024xf32> to vector<8x256xf32>
    %524 = arith.negf %523 : vector<8x256xf32>
    %525 = math.exp %524 : vector<8x256xf32>
    %cst_113 = arith.constant 1.000000e+00 : f32
    %526 = vector.broadcast %cst_113 : f32 to vector<8x256xf32>
    %527 = arith.addf %526, %525 : vector<8x256xf32>
    %528 = arith.divf %526, %527 : vector<8x256xf32>
    %529 = arith.mulf %520, %466 : vector<8x256xf32>
    %530 = arith.mulf %514, %522 : vector<8x256xf32>
    %531 = arith.addf %529, %530 : vector<8x256xf32>
    %532 = math.tanh %531 : vector<8x256xf32>
    %533 = arith.mulf %528, %532 : vector<8x256xf32>
    %c8_i32_114 = arith.constant 8 : i32
    %534 = tpu.concatenate %508, %533 in 1 : vector<8x256xf32>, vector<8x256xf32> -> vector<8x512xf32>
    %535 = arith.truncf %534 : vector<8x512xf32> to vector<8x512xbf16>
    %c0_115 = arith.constant 0 : index
    %c0_116 = arith.constant 0 : index
    %536 = vector.load %arg5[%c0_115, %c0_116] : memref<512x256xf32, #tpu.memory_space<vmem>>, vector<512x256xf32>
    %537 = arith.truncf %536 : vector<512x256xf32> to vector<512x256xbf16>
    %cst_117 = arith.constant dense<0.000000e+00> : vector<8x256xf32>
    %538 = tpu.matmul %535, %537, %cst_117 {dimension_numbers = #tpu.dot_dimension_numbers<[1], [0], [0], [1], [0, 0, 1, 1], [], []>} : vector<8x512xbf16>, vector<512x256xbf16>, vector<8x256xf32> -> vector<8x256xf32>
    %c0_118 = arith.constant 0 : index
    %c0_119 = arith.constant 0 : index
    %539 = vector.load %arg6[%c0_118, %c0_119] : memref<1x256xf32, #tpu.memory_space<vmem>>, vector<1x256xf32>
    %540 = vector.broadcast %539 : vector<1x256xf32> to vector<8x256xf32>
    %541 = arith.addf %538, %540 : vector<8x256xf32>
    %cst_120 = arith.constant 0.000000e+00 : f32
    %542 = vector.broadcast %cst_120 : f32 to vector<8x256xf32>
    %543 = arith.cmpf ogt, %541, %542 : vector<8x256xf32>
    %cst_121 = arith.constant 0.000000e+00 : f32
    %544 = vector.broadcast %cst_121 : f32 to vector<8x256xf32>
    %545 = arith.minimumf %541, %544 : vector<8x256xf32>
    %546 = math.exp %545 : vector<8x256xf32>
    %cst_122 = arith.constant 1.000000e+00 : f32
    %547 = vector.broadcast %cst_122 : f32 to vector<8x256xf32>
    %548 = arith.subf %546, %547 : vector<8x256xf32>
    %549 = arith.select %543, %541, %548 : vector<8x256xi1>, vector<8x256xf32>
    %550 = arith.truncf %549 : vector<8x256xf32> to vector<8x256xbf16>
    %c0_123 = arith.constant 0 : index
    %c0_124 = arith.constant 0 : index
    %551 = vector.load %arg7[%c0_123, %c0_124] : memref<256x128xf32, #tpu.memory_space<vmem>>, vector<256x128xf32>
    %552 = arith.truncf %551 : vector<256x128xf32> to vector<256x128xbf16>
    %cst_125 = arith.constant dense<0.000000e+00> : vector<8x128xf32>
    %553 = tpu.matmul %550, %552, %cst_125 {dimension_numbers = #tpu.dot_dimension_numbers<[1], [0], [0], [1], [0, 0, 1, 1], [], []>} : vector<8x256xbf16>, vector<256x128xbf16>, vector<8x128xf32> -> vector<8x128xf32>
    %c0_126 = arith.constant 0 : index
    %c0_127 = arith.constant 0 : index
    %554 = vector.load %arg8[%c0_126, %c0_127] : memref<1x128xf32, #tpu.memory_space<vmem>>, vector<1x128xf32>
    %555 = vector.broadcast %554 : vector<1x128xf32> to vector<8x128xf32>
    %556 = arith.addf %553, %555 : vector<8x128xf32>
    %cst_128 = arith.constant 0.000000e+00 : f32
    %557 = vector.broadcast %cst_128 : f32 to vector<8x128xf32>
    %558 = arith.cmpf ogt, %556, %557 : vector<8x128xf32>
    %cst_129 = arith.constant 0.000000e+00 : f32
    %559 = vector.broadcast %cst_129 : f32 to vector<8x128xf32>
    %560 = arith.minimumf %556, %559 : vector<8x128xf32>
    %561 = math.exp %560 : vector<8x128xf32>
    %cst_130 = arith.constant 1.000000e+00 : f32
    %562 = vector.broadcast %cst_130 : f32 to vector<8x128xf32>
    %563 = arith.subf %561, %562 : vector<8x128xf32>
    %564 = arith.select %558, %556, %563 : vector<8x128xi1>, vector<8x128xf32>
    %565 = arith.truncf %564 : vector<8x128xf32> to vector<8x128xbf16>
    %c0_131 = arith.constant 0 : index
    %c0_132 = arith.constant 0 : index
    %566 = vector.load %arg9[%c0_131, %c0_132] : memref<128x128xf32, #tpu.memory_space<vmem>>, vector<128x128xf32>
    %567 = arith.truncf %566 : vector<128x128xf32> to vector<128x128xbf16>
    %cst_133 = arith.constant dense<0.000000e+00> : vector<8x128xf32>
    %568 = tpu.matmul %565, %567, %cst_133 {dimension_numbers = #tpu.dot_dimension_numbers<[1], [0], [0], [1], [0, 0, 1, 1], [], []>} : vector<8x128xbf16>, vector<128x128xbf16>, vector<8x128xf32> -> vector<8x128xf32>
    %c0_134 = arith.constant 0 : index
    %c0_135 = arith.constant 0 : index
    %569 = vector.load %arg10[%c0_134, %c0_135] : memref<1x128xf32, #tpu.memory_space<vmem>>, vector<1x128xf32>
    %570 = vector.broadcast %569 : vector<1x128xf32> to vector<8x128xf32>
    %571 = arith.addf %568, %570 : vector<8x128xf32>
    %c0_136 = arith.constant 0 : index
    %c0_137 = arith.constant 0 : index
    %572 = vector.load %arg11[%c0_136, %c0_137] : memref<8x128xf32, #tpu.memory_space<vmem>>, vector<8x128xf32>
    tpu.vector_store %arg11[%c0_136, %c0_137], %571 {strides = array<i32>} : memref<8x128xf32, #tpu.memory_space<vmem>>, vector<8x128xf32>,
    return
  }
}

</mosaic_0001>

<llo_original>
// kernel: tpu_custom_call.1
$region0: #{tpu_custom_call.1}
  #allocation0 [shape = 'u32[]', space=smem, size = 0x4, offset = 0x4, fixed_abs, tag = 'smem constant byte address 0x4 - core index']
  #allocation1 [shape = 'u32[144,128]{1,0:T(1,128)}', space=vmem, size = 0x12000, scoped, tag = 'internal scratch']
  #allocation2 [shape = 'f32[64,2048]{1,0:T(8,128)}', space=vmem, size = 0x80000, scoped, tag = 'scratch operand']
  %s0 = inlined_call_operand.vmem [shape: f32[64,8], index: 0, kind: input, shape index: {}]
  %s1 = inlined_call_operand.hbm [shape: f32[8,2048], index: 1, kind: input, shape index: {}]
  %s2 = inlined_call_operand.vmem [shape: f32[1,2048], index: 2, kind: input, shape index: {}]
  %s3 = inlined_call_operand.hbm [shape: f32[256,1024], index: 3, kind: input, shape index: {}]
  %s4 = inlined_call_operand.hbm [shape: f32[256,1024], index: 4, kind: input, shape index: {}]
  %s5 = inlined_call_operand.hbm [shape: f32[512,256], index: 5, kind: input, shape index: {}]
  %s6 = inlined_call_operand.vmem [shape: f32[1,256], index: 6, kind: input, shape index: {}]
  %s7 = inlined_call_operand.hbm [shape: f32[256,128], index: 7, kind: input, shape index: {}]
  %s8 = inlined_call_operand.vmem [shape: f32[1,128], index: 8, kind: input, shape index: {}]
  %s9 = inlined_call_operand.hbm [shape: f32[128,128], index: 9, kind: input, shape index: {}]
  %s10 = inlined_call_operand.vmem [shape: f32[1,128], index: 10, kind: input, shape index: {}]
  %s11 = inlined_call_operand.hbm [shape: f32[8,128], index: 11, kind: output, shape index: {}]
  %s12 = sld [smem:[#allocation0]]
  $region78: #{tpu_custom_call.1} parent=0
    _
  %s14 = ssub.s32 1, %s12
  %s15 = scalar_select 0, %s14, %s12
  $region1: #{tpu_custom_call.1} parent=0
    #allocation3 [shape = 'u8[65536]{0}', space=vmem, size = 0x10000, scoped, tag = 'input window, operand 1, single buffered']
    #allocation4 [shape = 's32[1]{0}', space=sflag, size = 0x4, scoped, tag = 'scoped memory for tpu_custom_call.1']
    #allocation5 [shape = 's32[1]{0}', space=sflag, size = 0x4, scoped, tag = 'scoped memory for tpu_custom_call.1']
    #allocation6 [shape = 'u8[1048576]{0}', space=vmem, size = 0x100000, scoped, tag = 'input window, operand 3, single buffered']
    #allocation7 [shape = 's32[1]{0}', space=sflag, size = 0x4, scoped, tag = 'scoped memory for tpu_custom_call.1']
    #allocation8 [shape = 'u8[1048576]{0}', space=vmem, size = 0x100000, scoped, tag = 'input window, operand 4, single buffered']
    #allocation9 [shape = 'u8[524288]{0}', space=vmem, size = 0x80000, scoped, tag = 'input window, operand 5, single buffered']
    #allocation10 [shape = 's32[1]{0}', space=sflag, size = 0x4, scoped, tag = 'scoped memory for tpu_custom_call.1']
    #allocation11 [shape = 'u8[131072]{0}', space=vmem, size = 0x20000, scoped, tag = 'input window, operand 7, single buffered']
    #allocation12 [shape = 'u8[65536]{0}', space=vmem, size = 0x10000, scoped, tag = 'input window, operand 9, single buffered']
    #allocation13 [shape = 's32[1]{0}', space=sflag, size = 0x4, scoped, tag = 'scoped memory for tpu_custom_call.1']
    #allocation14 [shape = 'u8[4096]{0}', space=vmem, size = 0x1000, scoped, tag = 'output window, operand 0, single buffered']
    %16 = vsyncpa [#allocation4], 0
    %17 = vsyncpa [#allocation7], 0
    %18 = vsyncpa [#allocation10], 0
    %19 = vsyncpa [#allocation13], 0
    %20 = vsyncpa [#allocation5], 0
    // Predicated region
    $region2: #{tpu_custom_call.1} parent=1 // pred_check
      _
    $region3: #{tpu_custom_call.1} parent=1 // pred_check_branch
      %22 = sbr.rel (0) target = $region5
    $region4: #{tpu_custom_call.1} parent=1 // pred_region
      _
    $region5: #{tpu_custom_call.1} parent=1 // pred_fallthru
      _
    // Predicated region
    $region6: #{tpu_custom_call.1} parent=1 // pred_check
      _
    $region7: #{tpu_custom_call.1} parent=1 // pred_check_branch
      %24 = sbr.rel (0) target = $region9
    $region8: #{tpu_custom_call.1} parent=1 // pred_region
      %s26 = ssub.s32 2048, 2048
      %27 = vsyncadd [#allocation4], %s26
      %s29 = sshll.u32 [#allocation3], 4
      %s30 = int_to_ptr.vmem [resolvable:$true] %s29
      %32 = dma.hbm_to_vmem [thread:$0]  %s1, 2048, %s30, [#allocation4]
    $region9: #{tpu_custom_call.1} parent=1 // pred_fallthru
      _
    // Predicated region
    $region10: #{tpu_custom_call.1} parent=1 // pred_check
      _
    $region11: #{tpu_custom_call.1} parent=1 // pred_check_branch
      %34 = sbr.rel (0) target = $region13
    $region12: #{tpu_custom_call.1} parent=1 // pred_region
      _
    $region13: #{tpu_custom_call.1} parent=1 // pred_fallthru
      _
    // Predicated region
    $region14: #{tpu_custom_call.1} parent=1 // pred_check
      _
    $region15: #{tpu_custom_call.1} parent=1 // pred_check_branch
      %36 = sbr.rel (0) target = $region17
    $region16: #{tpu_custom_call.1} parent=1 // pred_region
      %s38 = ssub.s32 32768, 32768
      %39 = vsyncadd [#allocation7], %s38
      %s40 = sshll.u32 [#allocation6], 4
      %s41 = int_to_ptr.vmem [resolvable:$true] %s40
      %46 = dma.hbm_to_vmem [thread:$0]  %s3, 32768, %s41, [#allocation7], 1024, 1024, 64
    $region17: #{tpu_custom_call.1} parent=1 // pred_fallthru
      _
    // Predicated region
    $region18: #{tpu_custom_call.1} parent=1 // pred_check
      _
    $region19: #{tpu_custom_call.1} parent=1 // pred_check_branch
      %48 = sbr.rel (0) target = $region21
    $region20: #{tpu_custom_call.1} parent=1 // pred_region
      %s50 = ssub.s32 32768, 32768
      %51 = vsyncadd [#allocation7], %s50
      %s52 = sshll.u32 [#allocation8], 4
      %s53 = int_to_ptr.vmem [resolvable:$true] %s52
      %58 = dma.hbm_to_vmem [thread:$0]  %s4, 32768, %s53, [#allocation7], 1024, 1024, 64
    $region21: #{tpu_custom_call.1} parent=1 // pred_fallthru
      _
    // Predicated region
    $region22: #{tpu_custom_call.1} parent=1 // pred_check
      _
    $region23: #{tpu_custom_call.1} parent=1 // pred_check_branch
      %60 = sbr.rel (0) target = $region25
    $region24: #{tpu_custom_call.1} parent=1 // pred_region
      %s62 = ssub.s32 16384, 16384
      %63 = vsyncadd [#allocation10], %s62
      %s64 = sshll.u32 [#allocation9], 4
      %s65 = int_to_ptr.vmem [resolvable:$true] %s64
      %70 = dma.hbm_to_vmem [thread:$0]  %s5, 16384, %s65, [#allocation10], 256, 256, 16
    $region25: #{tpu_custom_call.1} parent=1 // pred_fallthru
      _
    // Predicated region
    $region26: #{tpu_custom_call.1} parent=1 // pred_check
      _
    $region27: #{tpu_custom_call.1} parent=1 // pred_check_branch
      %72 = sbr.rel (0) target = $region29
    $region28: #{tpu_custom_call.1} parent=1 // pred_region
      _
    $region29: #{tpu_custom_call.1} parent=1 // pred_fallthru
      _
    // Predicated region
    $region30: #{tpu_custom_call.1} parent=1 // pred_check
      _
    $region31: #{tpu_custom_call.1} parent=1 // pred_check_branch
      %74 = sbr.rel (0) target = $region33
    $region32: #{tpu_custom_call.1} parent=1 // pred_region
      %s76 = ssub.s32 4096, 4096
      %77 = vsyncadd [#allocation10], %s76
      %s78 = sshll.u32 [#allocation11], 4
      %s79 = int_to_ptr.vmem [resolvable:$true] %s78
      %84 = dma.hbm_to_vmem [thread:$0]  %s7, 4096, %s79, [#allocation10], 128, 128, 8
    $region33: #{tpu_custom_call.1} parent=1 // pred_fallthru
      _
    // Predicated region
    $region34: #{tpu_custom_call.1} parent=1 // pred_check
      _
    $region35: #{tpu_custom_call.1} parent=1 // pred_check_branch
      %86 = sbr.rel (0) target = $region37
    $region36: #{tpu_custom_call.1} parent=1 // pred_region
      _
    $region37: #{tpu_custom_call.1} parent=1 // pred_fallthru
      _
    // Predicated region
    $region38: #{tpu_custom_call.1} parent=1 // pred_check
      _
    $region39: #{tpu_custom_call.1} parent=1 // pred_check_branch
      %88 = sbr.rel (0) target = $region41
    $region40: #{tpu_custom_call.1} parent=1 // pred_region
      %s90 = ssub.s32 2048, 2048
      %91 = vsyncadd [#allocation13], %s90
      %s92 = sshll.u32 [#allocation12], 4
      %s93 = int_to_ptr.vmem [resolvable:$true] %s92
      %98 = dma.hbm_to_vmem [thread:$0]  %s9, 2048, %s93, [#allocation13], 128, 128, 8
    $region41: #{tpu_custom_call.1} parent=1 // pred_fallthru
      _
    // Predicated region
    $region42: #{tpu_custom_call.1} parent=1 // pred_check
      _
    $region43: #{tpu_custom_call.1} parent=1 // pred_check_branch
      %100 = sbr.rel (0) target = $region45
    $region44: #{tpu_custom_call.1} parent=1 // pred_region
      _
    $region45: #{tpu_custom_call.1} parent=1 // pred_fallthru
      _
    // Predicated region
    $region46: #{tpu_custom_call.1} parent=1 // pred_check
      _
    $region47: #{tpu_custom_call.1} parent=1 // pred_check_branch
      %102 = sbr.rel (0) target = $region49
    $region48: #{tpu_custom_call.1} parent=1 // pred_region
      %103 = dma.done [#allocation4], 2048
    $region49: #{tpu_custom_call.1} parent=1 // pred_fallthru
      _
    // Predicated region
    $region50: #{tpu_custom_call.1} parent=1 // pred_check
      _
    $region51: #{tpu_custom_call.1} parent=1 // pred_check_branch
      %105 = sbr.rel (0) target = $region53
    $region52: #{tpu_custom_call.1} parent=1 // pred_region
      %106 = dma.done [#allocation7], 32768
    $region53: #{tpu_custom_call.1} parent=1 // pred_fallthru
      _
    // Predicated region
    $region54: #{tpu_custom_call.1} parent=1 // pred_check
      _
    $region55: #{tpu_custom_call.1} parent=1 // pred_check_branch
      %108 = sbr.rel (0) target = $region57
    $region56: #{tpu_custom_call.1} parent=1 // pred_region
      %109 = dma.done [#allocation7], 32768
    $region57: #{tpu_custom_call.1} parent=1 // pred_fallthru
      _
    // Predicated region
    $region58: #{tpu_custom_call.1} parent=1 // pred_check
      _
    $region59: #{tpu_custom_call.1} parent=1 // pred_check_branch
      %111 = sbr.rel (0) target = $region61
    $region60: #{tpu_custom_call.1} parent=1 // pred_region
      %112 = dma.done [#allocation10], 16384
    $region61: #{tpu_custom_call.1} parent=1 // pred_fallthru
      _
    // Predicated region
    $region62: #{tpu_custom_call.1} parent=1 // pred_check
      _
    $region63: #{tpu_custom_call.1} parent=1 // pred_check_branch
      %114 = sbr.rel (0) target = $region65
    $region64: #{tpu_custom_call.1} parent=1 // pred_region
      %115 = dma.done [#allocation10], 4096
    $region65: #{tpu_custom_call.1} parent=1 // pred_fallthru
      _
    // Predicated region
    $region66: #{tpu_custom_call.1} parent=1 // pred_check
      _
    $region67: #{tpu_custom_call.1} parent=1 // pred_check_branch
      %117 = sbr.rel (0) target = $region69
    $region68: #{tpu_custom_call.1} parent=1 // pred_region
      %118 = dma.done [#allocation13], 2048
    $region69: #{tpu_custom_call.1} parent=1 // pred_fallthru
      _
    %v120 = vld [vmem:[%s0] sm:$0xff]
    %v121 = vld [vmem:[%s0 + $0x8] sm:$0xff]
    %v122 = vld [vmem:[%s0 + $0x10] sm:$0xff]
    %v123 = vld [vmem:[%s0 + $0x18] sm:$0xff]
    %v124 = vld [vmem:[%s0 + $0x20] sm:$0xff]
    %v125 = vld [vmem:[%s0 + $0x28] sm:$0xff]
    %v126 = vld [vmem:[%s0 + $0x30] sm:$0xff]
    %v127 = vld [vmem:[%s0 + $0x38] sm:$0xff]
    %v128 = vpack.c.bf16 %v121, %v120
    %v129 = vpack.c.bf16 %v123, %v122
    %v130 = vpack.c.bf16 %v125, %v124
    %v131 = vpack.c.bf16 %v127, %v126
    %v132 = vld [vmem:[#allocation3] sm:$0xff]
    %v133 = vld [vmem:[#allocation3 + $0x8] sm:$0xff]
    %v134 = vld [vmem:[#allocation3 + $0x10] sm:$0xff]
    %v135 = vld [vmem:[#allocation3 + $0x18] sm:$0xff]
    %v136 = vld [vmem:[#allocation3 + $0x20] sm:$0xff]
    %v137 = vld [vmem:[#allocation3 + $0x28] sm:$0xff]
    %v138 = vld [vmem:[#allocation3 + $0x30] sm:$0xff]
    %v139 = vld [vmem:[#allocation3 + $0x38] sm:$0xff]
    %v140 = vld [vmem:[#allocation3 + $0x40] sm:$0xff]
    %v141 = vld [vmem:[#allocation3 + $0x48] sm:$0xff]
    %v142 = vld [vmem:[#allocation3 + $0x50] sm:$0xff]
    %v143 = vld [vmem:[#allocation3 + $0x58] sm:$0xff]
    %v144 = vld [vmem:[#allocation3 + $0x60] sm:$0xff]
    %v145 = vld [vmem:[#allocation3 + $0x68] sm:$0xff]
    %v146 = vld [vmem:[#allocation3 + $0x70] sm:$0xff]
    %v147 = vld [vmem:[#allocation3 + $0x78] sm:$0xff]
    %v148 = vpack.c.bf16 %v132, %v132
    %v149 = vpack.c.bf16 %v133, %v133
    %v150 = vpack.c.bf16 %v134, %v134
    %v151 = vpack.c.bf16 %v135, %v135
    %v152 = vpack.c.bf16 %v136, %v136
    %v153 = vpack.c.bf16 %v137, %v137
    %v154 = vpack.c.bf16 %v138, %v138
    %v155 = vpack.c.bf16 %v139, %v139
    %v156 = vpack.c.bf16 %v140, %v140
    %v157 = vpack.c.bf16 %v141, %v141
    %v158 = vpack.c.bf16 %v142, %v142
    %v159 = vpack.c.bf16 %v143, %v143
    %v160 = vpack.c.bf16 %v144, %v144
    %v161 = vpack.c.bf16 %v145, %v145
    %v162 = vpack.c.bf16 %v146, %v146
    %v163 = vpack.c.bf16 %v147, %v147
    %v164 = vld [vmem:[%s2] sm:$0xff]
    %v165 = vld [vmem:[%s2 + $0x8] sm:$0xff]
    %v168 = vlaneseq
    %v169 = vshrl.u32 %v168, 7
    %v170 = vsub.s32 0, %v169
    %v171 = vrot.slane %v164, %v170
    %v172 = vlaneseq
    %v173 = vshrl.u32 %v172, 7
    %v174 = vsub.s32 1, %v173
    %v175 = vrot.slane %v164, %v174
    %v176 = vlaneseq
    %v177 = vshrl.u32 %v176, 7
    %v178 = vsub.s32 2, %v177
    %v179 = vrot.slane %v164, %v178
    %v180 = vlaneseq
    %v181 = vshrl.u32 %v180, 7
    %v182 = vsub.s32 3, %v181
    %v183 = vrot.slane %v164, %v182
    %v184 = vlaneseq
    %v185 = vshrl.u32 %v184, 7
    %v186 = vsub.s32 4, %v185
    %v187 = vrot.slane %v164, %v186
    %v188 = vlaneseq
    %v189 = vshrl.u32 %v188, 7
    %v190 = vsub.s32 5, %v189
    %v191 = vrot.slane %v164, %v190
    %v192 = vlaneseq
    %v193 = vshrl.u32 %v192, 7
    %v194 = vsub.s32 6, %v193
    %v195 = vrot.slane %v164, %v194
    %v196 = vlaneseq
    %v197 = vshrl.u32 %v196, 7
    %v198 = vsub.s32 7, %v197
    %v199 = vrot.slane %v164, %v198
    %v200 = vlaneseq
    %v201 = vshrl.u32 %v200, 7
    %v202 = vsub.s32 0, %v201
    %v203 = vrot.slane %v165, %v202
    %v204 = vlaneseq
    %v205 = vshrl.u32 %v204, 7
    %v206 = vsub.s32 1, %v205
    %v207 = vrot.slane %v165, %v206
    %v208 = vlaneseq
    %v209 = vshrl.u32 %v208, 7
    %v210 = vsub.s32 2, %v209
    %v211 = vrot.slane %v165, %v210
    %v212 = vlaneseq
    %v213 = vshrl.u32 %v212, 7
    %v214 = vsub.s32 3, %v213
    %v215 = vrot.slane %v165, %v214
    %v216 = vlaneseq
    %v217 = vshrl.u32 %v216, 7
    %v218 = vsub.s32 4, %v217
    %v219 = vrot.slane %v165, %v218
    %v220 = vlaneseq
    %v221 = vshrl.u32 %v220, 7
    %v222 = vsub.s32 5, %v221
    %v223 = vrot.slane %v165, %v222
    %v224 = vlaneseq
    %v225 = vshrl.u32 %v224, 7
    %v226 = vsub.s32 6, %v225
    %v227 = vrot.slane %v165, %v226
    %v228 = vlaneseq
    %v229 = vshrl.u32 %v228, 7
    %v230 = vsub.s32 7, %v229
    %v231 = vrot.slane %v165, %v230
    %vm248 = vcmask 64512
    %v250 = vsel %vm248, %v128, 0
    %v253 = vsel %vm248, %v129, 0
    %v256 = vsel %vm248, %v130, 0
    %v259 = vsel %vm248, %v131, 0
    %vm261 = vcmask 1043456
    %v263 = vsel %vm261, %v148, 0
    %v266 = vsel %vm261, %v149, 0
    %v269 = vsel %vm261, %v150, 0
    %v272 = vsel %vm261, %v151, 0
    %v275 = vsel %vm261, %v152, 0
    %v278 = vsel %vm261, %v153, 0
    %v281 = vsel %vm261, %v154, 0
    %v284 = vsel %vm261, %v155, 0
    %v287 = vsel %vm261, %v156, 0
    %v290 = vsel %vm261, %v157, 0
    %v293 = vsel %vm261, %v158, 0
    %v296 = vsel %vm261, %v159, 0
    %v299 = vsel %vm261, %v160, 0
    %v302 = vsel %vm261, %v161, 0
    %v305 = vsel %vm261, %v162, 0
    %v308 = vsel %vm261, %v163, 0
    %310 = vmatprep.subr.bf16.mxu0 0
    %311 = vmatpush1.bf16.msra.mxu0 0
    %312 = vmatprep.subr.bf16.mxu0 0
    %313 = vmatpush1.bf16.msra.mxu0 0
    %314 = vmatprep.subr.bf16.mxu0 0
    %315 = vmatpush1.bf16.msra.mxu0 0
    %316 = vmatprep.subr.bf16.mxu0 0
    %317 = vmatpush1.bf16.msra.mxu0 0
    %318 = vmatprep.subr.bf16.mxu0 0
    %319 = vmatpush1.bf16.msra.mxu0 0
    %320 = vmatprep.subr.bf16.mxu0 0
    %321 = vmatpush1.bf16.msra.mxu0 0
    %322 = vmatprep.subr.bf16.mxu0 0
    %323 = vmatpush1.bf16.msra.mxu0 0
    %324 = vmatprep.subr.bf16.mxu0 %v266
    %325 = vmatpush1.bf16.msra.mxu0 %v263
    %326 = vmatprep.subr.bf16.mxu0 0
    %327 = vmatpush2.bf16.msra.mxu0 0
    %328 = vmatprep.subr.bf16.mxu0 0
    %329 = vmatpush2.bf16.msra.mxu0 0
    %330 = vmatprep.subr.bf16.mxu0 0
    %331 = vmatpush2.bf16.msra.mxu0 0
    %332 = vmatprep.subr.bf16.mxu0 0
    %333 = vmatpush2.bf16.msra.mxu0 0
    %334 = vmatprep.subr.bf16.mxu0 0
    %335 = vmatpush2.bf16.msra.mxu0 0
    %336 = vmatprep.subr.bf16.mxu0 0
    %337 = vmatpush2.bf16.msra.mxu0 0
    %338 = vmatprep.subr.bf16.mxu0 0
    %339 = vmatpush2.bf16.msra.mxu0 0
    %340 = vmatprep.subr.bf16.mxu0 0
    %341 = vmatpush2.bf16.msra.mxu0 0
    %342 = vmatprep.mubr.bf16.mxu0 0
    %343 = vmatmul.mubr.bf16.gmra.mxu0 %v250
    %v344 = vpop.f32.mrf.mxu0
    %v345 = vadd.f32 %v171, %v344
    %v346 = vpop.f32.mrf.mxu0
    %v347 = vadd.f32 %v175, %v346
    %v348 = vpop.f32.mrf.mxu0
    %v349 = vadd.f32 %v171, %v348
    %v350 = vpop.f32.mrf.mxu0
    %v351 = vadd.f32 %v175, %v350
    %352 = vmatprep.mubr.bf16.mxu0 0
    %353 = vmatmul.mubr.bf16.gmra.mxu0 %v253
    %v354 = vpop.f32.mrf.mxu0
    %v355 = vadd.f32 %v171, %v354
    %v356 = vpop.f32.mrf.mxu0
    %v357 = vadd.f32 %v175, %v356
    %v358 = vpop.f32.mrf.mxu0
    %v359 = vadd.f32 %v171, %v358
    %v360 = vpop.f32.mrf.mxu0
    %v361 = vadd.f32 %v175, %v360
    %362 = vmatprep.mubr.bf16.mxu0 0
    %363 = vmatmul.mubr.bf16.gmra.mxu0 %v256
    %v364 = vpop.f32.mrf.mxu0
    %v365 = vadd.f32 %v171, %v364
    %v366 = vpop.f32.mrf.mxu0
    %v367 = vadd.f32 %v175, %v366
    %v368 = vpop.f32.mrf.mxu0
    %v369 = vadd.f32 %v171, %v368
    %v370 = vpop.f32.mrf.mxu0
    %v371 = vadd.f32 %v175, %v370
    %372 = vmatprep.mubr.bf16.mxu0 0
    %373 = vmatmul.mubr.bf16.gmra.mxu0 %v259
    %v374 = vpop.f32.mrf.mxu0
    %v375 = vadd.f32 %v171, %v374
    %v376 = vpop.f32.mrf.mxu0
    %v377 = vadd.f32 %v175, %v376
    %v378 = vpop.f32.mrf.mxu0
    %v379 = vadd.f32 %v171, %v378
    %v380 = vpop.f32.mrf.mxu0
    %v381 = vadd.f32 %v175, %v380
    %382 = vdwg.mxu0
    %383 = vmatprep.subr.bf16.mxu0 0
    %384 = vmatpush1.bf16.msra.mxu0 0
    %385 = vmatprep.subr.bf16.mxu0 0
    %386 = vmatpush1.bf16.msra.mxu0 0
    %387 = vmatprep.subr.bf16.mxu0 0
    %388 = vmatpush1.bf16.msra.mxu0 0
    %389 = vmatprep.subr.bf16.mxu0 0
    %390 = vmatpush1.bf16.msra.mxu0 0
    %391 = vmatprep.subr.bf16.mxu0 0
    %392 = vmatpush1.bf16.msra.mxu0 0
    %393 = vmatprep.subr.bf16.mxu0 0
    %394 = vmatpush1.bf16.msra.mxu0 0
    %395 = vmatprep.subr.bf16.mxu0 0
    %396 = vmatpush1.bf16.msra.mxu0 0
    %397 = vmatprep.subr.bf16.mxu0 %v272
    %398 = vmatpush1.bf16.msra.mxu0 %v269
    %399 = vmatprep.subr.bf16.mxu0 0
    %400 = vmatpush2.bf16.msra.mxu0 0
    %401 = vmatprep.subr.bf16.mxu0 0
    %402 = vmatpush2.bf16.msra.mxu0 0
    %403 = vmatprep.subr.bf16.mxu0 0
    %404 = vmatpush2.bf16.msra.mxu0 0
    %405 = vmatprep.subr.bf16.mxu0 0
    %406 = vmatpush2.bf16.msra.mxu0 0
    %407 = vmatprep.subr.bf16.mxu0 0
    %408 = vmatpush2.bf16.msra.mxu0 0
    %409 = vmatprep.subr.bf16.mxu0 0
    %410 = vmatpush2.bf16.msra.mxu0 0
    %411 = vmatprep.subr.bf16.mxu0 0
    %412 = vmatpush2.bf16.msra.mxu0 0
    %413 = vmatprep.subr.bf16.mxu0 0
    %414 = vmatpush2.bf16.msra.mxu0 0
    %415 = vmatprep.mubr.bf16.mxu0 0
    %416 = vmatmul.mubr.bf16.gmra.mxu0 %v250
    %v417 = vpop.f32.mrf.mxu0
    %v418 = vadd.f32 %v179, %v417
    %v419 = vpop.f32.mrf.mxu0
    %v420 = vadd.f32 %v183, %v419
    %v421 = vpop.f32.mrf.mxu0
    %v422 = vadd.f32 %v179, %v421
    %v423 = vpop.f32.mrf.mxu0
    %v424 = vadd.f32 %v183, %v423
    %425 = vmatprep.mubr.bf16.mxu0 0
    %426 = vmatmul.mubr.bf16.gmra.mxu0 %v253
    %v427 = vpop.f32.mrf.mxu0
    %v428 = vadd.f32 %v179, %v427
    %v429 = vpop.f32.mrf.mxu0
    %v430 = vadd.f32 %v183, %v429
    %v431 = vpop.f32.mrf.mxu0
    %v432 = vadd.f32 %v179, %v431
    %v433 = vpop.f32.mrf.mxu0
    %v434 = vadd.f32 %v183, %v433
    %435 = vmatprep.mubr.bf16.mxu0 0
    %436 = vmatmul.mubr.bf16.gmra.mxu0 %v256
    %v437 = vpop.f32.mrf.mxu0
    %v438 = vadd.f32 %v179, %v437
    %v439 = vpop.f32.mrf.mxu0
    %v440 = vadd.f32 %v183, %v439
    %v441 = vpop.f32.mrf.mxu0
    %v442 = vadd.f32 %v179, %v441
    %v443 = vpop.f32.mrf.mxu0
    %v444 = vadd.f32 %v183, %v443
    %445 = vmatprep.mubr.bf16.mxu0 0
    %446 = vmatmul.mubr.bf16.gmra.mxu0 %v259
    %v447 = vpop.f32.mrf.mxu0
    %v448 = vadd.f32 %v179, %v447
    %v449 = vpop.f32.mrf.mxu0
    %v450 = vadd.f32 %v183, %v449
    %v451 = vpop.f32.mrf.mxu0
    %v452 = vadd.f32 %v179, %v451
    %v453 = vpop.f32.mrf.mxu0
    %v454 = vadd.f32 %v183, %v453
    %455 = vdwg.mxu0
    %456 = vmatprep.subr.bf16.mxu0 0
    %457 = vmatpush1.bf16.msra.mxu0 0
    %458 = vmatprep.subr.bf16.mxu0 0
    %459 = vmatpush1.bf16.msra.mxu0 0
    %460 = vmatprep.subr.bf16.mxu0 0
    %461 = vmatpush1.bf16.msra.mxu0 0
    %462 = vmatprep.subr.bf16.mxu0 0
    %463 = vmatpush1.bf16.msra.mxu0 0
    %464 = vmatprep.subr.bf16.mxu0 0
    %465 = vmatpush1.bf16.msra.mxu0 0
    %466 = vmatprep.subr.bf16.mxu0 0
    %467 = vmatpush1.bf16.msra.mxu0 0
    %468 = vmatprep.subr.bf16.mxu0 0
    %469 = vmatpush1.bf16.msra.mxu0 0
    %470 = vmatprep.subr.bf16.mxu0 %v278
    %471 = vmatpush1.bf16.msra.mxu0 %v275
    %472 = vmatprep.subr.bf16.mxu0 0
    %473 = vmatpush2.bf16.msra.mxu0 0
    %474 = vmatprep.subr.bf16.mxu0 0
    %475 = vmatpush2.bf16.msra.mxu0 0
    %476 = vmatprep.subr.bf16.mxu0 0
    %477 = vmatpush2.bf16.msra.mxu0 0
    %478 = vmatprep.subr.bf16.mxu0 0
    %479 = vmatpush2.bf16.msra.mxu0 0
    %480 = vmatprep.subr.bf16.mxu0 0
    %481 = vmatpush2.bf16.msra.mxu0 0
    %482 = vmatprep.subr.bf16.mxu0 0
    %483 = vmatpush2.bf16.msra.mxu0 0
    %484 = vmatprep.subr.bf16.mxu0 0
    %485 = vmatpush2.bf16.msra.mxu0 0
    %486 = vmatprep.subr.bf16.mxu0 0
    %487 = vmatpush2.bf16.msra.mxu0 0
    %488 = vmatprep.mubr.bf16.mxu0 0
    %489 = vmatmul.mubr.bf16.gmra.mxu0 %v250
    %v490 = vpop.f32.mrf.mxu0
    %v491 = vadd.f32 %v187, %v490
    %v492 = vpop.f32.mrf.mxu0
    %v493 = vadd.f32 %v191, %v492
    %v494 = vpop.f32.mrf.mxu0
    %v495 = vadd.f32 %v187, %v494
    %v496 = vpop.f32.mrf.mxu0
    %v497 = vadd.f32 %v191, %v496
    %498 = vmatprep.mubr.bf16.mxu0 0
    %499 = vmatmul.mubr.bf16.gmra.mxu0 %v253
    %v500 = vpop.f32.mrf.mxu0
    %v501 = vadd.f32 %v187, %v500
    %v502 = vpop.f32.mrf.mxu0
    %v503 = vadd.f32 %v191, %v502
    %v504 = vpop.f32.mrf.mxu0
    %v505 = vadd.f32 %v187, %v504
    %v506 = vpop.f32.mrf.mxu0
    %v507 = vadd.f32 %v191, %v506
    %508 = vmatprep.mubr.bf16.mxu0 0
    %509 = vmatmul.mubr.bf16.gmra.mxu0 %v256
    %v510 = vpop.f32.mrf.mxu0
    %v511 = vadd.f32 %v187, %v510
    %v512 = vpop.f32.mrf.mxu0
    %v513 = vadd.f32 %v191, %v512
    %v514 = vpop.f32.mrf.mxu0
    %v515 = vadd.f32 %v187, %v514
    %v516 = vpop.f32.mrf.mxu0
    %v517 = vadd.f32 %v191, %v516
    %518 = vmatprep.mubr.bf16.mxu0 0
    %519 = vmatmul.mubr.bf16.gmra.mxu0 %v259
    %v520 = vpop.f32.mrf.mxu0
    %v521 = vadd.f32 %v187, %v520
    %v522 = vpop.f32.mrf.mxu0
    %v523 = vadd.f32 %v191, %v522
    %v524 = vpop.f32.mrf.mxu0
    %v525 = vadd.f32 %v187, %v524
    %v526 = vpop.f32.mrf.mxu0
    %v527 = vadd.f32 %v191, %v526
    %528 = vdwg.mxu0
    %529 = vmatprep.subr.bf16.mxu0 0
    %530 = vmatpush1.bf16.msra.mxu0 0
    %531 = vmatprep.subr.bf16.mxu0 0
    %532 = vmatpush1.bf16.msra.mxu0 0
    %533 = vmatprep.subr.bf16.mxu0 0
    %534 = vmatpush1.bf16.msra.mxu0 0
    %535 = vmatprep.subr.bf16.mxu0 0
    %536 = vmatpush1.bf16.msra.mxu0 0
    %537 = vmatprep.subr.bf16.mxu0 0
    %538 = vmatpush1.bf16.msra.mxu0 0
    %539 = vmatprep.subr.bf16.mxu0 0
    %540 = vmatpush1.bf16.msra.mxu0 0
    %541 = vmatprep.subr.bf16.mxu0 0
    %542 = vmatpush1.bf16.msra.mxu0 0
    %543 = vmatprep.subr.bf16.mxu0 %v284
    %544 = vmatpush1.bf16.msra.mxu0 %v281
    %545 = vmatprep.subr.bf16.mxu0 0
    %546 = vmatpush2.bf16.msra.mxu0 0
    %547 = vmatprep.subr.bf16.mxu0 0
    %548 = vmatpush2.bf16.msra.mxu0 0
    %549 = vmatprep.subr.bf16.mxu0 0
    %550 = vmatpush2.bf16.msra.mxu0 0
    %551 = vmatprep.subr.bf16.mxu0 0
    %552 = vmatpush2.bf16.msra.mxu0 0
    %553 = vmatprep.subr.bf16.mxu0 0
    %554 = vmatpush2.bf16.msra.mxu0 0
    %555 = vmatprep.subr.bf16.mxu0 0
    %556 = vmatpush2.bf16.msra.mxu0 0
    %557 = vmatprep.subr.bf16.mxu0 0
    %558 = vmatpush2.bf16.msra.mxu0 0
    %559 = vmatprep.subr.bf16.mxu0 0
    %560 = vmatpush2.bf16.msra.mxu0 0
    %561 = vmatprep.mubr.bf16.mxu0 0
    %562 = vmatmul.mubr.bf16.gmra.mxu0 %v250
    %v563 = vpop.f32.mrf.mxu0
    %v564 = vadd.f32 %v195, %v563
    %v565 = vpop.f32.mrf.mxu0
    %v566 = vadd.f32 %v199, %v565
    %v567 = vpop.f32.mrf.mxu0
    %v568 = vadd.f32 %v195, %v567
    %v569 = vpop.f32.mrf.mxu0
    %v570 = vadd.f32 %v199, %v569
    %571 = vmatprep.mubr.bf16.mxu0 0
    %572 = vmatmul.mubr.bf16.gmra.mxu0 %v253
    %v573 = vpop.f32.mrf.mxu0
    %v574 = vadd.f32 %v195, %v573
    %v575 = vpop.f32.mrf.mxu0
    %v576 = vadd.f32 %v199, %v575
    %v577 = vpop.f32.mrf.mxu0
    %v578 = vadd.f32 %v195, %v577
    %v579 = vpop.f32.mrf.mxu0
    %v580 = vadd.f32 %v199, %v579
    %581 = vmatprep.mubr.bf16.mxu0 0
    %582 = vmatmul.mubr.bf16.gmra.mxu0 %v256
    %v583 = vpop.f32.mrf.mxu0
    %v584 = vadd.f32 %v195, %v583
    %v585 = vpop.f32.mrf.mxu0
    %v586 = vadd.f32 %v199, %v585
    %v587 = vpop.f32.mrf.mxu0
    %v588 = vadd.f32 %v195, %v587
    %v589 = vpop.f32.mrf.mxu0
    %v590 = vadd.f32 %v199, %v589
    %591 = vmatprep.mubr.bf16.mxu0 0
    %592 = vmatmul.mubr.bf16.gmra.mxu0 %v259
    %v593 = vpop.f32.mrf.mxu0
    %v594 = vadd.f32 %v195, %v593
    %v595 = vpop.f32.mrf.mxu0
    %v596 = vadd.f32 %v199, %v595
    %v597 = vpop.f32.mrf.mxu0
    %v598 = vadd.f32 %v195, %v597
    %v599 = vpop.f32.mrf.mxu0
    %v600 = vadd.f32 %v199, %v599
    %601 = vdwg.mxu0
    %602 = vmatprep.subr.bf16.mxu0 0
    %603 = vmatpush1.bf16.msra.mxu0 0
    %604 = vmatprep.subr.bf16.mxu0 0
    %605 = vmatpush1.bf16.msra.mxu0 0
    %606 = vmatprep.subr.bf16.mxu0 0
    %607 = vmatpush1.bf16.msra.mxu0 0
    %608 = vmatprep.subr.bf16.mxu0 0
    %609 = vmatpush1.bf16.msra.mxu0 0
    %610 = vmatprep.subr.bf16.mxu0 0
    %611 = vmatpush1.bf16.msra.mxu0 0
    %612 = vmatprep.subr.bf16.mxu0 0
    %613 = vmatpush1.bf16.msra.mxu0 0
    %614 = vmatprep.subr.bf16.mxu0 0
    %615 = vmatpush1.bf16.msra.mxu0 0
    %616 = vmatprep.subr.bf16.mxu0 %v290
    %617 = vmatpush1.bf16.msra.mxu0 %v287
    %618 = vmatprep.subr.bf16.mxu0 0
    %619 = vmatpush2.bf16.msra.mxu0 0
    %620 = vmatprep.subr.bf16.mxu0 0
    %621 = vmatpush2.bf16.msra.mxu0 0
    %622 = vmatprep.subr.bf16.mxu0 0
    %623 = vmatpush2.bf16.msra.mxu0 0
    %624 = vmatprep.subr.bf16.mxu0 0
    %625 = vmatpush2.bf16.msra.mxu0 0
    %626 = vmatprep.subr.bf16.mxu0 0
    %627 = vmatpush2.bf16.msra.mxu0 0
    %628 = vmatprep.subr.bf16.mxu0 0
    %629 = vmatpush2.bf16.msra.mxu0 0
    %630 = vmatprep.subr.bf16.mxu0 0
    %631 = vmatpush2.bf16.msra.mxu0 0
    %632 = vmatprep.subr.bf16.mxu0 0
    %633 = vmatpush2.bf16.msra.mxu0 0
    %634 = vmatprep.mubr.bf16.mxu0 0
    %635 = vmatmul.mubr.bf16.gmra.mxu0 %v250
    %v636 = vpop.f32.mrf.mxu0
    %v637 = vadd.f32 %v203, %v636
    %v638 = vpop.f32.mrf.mxu0
    %v639 = vadd.f32 %v207, %v638
    %v640 = vpop.f32.mrf.mxu0
    %v641 = vadd.f32 %v203, %v640
    %v642 = vpop.f32.mrf.mxu0
    %v643 = vadd.f32 %v207, %v642
    %644 = vmatprep.mubr.bf16.mxu0 0
    %645 = vmatmul.mubr.bf16.gmra.mxu0 %v253
    %v646 = vpop.f32.mrf.mxu0
    %v647 = vadd.f32 %v203, %v646
    %v648 = vpop.f32.mrf.mxu0
    %v649 = vadd.f32 %v207, %v648
    %v650 = vpop.f32.mrf.mxu0
    %v651 = vadd.f32 %v203, %v650
    %v652 = vpop.f32.mrf.mxu0
    %v653 = vadd.f32 %v207, %v652
    %654 = vmatprep.mubr.bf16.mxu0 0
    %655 = vmatmul.mubr.bf16.gmra.mxu0 %v256
    %v656 = vpop.f32.mrf.mxu0
    %v657 = vadd.f32 %v203, %v656
    %v658 = vpop.f32.mrf.mxu0
    %v659 = vadd.f32 %v207, %v658
    %v660 = vpop.f32.mrf.mxu0
    %v661 = vadd.f32 %v203, %v660
    %v662 = vpop.f32.mrf.mxu0
    %v663 = vadd.f32 %v207, %v662
    %664 = vmatprep.mubr.bf16.mxu0 0
    %665 = vmatmul.mubr.bf16.gmra.mxu0 %v259
    %v666 = vpop.f32.mrf.mxu0
    %v667 = vadd.f32 %v203, %v666
    %v668 = vpop.f32.mrf.mxu0
    %v669 = vadd.f32 %v207, %v668
    %v670 = vpop.f32.mrf.mxu0
    %v671 = vadd.f32 %v203, %v670
    %v672 = vpop.f32.mrf.mxu0
    %v673 = vadd.f32 %v207, %v672
    %674 = vdwg.mxu0
    %675 = vmatprep.subr.bf16.mxu0 0
    %676 = vmatpush1.bf16.msra.mxu0 0
    %677 = vmatprep.subr.bf16.mxu0 0
    %678 = vmatpush1.bf16.msra.mxu0 0
    %679 = vmatprep.subr.bf16.mxu0 0
    %680 = vmatpush1.bf16.msra.mxu0 0
    %681 = vmatprep.subr.bf16.mxu0 0
    %682 = vmatpush1.bf16.msra.mxu0 0
    %683 = vmatprep.subr.bf16.mxu0 0
    %684 = vmatpush1.bf16.msra.mxu0 0
    %685 = vmatprep.subr.bf16.mxu0 0
    %686 = vmatpush1.bf16.msra.mxu0 0
    %687 = vmatprep.subr.bf16.mxu0 0
    %688 = vmatpush1.bf16.msra.mxu0 0
    %689 = vmatprep.subr.bf16.mxu0 %v296
    %690 = vmatpush1.bf16.msra.mxu0 %v293
    %691 = vmatprep.subr.bf16.mxu0 0
    %692 = vmatpush2.bf16.msra.mxu0 0
    %693 = vmatprep.subr.bf16.mxu0 0
    %694 = vmatpush2.bf16.msra.mxu0 0
    %695 = vmatprep.subr.bf16.mxu0 0
    %696 = vmatpush2.bf16.msra.mxu0 0
    %697 = vmatprep.subr.bf16.mxu0 0
    %698 = vmatpush2.bf16.msra.mxu0 0
    %699 = vmatprep.subr.bf16.mxu0 0
    %700 = vmatpush2.bf16.msra.mxu0 0
    %701 = vmatprep.subr.bf16.mxu0 0
    %702 = vmatpush2.bf16.msra.mxu0 0
    %703 = vmatprep.subr.bf16.mxu0 0
    %704 = vmatpush2.bf16.msra.mxu0 0
    %705 = vmatprep.subr.bf16.mxu0 0
    %706 = vmatpush2.bf16.msra.mxu0 0
    %707 = vmatprep.mubr.bf16.mxu0 0
    %708 = vmatmul.mubr.bf16.gmra.mxu0 %v250
    %v709 = vpop.f32.mrf.mxu0
    %v710 = vadd.f32 %v211, %v709
    %v711 = vpop.f32.mrf.mxu0
    %v712 = vadd.f32 %v215, %v711
    %v713 = vpop.f32.mrf.mxu0
    %v714 = vadd.f32 %v211, %v713
    %v715 = vpop.f32.mrf.mxu0
    %v716 = vadd.f32 %v215, %v715
    %717 = vmatprep.mubr.bf16.mxu0 0
    %718 = vmatmul.mubr.bf16.gmra.mxu0 %v253
    %v719 = vpop.f32.mrf.mxu0
    %v720 = vadd.f32 %v211, %v719
    %v721 = vpop.f32.mrf.mxu0
    %v722 = vadd.f32 %v215, %v721
    %v723 = vpop.f32.mrf.mxu0
    %v724 = vadd.f32 %v211, %v723
    %v725 = vpop.f32.mrf.mxu0
    %v726 = vadd.f32 %v215, %v725
    %727 = vmatprep.mubr.bf16.mxu0 0
    %728 = vmatmul.mubr.bf16.gmra.mxu0 %v256
    %v729 = vpop.f32.mrf.mxu0
    %v730 = vadd.f32 %v211, %v729
    %v731 = vpop.f32.mrf.mxu0
    %v732 = vadd.f32 %v215, %v731
    %v733 = vpop.f32.mrf.mxu0
    %v734 = vadd.f32 %v211, %v733
    %v735 = vpop.f32.mrf.mxu0
    %v736 = vadd.f32 %v215, %v735
    %737 = vmatprep.mubr.bf16.mxu0 0
    %738 = vmatmul.mubr.bf16.gmra.mxu0 %v259
    %v739 = vpop.f32.mrf.mxu0
    %v740 = vadd.f32 %v211, %v739
    %v741 = vpop.f32.mrf.mxu0
    %v742 = vadd.f32 %v215, %v741
    %v743 = vpop.f32.mrf.mxu0
    %v744 = vadd.f32 %v211, %v743
    %v745 = vpop.f32.mrf.mxu0
    %v746 = vadd.f32 %v215, %v745
    %747 = vdwg.mxu0
    %748 = vmatprep.subr.bf16.mxu0 0
    %749 = vmatpush1.bf16.msra.mxu0 0
    %750 = vmatprep.subr.bf16.mxu0 0
    %751 = vmatpush1.bf16.msra.mxu0 0
    %752 = vmatprep.subr.bf16.mxu0 0
    %753 = vmatpush1.bf16.msra.mxu0 0
    %754 = vmatprep.subr.bf16.mxu0 0
    %755 = vmatpush1.bf16.msra.mxu0 0
    %756 = vmatprep.subr.bf16.mxu0 0
    %757 = vmatpush1.bf16.msra.mxu0 0
    %758 = vmatprep.subr.bf16.mxu0 0
    %759 = vmatpush1.bf16.msra.mxu0 0
    %760 = vmatprep.subr.bf16.mxu0 0
    %761 = vmatpush1.bf16.msra.mxu0 0
    %762 = vmatprep.subr.bf16.mxu0 %v302
    %763 = vmatpush1.bf16.msra.mxu0 %v299
    %764 = vmatprep.subr.bf16.mxu0 0
    %765 = vmatpush2.bf16.msra.mxu0 0
    %766 = vmatprep.subr.bf16.mxu0 0
    %767 = vmatpush2.bf16.msra.mxu0 0
    %768 = vmatprep.subr.bf16.mxu0 0
    %769 = vmatpush2.bf16.msra.mxu0 0
    %770 = vmatprep.subr.bf16.mxu0 0
    %771 = vmatpush2.bf16.msra.mxu0 0
    %772 = vmatprep.subr.bf16.mxu0 0
    %773 = vmatpush2.bf16.msra.mxu0 0
    %774 = vmatprep.subr.bf16.mxu0 0
    %775 = vmatpush2.bf16.msra.mxu0 0
    %776 = vmatprep.subr.bf16.mxu0 0
    %777 = vmatpush2.bf16.msra.mxu0 0
    %778 = vmatprep.subr.bf16.mxu0 0
    %779 = vmatpush2.bf16.msra.mxu0 0
    %780 = vmatprep.mubr.bf16.mxu0 0
    %781 = vmatmul.mubr.bf16.gmra.mxu0 %v250
    %v782 = vpop.f32.mrf.mxu0
    %v783 = vadd.f32 %v219, %v782
    %v784 = vpop.f32.mrf.mxu0
    %v785 = vadd.f32 %v223, %v784
    %v786 = vpop.f32.mrf.mxu0
    %v787 = vadd.f32 %v219, %v786
    %v788 = vpop.f32.mrf.mxu0
    %v789 = vadd.f32 %v223, %v788
    %790 = vmatprep.mubr.bf16.mxu0 0
    %791 = vmatmul.mubr.bf16.gmra.mxu0 %v253
    %v792 = vpop.f32.mrf.mxu0
    %v793 = vadd.f32 %v219, %v792
    %v794 = vpop.f32.mrf.mxu0
    %v795 = vadd.f32 %v223, %v794
    %v796 = vpop.f32.mrf.mxu0
    %v797 = vadd.f32 %v219, %v796
    %v798 = vpop.f32.mrf.mxu0
    %v799 = vadd.f32 %v223, %v798
    %800 = vmatprep.mubr.bf16.mxu0 0
    %801 = vmatmul.mubr.bf16.gmra.mxu0 %v256
    %v802 = vpop.f32.mrf.mxu0
    %v803 = vadd.f32 %v219, %v802
    %v804 = vpop.f32.mrf.mxu0
    %v805 = vadd.f32 %v223, %v804
    %v806 = vpop.f32.mrf.mxu0
    %v807 = vadd.f32 %v219, %v806
    %v808 = vpop.f32.mrf.mxu0
    %v809 = vadd.f32 %v223, %v808
    %810 = vmatprep.mubr.bf16.mxu0 0
    %811 = vmatmul.mubr.bf16.gmra.mxu0 %v259
    %v812 = vpop.f32.mrf.mxu0
    %v813 = vadd.f32 %v219, %v812
    %v814 = vpop.f32.mrf.mxu0
    %v815 = vadd.f32 %v223, %v814
    %v816 = vpop.f32.mrf.mxu0
    %v817 = vadd.f32 %v219, %v816
    %v818 = vpop.f32.mrf.mxu0
    %v819 = vadd.f32 %v223, %v818
    %820 = vdwg.mxu0
    %821 = vmatprep.subr.bf16.mxu0 0
    %822 = vmatpush1.bf16.msra.mxu0 0
    %823 = vmatprep.subr.bf16.mxu0 0
    %824 = vmatpush1.bf16.msra.mxu0 0
    %825 = vmatprep.subr.bf16.mxu0 0
    %826 = vmatpush1.bf16.msra.mxu0 0
    %827 = vmatprep.subr.bf16.mxu0 0
    %828 = vmatpush1.bf16.msra.mxu0 0
    %829 = vmatprep.subr.bf16.mxu0 0
    %830 = vmatpush1.bf16.msra.mxu0 0
    %831 = vmatprep.subr.bf16.mxu0 0
    %832 = vmatpush1.bf16.msra.mxu0 0
    %833 = vmatprep.subr.bf16.mxu0 0
    %834 = vmatpush1.bf16.msra.mxu0 0
    %835 = vmatprep.subr.bf16.mxu0 %v308
    %836 = vmatpush1.bf16.msra.mxu0 %v305
    %837 = vmatprep.subr.bf16.mxu0 0
    %838 = vmatpush2.bf16.msra.mxu0 0
    %839 = vmatprep.subr.bf16.mxu0 0
    %840 = vmatpush2.bf16.msra.mxu0 0
    %841 = vmatprep.subr.bf16.mxu0 0
    %842 = vmatpush2.bf16.msra.mxu0 0
    %843 = vmatprep.subr.bf16.mxu0 0
    %844 = vmatpush2.bf16.msra.mxu0 0
    %845 = vmatprep.subr.bf16.mxu0 0
    %846 = vmatpush2.bf16.msra.mxu0 0
    %847 = vmatprep.subr.bf16.mxu0 0
    %848 = vmatpush2.bf16.msra.mxu0 0
    %849 = vmatprep.subr.bf16.mxu0 0
    %850 = vmatpush2.bf16.msra.mxu0 0
    %851 = vmatprep.subr.bf16.mxu0 0
    %852 = vmatpush2.bf16.msra.mxu0 0
    %853 = vmatprep.mubr.bf16.mxu0 0
    %854 = vmatmul.mubr.bf16.gmra.mxu0 %v250
    %v855 = vpop.f32.mrf.mxu0
    %v856 = vadd.f32 %v227, %v855
    %v857 = vpop.f32.mrf.mxu0
    %v858 = vadd.f32 %v231, %v857
    %v859 = vpop.f32.mrf.mxu0
    %v860 = vadd.f32 %v227, %v859
    %v861 = vpop.f32.mrf.mxu0
    %v862 = vadd.f32 %v231, %v861
    %863 = vmatprep.mubr.bf16.mxu0 0
    %864 = vmatmul.mubr.bf16.gmra.mxu0 %v253
    %v865 = vpop.f32.mrf.mxu0
    %v866 = vadd.f32 %v227, %v865
    %v867 = vpop.f32.mrf.mxu0
    %v868 = vadd.f32 %v231, %v867
    %v869 = vpop.f32.mrf.mxu0
    %v870 = vadd.f32 %v227, %v869
    %v871 = vpop.f32.mrf.mxu0
    %v872 = vadd.f32 %v231, %v871
    %873 = vmatprep.mubr.bf16.mxu0 0
    %874 = vmatmul.mubr.bf16.gmra.mxu0 %v256
    %v875 = vpop.f32.mrf.mxu0
    %v876 = vadd.f32 %v227, %v875
    %v877 = vpop.f32.mrf.mxu0
    %v878 = vadd.f32 %v231, %v877
    %v879 = vpop.f32.mrf.mxu0
    %v880 = vadd.f32 %v227, %v879
    %v881 = vpop.f32.mrf.mxu0
    %v882 = vadd.f32 %v231, %v881
    %883 = vmatprep.mubr.bf16.mxu0 0
    %884 = vmatmul.mubr.bf16.gmra.mxu0 %v259
    %v885 = vpop.f32.mrf.mxu0
    %v886 = vadd.f32 %v227, %v885
    %v887 = vpop.f32.mrf.mxu0
    %v888 = vadd.f32 %v231, %v887
    %v889 = vpop.f32.mrf.mxu0
    %v890 = vadd.f32 %v227, %v889
    %v891 = vpop.f32.mrf.mxu0
    %v892 = vadd.f32 %v231, %v891
    %893 = vdwg.mxu0
    %894 = vst [vmem:[#allocation2] sm:$0xff] %v345
    %895 = vst [vmem:[#allocation2 + $0x8] sm:$0xff] %v347
    %896 = vst [vmem:[#allocation2 + $0x10] sm:$0xff] %v418
    %897 = vst [vmem:[#allocation2 + $0x18] sm:$0xff] %v420
    %898 = vst [vmem:[#allocation2 + $0x20] sm:$0xff] %v491
    %899 = vst [vmem:[#allocation2 + $0x28] sm:$0xff] %v493
    %900 = vst [vmem:[#allocation2 + $0x30] sm:$0xff] %v564
    %901 = vst [vmem:[#allocation2 + $0x38] sm:$0xff] %v566
    %902 = vst [vmem:[#allocation2 + $0x40] sm:$0xff] %v637
    %903 = vst [vmem:[#allocation2 + $0x48] sm:$0xff] %v639
    %904 = vst [vmem:[#allocation2 + $0x50] sm:$0xff] %v710
    %905 = vst [vmem:[#allocation2 + $0x58] sm:$0xff] %v712
    %906 = vst [vmem:[#allocation2 + $0x60] sm:$0xff] %v783
    %907 = vst [vmem:[#allocation2 + $0x68] sm:$0xff] %v785
    %908 = vst [vmem:[#allocation2 + $0x70] sm:$0xff] %v856
    %909 = vst [vmem:[#allocation2 + $0x78] sm:$0xff] %v858
    %910 = vst [vmem:[#allocation2 + $0x80] sm:$0xff] %v349
    %911 = vst [vmem:[#allocation2 + $0x88] sm:$0xff] %v351
    %912 = vst [vmem:[#allocation2 + $0x90] sm:$0xff] %v422
    %913 = vst [vmem:[#allocation2 + $0x98] sm:$0xff] %v424
    %914 = vst [vmem:[#allocation2 + $0xa0] sm:$0xff] %v495
    %915 = vst [vmem:[#allocation2 + $0xa8] sm:$0xff] %v497
    %916 = vst [vmem:[#allocation2 + $0xb0] sm:$0xff] %v568
    %917 = vst [vmem:[#allocation2 + $0xb8] sm:$0xff] %v570
    %918 = vst [vmem:[#allocation2 + $0xc0] sm:$0xff] %v641
    %919 = vst [vmem:[#allocation2 + $0xc8] sm:$0xff] %v643
    %920 = vst [vmem:[#allocation2 + $0xd0] sm:$0xff] %v714
    %921 = vst [vmem:[#allocation2 + $0xd8] sm:$0xff] %v716
    %922 = vst [vmem:[#allocation2 + $0xe0] sm:$0xff] %v787
    %923 = vst [vmem:[#allocation2 + $0xe8] sm:$0xff] %v789
    %924 = vst [vmem:[#allocation2 + $0xf0] sm:$0xff] %v860
    %925 = vst [vmem:[#allocation2 + $0xf8] sm:$0xff] %v862
    %926 = vst [vmem:[#allocation2 + $0x100] sm:$0xff] %v355
    %927 = vst [vmem:[#allocation2 + $0x108] sm:$0xff] %v357
    %928 = vst [vmem:[#allocation2 + $0x110] sm:$0xff] %v428
    %929 = vst [vmem:[#allocation2 + $0x118] sm:$0xff] %v430
    %930 = vst [vmem:[#allocation2 + $0x120] sm:$0xff] %v501
    %931 = vst [vmem:[#allocation2 + $0x128] sm:$0xff] %v503
    %932 = vst [vmem:[#allocation2 + $0x130] sm:$0xff] %v574
    %933 = vst [vmem:[#allocation2 + $0x138] sm:$0xff] %v576
    %934 = vst [vmem:[#allocation2 + $0x140] sm:$0xff] %v647
    %935 = vst [vmem:[#allocation2 + $0x148] sm:$0xff] %v649
    %936 = vst [vmem:[#allocation2 + $0x150] sm:$0xff] %v720
    %937 = vst [vmem:[#allocation2 + $0x158] sm:$0xff] %v722
    %938 = vst [vmem:[#allocation2 + $0x160] sm:$0xff] %v793
    %939 = vst [vmem:[#allocation2 + $0x168] sm:$0xff] %v795
    %940 = vst [vmem:[#allocation2 + $0x170] sm:$0xff] %v866
    %941 = vst [vmem:[#allocation2 + $0x178] sm:$0xff] %v868
    %942 = vst [vmem:[#allocation2 + $0x180] sm:$0xff] %v359
    %943 = vst [vmem:[#allocation2 + $0x188] sm:$0xff] %v361
    %944 = vst [vmem:[#allocation2 + $0x190] sm:$0xff] %v432
    %945 = vst [vmem:[#allocation2 + $0x198] sm:$0xff] %v434
    %946 = vst [vmem:[#allocation2 + $0x1a0] sm:$0xff] %v505
    %947 = vst [vmem:[#allocation2 + $0x1a8] sm:$0xff] %v507
    %948 = vst [vmem:[#allocation2 + $0x1b0] sm:$0xff] %v578
    %949 = vst [vmem:[#allocation2 + $0x1b8] sm:$0xff] %v580
    %950 = vst [vmem:[#allocation2 + $0x1c0] sm:$0xff] %v651
    %951 = vst [vmem:[#allocation2 + $0x1c8] sm:$0xff] %v653
    %952 = vst [vmem:[#allocation2 + $0x1d0] sm:$0xff] %v724
    %953 = vst [vmem:[#allocation2 + $0x1d8] sm:$0xff] %v726
    %954 = vst [vmem:[#allocation2 + $0x1e0] sm:$0xff] %v797
    %955 = vst [vmem:[#allocation2 + $0x1e8] sm:$0xff] %v799
    %956 = vst [vmem:[#allocation2 + $0x1f0] sm:$0xff] %v870
    %957 = vst [vmem:[#allocation2 + $0x1f8] sm:$0xff] %v872
    %958 = vst [vmem:[#allocation2 + $0x200] sm:$0xff] %v365
    %959 = vst [vmem:[#allocation2 + $0x208] sm:$0xff] %v367
    %960 = vst [vmem:[#allocation2 + $0x210] sm:$0xff] %v438
    %961 = vst [vmem:[#allocation2 + $0x218] sm:$0xff] %v440
    %962 = vst [vmem:[#allocation2 + $0x220] sm:$0xff] %v511
    %963 = vst [vmem:[#allocation2 + $0x228] sm:$0xff] %v513
    %964 = vst [vmem:[#allocation2 + $0x230] sm:$0xff] %v584
    %965 = vst [vmem:[#allocation2 + $0x238] sm:$0xff] %v586
    %966 = vst [vmem:[#allocation2 + $0x240] sm:$0xff] %v657
    %967 = vst [vmem:[#allocation2 + $0x248] sm:$0xff] %v659
    %968 = vst [vmem:[#allocation2 + $0x250] sm:$0xff] %v730
    %969 = vst [vmem:[#allocation2 + $0x258] sm:$0xff] %v732
    %970 = vst [vmem:[#allocation2 + $0x260] sm:$0xff] %v803
    %971 = vst [vmem:[#allocation2 + $0x268] sm:$0xff] %v805
    %972 = vst [vmem:[#allocation2 + $0x270] sm:$0xff] %v876
    %973 = vst [vmem:[#allocation2 + $0x278] sm:$0xff] %v878
    %974 = vst [vmem:[#allocation2 + $0x280] sm:$0xff] %v369
    %975 = vst [vmem:[#allocation2 + $0x288] sm:$0xff] %v371
    %976 = vst [vmem:[#allocation2 + $0x290] sm:$0xff] %v442
    %977 = vst [vmem:[#allocation2 + $0x298] sm:$0xff] %v444
    %978 = vst [vmem:[#allocation2 + $0x2a0] sm:$0xff] %v515
    %979 = vst [vmem:[#allocation2 + $0x2a8] sm:$0xff] %v517
    %980 = vst [vmem:[#allocation2 + $0x2b0] sm:$0xff] %v588
    %981 = vst [vmem:[#allocation2 + $0x2b8] sm:$0xff] %v590
    %982 = vst [vmem:[#allocation2 + $0x2c0] sm:$0xff] %v661
    %983 = vst [vmem:[#allocation2 + $0x2c8] sm:$0xff] %v663
    %984 = vst [vmem:[#allocation2 + $0x2d0] sm:$0xff] %v734
    %985 = vst [vmem:[#allocation2 + $0x2d8] sm:$0xff] %v736
    %986 = vst [vmem:[#allocation2 + $0x2e0] sm:$0xff] %v807
    %987 = vst [vmem:[#allocation2 + $0x2e8] sm:$0xff] %v809
    %988 = vst [vmem:[#allocation2 + $0x2f0] sm:$0xff] %v880
    %989 = vst [vmem:[#allocation2 + $0x2f8] sm:$0xff] %v882
    %990 = vst [vmem:[#allocation2 + $0x300] sm:$0xff] %v375
    %991 = vst [vmem:[#allocation2 + $0x308] sm:$0xff] %v377
    %992 = vst [vmem:[#allocation2 + $0x310] sm:$0xff] %v448
    %993 = vst [vmem:[#allocation2 + $0x318] sm:$0xff] %v450
    %994 = vst [vmem:[#allocation2 + $0x320] sm:$0xff] %v521
    %995 = vst [vmem:[#allocation2 + $0x328] sm:$0xff] %v523
    %996 = vst [vmem:[#allocation2 + $0x330] sm:$0xff] %v594
    %997 = vst [vmem:[#allocation2 + $0x338] sm:$0xff] %v596
    %998 = vst [vmem:[#allocation2 + $0x340] sm:$0xff] %v667
    %999 = vst [vmem:[#allocation2 + $0x348] sm:$0xff] %v669
    %1000 = vst [vmem:[#allocation2 + $0x350] sm:$0xff] %v740
    %1001 = vst [vmem:[#allocation2 + $0x358] sm:$0xff] %v742
    %1002 = vst [vmem:[#allocation2 + $0x360] sm:$0xff] %v813
    %1003 = vst [vmem:[#allocation2 + $0x368] sm:$0xff] %v815
    %1004 = vst [vmem:[#allocation2 + $0x370] sm:$0xff] %v886
    %1005 = vst [vmem:[#allocation2 + $0x378] sm:$0xff] %v888
    %1006 = vst [vmem:[#allocation2 + $0x380] sm:$0xff] %v379
    %1007 = vst [vmem:[#allocation2 + $0x388] sm:$0xff] %v381
    %1008 = vst [vmem:[#allocation2 + $0x390] sm:$0xff] %v452
    %1009 = vst [vmem:[#allocation2 + $0x398] sm:$0xff] %v454
    %1010 = vst [vmem:[#allocation2 + $0x3a0] sm:$0xff] %v525
    %1011 = vst [vmem:[#allocation2 + $0x3a8] sm:$0xff] %v527
    %1012 = vst [vmem:[#allocation2 + $0x3b0] sm:$0xff] %v598
    %1013 = vst [vmem:[#allocation2 + $0x3b8] sm:$0xff] %v600
    %1014 = vst [vmem:[#allocation2 + $0x3c0] sm:$0xff] %v671
    %1015 = vst [vmem:[#allocation2 + $0x3c8] sm:$0xff] %v673
    %1016 = vst [vmem:[#allocation2 + $0x3d0] sm:$0xff] %v744
    %1017 = vst [vmem:[#allocation2 + $0x3d8] sm:$0xff] %v746
    %1018 = vst [vmem:[#allocation2 + $0x3e0] sm:$0xff] %v817
    %1019 = vst [vmem:[#allocation2 + $0x3e8] sm:$0xff] %v819
    %1020 = vst [vmem:[#allocation2 + $0x3f0] sm:$0xff] %v890
    %1021 = vst [vmem:[#allocation2 + $0x3f8] sm:$0xff] %v892
    %v1022 = vld [vmem:[#allocation6] sm:$0xff]
    %v1023 = vld [vmem:[#allocation6 + $0x8] sm:$0xff]
    %v1024 = vld [vmem:[#allocation6 + $0x10] sm:$0xff]
    %v1025 = vld [vmem:[#allocation6 + $0x18] sm:$0xff]
    %v1026 = vld [vmem:[#allocation6 + $0x20] sm:$0xff]
    %v1027 = vld [vmem:[#allocation6 + $0x28] sm:$0xff]
    %v1028 = vld [vmem:[#allocation6 + $0x30] sm:$0xff]
    %v1029 = vld [vmem:[#allocation6 + $0x38] sm:$0xff]
    %v1030 = vld [vmem:[#allocation6 + $0x40] sm:$0xff]
    %v1031 = vld [vmem:[#allocation6 + $0x48] sm:$0xff]
    %v1032 = vld [vmem:[#allocation6 + $0x50] sm:$0xff]
    %v1033 = vld [vmem:[#allocation6 + $0x58] sm:$0xff]
    %v1034 = vld [vmem:[#allocation6 + $0x60] sm:$0xff]
    %v1035 = vld [vmem:[#allocation6 + $0x68] sm:$0xff]
    %v1036 = vld [vmem:[#allocation6 + $0x70] sm:$0xff]
    %v1037 = vld [vmem:[#allocation6 + $0x78] sm:$0xff]
    %v1038 = vld [vmem:[#allocation6 + $0x80] sm:$0xff]
    %v1039 = vld [vmem:[#allocation6 + $0x88] sm:$0xff]
    %v1040 = vld [vmem:[#allocation6 + $0x90] sm:$0xff]
    %v1041 = vld [vmem:[#allocation6 + $0x98] sm:$0xff]
    %v1042 = vld [vmem:[#allocation6 + $0xa0] sm:$0xff]
    %v1043 = vld [vmem:[#allocation6 + $0xa8] sm:$0xff]
    %v1044 = vld [vmem:[#allocation6 + $0xb0] sm:$0xff]
    %v1045 = vld [vmem:[#allocation6 + $0xb8] sm:$0xff]
    %v1046 = vld [vmem:[#allocation6 + $0xc0] sm:$0xff]
    %v1047 = vld [vmem:[#allocation6 + $0xc8] sm:$0xff]
    %v1048 = vld [vmem:[#allocation6 + $0xd0] sm:$0xff]
    %v1049 = vld [vmem:[#allocation6 + $0xd8] sm:$0xff]
    %v1050 = vld [vmem:[#allocation6 + $0xe0] sm:$0xff]
    %v1051 = vld [vmem:[#allocation6 + $0xe8] sm:$0xff]
    %v1052 = vld [vmem:[#allocation6 + $0xf0] sm:$0xff]
    %v1053 = vld [vmem:[#allocation6 + $0xf8] sm:$0xff]
    %v1054 = vld [vmem:[#allocation6 + $0x100] sm:$0xff]
    %v1055 = vld [vmem:[#allocation6 + $0x108] sm:$0xff]
    %v1056 = vld [vmem:[#allocation6 + $0x110] sm:$0xff]
    %v1057 = vld [vmem:[#allocation6 + $0x118] sm:$0xff]
    %v1058 = vld [vmem:[#allocation6 + $0x120] sm:$0xff]
    %v1059 = vld [vmem:[#allocation6 + $0x128] sm:$0xff]
    %v1060 = vld [vmem:[#allocation6 + $0x130] sm:$0xff]
    %v1061 = vld [vmem:[#allocation6 + $0x138] sm:$0xff]
    %v1062 = vld [vmem:[#allocation6 + $0x140] sm:$0xff]
    %v1063 = vld [vmem:[#allocation6 + $0x148] sm:$0xff]
    %v1064 = vld [vmem:[#allocation6 + $0x150] sm:$0xff]
    %v1065 = vld [vmem:[#allocation6 + $0x158] sm:$0xff]
    %v1066 = vld [vmem:[#allocation6 + $0x160] sm:$0xff]
    %v1067 = vld [vmem:[#allocation6 + $0x168] sm:$0xff]
    %v1068 = vld [vmem:[#allocation6 + $0x170] sm:$0xff]
    %v1069 = vld [vmem:[#allocation6 + $0x178] sm:$0xff]
    %v1070 = vld [vmem:[#allocation6 + $0x180] sm:$0xff]
    %v1071 = vld [vmem:[#allocation6 + $0x188] sm:$0xff]
    %v1072 = vld [vmem:[#allocation6 + $0x190] sm:$0xff]
    %v1073 = vld [vmem:[#allocation6 + $0x198] sm:$0xff]
    %v1074 = vld [vmem:[#allocation6 + $0x1a0] sm:$0xff]
    %v1075 = vld [vmem:[#allocation6 + $0x1a8] sm:$0xff]
    %v1076 = vld [vmem:[#allocation6 + $0x1b0] sm:$0xff]
    %v1077 = vld [vmem:[#allocation6 + $0x1b8] sm:$0xff]
    %v1078 = vld [vmem:[#allocation6 + $0x1c0] sm:$0xff]
    %v1079 = vld [vmem:[#allocation6 + $0x1c8] sm:$0xff]
    %v1080 = vld [vmem:[#allocation6 + $0x1d0] sm:$0xff]
    %v1081 = vld [vmem:[#allocation6 + $0x1d8] sm:$0xff]
    %v1082 = vld [vmem:[#allocation6 + $0x1e0] sm:$0xff]
    %v1083 = vld [vmem:[#allocation6 + $0x1e8] sm:$0xff]
    %v1084 = vld [vmem:[#allocation6 + $0x1f0] sm:$0xff]
    %v1085 = vld [vmem:[#allocation6 + $0x1f8] sm:$0xff]
    %v1086 = vld [vmem:[#allocation6 + $0x200] sm:$0xff]
    %v1087 = vld [vmem:[#allocation6 + $0x208] sm:$0xff]
    %v1088 = vld [vmem:[#allocation6 + $0x210] sm:$0xff]
    %v1089 = vld [vmem:[#allocation6 + $0x218] sm:$0xff]
    %v1090 = vld [vmem:[#allocation6 + $0x220] sm:$0xff]
    %v1091 = vld [vmem:[#allocation6 + $0x228] sm:$0xff]
    %v1092 = vld [vmem:[#allocation6 + $0x230] sm:$0xff]
    %v1093 = vld [vmem:[#allocation6 + $0x238] sm:$0xff]
    %v1094 = vld [vmem:[#allocation6 + $0x240] sm:$0xff]
    %v1095 = vld [vmem:[#allocation6 + $0x248] sm:$0xff]
    %v1096 = vld [vmem:[#allocation6 + $0x250] sm:$0xff]
    %v1097 = vld [vmem:[#allocation6 + $0x258] sm:$0xff]
    %v1098 = vld [vmem:[#allocation6 + $0x260] sm:$0xff]
    %v1099 = vld [vmem:[#allocation6 + $0x268] sm:$0xff]
    %v1100 = vld [vmem:[#allocation6 + $0x270] sm:$0xff]
    %v1101 = vld [vmem:[#allocation6 + $0x278] sm:$0xff]
    %v1102 = vld [vmem:[#allocation6 + $0x280] sm:$0xff]
    %v1103 = vld [vmem:[#allocation6 + $0x288] sm:$0xff]
    %v1104 = vld [vmem:[#allocation6 + $0x290] sm:$0xff]
    %v1105 = vld [vmem:[#allocation6 + $0x298] sm:$0xff]
    %v1106 = vld [vmem:[#allocation6 + $0x2a0] sm:$0xff]
    %v1107 = vld [vmem:[#allocation6 + $0x2a8] sm:$0xff]
    %v1108 = vld [vmem:[#allocation6 + $0x2b0] sm:$0xff]
    %v1109 = vld [vmem:[#allocation6 + $0x2b8] sm:$0xff]
    %v1110 = vld [vmem:[#allocation6 + $0x2c0] sm:$0xff]
    %v1111 = vld [vmem:[#allocation6 + $0x2c8] sm:$0xff]
    %v1112 = vld [vmem:[#allocation6 + $0x2d0] sm:$0xff]
    %v1113 = vld [vmem:[#allocation6 + $0x2d8] sm:$0xff]
    %v1114 = vld [vmem:[#allocation6 + $0x2e0] sm:$0xff]
    %v1115 = vld [vmem:[#allocation6 + $0x2e8] sm:$0xff]
    %v1116 = vld [vmem:[#allocation6 + $0x2f0] sm:$0xff]
    %v1117 = vld [vmem:[#allocation6 + $0x2f8] sm:$0xff]
    %v1118 = vld [vmem:[#allocation6 + $0x300] sm:$0xff]
    %v1119 = vld [vmem:[#allocation6 + $0x308] sm:$0xff]
    %v1120 = vld [vmem:[#allocation6 + $0x310] sm:$0xff]
    %v1121 = vld [vmem:[#allocation6 + $0x318] sm:$0xff]
    %v1122 = vld [vmem:[#allocation6 + $0x320] sm:$0xff]
    %v1123 = vld [vmem:[#allocation6 + $0x328] sm:$0xff]
    %v1124 = vld [vmem:[#allocation6 + $0x330] sm:$0xff]
    %v1125 = vld [vmem:[#allocation6 + $0x338] sm:$0xff]
    %v1126 = vld [vmem:[#allocation6 + $0x340] sm:$0xff]
    %v1127 = vld [vmem:[#allocation6 + $0x348] sm:$0xff]
    %v1128 = vld [vmem:[#allocation6 + $0x350] sm:$0xff]
    %v1129 = vld [vmem:[#allocation6 + $0x358] sm:$0xff]
    %v1130 = vld [vmem:[#allocation6 + $0x360] sm:$0xff]
    %v1131 = vld [vmem:[#allocation6 + $0x368] sm:$0xff]
    %v1132 = vld [vmem:[#allocation6 + $0x370] sm:$0xff]
    %v1133 = vld [vmem:[#allocation6 + $0x378] sm:$0xff]
    %v1134 = vld [vmem:[#allocation6 + $0x380] sm:$0xff]
    %v1135 = vld [vmem:[#allocation6 + $0x388] sm:$0xff]
    %v1136 = vld [vmem:[#allocation6 + $0x390] sm:$0xff]
    %v1137 = vld [vmem:[#allocation6 + $0x398] sm:$0xff]
    %v1138 = vld [vmem:[#allocation6 + $0x3a0] sm:$0xff]
    %v1139 = vld [vmem:[#allocation6 + $0x3a8] sm:$0xff]
    %v1140 = vld [vmem:[#allocation6 + $0x3b0] sm:$0xff]
    %v1141 = vld [vmem:[#allocation6 + $0x3b8] sm:$0xff]
    %v1142 = vld [vmem:[#allocation6 + $0x3c0] sm:$0xff]
    %v1143 = vld [vmem:[#allocation6 + $0x3c8] sm:$0xff]
    %v1144 = vld [vmem:[#allocation6 + $0x3d0] sm:$0xff]
    %v1145 = vld [vmem:[#allocation6 + $0x3d8] sm:$0xff]
    %v1146 = vld [vmem:[#allocation6 + $0x3e0] sm:$0xff]
    %v1147 = vld [vmem:[#allocation6 + $0x3e8] sm:$0xff]
    %v1148 = vld [vmem:[#allocation6 + $0x3f0] sm:$0xff]
    %v1149 = vld [vmem:[#allocation6 + $0x3f8] sm:$0xff]
    %v1150 = vld [vmem:[#allocation6 + $0x400] sm:$0xff]
    %v1151 = vld [vmem:[#allocation6 + $0x408] sm:$0xff]
    %v1152 = vld [vmem:[#allocation6 + $0x410] sm:$0xff]
    %v1153 = vld [vmem:[#allocation6 + $0x418] sm:$0xff]
    %v1154 = vld [vmem:[#allocation6 + $0x420] sm:$0xff]
    %v1155 = vld [vmem:[#allocation6 + $0x428] sm:$0xff]
    %v1156 = vld [vmem:[#allocation6 + $0x430] sm:$0xff]
    %v1157 = vld [vmem:[#allocation6 + $0x438] sm:$0xff]
    %v1158 = vld [vmem:[#allocation6 + $0x440] sm:$0xff]
    %v1159 = vld [vmem:[#allocation6 + $0x448] sm:$0xff]
    %v1160 = vld [vmem:[#allocation6 + $0x450] sm:$0xff]
    %v1161 = vld [vmem:[#allocation6 + $0x458] sm:$0xff]
    %v1162 = vld [vmem:[#allocation6 + $0x460] sm:$0xff]
    %v1163 = vld [vmem:[#allocation6 + $0x468] sm:$0xff]
    %v1164 = vld [vmem:[#allocation6 + $0x470] sm:$0xff]
    %v1165 = vld [vmem:[#allocation6 + $0x478] sm:$0xff]
    %v1166 = vld [vmem:[#allocation6 + $0x480] sm:$0xff]
    %v1167 = vld [vmem:[#allocation6 + $0x488] sm:$0xff]
    %v1168 = vld [vmem:[#allocation6 + $0x490] sm:$0xff]
    %v1169 = vld [vmem:[#allocation6 + $0x498] sm:$0xff]
    %v1170 = vld [vmem:[#allocation6 + $0x4a0] sm:$0xff]
    %v1171 = vld [vmem:[#allocation6 + $0x4a8] sm:$0xff]
    %v1172 = vld [vmem:[#allocation6 + $0x4b0] sm:$0xff]
    %v1173 = vld [vmem:[#allocation6 + $0x4b8] sm:$0xff]
    %v1174 = vld [vmem:[#allocation6 + $0x4c0] sm:$0xff]
    %v1175 = vld [vmem:[#allocation6 + $0x4c8] sm:$0xff]
    %v1176 = vld [vmem:[#allocation6 + $0x4d0] sm:$0xff]
    %v1177 = vld [vmem:[#allocation6 + $0x4d8] sm:$0xff]
    %v1178 = vld [vmem:[#allocation6 + $0x4e0] sm:$0xff]
    %v1179 = vld [vmem:[#allocation6 + $0x4e8] sm:$0xff]
    %v1180 = vld [vmem:[#allocation6 + $0x4f0] sm:$0xff]
    %v1181 = vld [vmem:[#allocation6 + $0x4f8] sm:$0xff]
    %v1182 = vld [vmem:[#allocation6 + $0x500] sm:$0xff]
    %v1183 = vld [vmem:[#allocation6 + $0x508] sm:$0xff]
    %v1184 = vld [vmem:[#allocation6 + $0x510] sm:$0xff]
    %v1185 = vld [vmem:[#allocation6 + $0x518] sm:$0xff]
    %v1186 = vld [vmem:[#allocation6 + $0x520] sm:$0xff]
    %v1187 = vld [vmem:[#allocation6 + $0x528] sm:$0xff]
    %v1188 = vld [vmem:[#allocation6 + $0x530] sm:$0xff]
    %v1189 = vld [vmem:[#allocation6 + $0x538] sm:$0xff]
    %v1190 = vld [vmem:[#allocation6 + $0x540] sm:$0xff]
    %v1191 = vld [vmem:[#allocation6 + $0x548] sm:$0xff]
    %v1192 = vld [vmem:[#allocation6 + $0x550] sm:$0xff]
    %v1193 = vld [vmem:[#allocation6 + $0x558] sm:$0xff]
    %v1194 = vld [vmem:[#allocation6 + $0x560] sm:$0xff]
    %v1195 = vld [vmem:[#allocation6 + $0x568] sm:$0xff]
    %v1196 = vld [vmem:[#allocation6 + $0x570] sm:$0xff]
    %v1197 = vld [vmem:[#allocation6 + $0x578] sm:$0xff]
    %v1198 = vld [vmem:[#allocation6 + $0x580] sm:$0xff]
    %v1199 = vld [vmem:[#allocation6 + $0x588] sm:$0xff]
    %v1200 = vld [vmem:[#allocation6 + $0x590] sm:$0xff]
    %v1201 = vld [vmem:[#allocation6 + $0x598] sm:$0xff]
    %v1202 = vld [vmem:[#allocation6 + $0x5a0] sm:$0xff]
    %v1203 = vld [vmem:[#allocation6 + $0x5a8] sm:$0xff]
    %v1204 = vld [vmem:[#allocation6 + $0x5b0] sm:$0xff]
    %v1205 = vld [vmem:[#allocation6 + $0x5b8] sm:$0xff]
    %v1206 = vld [vmem:[#allocation6 + $0x5c0] sm:$0xff]
    %v1207 = vld [vmem:[#allocation6 + $0x5c8] sm:$0xff]
    %v1208 = vld [vmem:[#allocation6 + $0x5d0] sm:$0xff]
    %v1209 = vld [vmem:[#allocation6 + $0x5d8] sm:$0xff]
    %v1210 = vld [vmem:[#allocation6 + $0x5e0] sm:$0xff]
    %v1211 = vld [vmem:[#allocation6 + $0x5e8] sm:$0xff]
    %v1212 = vld [vmem:[#allocation6 + $0x5f0] sm:$0xff]
    %v1213 = vld [vmem:[#allocation6 + $0x5f8] sm:$0xff]
    %v1214 = vld [vmem:[#allocation6 + $0x600] sm:$0xff]
    %v1215 = vld [vmem:[#allocation6 + $0x608] sm:$0xff]
    %v1216 = vld [vmem:[#allocation6 + $0x610] sm:$0xff]
    %v1217 = vld [vmem:[#allocation6 + $0x618] sm:$0xff]
    %v1218 = vld [vmem:[#allocation6 + $0x620] sm:$0xff]
    %v1219 = vld [vmem:[#allocation6 + $0x628] sm:$0xff]
    %v1220 = vld [vmem:[#allocation6 + $0x630] sm:$0xff]
    %v1221 = vld [vmem:[#allocation6 + $0x638] sm:$0xff]
    %v1222 = vld [vmem:[#allocation6 + $0x640] sm:$0xff]
    %v1223 = vld [vmem:[#allocation6 + $0x648] sm:$0xff]
    %v1224 = vld [vmem:[#allocation6 + $0x650] sm:$0xff]
    %v1225 = vld [vmem:[#allocation6 + $0x658] sm:$0xff]
    %v1226 = vld [vmem:[#allocation6 + $0x660] sm:$0xff]
    %v1227 = vld [vmem:[#allocation6 + $0x668] sm:$0xff]
    %v1228 = vld [vmem:[#allocation6 + $0x670] sm:$0xff]
    %v1229 = vld [vmem:[#allocation6 + $0x678] sm:$0xff]
    %v1230 = vld [vmem:[#allocation6 + $0x680] sm:$0xff]
    %v1231 = vld [vmem:[#allocation6 + $0x688] sm:$0xff]
    %v1232 = vld [vmem:[#allocation6 + $0x690] sm:$0xff]
    %v1233 = vld [vmem:[#allocation6 + $0x698] sm:$0xff]
    %v1234 = vld [vmem:[#allocation6 + $0x6a0] sm:$0xff]
    %v1235 = vld [vmem:[#allocation6 + $0x6a8] sm:$0xff]
    %v1236 = vld [vmem:[#allocation6 + $0x6b0] sm:$0xff]
    %v1237 = vld [vmem:[#allocation6 + $0x6b8] sm:$0xff]
    %v1238 = vld [vmem:[#allocation6 + $0x6c0] sm:$0xff]
    %v1239 = vld [vmem:[#allocation6 + $0x6c8] sm:$0xff]
    %v1240 = vld [vmem:[#allocation6 + $0x6d0] sm:$0xff]
    %v1241 = vld [vmem:[#allocation6 + $0x6d8] sm:$0xff]
    %v1242 = vld [vmem:[#allocation6 + $0x6e0] sm:$0xff]
    %v1243 = vld [vmem:[#allocation6 + $0x6e8] sm:$0xff]
    %v1244 = vld [vmem:[#allocation6 + $0x6f0] sm:$0xff]
    %v1245 = vld [vmem:[#allocation6 + $0x6f8] sm:$0xff]
    %v1246 = vld [vmem:[#allocation6 + $0x700] sm:$0xff]
    %v1247 = vld [vmem:[#allocation6 + $0x708] sm:$0xff]
    %v1248 = vld [vmem:[#allocation6 + $0x710] sm:$0xff]
    %v1249 = vld [vmem:[#allocation6 + $0x718] sm:$0xff]
    %v1250 = vld [vmem:[#allocation6 + $0x720] sm:$0xff]
    %v1251 = vld [vmem:[#allocation6 + $0x728] sm:$0xff]
    %v1252 = vld [vmem:[#allocation6 + $0x730] sm:$0xff]
    %v1253 = vld [vmem:[#allocation6 + $0x738] sm:$0xff]
    %v1254 = vld [vmem:[#allocation6 + $0x740] sm:$0xff]
    %v1255 = vld [vmem:[#allocation6 + $0x748] sm:$0xff]
    %v1256 = vld [vmem:[#allocation6 + $0x750] sm:$0xff]
    %v1257 = vld [vmem:[#allocation6 + $0x758] sm:$0xff]
    %v1258 = vld [vmem:[#allocation6 + $0x760] sm:$0xff]
    %v1259 = vld [vmem:[#allocation6 + $0x768] sm:$0xff]
    %v1260 = vld [vmem:[#allocation6 + $0x770] sm:$0xff]
    %v1261 = vld [vmem:[#allocation6 + $0x778] sm:$0xff]
    %v1262 = vld [vmem:[#allocation6 + $0x780] sm:$0xff]
    %v1263 = vld [vmem:[#allocation6 + $0x788] sm:$0xff]
    %v1264 = vld [vmem:[#allocation6 + $0x790] sm:$0xff]
    %v1265 = vld [vmem:[#allocation6 + $0x798] sm:$0xff]
    %v1266 = vld [vmem:[#allocation6 + $0x7a0] sm:$0xff]
    %v1267 = vld [vmem:[#allocation6 + $0x7a8] sm:$0xff]
    %v1268 = vld [vmem:[#allocation6 + $0x7b0] sm:$0xff]
    %v1269 = vld [vmem:[#allocation6 + $0x7b8] sm:$0xff]
    %v1270 = vld [vmem:[#allocation6 + $0x7c0] sm:$0xff]
    %v1271 = vld [vmem:[#allocation6 + $0x7c8] sm:$0xff]
    %v1272 = vld [vmem:[#allocation6 + $0x7d0] sm:$0xff]
    %v1273 = vld [vmem:[#allocation6 + $0x7d8] sm:$0xff]
    %v1274 = vld [vmem:[#allocation6 + $0x7e0] sm:$0xff]
    %v1275 = vld [vmem:[#allocation6 + $0x7e8] sm:$0xff]
    %v1276 = vld [vmem:[#allocation6 + $0x7f0] sm:$0xff]
    %v1277 = vld [vmem:[#allocation6 + $0x7f8] sm:$0xff]
    %v1278 = vpack.c.bf16 %v1030, %v1022
    %v1279 = vpack.c.bf16 %v1031, %v1023
    %v1280 = vpack.c.bf16 %v1032, %v1024
    %v1281 = vpack.c.bf16 %v1033, %v1025
    %v1282 = vpack.c.bf16 %v1034, %v1026
    %v1283 = vpack.c.bf16 %v1035, %v1027
    %v1284 = vpack.c.bf16 %v1036, %v1028
    %v1285 = vpack.c.bf16 %v1037, %v1029
    %v1286 = vpack.c.bf16 %v1046, %v1038
    %v1287 = vpack.c.bf16 %v1047, %v1039
    %v1288 = vpack.c.bf16 %v1048, %v1040
    %v1289 = vpack.c.bf16 %v1049, %v1041
    %v1290 = vpack.c.bf16 %v1050, %v1042
    %v1291 = vpack.c.bf16 %v1051, %v1043
    %v1292 = vpack.c.bf16 %v1052, %v1044
    %v1293 = vpack.c.bf16 %v1053, %v1045
    %v1294 = vpack.c.bf16 %v1062, %v1054
    %v1295 = vpack.c.bf16 %v1063, %v1055
    %v1296 = vpack.c.bf16 %v1064, %v1056
    %v1297 = vpack.c.bf16 %v1065, %v1057
    %v1298 = vpack.c.bf16 %v1066, %v1058
    %v1299 = vpack.c.bf16 %v1067, %v1059
    %v1300 = vpack.c.bf16 %v1068, %v1060
    %v1301 = vpack.c.bf16 %v1069, %v1061
    %v1302 = vpack.c.bf16 %v1078, %v1070
    %v1303 = vpack.c.bf16 %v1079, %v1071
    %v1304 = vpack.c.bf16 %v1080, %v1072
    %v1305 = vpack.c.bf16 %v1081, %v1073
    %v1306 = vpack.c.bf16 %v1082, %v1074
    %v1307 = vpack.c.bf16 %v1083, %v1075
    %v1308 = vpack.c.bf16 %v1084, %v1076
    %v1309 = vpack.c.bf16 %v1085, %v1077
    %v1310 = vpack.c.bf16 %v1094, %v1086
    %v1311 = vpack.c.bf16 %v1095, %v1087
    %v1312 = vpack.c.bf16 %v1096, %v1088
    %v1313 = vpack.c.bf16 %v1097, %v1089
    %v1314 = vpack.c.bf16 %v1098, %v1090
    %v1315 = vpack.c.bf16 %v1099, %v1091
    %v1316 = vpack.c.bf16 %v1100, %v1092
    %v1317 = vpack.c.bf16 %v1101, %v1093
    %v1318 = vpack.c.bf16 %v1110, %v1102
    %v1319 = vpack.c.bf16 %v1111, %v1103
    %v1320 = vpack.c.bf16 %v1112, %v1104
    %v1321 = vpack.c.bf16 %v1113, %v1105
    %v1322 = vpack.c.bf16 %v1114, %v1106
    %v1323 = vpack.c.bf16 %v1115, %v1107
    %v1324 = vpack.c.bf16 %v1116, %v1108
    %v1325 = vpack.c.bf16 %v1117, %v1109
    %v1326 = vpack.c.bf16 %v1126, %v1118
    %v1327 = vpack.c.bf16 %v1127, %v1119
    %v1328 = vpack.c.bf16 %v1128, %v1120
    %v1329 = vpack.c.bf16 %v1129, %v1121
    %v1330 = vpack.c.bf16 %v1130, %v1122
    %v1331 = vpack.c.bf16 %v1131, %v1123
    %v1332 = vpack.c.bf16 %v1132, %v1124
    %v1333 = vpack.c.bf16 %v1133, %v1125
    %v1334 = vpack.c.bf16 %v1142, %v1134
    %v1335 = vpack.c.bf16 %v1143, %v1135
    %v1336 = vpack.c.bf16 %v1144, %v1136
    %v1337 = vpack.c.bf16 %v1145, %v1137
    %v1338 = vpack.c.bf16 %v1146, %v1138
    %v1339 = vpack.c.bf16 %v1147, %v1139
    %v1340 = vpack.c.bf16 %v1148, %v1140
    %v1341 = vpack.c.bf16 %v1149, %v1141
    %v1342 = vpack.c.bf16 %v1158, %v1150
    %v1343 = vpack.c.bf16 %v1159, %v1151
    %v1344 = vpack.c.bf16 %v1160, %v1152
    %v1345 = vpack.c.bf16 %v1161, %v1153
    %v1346 = vpack.c.bf16 %v1162, %v1154
    %v1347 = vpack.c.bf16 %v1163, %v1155
    %v1348 = vpack.c.bf16 %v1164, %v1156
    %v1349 = vpack.c.bf16 %v1165, %v1157
    %v1350 = vpack.c.bf16 %v1174, %v1166
    %v1351 = vpack.c.bf16 %v1175, %v1167
    %v1352 = vpack.c.bf16 %v1176, %v1168
    %v1353 = vpack.c.bf16 %v1177, %v1169
    %v1354 = vpack.c.bf16 %v1178, %v1170
    %v1355 = vpack.c.bf16 %v1179, %v1171
    %v1356 = vpack.c.bf16 %v1180, %v1172
    %v1357 = vpack.c.bf16 %v1181, %v1173
    %v1358 = vpack.c.bf16 %v1190, %v1182
    %v1359 = vpack.c.bf16 %v1191, %v1183
    %v1360 = vpack.c.bf16 %v1192, %v1184
    %v1361 = vpack.c.bf16 %v1193, %v1185
    %v1362 = vpack.c.bf16 %v1194, %v1186
    %v1363 = vpack.c.bf16 %v1195, %v1187
    %v1364 = vpack.c.bf16 %v1196, %v1188
    %v1365 = vpack.c.bf16 %v1197, %v1189
    %v1366 = vpack.c.bf16 %v1206, %v1198
    %v1367 = vpack.c.bf16 %v1207, %v1199
    %v1368 = vpack.c.bf16 %v1208, %v1200
    %v1369 = vpack.c.bf16 %v1209, %v1201
    %v1370 = vpack.c.bf16 %v1210, %v1202
    %v1371 = vpack.c.bf16 %v1211, %v1203
    %v1372 = vpack.c.bf16 %v1212, %v1204
    %v1373 = vpack.c.bf16 %v1213, %v1205
    %v1374 = vpack.c.bf16 %v1222, %v1214
    %v1375 = vpack.c.bf16 %v1223, %v1215
    %v1376 = vpack.c.bf16 %v1224, %v1216
    %v1377 = vpack.c.bf16 %v1225, %v1217
    %v1378 = vpack.c.bf16 %v1226, %v1218
    %v1379 = vpack.c.bf16 %v1227, %v1219
    %v1380 = vpack.c.bf16 %v1228, %v1220
    %v1381 = vpack.c.bf16 %v1229, %v1221
    %v1382 = vpack.c.bf16 %v1238, %v1230
    %v1383 = vpack.c.bf16 %v1239, %v1231
    %v1384 = vpack.c.bf16 %v1240, %v1232
    %v1385 = vpack.c.bf16 %v1241, %v1233
    %v1386 = vpack.c.bf16 %v1242, %v1234
    %v1387 = vpack.c.bf16 %v1243, %v1235
    %v1388 = vpack.c.bf16 %v1244, %v1236
    %v1389 = vpack.c.bf16 %v1245, %v1237
    %v1390 = vpack.c.bf16 %v1254, %v1246
    %v1391 = vpack.c.bf16 %v1255, %v1247
    %v1392 = vpack.c.bf16 %v1256, %v1248
    %v1393 = vpack.c.bf16 %v1257, %v1249
    %v1394 = vpack.c.bf16 %v1258, %v1250
    %v1395 = vpack.c.bf16 %v1259, %v1251
    %v1396 = vpack.c.bf16 %v1260, %v1252
    %v1397 = vpack.c.bf16 %v1261, %v1253
    %v1398 = vpack.c.bf16 %v1270, %v1262
    %v1399 = vpack.c.bf16 %v1271, %v1263
    %v1400 = vpack.c.bf16 %v1272, %v1264
    %v1401 = vpack.c.bf16 %v1273, %v1265
    %v1402 = vpack.c.bf16 %v1274, %v1266
    %v1403 = vpack.c.bf16 %v1275, %v1267
    %v1404 = vpack.c.bf16 %v1276, %v1268
    %v1405 = vpack.c.bf16 %v1277, %v1269
    %v1406 = vld [vmem:[#allocation8] sm:$0xff]
    %v1407 = vld [vmem:[#allocation8 + $0x8] sm:$0xff]
    %v1408 = vld [vmem:[#allocation8 + $0x10] sm:$0xff]
    %v1409 = vld [vmem:[#allocation8 + $0x18] sm:$0xff]
    %v1410 = vld [vmem:[#allocation8 + $0x20] sm:$0xff]
    %v1411 = vld [vmem:[#allocation8 + $0x28] sm:$0xff]
    %v1412 = vld [vmem:[#allocation8 + $0x30] sm:$0xff]
    %v1413 = vld [vmem:[#allocation8 + $0x38] sm:$0xff]
    %v1414 = vld [vmem:[#allocation8 + $0x40] sm:$0xff]
    %v1415 = vld [vmem:[#allocation8 + $0x48] sm:$0xff]
    %v1416 = vld [vmem:[#allocation8 + $0x50] sm:$0xff]
    %v1417 = vld [vmem:[#allocation8 + $0x58] sm:$0xff]
    %v1418 = vld [vmem:[#allocation8 + $0x60] sm:$0xff]
    %v1419 = vld [vmem:[#allocation8 + $0x68] sm:$0xff]
    %v1420 = vld [vmem:[#allocation8 + $0x70] sm:$0xff]
    %v1421 = vld [vmem:[#allocation8 + $0x78] sm:$0xff]
    %v1422 = vld [vmem:[#allocation8 + $0x80] sm:$0xff]
    %v1423 = vld [vmem:[#allocation8 + $0x88] sm:$0xff]
    %v1424 = vld [vmem:[#allocation8 + $0x90] sm:$0xff]
    %v1425 = vld [vmem:[#allocation8 + $0x98] sm:$0xff]
    %v1426 = vld [vmem:[#allocation8 + $0xa0] sm:$0xff]
    %v1427 = vld [vmem:[#allocation8 + $0xa8] sm:$0xff]
    %v1428 = vld [vmem:[#allocation8 + $0xb0] sm:$0xff]
    %v1429 = vld [vmem:[#allocation8 + $0xb8] sm:$0xff]
    %v1430 = vld [vmem:[#allocation8 + $0xc0] sm:$0xff]
    %v1431 = vld [vmem:[#allocation8 + $0xc8] sm:$0xff]
    %v1432 = vld [vmem:[#allocation8 + $0xd0] sm:$0xff]
    %v1433 = vld [vmem:[#allocation8 + $0xd8] sm:$0xff]
    %v1434 = vld [vmem:[#allocation8 + $0xe0] sm:$0xff]
    %v1435 = vld [vmem:[#allocation8 + $0xe8] sm:$0xff]
    %v1436 = vld [vmem:[#allocation8 + $0xf0] sm:$0xff]
    %v1437 = vld [vmem:[#allocation8 + $0xf8] sm:$0xff]
    %v1438 = vld [vmem:[#allocation8 + $0x100] sm:$0xff]
    %v1439 = vld [vmem:[#allocation8 + $0x108] sm:$0xff]
    %v1440 = vld [vmem:[#allocation8 + $0x110] sm:$0xff]
    %v1441 = vld [vmem:[#allocation8 + $0x118] sm:$0xff]
    %v1442 = vld [vmem:[#allocation8 + $0x120] sm:$0xff]
    %v1443 = vld [vmem:[#allocation8 + $0x128] sm:$0xff]
    %v1444 = vld [vmem:[#allocation8 + $0x130] sm:$0xff]
    %v1445 = vld [vmem:[#allocation8 + $0x138] sm:$0xff]
    %v1446 = vld [vmem:[#allocation8 + $0x140] sm:$0xff]
    %v1447 = vld [vmem:[#allocation8 + $0x148] sm:$0xff]
    %v1448 = vld [vmem:[#allocation8 + $0x150] sm:$0xff]
    %v1449 = vld [vmem:[#allocation8 + $0x158] sm:$0xff]
    %v1450 = vld [vmem:[#allocation8 + $0x160] sm:$0xff]
    %v1451 = vld [vmem:[#allocation8 + $0x168] sm:$0xff]
    %v1452 = vld [vmem:[#allocation8 + $0x170] sm:$0xff]
    %v1453 = vld [vmem:[#allocation8 + $0x178] sm:$0xff]
    %v1454 = vld [vmem:[#allocation8 + $0x180] sm:$0xff]
    %v1455 = vld [vmem:[#allocation8 + $0x188] sm:$0xff]
    %v1456 = vld [vmem:[#allocation8 + $0x190] sm:$0xff]
    %v1457 = vld [vmem:[#allocation8 + $0x198] sm:$0xff]
    %v1458 = vld [vmem:[#allocation8 + $0x1a0] sm:$0xff]
    %v1459 = vld [vmem:[#allocation8 + $0x1a8] sm:$0xff]
    %v1460 = vld [vmem:[#allocation8 + $0x1b0] sm:$0xff]
    %v1461 = vld [vmem:[#allocation8 + $0x1b8] sm:$0xff]
    %v1462 = vld [vmem:[#allocation8 + $0x1c0] sm:$0xff]
    %v1463 = vld [vmem:[#allocation8 + $0x1c8] sm:$0xff]
    %v1464 = vld [vmem:[#allocation8 + $0x1d0] sm:$0xff]
    %v1465 = vld [vmem:[#allocation8 + $0x1d8] sm:$0xff]
    %v1466 = vld [vmem:[#allocation8 + $0x1e0] sm:$0xff]
    %v1467 = vld [vmem:[#allocation8 + $0x1e8] sm:$0xff]
    %v1468 = vld [vmem:[#allocation8 + $0x1f0] sm:$0xff]
    %v1469 = vld [vmem:[#allocation8 + $0x1f8] sm:$0xff]
    %v1470 = vld [vmem:[#allocation8 + $0x200] sm:$0xff]
    %v1471 = vld [vmem:[#allocation8 + $0x208] sm:$0xff]
    %v1472 = vld [vmem:[#allocation8 + $0x210] sm:$0xff]
    %v1473 = vld [vmem:[#allocation8 + $0x218] sm:$0xff]
    %v1474 = vld [vmem:[#allocation8 + $0x220] sm:$0xff]
    %v1475 = vld [vmem:[#allocation8 + $0x228] sm:$0xff]
    %v1476 = vld [vmem:[#allocation8 + $0x230] sm:$0xff]
    %v1477 = vld [vmem:[#allocation8 + $0x238] sm:$0xff]
    %v1478 = vld [vmem:[#allocation8 + $0x240] sm:$0xff]
    %v1479 = vld [vmem:[#allocation8 + $0x248] sm:$0xff]
    %v1480 = vld [vmem:[#allocation8 + $0x250] sm:$0xff]
    %v1481 = vld [vmem:[#allocation8 + $0x258] sm:$0xff]
    %v1482 = vld [vmem:[#allocation8 + $0x260] sm:$0xff]
    %v1483 = vld [vmem:[#allocation8 + $0x268] sm:$0xff]
    %v1484 = vld [vmem:[#allocation8 + $0x270] sm:$0xff]
    %v1485 = vld [vmem:[#allocation8 + $0x278] sm:$0xff]
    %v1486 = vld [vmem:[#allocation8 + $0x280] sm:$0xff]
    %v1487 = vld [vmem:[#allocation8 + $0x288] sm:$0xff]
    %v1488 = vld [vmem:[#allocation8 + $0x290] sm:$0xff]
    %v1489 = vld [vmem:[#allocation8 + $0x298] sm:$0xff]
    %v1490 = vld [vmem:[#allocation8 + $0x2a0] sm:$0xff]
    %v1491 = vld [vmem:[#allocation8 + $0x2a8] sm:$0xff]
    %v1492 = vld [vmem:[#allocation8 + $0x2b0] sm:$0xff]
    %v1493 = vld [vmem:[#allocation8 + $0x2b8] sm:$0xff]
    %v1494 = vld [vmem:[#allocation8 + $0x2c0] sm:$0xff]
    %v1495 = vld [vmem:[#allocation8 + $0x2c8] sm:$0xff]
    %v1496 = vld [vmem:[#allocation8 + $0x2d0] sm:$0xff]
    %v1497 = vld [vmem:[#allocation8 + $0x2d8] sm:$0xff]
    %v1498 = vld [vmem:[#allocation8 + $0x2e0] sm:$0xff]
    %v1499 = vld [vmem:[#allocation8 + $0x2e8] sm:$0xff]
    %v1500 = vld [vmem:[#allocation8 + $0x2f0] sm:$0xff]
    %v1501 = vld [vmem:[#allocation8 + $0x2f8] sm:$0xff]
    %v1502 = vld [vmem:[#allocation8 + $0x300] sm:$0xff]
    %v1503 = vld [vmem:[#allocation8 + $0x308] sm:$0xff]
    %v1504 = vld [vmem:[#allocation8 + $0x310] sm:$0xff]
    %v1505 = vld [vmem:[#allocation8 + $0x318] sm:$0xff]
    %v1506 = vld [vmem:[#allocation8 + $0x320] sm:$0xff]
    %v1507 = vld [vmem:[#allocation8 + $0x328] sm:$0xff]
    %v1508 = vld [vmem:[#allocation8 + $0x330] sm:$0xff]
    %v1509 = vld [vmem:[#allocation8 + $0x338] sm:$0xff]
    %v1510 = vld [vmem:[#allocation8 + $0x340] sm:$0xff]
    %v1511 = vld [vmem:[#allocation8 + $0x348] sm:$0xff]
    %v1512 = vld [vmem:[#allocation8 + $0x350] sm:$0xff]
    %v1513 = vld [vmem:[#allocation8 + $0x358] sm:$0xff]
    %v1514 = vld [vmem:[#allocation8 + $0x360] sm:$0xff]
    %v1515 = vld [vmem:[#allocation8 + $0x368] sm:$0xff]
    %v1516 = vld [vmem:[#allocation8 + $0x370] sm:$0xff]
    %v1517 = vld [vmem:[#allocation8 + $0x378] sm:$0xff]
    %v1518 = vld [vmem:[#allocation8 + $0x380] sm:$0xff]
    %v1519 = vld [vmem:[#allocation8 + $0x388] sm:$0xff]
    %v1520 = vld [vmem:[#allocation8 + $0x390] sm:$0xff]
    %v1521 = vld [vmem:[#allocation8 + $0x398] sm:$0xff]
    %v1522 = vld [vmem:[#allocation8 + $0x3a0] sm:$0xff]
    %v1523 = vld [vmem:[#allocation8 + $0x3a8] sm:$0xff]
    %v1524 = vld [vmem:[#allocation8 + $0x3b0] sm:$0xff]
    %v1525 = vld [vmem:[#allocation8 + $0x3b8] sm:$0xff]
    %v1526 = vld [vmem:[#allocation8 + $0x3c0] sm:$0xff]
    %v1527 = vld [vmem:[#allocation8 + $0x3c8] sm:$0xff]
    %v1528 = vld [vmem:[#allocation8 + $0x3d0] sm:$0xff]
    %v1529 = vld [vmem:[#allocation8 + $0x3d8] sm:$0xff]
    %v1530 = vld [vmem:[#allocation8 + $0x3e0] sm:$0xff]
    %v1531 = vld [vmem:[#allocation8 + $0x3e8] sm:$0xff]
    %v1532 = vld [vmem:[#allocation8 + $0x3f0] sm:$0xff]
    %v1533 = vld [vmem:[#allocation8 + $0x3f8] sm:$0xff]
    %v1534 = vld [vmem:[#allocation8 + $0x400] sm:$0xff]
    %v1535 = vld [vmem:[#allocation8 + $0x408] sm:$0xff]
    %v1536 = vld [vmem:[#allocation8 + $0x410] sm:$0xff]
    %v1537 = vld [vmem:[#allocation8 + $0x418] sm:$0xff]
    %v1538 = vld [vmem:[#allocation8 + $0x420] sm:$0xff]
    %v1539 = vld [vmem:[#allocation8 + $0x428] sm:$0xff]
    %v1540 = vld [vmem:[#allocation8 + $0x430] sm:$0xff]
    %v1541 = vld [vmem:[#allocation8 + $0x438] sm:$0xff]
    %v1542 = vld [vmem:[#allocation8 + $0x440] sm:$0xff]
    %v1543 = vld [vmem:[#allocation8 + $0x448] sm:$0xff]
    %v1544 = vld [vmem:[#allocation8 + $0x450] sm:$0xff]
    %v1545 = vld [vmem:[#allocation8 + $0x458] sm:$0xff]
    %v1546 = vld [vmem:[#allocation8 + $0x460] sm:$0xff]
    %v1547 = vld [vmem:[#allocation8 + $0x468] sm:$0xff]
    %v1548 = vld [vmem:[#allocation8 + $0x470] sm:$0xff]
    %v1549 = vld [vmem:[#allocation8 + $0x478] sm:$0xff]
    %v1550 = vld [vmem:[#allocation8 + $0x480] sm:$0xff]
    %v1551 = vld [vmem:[#allocation8 + $0x488] sm:$0xff]
    %v1552 = vld [vmem:[#allocation8 + $0x490] sm:$0xff]
    %v1553 = vld [vmem:[#allocation8 + $0x498] sm:$0xff]
    %v1554 = vld [vmem:[#allocation8 + $0x4a0] sm:$0xff]
    %v1555 = vld [vmem:[#allocation8 + $0x4a8] sm:$0xff]
    %v1556 = vld [vmem:[#allocation8 + $0x4b0] sm:$0xff]
    %v1557 = vld [vmem:[#allocation8 + $0x4b8] sm:$0xff]
    %v1558 = vld [vmem:[#allocation8 + $0x4c0] sm:$0xff]
    %v1559 = vld [vmem:[#allocation8 + $0x4c8] sm:$0xff]
    %v1560 = vld [vmem:[#allocation8 + $0x4d0] sm:$0xff]
    %v1561 = vld [vmem:[#allocation8 + $0x4d8] sm:$0xff]
    %v1562 = vld [vmem:[#allocation8 + $0x4e0] sm:$0xff]
    %v1563 = vld [vmem:[#allocation8 + $0x4e8] sm:$0xff]
    %v1564 = vld [vmem:[#allocation8 + $0x4f0] sm:$0xff]
    %v1565 = vld [vmem:[#allocation8 + $0x4f8] sm:$0xff]
    %v1566 = vld [vmem:[#allocation8 + $0x500] sm:$0xff]
    %v1567 = vld [vmem:[#allocation8 + $0x508] sm:$0xff]
    %v1568 = vld [vmem:[#allocation8 + $0x510] sm:$0xff]
    %v1569 = vld [vmem:[#allocation8 + $0x518] sm:$0xff]
    %v1570 = vld [vmem:[#allocation8 + $0x520] sm:$0xff]
    %v1571 = vld [vmem:[#allocation8 + $0x528] sm:$0xff]
    %v1572 = vld [vmem:[#allocation8 + $0x530] sm:$0xff]
    %v1573 = vld [vmem:[#allocation8 + $0x538] sm:$0xff]
    %v1574 = vld [vmem:[#allocation8 + $0x540] sm:$0xff]
    %v1575 = vld [vmem:[#allocation8 + $0x548] sm:$0xff]
    %v1576 = vld [vmem:[#allocation8 + $0x550] sm:$0xff]
    %v1577 = vld [vmem:[#allocation8 + $0x558] sm:$0xff]
    %v1578 = vld [vmem:[#allocation8 + $0x560] sm:$0xff]
    %v1579 = vld [vmem:[#allocation8 + $0x568] sm:$0xff]
    %v1580 = vld [vmem:[#allocation8 + $0x570] sm:$0xff]
    %v1581 = vld [vmem:[#allocation8 + $0x578] sm:$0xff]
    %v1582 = vld [vmem:[#allocation8 + $0x580] sm:$0xff]
    %v1583 = vld [vmem:[#allocation8 + $0x588] sm:$0xff]
    %v1584 = vld [vmem:[#allocation8 + $0x590] sm:$0xff]
    %v1585 = vld [vmem:[#allocation8 + $0x598] sm:$0xff]
    %v1586 = vld [vmem:[#allocation8 + $0x5a0] sm:$0xff]
    %v1587 = vld [vmem:[#allocation8 + $0x5a8] sm:$0xff]
    %v1588 = vld [vmem:[#allocation8 + $0x5b0] sm:$0xff]
    %v1589 = vld [vmem:[#allocation8 + $0x5b8] sm:$0xff]
    %v1590 = vld [vmem:[#allocation8 + $0x5c0] sm:$0xff]
    %v1591 = vld [vmem:[#allocation8 + $0x5c8] sm:$0xff]
    %v1592 = vld [vmem:[#allocation8 + $0x5d0] sm:$0xff]
    %v1593 = vld [vmem:[#allocation8 + $0x5d8] sm:$0xff]
    %v1594 = vld [vmem:[#allocation8 + $0x5e0] sm:$0xff]
    %v1595 = vld [vmem:[#allocation8 + $0x5e8] sm:$0xff]
    %v1596 = vld [vmem:[#allocation8 + $0x5f0] sm:$0xff]
    %v1597 = vld [vmem:[#allocation8 + $0x5f8] sm:$0xff]
    %v1598 = vld [vmem:[#allocation8 + $0x600] sm:$0xff]
    %v1599 = vld [vmem:[#allocation8 + $0x608] sm:$0xff]
    %v1600 = vld [vmem:[#allocation8 + $0x610] sm:$0xff]
    %v1601 = vld [vmem:[#allocation8 + $0x618] sm:$0xff]
    %v1602 = vld [vmem:[#allocation8 + $0x620] sm:$0xff]
    %v1603 = vld [vmem:[#allocation8 + $0x628] sm:$0xff]
    %v1604 = vld [vmem:[#allocation8 + $0x630] sm:$0xff]
    %v1605 = vld [vmem:[#allocation8 + $0x638] sm:$0xff]
    %v1606 = vld [vmem:[#allocation8 + $0x640] sm:$0xff]
    %v1607 = vld [vmem:[#allocation8 + $0x648] sm:$0xff]
    %v1608 = vld [vmem:[#allocation8 + $0x650] sm:$0xff]
    %v1609 = vld [vmem:[#allocation8 + $0x658] sm:$0xff]
    %v1610 = vld [vmem:[#allocation8 + $0x660] sm:$0xff]
    %v1611 = vld [vmem:[#allocation8 + $0x668] sm:$0xff]
    %v1612 = vld [vmem:[#allocation8 + $0x670] sm:$0xff]
    %v1613 = vld [vmem:[#allocation8 + $0x678] sm:$0xff]
    %v1614 = vld [vmem:[#allocation8 + $0x680] sm:$0xff]
    %v1615 = vld [vmem:[#allocation8 + $0x688] sm:$0xff]
    %v1616 = vld [vmem:[#allocation8 + $0x690] sm:$0xff]
    %v1617 = vld [vmem:[#allocation8 + $0x698] sm:$0xff]
    %v1618 = vld [vmem:[#allocation8 + $0x6a0] sm:$0xff]
    %v1619 = vld [vmem:[#allocation8 + $0x6a8] sm:$0xff]
    %v1620 = vld [vmem:[#allocation8 + $0x6b0] sm:$0xff]
    %v1621 = vld [vmem:[#allocation8 + $0x6b8] sm:$0xff]
    %v1622 = vld [vmem:[#allocation8 + $0x6c0] sm:$0xff]
    %v1623 = vld [vmem:[#allocation8 + $0x6c8] sm:$0xff]
    %v1624 = vld [vmem:[#allocation8 + $0x6d0] sm:$0xff]
    %v1625 = vld [vmem:[#allocation8 + $0x6d8] sm:$0xff]
    %v1626 = vld [vmem:[#allocation8 + $0x6e0] sm:$0xff]
    %v1627 = vld [vmem:[#allocation8 + $0x6e8] sm:$0xff]
    %v1628 = vld [vmem:[#allocation8 + $0x6f0] sm:$0xff]
    %v1629 = vld [vmem:[#allocation8 + $0x6f8] sm:$0xff]
    %v1630 = vld [vmem:[#allocation8 + $0x700] sm:$0xff]
    %v1631 = vld [vmem:[#allocation8 + $0x708] sm:$0xff]
    %v1632 = vld [vmem:[#allocation8 + $0x710] sm:$0xff]
    %v1633 = vld [vmem:[#allocation8 + $0x718] sm:$0xff]
    %v1634 = vld [vmem:[#allocation8 + $0x720] sm:$0xff]
    %v1635 = vld [vmem:[#allocation8 + $0x728] sm:$0xff]
    %v1636 = vld [vmem:[#allocation8 + $0x730] sm:$0xff]
    %v1637 = vld [vmem:[#allocation8 + $0x738] sm:$0xff]
    %v1638 = vld [vmem:[#allocation8 + $0x740] sm:$0xff]
    %v1639 = vld [vmem:[#allocation8 + $0x748] sm:$0xff]
    %v1640 = vld [vmem:[#allocation8 + $0x750] sm:$0xff]
    %v1641 = vld [vmem:[#allocation8 + $0x758] sm:$0xff]
    %v1642 = vld [vmem:[#allocation8 + $0x760] sm:$0xff]
    %v1643 = vld [vmem:[#allocation8 + $0x768] sm:$0xff]
    %v1644 = vld [vmem:[#allocation8 + $0x770] sm:$0xff]
    %v1645 = vld [vmem:[#allocation8 + $0x778] sm:$0xff]
    %v1646 = vld [vmem:[#allocation8 + $0x780] sm:$0xff]
    %v1647 = vld [vmem:[#allocation8 + $0x788] sm:$0xff]
    %v1648 = vld [vmem:[#allocation8 + $0x790] sm:$0xff]
    %v1649 = vld [vmem:[#allocation8 + $0x798] sm:$0xff]
    %v1650 = vld [vmem:[#allocation8 + $0x7a0] sm:$0xff]
    %v1651 = vld [vmem:[#allocation8 + $0x7a8] sm:$0xff]
    %v1652 = vld [vmem:[#allocation8 + $0x7b0] sm:$0xff]
    %v1653 = vld [vmem:[#allocation8 + $0x7b8] sm:$0xff]
    %v1654 = vld [vmem:[#allocation8 + $0x7c0] sm:$0xff]
    %v1655 = vld [vmem:[#allocation8 + $0x7c8] sm:$0xff]
    %v1656 = vld [vmem:[#allocation8 + $0x7d0] sm:$0xff]
    %v1657 = vld [vmem:[#allocation8 + $0x7d8] sm:$0xff]
    %v1658 = vld [vmem:[#allocation8 + $0x7e0] sm:$0xff]
    %v1659 = vld [vmem:[#allocation8 + $0x7e8] sm:$0xff]
    %v1660 = vld [vmem:[#allocation8 + $0x7f0] sm:$0xff]
    %v1661 = vld [vmem:[#allocation8 + $0x7f8] sm:$0xff]
    %v1662 = vpack.c.bf16 %v1414, %v1406
    %v1663 = vpack.c.bf16 %v1415, %v1407
    %v1664 = vpack.c.bf16 %v1416, %v1408
    %v1665 = vpack.c.bf16 %v1417, %v1409
    %v1666 = vpack.c.bf16 %v1418, %v1410
    %v1667 = vpack.c.bf16 %v1419, %v1411
    %v1668 = vpack.c.bf16 %v1420, %v1412
    %v1669 = vpack.c.bf16 %v1421, %v1413
    %v1670 = vpack.c.bf16 %v1430, %v1422
    %v1671 = vpack.c.bf16 %v1431, %v1423
    %v1672 = vpack.c.bf16 %v1432, %v1424
    %v1673 = vpack.c.bf16 %v1433, %v1425
    %v1674 = vpack.c.bf16 %v1434, %v1426
    %v1675 = vpack.c.bf16 %v1435, %v1427
    %v1676 = vpack.c.bf16 %v1436, %v1428
    %v1677 = vpack.c.bf16 %v1437, %v1429
    %v1678 = vpack.c.bf16 %v1446, %v1438
    %v1679 = vpack.c.bf16 %v1447, %v1439
    %v1680 = vpack.c.bf16 %v1448, %v1440
    %v1681 = vpack.c.bf16 %v1449, %v1441
    %v1682 = vpack.c.bf16 %v1450, %v1442
    %v1683 = vpack.c.bf16 %v1451, %v1443
    %v1684 = vpack.c.bf16 %v1452, %v1444
    %v1685 = vpack.c.bf16 %v1453, %v1445
    %v1686 = vpack.c.bf16 %v1462, %v1454
    %v1687 = vpack.c.bf16 %v1463, %v1455
    %v1688 = vpack.c.bf16 %v1464, %v1456
    %v1689 = vpack.c.bf16 %v1465, %v1457
    %v1690 = vpack.c.bf16 %v1466, %v1458
    %v1691 = vpack.c.bf16 %v1467, %v1459
    %v1692 = vpack.c.bf16 %v1468, %v1460
    %v1693 = vpack.c.bf16 %v1469, %v1461
    %v1694 = vpack.c.bf16 %v1478, %v1470
    %v1695 = vpack.c.bf16 %v1479, %v1471
    %v1696 = vpack.c.bf16 %v1480, %v1472
    %v1697 = vpack.c.bf16 %v1481, %v1473
    %v1698 = vpack.c.bf16 %v1482, %v1474
    %v1699 = vpack.c.bf16 %v1483, %v1475
    %v1700 = vpack.c.bf16 %v1484, %v1476
    %v1701 = vpack.c.bf16 %v1485, %v1477
    %v1702 = vpack.c.bf16 %v1494, %v1486
    %v1703 = vpack.c.bf16 %v1495, %v1487
    %v1704 = vpack.c.bf16 %v1496, %v1488
    %v1705 = vpack.c.bf16 %v1497, %v1489
    %v1706 = vpack.c.bf16 %v1498, %v1490
    %v1707 = vpack.c.bf16 %v1499, %v1491
    %v1708 = vpack.c.bf16 %v1500, %v1492
    %v1709 = vpack.c.bf16 %v1501, %v1493
    %v1710 = vpack.c.bf16 %v1510, %v1502
    %v1711 = vpack.c.bf16 %v1511, %v1503
    %v1712 = vpack.c.bf16 %v1512, %v1504
    %v1713 = vpack.c.bf16 %v1513, %v1505
    %v1714 = vpack.c.bf16 %v1514, %v1506
    %v1715 = vpack.c.bf16 %v1515, %v1507
    %v1716 = vpack.c.bf16 %v1516, %v1508
    %v1717 = vpack.c.bf16 %v1517, %v1509
    %v1718 = vpack.c.bf16 %v1526, %v1518
    %v1719 = vpack.c.bf16 %v1527, %v1519
    %v1720 = vpack.c.bf16 %v1528, %v1520
    %v1721 = vpack.c.bf16 %v1529, %v1521
    %v1722 = vpack.c.bf16 %v1530, %v1522
    %v1723 = vpack.c.bf16 %v1531, %v1523
    %v1724 = vpack.c.bf16 %v1532, %v1524
    %v1725 = vpack.c.bf16 %v1533, %v1525
    %v1726 = vpack.c.bf16 %v1542, %v1534
    %v1727 = vpack.c.bf16 %v1543, %v1535
    %v1728 = vpack.c.bf16 %v1544, %v1536
    %v1729 = vpack.c.bf16 %v1545, %v1537
    %v1730 = vpack.c.bf16 %v1546, %v1538
    %v1731 = vpack.c.bf16 %v1547, %v1539
    %v1732 = vpack.c.bf16 %v1548, %v1540
    %v1733 = vpack.c.bf16 %v1549, %v1541
    %v1734 = vpack.c.bf16 %v1558, %v1550
    %v1735 = vpack.c.bf16 %v1559, %v1551
    %v1736 = vpack.c.bf16 %v1560, %v1552
    %v1737 = vpack.c.bf16 %v1561, %v1553
    %v1738 = vpack.c.bf16 %v1562, %v1554
    %v1739 = vpack.c.bf16 %v1563, %v1555
    %v1740 = vpack.c.bf16 %v1564, %v1556
    %v1741 = vpack.c.bf16 %v1565, %v1557
    %v1742 = vpack.c.bf16 %v1574, %v1566
    %v1743 = vpack.c.bf16 %v1575, %v1567
    %v1744 = vpack.c.bf16 %v1576, %v1568
    %v1745 = vpack.c.bf16 %v1577, %v1569
    %v1746 = vpack.c.bf16 %v1578, %v1570
    %v1747 = vpack.c.bf16 %v1579, %v1571
    %v1748 = vpack.c.bf16 %v1580, %v1572
    %v1749 = vpack.c.bf16 %v1581, %v1573
    %v1750 = vpack.c.bf16 %v1590, %v1582
    %v1751 = vpack.c.bf16 %v1591, %v1583
    %v1752 = vpack.c.bf16 %v1592, %v1584
    %v1753 = vpack.c.bf16 %v1593, %v1585
    %v1754 = vpack.c.bf16 %v1594, %v1586
    %v1755 = vpack.c.bf16 %v1595, %v1587
    %v1756 = vpack.c.bf16 %v1596, %v1588
    %v1757 = vpack.c.bf16 %v1597, %v1589
    %v1758 = vpack.c.bf16 %v1606, %v1598
    %v1759 = vpack.c.bf16 %v1607, %v1599
    %v1760 = vpack.c.bf16 %v1608, %v1600
    %v1761 = vpack.c.bf16 %v1609, %v1601
    %v1762 = vpack.c.bf16 %v1610, %v1602
    %v1763 = vpack.c.bf16 %v1611, %v1603
    %v1764 = vpack.c.bf16 %v1612, %v1604
    %v1765 = vpack.c.bf16 %v1613, %v1605
    %v1766 = vpack.c.bf16 %v1622, %v1614
    %v1767 = vpack.c.bf16 %v1623, %v1615
    %v1768 = vpack.c.bf16 %v1624, %v1616
    %v1769 = vpack.c.bf16 %v1625, %v1617
    %v1770 = vpack.c.bf16 %v1626, %v1618
    %v1771 = vpack.c.bf16 %v1627, %v1619
    %v1772 = vpack.c.bf16 %v1628, %v1620
    %v1773 = vpack.c.bf16 %v1629, %v1621
    %v1774 = vpack.c.bf16 %v1638, %v1630
    %v1775 = vpack.c.bf16 %v1639, %v1631
    %v1776 = vpack.c.bf16 %v1640, %v1632
    %v1777 = vpack.c.bf16 %v1641, %v1633
    %v1778 = vpack.c.bf16 %v1642, %v1634
    %v1779 = vpack.c.bf16 %v1643, %v1635
    %v1780 = vpack.c.bf16 %v1644, %v1636
    %v1781 = vpack.c.bf16 %v1645, %v1637
    %v1782 = vpack.c.bf16 %v1654, %v1646
    %v1783 = vpack.c.bf16 %v1655, %v1647
    %v1784 = vpack.c.bf16 %v1656, %v1648
    %v1785 = vpack.c.bf16 %v1657, %v1649
    %v1786 = vpack.c.bf16 %v1658, %v1650
    %v1787 = vpack.c.bf16 %v1659, %v1651
    %v1788 = vpack.c.bf16 %v1660, %v1652
    %v1789 = vpack.c.bf16 %v1661, %v1653
    %s1790 = smul.u32 0, 16
    %s1791 = smul.addr %s1790, 8
    %s1792 = scalar_lea.vmem [#allocation2], %s1791
    %v1793 = vld [vmem:[%s1792] sm:$0xff]
    %v1794 = vld [vmem:[%s1792 + $0x8] sm:$0xff]
    %v1795 = vld [vmem:[%s1792 + $0x10] sm:$0xff]
    %v1796 = vld [vmem:[%s1792 + $0x18] sm:$0xff]
    %v1797 = vld [vmem:[%s1792 + $0x20] sm:$0xff]
    %v1798 = vld [vmem:[%s1792 + $0x28] sm:$0xff]
    %v1799 = vld [vmem:[%s1792 + $0x30] sm:$0xff]
    %v1800 = vld [vmem:[%s1792 + $0x38] sm:$0xff]
    %s1801 = smul.u32 7, 16
    %s1802 = smul.addr %s1801, 8
    %s1803 = scalar_lea.vmem [#allocation2], %s1802
    %v1804 = vld [vmem:[%s1803 + $0x40] sm:$0xff]
    %v1805 = vld [vmem:[%s1803 + $0x48] sm:$0xff]
    %v1806 = vld [vmem:[%s1803 + $0x50] sm:$0xff]
    %v1807 = vld [vmem:[%s1803 + $0x58] sm:$0xff]
    %v1808 = vld [vmem:[%s1803 + $0x60] sm:$0xff]
    %v1809 = vld [vmem:[%s1803 + $0x68] sm:$0xff]
    %v1810 = vld [vmem:[%s1803 + $0x70] sm:$0xff]
    %v1811 = vld [vmem:[%s1803 + $0x78] sm:$0xff]
    %1812 = vmatprep.subr.bf16.mxu0 %v1335
    %1813 = vmatpush1.bf16.msra.mxu0 %v1334
    %1814 = vmatprep.subr.bf16.mxu0 %v1327
    %1815 = vmatpush1.bf16.msra.mxu0 %v1326
    %1816 = vmatprep.subr.bf16.mxu0 %v1319
    %1817 = vmatpush1.bf16.msra.mxu0 %v1318
    %1818 = vmatprep.subr.bf16.mxu0 %v1311
    %1819 = vmatpush1.bf16.msra.mxu0 %v1310
    %1820 = vmatprep.subr.bf16.mxu0 %v1303
    %1821 = vmatpush1.bf16.msra.mxu0 %v1302
    %1822 = vmatprep.subr.bf16.mxu0 %v1295
    %1823 = vmatpush1.bf16.msra.mxu0 %v1294
    %1824 = vmatprep.subr.bf16.mxu0 %v1287
    %1825 = vmatpush1.bf16.msra.mxu0 %v1286
    %1826 = vmatprep.subr.bf16.mxu0 %v1279
    %1827 = vmatpush1.bf16.msra.mxu0 %v1278
    %1828 = vmatprep.subr.bf16.mxu0 %v1399
    %1829 = vmatpush2.bf16.msra.mxu0 %v1398
    %1830 = vmatprep.subr.bf16.mxu0 %v1391
    %1831 = vmatpush2.bf16.msra.mxu0 %v1390
    %1832 = vmatprep.subr.bf16.mxu0 %v1383
    %1833 = vmatpush2.bf16.msra.mxu0 %v1382
    %1834 = vmatprep.subr.bf16.mxu0 %v1375
    %1835 = vmatpush2.bf16.msra.mxu0 %v1374
    %1836 = vmatprep.subr.bf16.mxu0 %v1367
    %1837 = vmatpush2.bf16.msra.mxu0 %v1366
    %1838 = vmatprep.subr.bf16.mxu0 %v1359
    %1839 = vmatpush2.bf16.msra.mxu0 %v1358
    %1840 = vmatprep.subr.bf16.mxu0 %v1351
    %1841 = vmatpush2.bf16.msra.mxu0 %v1350
    %1842 = vmatprep.subr.bf16.mxu0 %v1343
    %1843 = vmatpush2.bf16.msra.mxu0 %v1342
    %1844 = vmatprep.mubr.bf16.mxu0 0
    %1845 = vmatmul.mubr.bf16.gmra.mxu0 0
    %v1846 = vpop.f32.mrf.mxu0
    %v1847 = vadd.f32 0.0, %v1846
    %v1848 = vpop.f32.mrf.mxu0
    %v1849 = vadd.f32 0.0, %v1848
    %v1850 = vpop.f32.mrf.mxu0
    %v1851 = vpop.f32.mrf.mxu0
    %1852 = vdwg.mxu0
    %1853 = vmatprep.subr.bf16.mxu0 %v1337
    %1854 = vmatpush1.bf16.msra.mxu0 %v1336
    %1855 = vmatprep.subr.bf16.mxu0 %v1329
    %1856 = vmatpush1.bf16.msra.mxu0 %v1328
    %1857 = vmatprep.subr.bf16.mxu0 %v1321
    %1858 = vmatpush1.bf16.msra.mxu0 %v1320
    %1859 = vmatprep.subr.bf16.mxu0 %v1313
    %1860 = vmatpush1.bf16.msra.mxu0 %v1312
    %1861 = vmatprep.subr.bf16.mxu0 %v1305
    %1862 = vmatpush1.bf16.msra.mxu0 %v1304
    %1863 = vmatprep.subr.bf16.mxu0 %v1297
    %1864 = vmatpush1.bf16.msra.mxu0 %v1296
    %1865 = vmatprep.subr.bf16.mxu0 %v1289
    %1866 = vmatpush1.bf16.msra.mxu0 %v1288
    %1867 = vmatprep.subr.bf16.mxu0 %v1281
    %1868 = vmatpush1.bf16.msra.mxu0 %v1280
    %1869 = vmatprep.subr.bf16.mxu0 %v1401
    %1870 = vmatpush2.bf16.msra.mxu0 %v1400
    %1871 = vmatprep.subr.bf16.mxu0 %v1393
    %1872 = vmatpush2.bf16.msra.mxu0 %v1392
    %1873 = vmatprep.subr.bf16.mxu0 %v1385
    %1874 = vmatpush2.bf16.msra.mxu0 %v1384
    %1875 = vmatprep.subr.bf16.mxu0 %v1377
    %1876 = vmatpush2.bf16.msra.mxu0 %v1376
    %1877 = vmatprep.subr.bf16.mxu0 %v1369
    %1878 = vmatpush2.bf16.msra.mxu0 %v1368
    %1879 = vmatprep.subr.bf16.mxu0 %v1361
    %1880 = vmatpush2.bf16.msra.mxu0 %v1360
    %1881 = vmatprep.subr.bf16.mxu0 %v1353
    %1882 = vmatpush2.bf16.msra.mxu0 %v1352
    %1883 = vmatprep.subr.bf16.mxu0 %v1345
    %1884 = vmatpush2.bf16.msra.mxu0 %v1344
    %1885 = vmatprep.mubr.bf16.mxu0 0
    %1886 = vmatmul.mubr.bf16.gmra.mxu0 0
    %v1887 = vpop.f32.mrf.mxu0
    %v1888 = vadd.f32 0.0, %v1887
    %v1889 = vpop.f32.mrf.mxu0
    %v1890 = vadd.f32 0.0, %v1889
    %v1891 = vpop.f32.mrf.mxu0
    %v1892 = vpop.f32.mrf.mxu0
    %1893 = vdwg.mxu0
    %1894 = vmatprep.subr.bf16.mxu0 %v1339
    %1895 = vmatpush1.bf16.msra.mxu0 %v1338
    %1896 = vmatprep.subr.bf16.mxu0 %v1331
    %1897 = vmatpush1.bf16.msra.mxu0 %v1330
    %1898 = vmatprep.subr.bf16.mxu0 %v1323
    %1899 = vmatpush1.bf16.msra.mxu0 %v1322
    %1900 = vmatprep.subr.bf16.mxu0 %v1315
    %1901 = vmatpush1.bf16.msra.mxu0 %v1314
    %1902 = vmatprep.subr.bf16.mxu0 %v1307
    %1903 = vmatpush1.bf16.msra.mxu0 %v1306
    %1904 = vmatprep.subr.bf16.mxu0 %v1299
    %1905 = vmatpush1.bf16.msra.mxu0 %v1298
    %1906 = vmatprep.subr.bf16.mxu0 %v1291
    %1907 = vmatpush1.bf16.msra.mxu0 %v1290
    %1908 = vmatprep.subr.bf16.mxu0 %v1283
    %1909 = vmatpush1.bf16.msra.mxu0 %v1282
    %1910 = vmatprep.subr.bf16.mxu0 %v1403
    %1911 = vmatpush2.bf16.msra.mxu0 %v1402
    %1912 = vmatprep.subr.bf16.mxu0 %v1395
    %1913 = vmatpush2.bf16.msra.mxu0 %v1394
    %1914 = vmatprep.subr.bf16.mxu0 %v1387
    %1915 = vmatpush2.bf16.msra.mxu0 %v1386
    %1916 = vmatprep.subr.bf16.mxu0 %v1379
    %1917 = vmatpush2.bf16.msra.mxu0 %v1378
    %1918 = vmatprep.subr.bf16.mxu0 %v1371
    %1919 = vmatpush2.bf16.msra.mxu0 %v1370
    %1920 = vmatprep.subr.bf16.mxu0 %v1363
    %1921 = vmatpush2.bf16.msra.mxu0 %v1362
    %1922 = vmatprep.subr.bf16.mxu0 %v1355
    %1923 = vmatpush2.bf16.msra.mxu0 %v1354
    %1924 = vmatprep.subr.bf16.mxu0 %v1347
    %1925 = vmatpush2.bf16.msra.mxu0 %v1346
    %1926 = vmatprep.mubr.bf16.mxu0 0
    %1927 = vmatmul.mubr.bf16.gmra.mxu0 0
    %v1928 = vpop.f32.mrf.mxu0
    %v1929 = vadd.f32 0.0, %v1928
    %v1930 = vpop.f32.mrf.mxu0
    %v1931 = vadd.f32 0.0, %v1930
    %v1932 = vpop.f32.mrf.mxu0
    %v1933 = vpop.f32.mrf.mxu0
    %1934 = vdwg.mxu0
    %1935 = vmatprep.subr.bf16.mxu0 %v1341
    %1936 = vmatpush1.bf16.msra.mxu0 %v1340
    %1937 = vmatprep.subr.bf16.mxu0 %v1333
    %1938 = vmatpush1.bf16.msra.mxu0 %v1332
    %1939 = vmatprep.subr.bf16.mxu0 %v1325
    %1940 = vmatpush1.bf16.msra.mxu0 %v1324
    %1941 = vmatprep.subr.bf16.mxu0 %v1317
    %1942 = vmatpush1.bf16.msra.mxu0 %v1316
    %1943 = vmatprep.subr.bf16.mxu0 %v1309
    %1944 = vmatpush1.bf16.msra.mxu0 %v1308
    %1945 = vmatprep.subr.bf16.mxu0 %v1301
    %1946 = vmatpush1.bf16.msra.mxu0 %v1300
    %1947 = vmatprep.subr.bf16.mxu0 %v1293
    %1948 = vmatpush1.bf16.msra.mxu0 %v1292
    %1949 = vmatprep.subr.bf16.mxu0 %v1285
    %1950 = vmatpush1.bf16.msra.mxu0 %v1284
    %1951 = vmatprep.subr.bf16.mxu0 %v1405
    %1952 = vmatpush2.bf16.msra.mxu0 %v1404
    %1953 = vmatprep.subr.bf16.mxu0 %v1397
    %1954 = vmatpush2.bf16.msra.mxu0 %v1396
    %1955 = vmatprep.subr.bf16.mxu0 %v1389
    %1956 = vmatpush2.bf16.msra.mxu0 %v1388
    %1957 = vmatprep.subr.bf16.mxu0 %v1381
    %1958 = vmatpush2.bf16.msra.mxu0 %v1380
    %1959 = vmatprep.subr.bf16.mxu0 %v1373
    %1960 = vmatpush2.bf16.msra.mxu0 %v1372
    %1961 = vmatprep.subr.bf16.mxu0 %v1365
    %1962 = vmatpush2.bf16.msra.mxu0 %v1364
    %1963 = vmatprep.subr.bf16.mxu0 %v1357
    %1964 = vmatpush2.bf16.msra.mxu0 %v1356
    %1965 = vmatprep.subr.bf16.mxu0 %v1349
    %1966 = vmatpush2.bf16.msra.mxu0 %v1348
    %1967 = vmatprep.mubr.bf16.mxu0 0
    %1968 = vmatmul.mubr.bf16.gmra.mxu0 0
    %v1969 = vpop.f32.mrf.mxu0
    %v1970 = vadd.f32 0.0, %v1969
    %v1971 = vpop.f32.mrf.mxu0
    %v1972 = vadd.f32 0.0, %v1971
    %v1973 = vpop.f32.mrf.mxu0
    %v1974 = vpop.f32.mrf.mxu0
    %1975 = vdwg.mxu0
    %v1976 = vadd.f32 %v1793, %v1847
    %v1977 = vadd.f32 %v1794, %v1849
    %v1978 = vadd.f32 %v1795, %v1888
    %v1979 = vadd.f32 %v1796, %v1890
    %v1980 = vadd.f32 %v1797, %v1929
    %v1981 = vadd.f32 %v1798, %v1931
    %v1982 = vadd.f32 %v1799, %v1970
    %v1983 = vadd.f32 %v1800, %v1972
    %1984 = vmatprep.subr.bf16.mxu0 %v1719
    %1985 = vmatpush1.bf16.msra.mxu0 %v1718
    %1986 = vmatprep.subr.bf16.mxu0 %v1711
    %1987 = vmatpush1.bf16.msra.mxu0 %v1710
    %1988 = vmatprep.subr.bf16.mxu0 %v1703
    %1989 = vmatpush1.bf16.msra.mxu0 %v1702
    %1990 = vmatprep.subr.bf16.mxu0 %v1695
    %1991 = vmatpush1.bf16.msra.mxu0 %v1694
    %1992 = vmatprep.subr.bf16.mxu0 %v1687
    %1993 = vmatpush1.bf16.msra.mxu0 %v1686
    %1994 = vmatprep.subr.bf16.mxu0 %v1679
    %1995 = vmatpush1.bf16.msra.mxu0 %v1678
    %1996 = vmatprep.subr.bf16.mxu0 %v1671
    %1997 = vmatpush1.bf16.msra.mxu0 %v1670
    %1998 = vmatprep.subr.bf16.mxu0 %v1663
    %1999 = vmatpush1.bf16.msra.mxu0 %v1662
    %2000 = vmatprep.subr.bf16.mxu0 %v1783
    %2001 = vmatpush2.bf16.msra.mxu0 %v1782
    %2002 = vmatprep.subr.bf16.mxu0 %v1775
    %2003 = vmatpush2.bf16.msra.mxu0 %v1774
    %2004 = vmatprep.subr.bf16.mxu0 %v1767
    %2005 = vmatpush2.bf16.msra.mxu0 %v1766
    %2006 = vmatprep.subr.bf16.mxu0 %v1759
    %2007 = vmatpush2.bf16.msra.mxu0 %v1758
    %2008 = vmatprep.subr.bf16.mxu0 %v1751
    %2009 = vmatpush2.bf16.msra.mxu0 %v1750
    %2010 = vmatprep.subr.bf16.mxu0 %v1743
    %2011 = vmatpush2.bf16.msra.mxu0 %v1742
    %2012 = vmatprep.subr.bf16.mxu0 %v1735
    %2013 = vmatpush2.bf16.msra.mxu0 %v1734
    %2014 = vmatprep.subr.bf16.mxu0 %v1727
    %2015 = vmatpush2.bf16.msra.mxu0 %v1726
    %2016 = vmatprep.mubr.bf16.mxu0 0
    %2017 = vmatmul.mubr.bf16.gmra.mxu0 0
    %v2018 = vpop.f32.mrf.mxu0
    %v2019 = vadd.f32 0.0, %v2018
    %v2020 = vpop.f32.mrf.mxu0
    %v2021 = vadd.f32 0.0, %v2020
    %v2022 = vpop.f32.mrf.mxu0
    %v2023 = vpop.f32.mrf.mxu0
    %2024 = vdwg.mxu0
    %2025 = vmatprep.subr.bf16.mxu0 %v1721
    %2026 = vmatpush1.bf16.msra.mxu0 %v1720
    %2027 = vmatprep.subr.bf16.mxu0 %v1713
    %2028 = vmatpush1.bf16.msra.mxu0 %v1712
    %2029 = vmatprep.subr.bf16.mxu0 %v1705
    %2030 = vmatpush1.bf16.msra.mxu0 %v1704
    %2031 = vmatprep.subr.bf16.mxu0 %v1697
    %2032 = vmatpush1.bf16.msra.mxu0 %v1696
    %2033 = vmatprep.subr.bf16.mxu0 %v1689
    %2034 = vmatpush1.bf16.msra.mxu0 %v1688
    %2035 = vmatprep.subr.bf16.mxu0 %v1681
    %2036 = vmatpush1.bf16.msra.mxu0 %v1680
    %2037 = vmatprep.subr.bf16.mxu0 %v1673
    %2038 = vmatpush1.bf16.msra.mxu0 %v1672
    %2039 = vmatprep.subr.bf16.mxu0 %v1665
    %2040 = vmatpush1.bf16.msra.mxu0 %v1664
    %2041 = vmatprep.subr.bf16.mxu0 %v1785
    %2042 = vmatpush2.bf16.msra.mxu0 %v1784
    %2043 = vmatprep.subr.bf16.mxu0 %v1777
    %2044 = vmatpush2.bf16.msra.mxu0 %v1776
    %2045 = vmatprep.subr.bf16.mxu0 %v1769
    %2046 = vmatpush2.bf16.msra.mxu0 %v1768
    %2047 = vmatprep.subr.bf16.mxu0 %v1761
    %2048 = vmatpush2.bf16.msra.mxu0 %v1760
    %2049 = vmatprep.subr.bf16.mxu0 %v1753
    %2050 = vmatpush2.bf16.msra.mxu0 %v1752
    %2051 = vmatprep.subr.bf16.mxu0 %v1745
    %2052 = vmatpush2.bf16.msra.mxu0 %v1744
    %2053 = vmatprep.subr.bf16.mxu0 %v1737
    %2054 = vmatpush2.bf16.msra.mxu0 %v1736
    %2055 = vmatprep.subr.bf16.mxu0 %v1729
    %2056 = vmatpush2.bf16.msra.mxu0 %v1728
    %2057 = vmatprep.mubr.bf16.mxu0 0
    %2058 = vmatmul.mubr.bf16.gmra.mxu0 0
    %v2059 = vpop.f32.mrf.mxu0
    %v2060 = vadd.f32 0.0, %v2059
    %v2061 = vpop.f32.mrf.mxu0
    %v2062 = vadd.f32 0.0, %v2061
    %v2063 = vpop.f32.mrf.mxu0
    %v2064 = vpop.f32.mrf.mxu0
    %2065 = vdwg.mxu0
    %2066 = vmatprep.subr.bf16.mxu0 %v1723
    %2067 = vmatpush1.bf16.msra.mxu0 %v1722
    %2068 = vmatprep.subr.bf16.mxu0 %v1715
    %2069 = vmatpush1.bf16.msra.mxu0 %v1714
    %2070 = vmatprep.subr.bf16.mxu0 %v1707
    %2071 = vmatpush1.bf16.msra.mxu0 %v1706
    %2072 = vmatprep.subr.bf16.mxu0 %v1699
    %2073 = vmatpush1.bf16.msra.mxu0 %v1698
    %2074 = vmatprep.subr.bf16.mxu0 %v1691
    %2075 = vmatpush1.bf16.msra.mxu0 %v1690
    %2076 = vmatprep.subr.bf16.mxu0 %v1683
    %2077 = vmatpush1.bf16.msra.mxu0 %v1682
    %2078 = vmatprep.subr.bf16.mxu0 %v1675
    %2079 = vmatpush1.bf16.msra.mxu0 %v1674
    %2080 = vmatprep.subr.bf16.mxu0 %v1667
    %2081 = vmatpush1.bf16.msra.mxu0 %v1666
    %2082 = vmatprep.subr.bf16.mxu0 %v1787
    %2083 = vmatpush2.bf16.msra.mxu0 %v1786
    %2084 = vmatprep.subr.bf16.mxu0 %v1779
    %2085 = vmatpush2.bf16.msra.mxu0 %v1778
    %2086 = vmatprep.subr.bf16.mxu0 %v1771
    %2087 = vmatpush2.bf16.msra.mxu0 %v1770
    %2088 = vmatprep.subr.bf16.mxu0 %v1763
    %2089 = vmatpush2.bf16.msra.mxu0 %v1762
    %2090 = vmatprep.subr.bf16.mxu0 %v1755
    %2091 = vmatpush2.bf16.msra.mxu0 %v1754
    %2092 = vmatprep.subr.bf16.mxu0 %v1747
    %2093 = vmatpush2.bf16.msra.mxu0 %v1746
    %2094 = vmatprep.subr.bf16.mxu0 %v1739
    %2095 = vmatpush2.bf16.msra.mxu0 %v1738
    %2096 = vmatprep.subr.bf16.mxu0 %v1731
    %2097 = vmatpush2.bf16.msra.mxu0 %v1730
    %2098 = vmatprep.mubr.bf16.mxu0 0
    %2099 = vmatmul.mubr.bf16.gmra.mxu0 0
    %v2100 = vpop.f32.mrf.mxu0
    %v2101 = vadd.f32 0.0, %v2100
    %v2102 = vpop.f32.mrf.mxu0
    %v2103 = vadd.f32 0.0, %v2102
    %v2104 = vpop.f32.mrf.mxu0
    %v2105 = vpop.f32.mrf.mxu0
    %2106 = vdwg.mxu0
    %2107 = vmatprep.subr.bf16.mxu0 %v1725
    %2108 = vmatpush1.bf16.msra.mxu0 %v1724
    %2109 = vmatprep.subr.bf16.mxu0 %v1717
    %2110 = vmatpush1.bf16.msra.mxu0 %v1716
    %2111 = vmatprep.subr.bf16.mxu0 %v1709
    %2112 = vmatpush1.bf16.msra.mxu0 %v1708
    %2113 = vmatprep.subr.bf16.mxu0 %v1701
    %2114 = vmatpush1.bf16.msra.mxu0 %v1700
    %2115 = vmatprep.subr.bf16.mxu0 %v1693
    %2116 = vmatpush1.bf16.msra.mxu0 %v1692
    %2117 = vmatprep.subr.bf16.mxu0 %v1685
    %2118 = vmatpush1.bf16.msra.mxu0 %v1684
    %2119 = vmatprep.subr.bf16.mxu0 %v1677
    %2120 = vmatpush1.bf16.msra.mxu0 %v1676
    %2121 = vmatprep.subr.bf16.mxu0 %v1669
    %2122 = vmatpush1.bf16.msra.mxu0 %v1668
    %2123 = vmatprep.subr.bf16.mxu0 %v1789
    %2124 = vmatpush2.bf16.msra.mxu0 %v1788
    %2125 = vmatprep.subr.bf16.mxu0 %v1781
    %2126 = vmatpush2.bf16.msra.mxu0 %v1780
    %2127 = vmatprep.subr.bf16.mxu0 %v1773
    %2128 = vmatpush2.bf16.msra.mxu0 %v1772
    %2129 = vmatprep.subr.bf16.mxu0 %v1765
    %2130 = vmatpush2.bf16.msra.mxu0 %v1764
    %2131 = vmatprep.subr.bf16.mxu0 %v1757
    %2132 = vmatpush2.bf16.msra.mxu0 %v1756
    %2133 = vmatprep.subr.bf16.mxu0 %v1749
    %2134 = vmatpush2.bf16.msra.mxu0 %v1748
    %2135 = vmatprep.subr.bf16.mxu0 %v1741
    %2136 = vmatpush2.bf16.msra.mxu0 %v1740
    %2137 = vmatprep.subr.bf16.mxu0 %v1733
    %2138 = vmatpush2.bf16.msra.mxu0 %v1732
    %2139 = vmatprep.mubr.bf16.mxu0 0
    %2140 = vmatmul.mubr.bf16.gmra.mxu0 0
    %v2141 = vpop.f32.mrf.mxu0
    %v2142 = vadd.f32 0.0, %v2141
    %v2143 = vpop.f32.mrf.mxu0
    %v2144 = vadd.f32 0.0, %v2143
    %v2145 = vpop.f32.mrf.mxu0
    %v2146 = vpop.f32.mrf.mxu0
    %2147 = vdwg.mxu0
    %v2148 = vadd.f32 %v1804, %v2019
    %v2149 = vadd.f32 %v1805, %v2021
    %v2150 = vadd.f32 %v1806, %v2060
    %v2151 = vadd.f32 %v1807, %v2062
    %v2152 = vadd.f32 %v1808, %v2101
    %v2153 = vadd.f32 %v1809, %v2103
    %v2154 = vadd.f32 %v1810, %v2142
    %v2155 = vadd.f32 %v1811, %v2144
    %v2156 = vxor.u32 %v1976, 2147483648
    %v2157 = vxor.u32 %v1977, 2147483648
    %v2158 = vmul.f32 %v2156, 1.442695
    %v2159 = vpow.pop %v2158
    %v2160 = vmul.f32 %v2157, 1.442695
    %v2161 = vpow.pop %v2160
    %v2162 = vadd.f32 %v2159, 1.0
    %v2163 = vadd.f32 %v2161, 1.0
    %v2164 = vrcp.pop %v2162
    %v2165 = vmul.f32 1.0, %v2164
    %v2166 = vrcp.pop %v2163
    %v2167 = vmul.f32 1.0, %v2166
    %v2168 = vxor.u32 %v1978, 2147483648
    %v2169 = vxor.u32 %v1979, 2147483648
    %v2170 = vmul.f32 %v2168, 1.442695
    %v2171 = vpow.pop %v2170
    %v2172 = vmul.f32 %v2169, 1.442695
    %v2173 = vpow.pop %v2172
    %v2174 = vadd.f32 %v2171, 1.0
    %v2175 = vadd.f32 %v2173, 1.0
    %v2176 = vrcp.pop %v2174
    %v2177 = vmul.f32 1.0, %v2176
    %v2178 = vrcp.pop %v2175
    %v2179 = vmul.f32 1.0, %v2178
    %v2180 = vtanh.pop %v1980
    %v2181 = vtanh.pop %v1981
    %v2182 = vxor.u32 %v1982, 2147483648
    %v2183 = vxor.u32 %v1983, 2147483648
    %v2184 = vmul.f32 %v2182, 1.442695
    %v2185 = vpow.pop %v2184
    %v2186 = vmul.f32 %v2183, 1.442695
    %v2187 = vpow.pop %v2186
    %v2188 = vadd.f32 %v2185, 1.0
    %v2189 = vadd.f32 %v2187, 1.0
    %v2190 = vrcp.pop %v2188
    %v2191 = vmul.f32 1.0, %v2190
    %v2192 = vrcp.pop %v2189
    %v2193 = vmul.f32 1.0, %v2192
    %v2194 = vmul.f32 %v2177, 0.0
    %v2195 = vmul.f32 %v2179, 0.0
    %v2196 = vmul.f32 %v2165, %v2180
    %v2197 = vmul.f32 %v2167, %v2181
    %v2198 = vadd.f32 %v2194, %v2196
    %v2199 = vadd.f32 %v2195, %v2197
    %v2200 = vtanh.pop %v2198
    %v2201 = vtanh.pop %v2199
    %v2202 = vmul.f32 %v2191, %v2200
    %v2203 = vmul.f32 %v2193, %v2201
    %v2204 = vxor.u32 %v2148, 2147483648
    %v2205 = vxor.u32 %v2149, 2147483648
    %v2206 = vmul.f32 %v2204, 1.442695
    %v2207 = vpow.pop %v2206
    %v2208 = vmul.f32 %v2205, 1.442695
    %v2209 = vpow.pop %v2208
    %v2210 = vadd.f32 %v2207, 1.0
    %v2211 = vadd.f32 %v2209, 1.0
    %v2212 = vrcp.pop %v2210
    %v2213 = vmul.f32 1.0, %v2212
    %v2214 = vrcp.pop %v2211
    %v2215 = vmul.f32 1.0, %v2214
    %v2216 = vxor.u32 %v2150, 2147483648
    %v2217 = vxor.u32 %v2151, 2147483648
    %v2218 = vmul.f32 %v2216, 1.442695
    %v2219 = vpow.pop %v2218
    %v2220 = vmul.f32 %v2217, 1.442695
    %v2221 = vpow.pop %v2220
    %v2222 = vadd.f32 %v2219, 1.0
    %v2223 = vadd.f32 %v2221, 1.0
    %v2224 = vrcp.pop %v2222
    %v2225 = vmul.f32 1.0, %v2224
    %v2226 = vrcp.pop %v2223
    %v2227 = vmul.f32 1.0, %v2226
    %v2228 = vtanh.pop %v2152
    %v2229 = vtanh.pop %v2153
    %v2230 = vxor.u32 %v2154, 2147483648
    %v2231 = vxor.u32 %v2155, 2147483648
    %v2232 = vmul.f32 %v2230, 1.442695
    %v2233 = vpow.pop %v2232
    %v2234 = vmul.f32 %v2231, 1.442695
    %v2235 = vpow.pop %v2234
    %v2236 = vadd.f32 %v2233, 1.0
    %v2237 = vadd.f32 %v2235, 1.0
    %v2238 = vrcp.pop %v2236
    %v2239 = vmul.f32 1.0, %v2238
    %v2240 = vrcp.pop %v2237
    %v2241 = vmul.f32 1.0, %v2240
    %v2242 = vmul.f32 %v2225, 0.0
    %v2243 = vmul.f32 %v2227, 0.0
    %v2244 = vmul.f32 %v2213, %v2228
    %v2245 = vmul.f32 %v2215, %v2229
    %v2246 = vadd.f32 %v2242, %v2244
    %v2247 = vadd.f32 %v2243, %v2245
    %v2248 = vtanh.pop %v2246
    %v2249 = vtanh.pop %v2247
    %v2250 = vmul.f32 %v2239, %v2248
    %v2251 = vmul.f32 %v2241, %v2249
    %s2252 = smul.u32 1, 16
    %s2253 = smul.addr %s2252, 8
    %s2254 = scalar_lea.vmem [#allocation2], %s2253
    %v2255 = vld [vmem:[%s2254] sm:$0xff]
    %v2256 = vld [vmem:[%s2254 + $0x8] sm:$0xff]
    %v2257 = vld [vmem:[%s2254 + $0x10] sm:$0xff]
    %v2258 = vld [vmem:[%s2254 + $0x18] sm:$0xff]
    %v2259 = vld [vmem:[%s2254 + $0x20] sm:$0xff]
    %v2260 = vld [vmem:[%s2254 + $0x28] sm:$0xff]
    %v2261 = vld [vmem:[%s2254 + $0x30] sm:$0xff]
    %v2262 = vld [vmem:[%s2254 + $0x38] sm:$0xff]
    %s2263 = smul.u32 6, 16
    %s2264 = smul.addr %s2263, 8
    %s2265 = scalar_lea.vmem [#allocation2], %s2264
    %v2266 = vld [vmem:[%s2265 + $0x40] sm:$0xff]
    %v2267 = vld [vmem:[%s2265 + $0x48] sm:$0xff]
    %v2268 = vld [vmem:[%s2265 + $0x50] sm:$0xff]
    %v2269 = vld [vmem:[%s2265 + $0x58] sm:$0xff]
    %v2270 = vld [vmem:[%s2265 + $0x60] sm:$0xff]
    %v2271 = vld [vmem:[%s2265 + $0x68] sm:$0xff]
    %v2272 = vld [vmem:[%s2265 + $0x70] sm:$0xff]
    %v2273 = vld [vmem:[%s2265 + $0x78] sm:$0xff]
    %v2274 = vpack.c.bf16 %v2202, %v2202
    %v2275 = vpack.c.bf16 %v2203, %v2203
    %2276 = vmatprep.subr.bf16.mxu0 %v1335
    %2277 = vmatpush1.bf16.msra.mxu0 %v1334
    %2278 = vmatprep.subr.bf16.mxu0 %v1327
    %2279 = vmatpush1.bf16.msra.mxu0 %v1326
    %2280 = vmatprep.subr.bf16.mxu0 %v1319
    %2281 = vmatpush1.bf16.msra.mxu0 %v1318
    %2282 = vmatprep.subr.bf16.mxu0 %v1311
    %2283 = vmatpush1.bf16.msra.mxu0 %v1310
    %2284 = vmatprep.subr.bf16.mxu0 %v1303
    %2285 = vmatpush1.bf16.msra.mxu0 %v1302
    %2286 = vmatprep.subr.bf16.mxu0 %v1295
    %2287 = vmatpush1.bf16.msra.mxu0 %v1294
    %2288 = vmatprep.subr.bf16.mxu0 %v1287
    %2289 = vmatpush1.bf16.msra.mxu0 %v1286
    %2290 = vmatprep.subr.bf16.mxu0 %v1279
    %2291 = vmatpush1.bf16.msra.mxu0 %v1278
    %2292 = vmatprep.subr.bf16.mxu0 %v1399
    %2293 = vmatpush2.bf16.msra.mxu0 %v1398
    %2294 = vmatprep.subr.bf16.mxu0 %v1391
    %2295 = vmatpush2.bf16.msra.mxu0 %v1390
    %2296 = vmatprep.subr.bf16.mxu0 %v1383
    %2297 = vmatpush2.bf16.msra.mxu0 %v1382
    %2298 = vmatprep.subr.bf16.mxu0 %v1375
    %2299 = vmatpush2.bf16.msra.mxu0 %v1374
    %2300 = vmatprep.subr.bf16.mxu0 %v1367
    %2301 = vmatpush2.bf16.msra.mxu0 %v1366
    %2302 = vmatprep.subr.bf16.mxu0 %v1359
    %2303 = vmatpush2.bf16.msra.mxu0 %v1358
    %2304 = vmatprep.subr.bf16.mxu0 %v1351
    %2305 = vmatpush2.bf16.msra.mxu0 %v1350
    %2306 = vmatprep.subr.bf16.mxu0 %v1343
    %2307 = vmatpush2.bf16.msra.mxu0 %v1342
    %2308 = vmatprep.mubr.bf16.mxu0 %v2275
    %2309 = vmatmul.mubr.bf16.gmra.mxu0 %v2274
    %v2310 = vpop.f32.mrf.mxu0
    %v2311 = vadd.f32 0.0, %v2310
    %v2312 = vpop.f32.mrf.mxu0
    %v2313 = vadd.f32 0.0, %v2312
    %v2314 = vpop.f32.mrf.mxu0
    %v2315 = vpop.f32.mrf.mxu0
    %2316 = vdwg.mxu0
    %2317 = vmatprep.subr.bf16.mxu0 %v1337
    %2318 = vmatpush1.bf16.msra.mxu0 %v1336
    %2319 = vmatprep.subr.bf16.mxu0 %v1329
    %2320 = vmatpush1.bf16.msra.mxu0 %v1328
    %2321 = vmatprep.subr.bf16.mxu0 %v1321
    %2322 = vmatpush1.bf16.msra.mxu0 %v1320
    %2323 = vmatprep.subr.bf16.mxu0 %v1313
    %2324 = vmatpush1.bf16.msra.mxu0 %v1312
    %2325 = vmatprep.subr.bf16.mxu0 %v1305
    %2326 = vmatpush1.bf16.msra.mxu0 %v1304
    %2327 = vmatprep.subr.bf16.mxu0 %v1297
    %2328 = vmatpush1.bf16.msra.mxu0 %v1296
    %2329 = vmatprep.subr.bf16.mxu0 %v1289
    %2330 = vmatpush1.bf16.msra.mxu0 %v1288
    %2331 = vmatprep.subr.bf16.mxu0 %v1281
    %2332 = vmatpush1.bf16.msra.mxu0 %v1280
    %2333 = vmatprep.subr.bf16.mxu0 %v1401
    %2334 = vmatpush2.bf16.msra.mxu0 %v1400
    %2335 = vmatprep.subr.bf16.mxu0 %v1393
    %2336 = vmatpush2.bf16.msra.mxu0 %v1392
    %2337 = vmatprep.subr.bf16.mxu0 %v1385
    %2338 = vmatpush2.bf16.msra.mxu0 %v1384
    %2339 = vmatprep.subr.bf16.mxu0 %v1377
    %2340 = vmatpush2.bf16.msra.mxu0 %v1376
    %2341 = vmatprep.subr.bf16.mxu0 %v1369
    %2342 = vmatpush2.bf16.msra.mxu0 %v1368
    %2343 = vmatprep.subr.bf16.mxu0 %v1361
    %2344 = vmatpush2.bf16.msra.mxu0 %v1360
    %2345 = vmatprep.subr.bf16.mxu0 %v1353
    %2346 = vmatpush2.bf16.msra.mxu0 %v1352
    %2347 = vmatprep.subr.bf16.mxu0 %v1345
    %2348 = vmatpush2.bf16.msra.mxu0 %v1344
    %2349 = vmatprep.mubr.bf16.mxu0 %v2275
    %2350 = vmatmul.mubr.bf16.gmra.mxu0 %v2274
    %v2351 = vpop.f32.mrf.mxu0
    %v2352 = vadd.f32 0.0, %v2351
    %v2353 = vpop.f32.mrf.mxu0
    %v2354 = vadd.f32 0.0, %v2353
    %v2355 = vpop.f32.mrf.mxu0
    %v2356 = vpop.f32.mrf.mxu0
    %2357 = vdwg.mxu0
    %2358 = vmatprep.subr.bf16.mxu0 %v1339
    %2359 = vmatpush1.bf16.msra.mxu0 %v1338
    %2360 = vmatprep.subr.bf16.mxu0 %v1331
    %2361 = vmatpush1.bf16.msra.mxu0 %v1330
    %2362 = vmatprep.subr.bf16.mxu0 %v1323
    %2363 = vmatpush1.bf16.msra.mxu0 %v1322
    %2364 = vmatprep.subr.bf16.mxu0 %v1315
    %2365 = vmatpush1.bf16.msra.mxu0 %v1314
    %2366 = vmatprep.subr.bf16.mxu0 %v1307
    %2367 = vmatpush1.bf16.msra.mxu0 %v1306
    %2368 = vmatprep.subr.bf16.mxu0 %v1299
    %2369 = vmatpush1.bf16.msra.mxu0 %v1298
    %2370 = vmatprep.subr.bf16.mxu0 %v1291
    %2371 = vmatpush1.bf16.msra.mxu0 %v1290
    %2372 = vmatprep.subr.bf16.mxu0 %v1283
    %2373 = vmatpush1.bf16.msra.mxu0 %v1282
    %2374 = vmatprep.subr.bf16.mxu0 %v1403
    %2375 = vmatpush2.bf16.msra.mxu0 %v1402
    %2376 = vmatprep.subr.bf16.mxu0 %v1395
    %2377 = vmatpush2.bf16.msra.mxu0 %v1394
    %2378 = vmatprep.subr.bf16.mxu0 %v1387
    %2379 = vmatpush2.bf16.msra.mxu0 %v1386
    %2380 = vmatprep.subr.bf16.mxu0 %v1379
    %2381 = vmatpush2.bf16.msra.mxu0 %v1378
    %2382 = vmatprep.subr.bf16.mxu0 %v1371
    %2383 = vmatpush2.bf16.msra.mxu0 %v1370
    %2384 = vmatprep.subr.bf16.mxu0 %v1363
    %2385 = vmatpush2.bf16.msra.mxu0 %v1362
    %2386 = vmatprep.subr.bf16.mxu0 %v1355
    %2387 = vmatpush2.bf16.msra.mxu0 %v1354
    %2388 = vmatprep.subr.bf16.mxu0 %v1347
    %2389 = vmatpush2.bf16.msra.mxu0 %v1346
    %2390 = vmatprep.mubr.bf16.mxu0 %v2275
    %2391 = vmatmul.mubr.bf16.gmra.mxu0 %v2274
    %v2392 = vpop.f32.mrf.mxu0
    %v2393 = vadd.f32 0.0, %v2392
    %v2394 = vpop.f32.mrf.mxu0
    %v2395 = vadd.f32 0.0, %v2394
    %v2396 = vpop.f32.mrf.mxu0
    %v2397 = vpop.f32.mrf.mxu0
    %2398 = vdwg.mxu0
    %2399 = vmatprep.subr.bf16.mxu0 %v1341
    %2400 = vmatpush1.bf16.msra.mxu0 %v1340
    %2401 = vmatprep.subr.bf16.mxu0 %v1333
    %2402 = vmatpush1.bf16.msra.mxu0 %v1332
    %2403 = vmatprep.subr.bf16.mxu0 %v1325
    %2404 = vmatpush1.bf16.msra.mxu0 %v1324
    %2405 = vmatprep.subr.bf16.mxu0 %v1317
    %2406 = vmatpush1.bf16.msra.mxu0 %v1316
    %2407 = vmatprep.subr.bf16.mxu0 %v1309
    %2408 = vmatpush1.bf16.msra.mxu0 %v1308
    %2409 = vmatprep.subr.bf16.mxu0 %v1301
    %2410 = vmatpush1.bf16.msra.mxu0 %v1300
    %2411 = vmatprep.subr.bf16.mxu0 %v1293
    %2412 = vmatpush1.bf16.msra.mxu0 %v1292
    %2413 = vmatprep.subr.bf16.mxu0 %v1285
    %2414 = vmatpush1.bf16.msra.mxu0 %v1284
    %2415 = vmatprep.subr.bf16.mxu0 %v1405
    %2416 = vmatpush2.bf16.msra.mxu0 %v1404
    %2417 = vmatprep.subr.bf16.mxu0 %v1397
    %2418 = vmatpush2.bf16.msra.mxu0 %v1396
    %2419 = vmatprep.subr.bf16.mxu0 %v1389
    %2420 = vmatpush2.bf16.msra.mxu0 %v1388
    %2421 = vmatprep.subr.bf16.mxu0 %v1381
    %2422 = vmatpush2.bf16.msra.mxu0 %v1380
    %2423 = vmatprep.subr.bf16.mxu0 %v1373
    %2424 = vmatpush2.bf16.msra.mxu0 %v1372
    %2425 = vmatprep.subr.bf16.mxu0 %v1365
    %2426 = vmatpush2.bf16.msra.mxu0 %v1364
    %2427 = vmatprep.subr.bf16.mxu0 %v1357
    %2428 = vmatpush2.bf16.msra.mxu0 %v1356
    %2429 = vmatprep.subr.bf16.mxu0 %v1349
    %2430 = vmatpush2.bf16.msra.mxu0 %v1348
    %2431 = vmatprep.mubr.bf16.mxu0 %v2275
    %2432 = vmatmul.mubr.bf16.gmra.mxu0 %v2274
    %v2433 = vpop.f32.mrf.mxu0
    %v2434 = vadd.f32 0.0, %v2433
    %v2435 = vpop.f32.mrf.mxu0
    %v2436 = vadd.f32 0.0, %v2435
    %v2437 = vpop.f32.mrf.mxu0
    %v2438 = vpop.f32.mrf.mxu0
    %2439 = vdwg.mxu0
    %v2440 = vadd.f32 %v2255, %v2311
    %v2441 = vadd.f32 %v2256, %v2313
    %v2442 = vadd.f32 %v2257, %v2352
    %v2443 = vadd.f32 %v2258, %v2354
    %v2444 = vadd.f32 %v2259, %v2393
    %v2445 = vadd.f32 %v2260, %v2395
    %v2446 = vadd.f32 %v2261, %v2434
    %v2447 = vadd.f32 %v2262, %v2436
    %v2448 = vpack.c.bf16 %v2250, %v2250
    %v2449 = vpack.c.bf16 %v2251, %v2251
    %2450 = vmatprep.subr.bf16.mxu0 %v1719
    %2451 = vmatpush1.bf16.msra.mxu0 %v1718
    %2452 = vmatprep.subr.bf16.mxu0 %v1711
    %2453 = vmatpush1.bf16.msra.mxu0 %v1710
    %2454 = vmatprep.subr.bf16.mxu0 %v1703
    %2455 = vmatpush1.bf16.msra.mxu0 %v1702
    %2456 = vmatprep.subr.bf16.mxu0 %v1695
    %2457 = vmatpush1.bf16.msra.mxu0 %v1694
    %2458 = vmatprep.subr.bf16.mxu0 %v1687
    %2459 = vmatpush1.bf16.msra.mxu0 %v1686
    %2460 = vmatprep.subr.bf16.mxu0 %v1679
    %2461 = vmatpush1.bf16.msra.mxu0 %v1678
    %2462 = vmatprep.subr.bf16.mxu0 %v1671
    %2463 = vmatpush1.bf16.msra.mxu0 %v1670
    %2464 = vmatprep.subr.bf16.mxu0 %v1663
    %2465 = vmatpush1.bf16.msra.mxu0 %v1662
    %2466 = vmatprep.subr.bf16.mxu0 %v1783
    %2467 = vmatpush2.bf16.msra.mxu0 %v1782
    %2468 = vmatprep.subr.bf16.mxu0 %v1775
    %2469 = vmatpush2.bf16.msra.mxu0 %v1774
    %2470 = vmatprep.subr.bf16.mxu0 %v1767
    %2471 = vmatpush2.bf16.msra.mxu0 %v1766
    %2472 = vmatprep.subr.bf16.mxu0 %v1759
    %2473 = vmatpush2.bf16.msra.mxu0 %v1758
    %2474 = vmatprep.subr.bf16.mxu0 %v1751
    %2475 = vmatpush2.bf16.msra.mxu0 %v1750
    %2476 = vmatprep.subr.bf16.mxu0 %v1743
    %2477 = vmatpush2.bf16.msra.mxu0 %v1742
    %2478 = vmatprep.subr.bf16.mxu0 %v1735
    %2479 = vmatpush2.bf16.msra.mxu0 %v1734
    %2480 = vmatprep.subr.bf16.mxu0 %v1727
    %2481 = vmatpush2.bf16.msra.mxu0 %v1726
    %2482 = vmatprep.mubr.bf16.mxu0 %v2449
    %2483 = vmatmul.mubr.bf16.gmra.mxu0 %v2448
    %v2484 = vpop.f32.mrf.mxu0
    %v2485 = vadd.f32 0.0, %v2484
    %v2486 = vpop.f32.mrf.mxu0
    %v2487 = vadd.f32 0.0, %v2486
    %v2488 = vpop.f32.mrf.mxu0
    %v2489 = vpop.f32.mrf.mxu0
    %2490 = vdwg.mxu0
    %2491 = vmatprep.subr.bf16.mxu0 %v1721
    %2492 = vmatpush1.bf16.msra.mxu0 %v1720
    %2493 = vmatprep.subr.bf16.mxu0 %v1713
    %2494 = vmatpush1.bf16.msra.mxu0 %v1712
    %2495 = vmatprep.subr.bf16.mxu0 %v1705
    %2496 = vmatpush1.bf16.msra.mxu0 %v1704
    %2497 = vmatprep.subr.bf16.mxu0 %v1697
    %2498 = vmatpush1.bf16.msra.mxu0 %v1696
    %2499 = vmatprep.subr.bf16.mxu0 %v1689
    %2500 = vmatpush1.bf16.msra.mxu0 %v1688
    %2501 = vmatprep.subr.bf16.mxu0 %v1681
    %2502 = vmatpush1.bf16.msra.mxu0 %v1680
    %2503 = vmatprep.subr.bf16.mxu0 %v1673
    %2504 = vmatpush1.bf16.msra.mxu0 %v1672
    %2505 = vmatprep.subr.bf16.mxu0 %v1665
    %2506 = vmatpush1.bf16.msra.mxu0 %v1664
    %2507 = vmatprep.subr.bf16.mxu0 %v1785
    %2508 = vmatpush2.bf16.msra.mxu0 %v1784
    %2509 = vmatprep.subr.bf16.mxu0 %v1777
    %2510 = vmatpush2.bf16.msra.mxu0 %v1776
    %2511 = vmatprep.subr.bf16.mxu0 %v1769
    %2512 = vmatpush2.bf16.msra.mxu0 %v1768
    %2513 = vmatprep.subr.bf16.mxu0 %v1761
    %2514 = vmatpush2.bf16.msra.mxu0 %v1760
    %2515 = vmatprep.subr.bf16.mxu0 %v1753
    %2516 = vmatpush2.bf16.msra.mxu0 %v1752
    %2517 = vmatprep.subr.bf16.mxu0 %v1745
    %2518 = vmatpush2.bf16.msra.mxu0 %v1744
    %2519 = vmatprep.subr.bf16.mxu0 %v1737
    %2520 = vmatpush2.bf16.msra.mxu0 %v1736
    %2521 = vmatprep.subr.bf16.mxu0 %v1729
    %2522 = vmatpush2.bf16.msra.mxu0 %v1728
    %2523 = vmatprep.mubr.bf16.mxu0 %v2449
    %2524 = vmatmul.mubr.bf16.gmra.mxu0 %v2448
    %v2525 = vpop.f32.mrf.mxu0
    %v2526 = vadd.f32 0.0, %v2525
    %v2527 = vpop.f32.mrf.mxu0
    %v2528 = vadd.f32 0.0, %v2527
    %v2529 = vpop.f32.mrf.mxu0
    %v2530 = vpop.f32.mrf.mxu0
    %2531 = vdwg.mxu0
    %2532 = vmatprep.subr.bf16.mxu0 %v1723
    %2533 = vmatpush1.bf16.msra.mxu0 %v1722
    %2534 = vmatprep.subr.bf16.mxu0 %v1715
    %2535 = vmatpush1.bf16.msra.mxu0 %v1714
    %2536 = vmatprep.subr.bf16.mxu0 %v1707
    %2537 = vmatpush1.bf16.msra.mxu0 %v1706
    %2538 = vmatprep.subr.bf16.mxu0 %v1699
    %2539 = vmatpush1.bf16.msra.mxu0 %v1698
    %2540 = vmatprep.subr.bf16.mxu0 %v1691
    %2541 = vmatpush1.bf16.msra.mxu0 %v1690
    %2542 = vmatprep.subr.bf16.mxu0 %v1683
    %2543 = vmatpush1.bf16.msra.mxu0 %v1682
    %2544 = vmatprep.subr.bf16.mxu0 %v1675
    %2545 = vmatpush1.bf16.msra.mxu0 %v1674
    %2546 = vmatprep.subr.bf16.mxu0 %v1667
    %2547 = vmatpush1.bf16.msra.mxu0 %v1666
    %2548 = vmatprep.subr.bf16.mxu0 %v1787
    %2549 = vmatpush2.bf16.msra.mxu0 %v1786
    %2550 = vmatprep.subr.bf16.mxu0 %v1779
    %2551 = vmatpush2.bf16.msra.mxu0 %v1778
    %2552 = vmatprep.subr.bf16.mxu0 %v1771
    %2553 = vmatpush2.bf16.msra.mxu0 %v1770
    %2554 = vmatprep.subr.bf16.mxu0 %v1763
    %2555 = vmatpush2.bf16.msra.mxu0 %v1762
    %2556 = vmatprep.subr.bf16.mxu0 %v1755
    %2557 = vmatpush2.bf16.msra.mxu0 %v1754
    %2558 = vmatprep.subr.bf16.mxu0 %v1747
    %2559 = vmatpush2.bf16.msra.mxu0 %v1746
    %2560 = vmatprep.subr.bf16.mxu0 %v1739
    %2561 = vmatpush2.bf16.msra.mxu0 %v1738
    %2562 = vmatprep.subr.bf16.mxu0 %v1731
    %2563 = vmatpush2.bf16.msra.mxu0 %v1730
    %2564 = vmatprep.mubr.bf16.mxu0 %v2449
    %2565 = vmatmul.mubr.bf16.gmra.mxu0 %v2448
    %v2566 = vpop.f32.mrf.mxu0
    %v2567 = vadd.f32 0.0, %v2566
    %v2568 = vpop.f32.mrf.mxu0
    %v2569 = vadd.f32 0.0, %v2568
    %v2570 = vpop.f32.mrf.mxu0
    %v2571 = vpop.f32.mrf.mxu0
    %2572 = vdwg.mxu0
    %2573 = vmatprep.subr.bf16.mxu0 %v1725
    %2574 = vmatpush1.bf16.msra.mxu0 %v1724
    %2575 = vmatprep.subr.bf16.mxu0 %v1717
    %2576 = vmatpush1.bf16.msra.mxu0 %v1716
    %2577 = vmatprep.subr.bf16.mxu0 %v1709
    %2578 = vmatpush1.bf16.msra.mxu0 %v1708
    %2579 = vmatprep.subr.bf16.mxu0 %v1701
    %2580 = vmatpush1.bf16.msra.mxu0 %v1700
    %2581 = vmatprep.subr.bf16.mxu0 %v1693
    %2582 = vmatpush1.bf16.msra.mxu0 %v1692
    %2583 = vmatprep.subr.bf16.mxu0 %v1685
    %2584 = vmatpush1.bf16.msra.mxu0 %v1684
    %2585 = vmatprep.subr.bf16.mxu0 %v1677
    %2586 = vmatpush1.bf16.msra.mxu0 %v1676
    %2587 = vmatprep.subr.bf16.mxu0 %v1669
    %2588 = vmatpush1.bf16.msra.mxu0 %v1668
    %2589 = vmatprep.subr.bf16.mxu0 %v1789
    %2590 = vmatpush2.bf16.msra.mxu0 %v1788
    %2591 = vmatprep.subr.bf16.mxu0 %v1781
    %2592 = vmatpush2.bf16.msra.mxu0 %v1780
    %2593 = vmatprep.subr.bf16.mxu0 %v1773
    %2594 = vmatpush2.bf16.msra.mxu0 %v1772
    %2595 = vmatprep.subr.bf16.mxu0 %v1765
    %2596 = vmatpush2.bf16.msra.mxu0 %v1764
    %2597 = vmatprep.subr.bf16.mxu0 %v1757
    %2598 = vmatpush2.bf16.msra.mxu0 %v1756
    %2599 = vmatprep.subr.bf16.mxu0 %v1749
    %2600 = vmatpush2.bf16.msra.mxu0 %v1748
    %2601 = vmatprep.subr.bf16.mxu0 %v1741
    %2602 = vmatpush2.bf16.msra.mxu0 %v1740
    %2603 = vmatprep.subr.bf16.mxu0 %v1733
    %2604 = vmatpush2.bf16.msra.mxu0 %v1732
    %2605 = vmatprep.mubr.bf16.mxu0 %v2449
    %2606 = vmatmul.mubr.bf16.gmra.mxu0 %v2448
    %v2607 = vpop.f32.mrf.mxu0
    %v2608 = vadd.f32 0.0, %v2607
    %v2609 = vpop.f32.mrf.mxu0
    %v2610 = vadd.f32 0.0, %v2609
    %v2611 = vpop.f32.mrf.mxu0
    %v2612 = vpop.f32.mrf.mxu0
    %2613 = vdwg.mxu0
    %v2614 = vadd.f32 %v2266, %v2485
    %v2615 = vadd.f32 %v2267, %v2487
    %v2616 = vadd.f32 %v2268, %v2526
    %v2617 = vadd.f32 %v2269, %v2528
    %v2618 = vadd.f32 %v2270, %v2567
    %v2619 = vadd.f32 %v2271, %v2569
    %v2620 = vadd.f32 %v2272, %v2608
    %v2621 = vadd.f32 %v2273, %v2610
    %v2622 = vxor.u32 %v2440, 2147483648
    %v2623 = vxor.u32 %v2441, 2147483648
    %v2624 = vmul.f32 %v2622, 1.442695
    %v2625 = vpow.pop %v2624
    %v2626 = vmul.f32 %v2623, 1.442695
    %v2627 = vpow.pop %v2626
    %v2628 = vadd.f32 %v2625, 1.0
    %v2629 = vadd.f32 %v2627, 1.0
    %v2630 = vrcp.pop %v2628
    %v2631 = vmul.f32 1.0, %v2630
    %v2632 = vrcp.pop %v2629
    %v2633 = vmul.f32 1.0, %v2632
    %v2634 = vxor.u32 %v2442, 2147483648
    %v2635 = vxor.u32 %v2443, 2147483648
    %v2636 = vmul.f32 %v2634, 1.442695
    %v2637 = vpow.pop %v2636
    %v2638 = vmul.f32 %v2635, 1.442695
    %v2639 = vpow.pop %v2638
    %v2640 = vadd.f32 %v2637, 1.0
    %v2641 = vadd.f32 %v2639, 1.0
    %v2642 = vrcp.pop %v2640
    %v2643 = vmul.f32 1.0, %v2642
    %v2644 = vrcp.pop %v2641
    %v2645 = vmul.f32 1.0, %v2644
    %v2646 = vtanh.pop %v2444
    %v2647 = vtanh.pop %v2445
    %v2648 = vxor.u32 %v2446, 2147483648
    %v2649 = vxor.u32 %v2447, 2147483648
    %v2650 = vmul.f32 %v2648, 1.442695
    %v2651 = vpow.pop %v2650
    %v2652 = vmul.f32 %v2649, 1.442695
    %v2653 = vpow.pop %v2652
    %v2654 = vadd.f32 %v2651, 1.0
    %v2655 = vadd.f32 %v2653, 1.0
    %v2656 = vrcp.pop %v2654
    %v2657 = vmul.f32 1.0, %v2656
    %v2658 = vrcp.pop %v2655
    %v2659 = vmul.f32 1.0, %v2658
    %v2660 = vmul.f32 %v2643, %v2198
    %v2661 = vmul.f32 %v2645, %v2199
    %v2662 = vmul.f32 %v2631, %v2646
    %v2663 = vmul.f32 %v2633, %v2647
    %v2664 = vadd.f32 %v2660, %v2662
    %v2665 = vadd.f32 %v2661, %v2663
    %v2666 = vtanh.pop %v2664
    %v2667 = vtanh.pop %v2665
    %v2668 = vmul.f32 %v2657, %v2666
    %v2669 = vmul.f32 %v2659, %v2667
    %v2670 = vxor.u32 %v2614, 2147483648
    %v2671 = vxor.u32 %v2615, 2147483648
    %v2672 = vmul.f32 %v2670, 1.442695
    %v2673 = vpow.pop %v2672
    %v2674 = vmul.f32 %v2671, 1.442695
    %v2675 = vpow.pop %v2674
    %v2676 = vadd.f32 %v2673, 1.0
    %v2677 = vadd.f32 %v2675, 1.0
    %v2678 = vrcp.pop %v2676
    %v2679 = vmul.f32 1.0, %v2678
    %v2680 = vrcp.pop %v2677
    %v2681 = vmul.f32 1.0, %v2680
    %v2682 = vxor.u32 %v2616, 2147483648
    %v2683 = vxor.u32 %v2617, 2147483648
    %v2684 = vmul.f32 %v2682, 1.442695
    %v2685 = vpow.pop %v2684
    %v2686 = vmul.f32 %v2683, 1.442695
    %v2687 = vpow.pop %v2686
    %v2688 = vadd.f32 %v2685, 1.0
    %v2689 = vadd.f32 %v2687, 1.0
    %v2690 = vrcp.pop %v2688
    %v2691 = vmul.f32 1.0, %v2690
    %v2692 = vrcp.pop %v2689
    %v2693 = vmul.f32 1.0, %v2692
    %v2694 = vtanh.pop %v2618
    %v2695 = vtanh.pop %v2619
    %v2696 = vxor.u32 %v2620, 2147483648
    %v2697 = vxor.u32 %v2621, 2147483648
    %v2698 = vmul.f32 %v2696, 1.442695
    %v2699 = vpow.pop %v2698
    %v2700 = vmul.f32 %v2697, 1.442695
    %v2701 = vpow.pop %v2700
    %v2702 = vadd.f32 %v2699, 1.0
    %v2703 = vadd.f32 %v2701, 1.0
    %v2704 = vrcp.pop %v2702
    %v2705 = vmul.f32 1.0, %v2704
    %v2706 = vrcp.pop %v2703
    %v2707 = vmul.f32 1.0, %v2706
    %v2708 = vmul.f32 %v2691, %v2246
    %v2709 = vmul.f32 %v2693, %v2247
    %v2710 = vmul.f32 %v2679, %v2694
    %v2711 = vmul.f32 %v2681, %v2695
    %v2712 = vadd.f32 %v2708, %v2710
    %v2713 = vadd.f32 %v2709, %v2711
    %v2714 = vtanh.pop %v2712
    %v2715 = vtanh.pop %v2713
    %v2716 = vmul.f32 %v2705, %v2714
    %v2717 = vmul.f32 %v2707, %v2715
    %s2718 = smul.u32 2, 16
    %s2719 = smul.addr %s2718, 8
    %s2720 = scalar_lea.vmem [#allocation2], %s2719
    %v2721 = vld [vmem:[%s2720] sm:$0xff]
    %v2722 = vld [vmem:[%s2720 + $0x8] sm:$0xff]
    %v2723 = vld [vmem:[%s2720 + $0x10] sm:$0xff]
    %v2724 = vld [vmem:[%s2720 + $0x18] sm:$0xff]
    %v2725 = vld [vmem:[%s2720 + $0x20] sm:$0xff]
    %v2726 = vld [vmem:[%s2720 + $0x28] sm:$0xff]
    %v2727 = vld [vmem:[%s2720 + $0x30] sm:$0xff]
    %v2728 = vld [vmem:[%s2720 + $0x38] sm:$0xff]
    %s2729 = smul.u32 5, 16
    %s2730 = smul.addr %s2729, 8
    %s2731 = scalar_lea.vmem [#allocation2], %s2730
    %v2732 = vld [vmem:[%s2731 + $0x40] sm:$0xff]
    %v2733 = vld [vmem:[%s2731 + $0x48] sm:$0xff]
    %v2734 = vld [vmem:[%s2731 + $0x50] sm:$0xff]
    %v2735 = vld [vmem:[%s2731 + $0x58] sm:$0xff]
    %v2736 = vld [vmem:[%s2731 + $0x60] sm:$0xff]
    %v2737 = vld [vmem:[%s2731 + $0x68] sm:$0xff]
    %v2738 = vld [vmem:[%s2731 + $0x70] sm:$0xff]
    %v2739 = vld [vmem:[%s2731 + $0x78] sm:$0xff]
    %v2740 = vpack.c.bf16 %v2668, %v2668
    %v2741 = vpack.c.bf16 %v2669, %v2669
    %2742 = vmatprep.subr.bf16.mxu0 %v1335
    %2743 = vmatpush1.bf16.msra.mxu0 %v1334
    %2744 = vmatprep.subr.bf16.mxu0 %v1327
    %2745 = vmatpush1.bf16.msra.mxu0 %v1326
    %2746 = vmatprep.subr.bf16.mxu0 %v1319
    %2747 = vmatpush1.bf16.msra.mxu0 %v1318
    %2748 = vmatprep.subr.bf16.mxu0 %v1311
    %2749 = vmatpush1.bf16.msra.mxu0 %v1310
    %2750 = vmatprep.subr.bf16.mxu0 %v1303
    %2751 = vmatpush1.bf16.msra.mxu0 %v1302
    %2752 = vmatprep.subr.bf16.mxu0 %v1295
    %2753 = vmatpush1.bf16.msra.mxu0 %v1294
    %2754 = vmatprep.subr.bf16.mxu0 %v1287
    %2755 = vmatpush1.bf16.msra.mxu0 %v1286
    %2756 = vmatprep.subr.bf16.mxu0 %v1279
    %2757 = vmatpush1.bf16.msra.mxu0 %v1278
    %2758 = vmatprep.subr.bf16.mxu0 %v1399
    %2759 = vmatpush2.bf16.msra.mxu0 %v1398
    %2760 = vmatprep.subr.bf16.mxu0 %v1391
    %2761 = vmatpush2.bf16.msra.mxu0 %v1390
    %2762 = vmatprep.subr.bf16.mxu0 %v1383
    %2763 = vmatpush2.bf16.msra.mxu0 %v1382
    %2764 = vmatprep.subr.bf16.mxu0 %v1375
    %2765 = vmatpush2.bf16.msra.mxu0 %v1374
    %2766 = vmatprep.subr.bf16.mxu0 %v1367
    %2767 = vmatpush2.bf16.msra.mxu0 %v1366
    %2768 = vmatprep.subr.bf16.mxu0 %v1359
    %2769 = vmatpush2.bf16.msra.mxu0 %v1358
    %2770 = vmatprep.subr.bf16.mxu0 %v1351
    %2771 = vmatpush2.bf16.msra.mxu0 %v1350
    %2772 = vmatprep.subr.bf16.mxu0 %v1343
    %2773 = vmatpush2.bf16.msra.mxu0 %v1342
    %2774 = vmatprep.mubr.bf16.mxu0 %v2741
    %2775 = vmatmul.mubr.bf16.gmra.mxu0 %v2740
    %v2776 = vpop.f32.mrf.mxu0
    %v2777 = vadd.f32 0.0, %v2776
    %v2778 = vpop.f32.mrf.mxu0
    %v2779 = vadd.f32 0.0, %v2778
    %v2780 = vpop.f32.mrf.mxu0
    %v2781 = vpop.f32.mrf.mxu0
    %2782 = vdwg.mxu0
    %2783 = vmatprep.subr.bf16.mxu0 %v1337
    %2784 = vmatpush1.bf16.msra.mxu0 %v1336
    %2785 = vmatprep.subr.bf16.mxu0 %v1329
    %2786 = vmatpush1.bf16.msra.mxu0 %v1328
    %2787 = vmatprep.subr.bf16.mxu0 %v1321
    %2788 = vmatpush1.bf16.msra.mxu0 %v1320
    %2789 = vmatprep.subr.bf16.mxu0 %v1313
    %2790 = vmatpush1.bf16.msra.mxu0 %v1312
    %2791 = vmatprep.subr.bf16.mxu0 %v1305
    %2792 = vmatpush1.bf16.msra.mxu0 %v1304
    %2793 = vmatprep.subr.bf16.mxu0 %v1297
    %2794 = vmatpush1.bf16.msra.mxu0 %v1296
    %2795 = vmatprep.subr.bf16.mxu0 %v1289
    %2796 = vmatpush1.bf16.msra.mxu0 %v1288
    %2797 = vmatprep.subr.bf16.mxu0 %v1281
    %2798 = vmatpush1.bf16.msra.mxu0 %v1280
    %2799 = vmatprep.subr.bf16.mxu0 %v1401
    %2800 = vmatpush2.bf16.msra.mxu0 %v1400
    %2801 = vmatprep.subr.bf16.mxu0 %v1393
    %2802 = vmatpush2.bf16.msra.mxu0 %v1392
    %2803 = vmatprep.subr.bf16.mxu0 %v1385
    %2804 = vmatpush2.bf16.msra.mxu0 %v1384
    %2805 = vmatprep.subr.bf16.mxu0 %v1377
    %2806 = vmatpush2.bf16.msra.mxu0 %v1376
    %2807 = vmatprep.subr.bf16.mxu0 %v1369
    %2808 = vmatpush2.bf16.msra.mxu0 %v1368
    %2809 = vmatprep.subr.bf16.mxu0 %v1361
    %2810 = vmatpush2.bf16.msra.mxu0 %v1360
    %2811 = vmatprep.subr.bf16.mxu0 %v1353
    %2812 = vmatpush2.bf16.msra.mxu0 %v1352
    %2813 = vmatprep.subr.bf16.mxu0 %v1345
    %2814 = vmatpush2.bf16.msra.mxu0 %v1344
    %2815 = vmatprep.mubr.bf16.mxu0 %v2741
    %2816 = vmatmul.mubr.bf16.gmra.mxu0 %v2740
    %v2817 = vpop.f32.mrf.mxu0
    %v2818 = vadd.f32 0.0, %v2817
    %v2819 = vpop.f32.mrf.mxu0
    %v2820 = vadd.f32 0.0, %v2819
    %v2821 = vpop.f32.mrf.mxu0
    %v2822 = vpop.f32.mrf.mxu0
    %2823 = vdwg.mxu0
    %2824 = vmatprep.subr.bf16.mxu0 %v1339
    %2825 = vmatpush1.bf16.msra.mxu0 %v1338
    %2826 = vmatprep.subr.bf16.mxu0 %v1331
    %2827 = vmatpush1.bf16.msra.mxu0 %v1330
    %2828 = vmatprep.subr.bf16.mxu0 %v1323
    %2829 = vmatpush1.bf16.msra.mxu0 %v1322
    %2830 = vmatprep.subr.bf16.mxu0 %v1315
    %2831 = vmatpush1.bf16.msra.mxu0 %v1314
    %2832 = vmatprep.subr.bf16.mxu0 %v1307
    %2833 = vmatpush1.bf16.msra.mxu0 %v1306
    %2834 = vmatprep.subr.bf16.mxu0 %v1299
    %2835 = vmatpush1.bf16.msra.mxu0 %v1298
    %2836 = vmatprep.subr.bf16.mxu0 %v1291
    %2837 = vmatpush1.bf16.msra.mxu0 %v1290
    %2838 = vmatprep.subr.bf16.mxu0 %v1283
    %2839 = vmatpush1.bf16.msra.mxu0 %v1282
    %2840 = vmatprep.subr.bf16.mxu0 %v1403
    %2841 = vmatpush2.bf16.msra.mxu0 %v1402
    %2842 = vmatprep.subr.bf16.mxu0 %v1395
    %2843 = vmatpush2.bf16.msra.mxu0 %v1394
    %2844 = vmatprep.subr.bf16.mxu0 %v1387
    %2845 = vmatpush2.bf16.msra.mxu0 %v1386
    %2846 = vmatprep.subr.bf16.mxu0 %v1379
    %2847 = vmatpush2.bf16.msra.mxu0 %v1378
    %2848 = vmatprep.subr.bf16.mxu0 %v1371
    %2849 = vmatpush2.bf16.msra.mxu0 %v1370
    %2850 = vmatprep.subr.bf16.mxu0 %v1363
    %2851 = vmatpush2.bf16.msra.mxu0 %v1362
    %2852 = vmatprep.subr.bf16.mxu0 %v1355
    %2853 = vmatpush2.bf16.msra.mxu0 %v1354
    %2854 = vmatprep.subr.bf16.mxu0 %v1347
    %2855 = vmatpush2.bf16.msra.mxu0 %v1346
    %2856 = vmatprep.mubr.bf16.mxu0 %v2741
    %2857 = vmatmul.mubr.bf16.gmra.mxu0 %v2740
    %v2858 = vpop.f32.mrf.mxu0
    %v2859 = vadd.f32 0.0, %v2858
    %v2860 = vpop.f32.mrf.mxu0
    %v2861 = vadd.f32 0.0, %v2860
    %v2862 = vpop.f32.mrf.mxu0
    %v2863 = vpop.f32.mrf.mxu0
    %2864 = vdwg.mxu0
    %2865 = vmatprep.subr.bf16.mxu0 %v1341
    %2866 = vmatpush1.bf16.msra.mxu0 %v1340
    %2867 = vmatprep.subr.bf16.mxu0 %v1333
    %2868 = vmatpush1.bf16.msra.mxu0 %v1332
    %2869 = vmatprep.subr.bf16.mxu0 %v1325
    %2870 = vmatpush1.bf16.msra.mxu0 %v1324
    %2871 = vmatprep.subr.bf16.mxu0 %v1317
    %2872 = vmatpush1.bf16.msra.mxu0 %v1316
    %2873 = vmatprep.subr.bf16.mxu0 %v1309
    %2874 = vmatpush1.bf16.msra.mxu0 %v1308
    %2875 = vmatprep.subr.bf16.mxu0 %v1301
    %2876 = vmatpush1.bf16.msra.mxu0 %v1300
    %2877 = vmatprep.subr.bf16.mxu0 %v1293
    %2878 = vmatpush1.bf16.msra.mxu0 %v1292
    %2879 = vmatprep.subr.bf16.mxu0 %v1285
    %2880 = vmatpush1.bf16.msra.mxu0 %v1284
    %2881 = vmatprep.subr.bf16.mxu0 %v1405
    %2882 = vmatpush2.bf16.msra.mxu0 %v1404
    %2883 = vmatprep.subr.bf16.mxu0 %v1397
    %2884 = vmatpush2.bf16.msra.mxu0 %v1396
    %2885 = vmatprep.subr.bf16.mxu0 %v1389
    %2886 = vmatpush2.bf16.msra.mxu0 %v1388
    %2887 = vmatprep.subr.bf16.mxu0 %v1381
    %2888 = vmatpush2.bf16.msra.mxu0 %v1380
    %2889 = vmatprep.subr.bf16.mxu0 %v1373
    %2890 = vmatpush2.bf16.msra.mxu0 %v1372
    %2891 = vmatprep.subr.bf16.mxu0 %v1365
    %2892 = vmatpush2.bf16.msra.mxu0 %v1364
    %2893 = vmatprep.subr.bf16.mxu0 %v1357
    %2894 = vmatpush2.bf16.msra.mxu0 %v1356
    %2895 = vmatprep.subr.bf16.mxu0 %v1349
    %2896 = vmatpush2.bf16.msra.mxu0 %v1348
    %2897 = vmatprep.mubr.bf16.mxu0 %v2741
    %2898 = vmatmul.mubr.bf16.gmra.mxu0 %v2740
    %v2899 = vpop.f32.mrf.mxu0
    %v2900 = vadd.f32 0.0, %v2899
    %v2901 = vpop.f32.mrf.mxu0
    %v2902 = vadd.f32 0.0, %v2901
    %v2903 = vpop.f32.mrf.mxu0
    %v2904 = vpop.f32.mrf.mxu0
    %2905 = vdwg.mxu0
    %v2906 = vadd.f32 %v2721, %v2777
    %v2907 = vadd.f32 %v2722, %v2779
    %v2908 = vadd.f32 %v2723, %v2818
    %v2909 = vadd.f32 %v2724, %v2820
    %v2910 = vadd.f32 %v2725, %v2859
    %v2911 = vadd.f32 %v2726, %v2861
    %v2912 = vadd.f32 %v2727, %v2900
    %v2913 = vadd.f32 %v2728, %v2902
    %v2914 = vpack.c.bf16 %v2716, %v2716
    %v2915 = vpack.c.bf16 %v2717, %v2717
    %2916 = vmatprep.subr.bf16.mxu0 %v1719
    %2917 = vmatpush1.bf16.msra.mxu0 %v1718
    %2918 = vmatprep.subr.bf16.mxu0 %v1711
    %2919 = vmatpush1.bf16.msra.mxu0 %v1710
    %2920 = vmatprep.subr.bf16.mxu0 %v1703
    %2921 = vmatpush1.bf16.msra.mxu0 %v1702
    %2922 = vmatprep.subr.bf16.mxu0 %v1695
    %2923 = vmatpush1.bf16.msra.mxu0 %v1694
    %2924 = vmatprep.subr.bf16.mxu0 %v1687
    %2925 = vmatpush1.bf16.msra.mxu0 %v1686
    %2926 = vmatprep.subr.bf16.mxu0 %v1679
    %2927 = vmatpush1.bf16.msra.mxu0 %v1678
    %2928 = vmatprep.subr.bf16.mxu0 %v1671
    %2929 = vmatpush1.bf16.msra.mxu0 %v1670
    %2930 = vmatprep.subr.bf16.mxu0 %v1663
    %2931 = vmatpush1.bf16.msra.mxu0 %v1662
    %2932 = vmatprep.subr.bf16.mxu0 %v1783
    %2933 = vmatpush2.bf16.msra.mxu0 %v1782
    %2934 = vmatprep.subr.bf16.mxu0 %v1775
    %2935 = vmatpush2.bf16.msra.mxu0 %v1774
    %2936 = vmatprep.subr.bf16.mxu0 %v1767
    %2937 = vmatpush2.bf16.msra.mxu0 %v1766
    %2938 = vmatprep.subr.bf16.mxu0 %v1759
    %2939 = vmatpush2.bf16.msra.mxu0 %v1758
    %2940 = vmatprep.subr.bf16.mxu0 %v1751
    %2941 = vmatpush2.bf16.msra.mxu0 %v1750
    %2942 = vmatprep.subr.bf16.mxu0 %v1743
    %2943 = vmatpush2.bf16.msra.mxu0 %v1742
    %2944 = vmatprep.subr.bf16.mxu0 %v1735
    %2945 = vmatpush2.bf16.msra.mxu0 %v1734
    %2946 = vmatprep.subr.bf16.mxu0 %v1727
    %2947 = vmatpush2.bf16.msra.mxu0 %v1726
    %2948 = vmatprep.mubr.bf16.mxu0 %v2915
    %2949 = vmatmul.mubr.bf16.gmra.mxu0 %v2914
    %v2950 = vpop.f32.mrf.mxu0
    %v2951 = vadd.f32 0.0, %v2950
    %v2952 = vpop.f32.mrf.mxu0
    %v2953 = vadd.f32 0.0, %v2952
    %v2954 = vpop.f32.mrf.mxu0
    %v2955 = vpop.f32.mrf.mxu0
    %2956 = vdwg.mxu0
    %2957 = vmatprep.subr.bf16.mxu0 %v1721
    %2958 = vmatpush1.bf16.msra.mxu0 %v1720
    %2959 = vmatprep.subr.bf16.mxu0 %v1713
    %2960 = vmatpush1.bf16.msra.mxu0 %v1712
    %2961 = vmatprep.subr.bf16.mxu0 %v1705
    %2962 = vmatpush1.bf16.msra.mxu0 %v1704
    %2963 = vmatprep.subr.bf16.mxu0 %v1697
    %2964 = vmatpush1.bf16.msra.mxu0 %v1696
    %2965 = vmatprep.subr.bf16.mxu0 %v1689
    %2966 = vmatpush1.bf16.msra.mxu0 %v1688
    %2967 = vmatprep.subr.bf16.mxu0 %v1681
    %2968 = vmatpush1.bf16.msra.mxu0 %v1680
    %2969 = vmatprep.subr.bf16.mxu0 %v1673
    %2970 = vmatpush1.bf16.msra.mxu0 %v1672
    %2971 = vmatprep.subr.bf16.mxu0 %v1665
    %2972 = vmatpush1.bf16.msra.mxu0 %v1664
    %2973 = vmatprep.subr.bf16.mxu0 %v1785
    %2974 = vmatpush2.bf16.msra.mxu0 %v1784
    %2975 = vmatprep.subr.bf16.mxu0 %v1777
    %2976 = vmatpush2.bf16.msra.mxu0 %v1776
    %2977 = vmatprep.subr.bf16.mxu0 %v1769
    %2978 = vmatpush2.bf16.msra.mxu0 %v1768
    %2979 = vmatprep.subr.bf16.mxu0 %v1761
    %2980 = vmatpush2.bf16.msra.mxu0 %v1760
    %2981 = vmatprep.subr.bf16.mxu0 %v1753
    %2982 = vmatpush2.bf16.msra.mxu0 %v1752
    %2983 = vmatprep.subr.bf16.mxu0 %v1745
    %2984 = vmatpush2.bf16.msra.mxu0 %v1744
    %2985 = vmatprep.subr.bf16.mxu0 %v1737
    %2986 = vmatpush2.bf16.msra.mxu0 %v1736
    %2987 = vmatprep.subr.bf16.mxu0 %v1729
    %2988 = vmatpush2.bf16.msra.mxu0 %v1728
    %2989 = vmatprep.mubr.bf16.mxu0 %v2915
    %2990 = vmatmul.mubr.bf16.gmra.mxu0 %v2914
    %v2991 = vpop.f32.mrf.mxu0
    %v2992 = vadd.f32 0.0, %v2991
    %v2993 = vpop.f32.mrf.mxu0
    %v2994 = vadd.f32 0.0, %v2993
    %v2995 = vpop.f32.mrf.mxu0
    %v2996 = vpop.f32.mrf.mxu0
    %2997 = vdwg.mxu0
    %2998 = vmatprep.subr.bf16.mxu0 %v1723
    %2999 = vmatpush1.bf16.msra.mxu0 %v1722
    %3000 = vmatprep.subr.bf16.mxu0 %v1715
    %3001 = vmatpush1.bf16.msra.mxu0 %v1714
    %3002 = vmatprep.subr.bf16.mxu0 %v1707
    %3003 = vmatpush1.bf16.msra.mxu0 %v1706
    %3004 = vmatprep.subr.bf16.mxu0 %v1699
    %3005 = vmatpush1.bf16.msra.mxu0 %v1698
    %3006 = vmatprep.subr.bf16.mxu0 %v1691
    %3007 = vmatpush1.bf16.msra.mxu0 %v1690
    %3008 = vmatprep.subr.bf16.mxu0 %v1683
    %3009 = vmatpush1.bf16.msra.mxu0 %v1682
    %3010 = vmatprep.subr.bf16.mxu0 %v1675
    %3011 = vmatpush1.bf16.msra.mxu0 %v1674
    %3012 = vmatprep.subr.bf16.mxu0 %v1667
    %3013 = vmatpush1.bf16.msra.mxu0 %v1666
    %3014 = vmatprep.subr.bf16.mxu0 %v1787
    %3015 = vmatpush2.bf16.msra.mxu0 %v1786
    %3016 = vmatprep.subr.bf16.mxu0 %v1779
    %3017 = vmatpush2.bf16.msra.mxu0 %v1778
    %3018 = vmatprep.subr.bf16.mxu0 %v1771
    %3019 = vmatpush2.bf16.msra.mxu0 %v1770
    %3020 = vmatprep.subr.bf16.mxu0 %v1763
    %3021 = vmatpush2.bf16.msra.mxu0 %v1762
    %3022 = vmatprep.subr.bf16.mxu0 %v1755
    %3023 = vmatpush2.bf16.msra.mxu0 %v1754
    %3024 = vmatprep.subr.bf16.mxu0 %v1747
    %3025 = vmatpush2.bf16.msra.mxu0 %v1746
    %3026 = vmatprep.subr.bf16.mxu0 %v1739
    %3027 = vmatpush2.bf16.msra.mxu0 %v1738
    %3028 = vmatprep.subr.bf16.mxu0 %v1731
    %3029 = vmatpush2.bf16.msra.mxu0 %v1730
    %3030 = vmatprep.mubr.bf16.mxu0 %v2915
    %3031 = vmatmul.mubr.bf16.gmra.mxu0 %v2914
    %v3032 = vpop.f32.mrf.mxu0
    %v3033 = vadd.f32 0.0, %v3032
    %v3034 = vpop.f32.mrf.mxu0
    %v3035 = vadd.f32 0.0, %v3034
    %v3036 = vpop.f32.mrf.mxu0
    %v3037 = vpop.f32.mrf.mxu0
    %3038 = vdwg.mxu0
    %3039 = vmatprep.subr.bf16.mxu0 %v1725
    %3040 = vmatpush1.bf16.msra.mxu0 %v1724
    %3041 = vmatprep.subr.bf16.mxu0 %v1717
    %3042 = vmatpush1.bf16.msra.mxu0 %v1716
    %3043 = vmatprep.subr.bf16.mxu0 %v1709
    %3044 = vmatpush1.bf16.msra.mxu0 %v1708
    %3045 = vmatprep.subr.bf16.mxu0 %v1701
    %3046 = vmatpush1.bf16.msra.mxu0 %v1700
    %3047 = vmatprep.subr.bf16.mxu0 %v1693
    %3048 = vmatpush1.bf16.msra.mxu0 %v1692
    %3049 = vmatprep.subr.bf16.mxu0 %v1685
    %3050 = vmatpush1.bf16.msra.mxu0 %v1684
    %3051 = vmatprep.subr.bf16.mxu0 %v1677
    %3052 = vmatpush1.bf16.msra.mxu0 %v1676
    %3053 = vmatprep.subr.bf16.mxu0 %v1669
    %3054 = vmatpush1.bf16.msra.mxu0 %v1668
    %3055 = vmatprep.subr.bf16.mxu0 %v1789
    %3056 = vmatpush2.bf16.msra.mxu0 %v1788
    %3057 = vmatprep.subr.bf16.mxu0 %v1781
    %3058 = vmatpush2.bf16.msra.mxu0 %v1780
    %3059 = vmatprep.subr.bf16.mxu0 %v1773
    %3060 = vmatpush2.bf16.msra.mxu0 %v1772
    %3061 = vmatprep.subr.bf16.mxu0 %v1765
    %3062 = vmatpush2.bf16.msra.mxu0 %v1764
    %3063 = vmatprep.subr.bf16.mxu0 %v1757
    %3064 = vmatpush2.bf16.msra.mxu0 %v1756
    %3065 = vmatprep.subr.bf16.mxu0 %v1749
    %3066 = vmatpush2.bf16.msra.mxu0 %v1748
    %3067 = vmatprep.subr.bf16.mxu0 %v1741
    %3068 = vmatpush2.bf16.msra.mxu0 %v1740
    %3069 = vmatprep.subr.bf16.mxu0 %v1733
    %3070 = vmatpush2.bf16.msra.mxu0 %v1732
    %3071 = vmatprep.mubr.bf16.mxu0 %v2915
    %3072 = vmatmul.mubr.bf16.gmra.mxu0 %v2914
    %v3073 = vpop.f32.mrf.mxu0
    %v3074 = vadd.f32 0.0, %v3073
    %v3075 = vpop.f32.mrf.mxu0
    %v3076 = vadd.f32 0.0, %v3075
    %v3077 = vpop.f32.mrf.mxu0
    %v3078 = vpop.f32.mrf.mxu0
    %3079 = vdwg.mxu0
    %v3080 = vadd.f32 %v2732, %v2951
    %v3081 = vadd.f32 %v2733, %v2953
    %v3082 = vadd.f32 %v2734, %v2992
    %v3083 = vadd.f32 %v2735, %v2994
    %v3084 = vadd.f32 %v2736, %v3033
    %v3085 = vadd.f32 %v2737, %v3035
    %v3086 = vadd.f32 %v2738, %v3074
    %v3087 = vadd.f32 %v2739, %v3076
    %v3088 = vxor.u32 %v2906, 2147483648
    %v3089 = vxor.u32 %v2907, 2147483648
    %v3090 = vmul.f32 %v3088, 1.442695
    %v3091 = vpow.pop %v3090
    %v3092 = vmul.f32 %v3089, 1.442695
    %v3093 = vpow.pop %v3092
    %v3094 = vadd.f32 %v3091, 1.0
    %v3095 = vadd.f32 %v3093, 1.0
    %v3096 = vrcp.pop %v3094
    %v3097 = vmul.f32 1.0, %v3096
    %v3098 = vrcp.pop %v3095
    %v3099 = vmul.f32 1.0, %v3098
    %v3100 = vxor.u32 %v2908, 2147483648
    %v3101 = vxor.u32 %v2909, 2147483648
    %v3102 = vmul.f32 %v3100, 1.442695
    %v3103 = vpow.pop %v3102
    %v3104 = vmul.f32 %v3101, 1.442695
    %v3105 = vpow.pop %v3104
    %v3106 = vadd.f32 %v3103, 1.0
    %v3107 = vadd.f32 %v3105, 1.0
    %v3108 = vrcp.pop %v3106
    %v3109 = vmul.f32 1.0, %v3108
    %v3110 = vrcp.pop %v3107
    %v3111 = vmul.f32 1.0, %v3110
    %v3112 = vtanh.pop %v2910
    %v3113 = vtanh.pop %v2911
    %v3114 = vxor.u32 %v2912, 2147483648
    %v3115 = vxor.u32 %v2913, 2147483648
    %v3116 = vmul.f32 %v3114, 1.442695
    %v3117 = vpow.pop %v3116
    %v3118 = vmul.f32 %v3115, 1.442695
    %v3119 = vpow.pop %v3118
    %v3120 = vadd.f32 %v3117, 1.0
    %v3121 = vadd.f32 %v3119, 1.0
    %v3122 = vrcp.pop %v3120
    %v3123 = vmul.f32 1.0, %v3122
    %v3124 = vrcp.pop %v3121
    %v3125 = vmul.f32 1.0, %v3124
    %v3126 = vmul.f32 %v3109, %v2664
    %v3127 = vmul.f32 %v3111, %v2665
    %v3128 = vmul.f32 %v3097, %v3112
    %v3129 = vmul.f32 %v3099, %v3113
    %v3130 = vadd.f32 %v3126, %v3128
    %v3131 = vadd.f32 %v3127, %v3129
    %v3132 = vtanh.pop %v3130
    %v3133 = vtanh.pop %v3131
    %v3134 = vmul.f32 %v3123, %v3132
    %v3135 = vmul.f32 %v3125, %v3133
    %v3136 = vxor.u32 %v3080, 2147483648
    %v3137 = vxor.u32 %v3081, 2147483648
    %v3138 = vmul.f32 %v3136, 1.442695
    %v3139 = vpow.pop %v3138
    %v3140 = vmul.f32 %v3137, 1.442695
    %v3141 = vpow.pop %v3140
    %v3142 = vadd.f32 %v3139, 1.0
    %v3143 = vadd.f32 %v3141, 1.0
    %v3144 = vrcp.pop %v3142
    %v3145 = vmul.f32 1.0, %v3144
    %v3146 = vrcp.pop %v3143
    %v3147 = vmul.f32 1.0, %v3146
    %v3148 = vxor.u32 %v3082, 2147483648
    %v3149 = vxor.u32 %v3083, 2147483648
    %v3150 = vmul.f32 %v3148, 1.442695
    %v3151 = vpow.pop %v3150
    %v3152 = vmul.f32 %v3149, 1.442695
    %v3153 = vpow.pop %v3152
    %v3154 = vadd.f32 %v3151, 1.0
    %v3155 = vadd.f32 %v3153, 1.0
    %v3156 = vrcp.pop %v3154
    %v3157 = vmul.f32 1.0, %v3156
    %v3158 = vrcp.pop %v3155
    %v3159 = vmul.f32 1.0, %v3158
    %v3160 = vtanh.pop %v3084
    %v3161 = vtanh.pop %v3085
    %v3162 = vxor.u32 %v3086, 2147483648
    %v3163 = vxor.u32 %v3087, 2147483648
    %v3164 = vmul.f32 %v3162, 1.442695
    %v3165 = vpow.pop %v3164
    %v3166 = vmul.f32 %v3163, 1.442695
    %v3167 = vpow.pop %v3166
    %v3168 = vadd.f32 %v3165, 1.0
    %v3169 = vadd.f32 %v3167, 1.0
    %v3170 = vrcp.pop %v3168
    %v3171 = vmul.f32 1.0, %v3170
    %v3172 = vrcp.pop %v3169
    %v3173 = vmul.f32 1.0, %v3172
    %v3174 = vmul.f32 %v3157, %v2712
    %v3175 = vmul.f32 %v3159, %v2713
    %v3176 = vmul.f32 %v3145, %v3160
    %v3177 = vmul.f32 %v3147, %v3161
    %v3178 = vadd.f32 %v3174, %v3176
    %v3179 = vadd.f32 %v3175, %v3177
    %v3180 = vtanh.pop %v3178
    %v3181 = vtanh.pop %v3179
    %v3182 = vmul.f32 %v3171, %v3180
    %v3183 = vmul.f32 %v3173, %v3181
    %s3184 = smul.u32 3, 16
    %s3185 = smul.addr %s3184, 8
    %s3186 = scalar_lea.vmem [#allocation2], %s3185
    %v3187 = vld [vmem:[%s3186] sm:$0xff]
    %v3188 = vld [vmem:[%s3186 + $0x8] sm:$0xff]
    %v3189 = vld [vmem:[%s3186 + $0x10] sm:$0xff]
    %v3190 = vld [vmem:[%s3186 + $0x18] sm:$0xff]
    %v3191 = vld [vmem:[%s3186 + $0x20] sm:$0xff]
    %v3192 = vld [vmem:[%s3186 + $0x28] sm:$0xff]
    %v3193 = vld [vmem:[%s3186 + $0x30] sm:$0xff]
    %v3194 = vld [vmem:[%s3186 + $0x38] sm:$0xff]
    %s3195 = smul.u32 4, 16
    %s3196 = smul.addr %s3195, 8
    %s3197 = scalar_lea.vmem [#allocation2], %s3196
    %v3198 = vld [vmem:[%s3197 + $0x40] sm:$0xff]
    %v3199 = vld [vmem:[%s3197 + $0x48] sm:$0xff]
    %v3200 = vld [vmem:[%s3197 + $0x50] sm:$0xff]
    %v3201 = vld [vmem:[%s3197 + $0x58] sm:$0xff]
    %v3202 = vld [vmem:[%s3197 + $0x60] sm:$0xff]
    %v3203 = vld [vmem:[%s3197 + $0x68] sm:$0xff]
    %v3204 = vld [vmem:[%s3197 + $0x70] sm:$0xff]
    %v3205 = vld [vmem:[%s3197 + $0x78] sm:$0xff]
    %v3206 = vpack.c.bf16 %v3134, %v3134
    %v3207 = vpack.c.bf16 %v3135, %v3135
    %3208 = vmatprep.subr.bf16.mxu0 %v1335
    %3209 = vmatpush1.bf16.msra.mxu0 %v1334
    %3210 = vmatprep.subr.bf16.mxu0 %v1327
    %3211 = vmatpush1.bf16.msra.mxu0 %v1326
    %3212 = vmatprep.subr.bf16.mxu0 %v1319
    %3213 = vmatpush1.bf16.msra.mxu0 %v1318
    %3214 = vmatprep.subr.bf16.mxu0 %v1311
    %3215 = vmatpush1.bf16.msra.mxu0 %v1310
    %3216 = vmatprep.subr.bf16.mxu0 %v1303
    %3217 = vmatpush1.bf16.msra.mxu0 %v1302
    %3218 = vmatprep.subr.bf16.mxu0 %v1295
    %3219 = vmatpush1.bf16.msra.mxu0 %v1294
    %3220 = vmatprep.subr.bf16.mxu0 %v1287
    %3221 = vmatpush1.bf16.msra.mxu0 %v1286
    %3222 = vmatprep.subr.bf16.mxu0 %v1279
    %3223 = vmatpush1.bf16.msra.mxu0 %v1278
    %3224 = vmatprep.subr.bf16.mxu0 %v1399
    %3225 = vmatpush2.bf16.msra.mxu0 %v1398
    %3226 = vmatprep.subr.bf16.mxu0 %v1391
    %3227 = vmatpush2.bf16.msra.mxu0 %v1390
    %3228 = vmatprep.subr.bf16.mxu0 %v1383
    %3229 = vmatpush2.bf16.msra.mxu0 %v1382
    %3230 = vmatprep.subr.bf16.mxu0 %v1375
    %3231 = vmatpush2.bf16.msra.mxu0 %v1374
    %3232 = vmatprep.subr.bf16.mxu0 %v1367
    %3233 = vmatpush2.bf16.msra.mxu0 %v1366
    %3234 = vmatprep.subr.bf16.mxu0 %v1359
    %3235 = vmatpush2.bf16.msra.mxu0 %v1358
    %3236 = vmatprep.subr.bf16.mxu0 %v1351
    %3237 = vmatpush2.bf16.msra.mxu0 %v1350
    %3238 = vmatprep.subr.bf16.mxu0 %v1343
    %3239 = vmatpush2.bf16.msra.mxu0 %v1342
    %3240 = vmatprep.mubr.bf16.mxu0 %v3207
    %3241 = vmatmul.mubr.bf16.gmra.mxu0 %v3206
    %v3242 = vpop.f32.mrf.mxu0
    %v3243 = vadd.f32 0.0, %v3242
    %v3244 = vpop.f32.mrf.mxu0
    %v3245 = vadd.f32 0.0, %v3244
    %v3246 = vpop.f32.mrf.mxu0
    %v3247 = vpop.f32.mrf.mxu0
    %3248 = vdwg.mxu0
    %3249 = vmatprep.subr.bf16.mxu0 %v1337
    %3250 = vmatpush1.bf16.msra.mxu0 %v1336
    %3251 = vmatprep.subr.bf16.mxu0 %v1329
    %3252 = vmatpush1.bf16.msra.mxu0 %v1328
    %3253 = vmatprep.subr.bf16.mxu0 %v1321
    %3254 = vmatpush1.bf16.msra.mxu0 %v1320
    %3255 = vmatprep.subr.bf16.mxu0 %v1313
    %3256 = vmatpush1.bf16.msra.mxu0 %v1312
    %3257 = vmatprep.subr.bf16.mxu0 %v1305
    %3258 = vmatpush1.bf16.msra.mxu0 %v1304
    %3259 = vmatprep.subr.bf16.mxu0 %v1297
    %3260 = vmatpush1.bf16.msra.mxu0 %v1296
    %3261 = vmatprep.subr.bf16.mxu0 %v1289
    %3262 = vmatpush1.bf16.msra.mxu0 %v1288
    %3263 = vmatprep.subr.bf16.mxu0 %v1281
    %3264 = vmatpush1.bf16.msra.mxu0 %v1280
    %3265 = vmatprep.subr.bf16.mxu0 %v1401
    %3266 = vmatpush2.bf16.msra.mxu0 %v1400
    %3267 = vmatprep.subr.bf16.mxu0 %v1393
    %3268 = vmatpush2.bf16.msra.mxu0 %v1392
    %3269 = vmatprep.subr.bf16.mxu0 %v1385
    %3270 = vmatpush2.bf16.msra.mxu0 %v1384
    %3271 = vmatprep.subr.bf16.mxu0 %v1377
    %3272 = vmatpush2.bf16.msra.mxu0 %v1376
    %3273 = vmatprep.subr.bf16.mxu0 %v1369
    %3274 = vmatpush2.bf16.msra.mxu0 %v1368
    %3275 = vmatprep.subr.bf16.mxu0 %v1361
    %3276 = vmatpush2.bf16.msra.mxu0 %v1360
    %3277 = vmatprep.subr.bf16.mxu0 %v1353
    %3278 = vmatpush2.bf16.msra.mxu0 %v1352
    %3279 = vmatprep.subr.bf16.mxu0 %v1345
    %3280 = vmatpush2.bf16.msra.mxu0 %v1344
    %3281 = vmatprep.mubr.bf16.mxu0 %v3207
    %3282 = vmatmul.mubr.bf16.gmra.mxu0 %v3206
    %v3283 = vpop.f32.mrf.mxu0
    %v3284 = vadd.f32 0.0, %v3283
    %v3285 = vpop.f32.mrf.mxu0
    %v3286 = vadd.f32 0.0, %v3285
    %v3287 = vpop.f32.mrf.mxu0
    %v3288 = vpop.f32.mrf.mxu0
    %3289 = vdwg.mxu0
    %3290 = vmatprep.subr.bf16.mxu0 %v1339
    %3291 = vmatpush1.bf16.msra.mxu0 %v1338
    %3292 = vmatprep.subr.bf16.mxu0 %v1331
    %3293 = vmatpush1.bf16.msra.mxu0 %v1330
    %3294 = vmatprep.subr.bf16.mxu0 %v1323
    %3295 = vmatpush1.bf16.msra.mxu0 %v1322
    %3296 = vmatprep.subr.bf16.mxu0 %v1315
    %3297 = vmatpush1.bf16.msra.mxu0 %v1314
    %3298 = vmatprep.subr.bf16.mxu0 %v1307
    %3299 = vmatpush1.bf16.msra.mxu0 %v1306
    %3300 = vmatprep.subr.bf16.mxu0 %v1299
    %3301 = vmatpush1.bf16.msra.mxu0 %v1298
    %3302 = vmatprep.subr.bf16.mxu0 %v1291
    %3303 = vmatpush1.bf16.msra.mxu0 %v1290
    %3304 = vmatprep.subr.bf16.mxu0 %v1283
    %3305 = vmatpush1.bf16.msra.mxu0 %v1282
    %3306 = vmatprep.subr.bf16.mxu0 %v1403
    %3307 = vmatpush2.bf16.msra.mxu0 %v1402
    %3308 = vmatprep.subr.bf16.mxu0 %v1395
    %3309 = vmatpush2.bf16.msra.mxu0 %v1394
    %3310 = vmatprep.subr.bf16.mxu0 %v1387
    %3311 = vmatpush2.bf16.msra.mxu0 %v1386
    %3312 = vmatprep.subr.bf16.mxu0 %v1379
    %3313 = vmatpush2.bf16.msra.mxu0 %v1378
    %3314 = vmatprep.subr.bf16.mxu0 %v1371
    %3315 = vmatpush2.bf16.msra.mxu0 %v1370
    %3316 = vmatprep.subr.bf16.mxu0 %v1363
    %3317 = vmatpush2.bf16.msra.mxu0 %v1362
    %3318 = vmatprep.subr.bf16.mxu0 %v1355
    %3319 = vmatpush2.bf16.msra.mxu0 %v1354
    %3320 = vmatprep.subr.bf16.mxu0 %v1347
    %3321 = vmatpush2.bf16.msra.mxu0 %v1346
    %3322 = vmatprep.mubr.bf16.mxu0 %v3207
    %3323 = vmatmul.mubr.bf16.gmra.mxu0 %v3206
    %v3324 = vpop.f32.mrf.mxu0
    %v3325 = vadd.f32 0.0, %v3324
    %v3326 = vpop.f32.mrf.mxu0
    %v3327 = vadd.f32 0.0, %v3326
    %v3328 = vpop.f32.mrf.mxu0
    %v3329 = vpop.f32.mrf.mxu0
    %3330 = vdwg.mxu0
    %3331 = vmatprep.subr.bf16.mxu0 %v1341
    %3332 = vmatpush1.bf16.msra.mxu0 %v1340
    %3333 = vmatprep.subr.bf16.mxu0 %v1333
    %3334 = vmatpush1.bf16.msra.mxu0 %v1332
    %3335 = vmatprep.subr.bf16.mxu0 %v1325
    %3336 = vmatpush1.bf16.msra.mxu0 %v1324
    %3337 = vmatprep.subr.bf16.mxu0 %v1317
    %3338 = vmatpush1.bf16.msra.mxu0 %v1316
    %3339 = vmatprep.subr.bf16.mxu0 %v1309
    %3340 = vmatpush1.bf16.msra.mxu0 %v1308
    %3341 = vmatprep.subr.bf16.mxu0 %v1301
    %3342 = vmatpush1.bf16.msra.mxu0 %v1300
    %3343 = vmatprep.subr.bf16.mxu0 %v1293
    %3344 = vmatpush1.bf16.msra.mxu0 %v1292
    %3345 = vmatprep.subr.bf16.mxu0 %v1285
    %3346 = vmatpush1.bf16.msra.mxu0 %v1284
    %3347 = vmatprep.subr.bf16.mxu0 %v1405
    %3348 = vmatpush2.bf16.msra.mxu0 %v1404
    %3349 = vmatprep.subr.bf16.mxu0 %v1397
    %3350 = vmatpush2.bf16.msra.mxu0 %v1396
    %3351 = vmatprep.subr.bf16.mxu0 %v1389
    %3352 = vmatpush2.bf16.msra.mxu0 %v1388
    %3353 = vmatprep.subr.bf16.mxu0 %v1381
    %3354 = vmatpush2.bf16.msra.mxu0 %v1380
    %3355 = vmatprep.subr.bf16.mxu0 %v1373
    %3356 = vmatpush2.bf16.msra.mxu0 %v1372
    %3357 = vmatprep.subr.bf16.mxu0 %v1365
    %3358 = vmatpush2.bf16.msra.mxu0 %v1364
    %3359 = vmatprep.subr.bf16.mxu0 %v1357
    %3360 = vmatpush2.bf16.msra.mxu0 %v1356
    %3361 = vmatprep.subr.bf16.mxu0 %v1349
    %3362 = vmatpush2.bf16.msra.mxu0 %v1348
    %3363 = vmatprep.mubr.bf16.mxu0 %v3207
    %3364 = vmatmul.mubr.bf16.gmra.mxu0 %v3206
    %v3365 = vpop.f32.mrf.mxu0
    %v3366 = vadd.f32 0.0, %v3365
    %v3367 = vpop.f32.mrf.mxu0
    %v3368 = vadd.f32 0.0, %v3367
    %v3369 = vpop.f32.mrf.mxu0
    %v3370 = vpop.f32.mrf.mxu0
    %3371 = vdwg.mxu0
    %v3372 = vadd.f32 %v3187, %v3243
    %v3373 = vadd.f32 %v3188, %v3245
    %v3374 = vadd.f32 %v3189, %v3284
    %v3375 = vadd.f32 %v3190, %v3286
    %v3376 = vadd.f32 %v3191, %v3325
    %v3377 = vadd.f32 %v3192, %v3327
    %v3378 = vadd.f32 %v3193, %v3366
    %v3379 = vadd.f32 %v3194, %v3368
    %v3380 = vpack.c.bf16 %v3182, %v3182
    %v3381 = vpack.c.bf16 %v3183, %v3183
    %3382 = vmatprep.subr.bf16.mxu0 %v1719
    %3383 = vmatpush1.bf16.msra.mxu0 %v1718
    %3384 = vmatprep.subr.bf16.mxu0 %v1711
    %3385 = vmatpush1.bf16.msra.mxu0 %v1710
    %3386 = vmatprep.subr.bf16.mxu0 %v1703
    %3387 = vmatpush1.bf16.msra.mxu0 %v1702
    %3388 = vmatprep.subr.bf16.mxu0 %v1695
    %3389 = vmatpush1.bf16.msra.mxu0 %v1694
    %3390 = vmatprep.subr.bf16.mxu0 %v1687
    %3391 = vmatpush1.bf16.msra.mxu0 %v1686
    %3392 = vmatprep.subr.bf16.mxu0 %v1679
    %3393 = vmatpush1.bf16.msra.mxu0 %v1678
    %3394 = vmatprep.subr.bf16.mxu0 %v1671
    %3395 = vmatpush1.bf16.msra.mxu0 %v1670
    %3396 = vmatprep.subr.bf16.mxu0 %v1663
    %3397 = vmatpush1.bf16.msra.mxu0 %v1662
    %3398 = vmatprep.subr.bf16.mxu0 %v1783
    %3399 = vmatpush2.bf16.msra.mxu0 %v1782
    %3400 = vmatprep.subr.bf16.mxu0 %v1775
    %3401 = vmatpush2.bf16.msra.mxu0 %v1774
    %3402 = vmatprep.subr.bf16.mxu0 %v1767
    %3403 = vmatpush2.bf16.msra.mxu0 %v1766
    %3404 = vmatprep.subr.bf16.mxu0 %v1759
    %3405 = vmatpush2.bf16.msra.mxu0 %v1758
    %3406 = vmatprep.subr.bf16.mxu0 %v1751
    %3407 = vmatpush2.bf16.msra.mxu0 %v1750
    %3408 = vmatprep.subr.bf16.mxu0 %v1743
    %3409 = vmatpush2.bf16.msra.mxu0 %v1742
    %3410 = vmatprep.subr.bf16.mxu0 %v1735
    %3411 = vmatpush2.bf16.msra.mxu0 %v1734
    %3412 = vmatprep.subr.bf16.mxu0 %v1727
    %3413 = vmatpush2.bf16.msra.mxu0 %v1726
    %3414 = vmatprep.mubr.bf16.mxu0 %v3381
    %3415 = vmatmul.mubr.bf16.gmra.mxu0 %v3380
    %v3416 = vpop.f32.mrf.mxu0
    %v3417 = vadd.f32 0.0, %v3416
    %v3418 = vpop.f32.mrf.mxu0
    %v3419 = vadd.f32 0.0, %v3418
    %v3420 = vpop.f32.mrf.mxu0
    %v3421 = vpop.f32.mrf.mxu0
    %3422 = vdwg.mxu0
    %3423 = vmatprep.subr.bf16.mxu0 %v1721
    %3424 = vmatpush1.bf16.msra.mxu0 %v1720
    %3425 = vmatprep.subr.bf16.mxu0 %v1713
    %3426 = vmatpush1.bf16.msra.mxu0 %v1712
    %3427 = vmatprep.subr.bf16.mxu0 %v1705
    %3428 = vmatpush1.bf16.msra.mxu0 %v1704
    %3429 = vmatprep.subr.bf16.mxu0 %v1697
    %3430 = vmatpush1.bf16.msra.mxu0 %v1696
    %3431 = vmatprep.subr.bf16.mxu0 %v1689
    %3432 = vmatpush1.bf16.msra.mxu0 %v1688
    %3433 = vmatprep.subr.bf16.mxu0 %v1681
    %3434 = vmatpush1.bf16.msra.mxu0 %v1680
    %3435 = vmatprep.subr.bf16.mxu0 %v1673
    %3436 = vmatpush1.bf16.msra.mxu0 %v1672
    %3437 = vmatprep.subr.bf16.mxu0 %v1665
    %3438 = vmatpush1.bf16.msra.mxu0 %v1664
    %3439 = vmatprep.subr.bf16.mxu0 %v1785
    %3440 = vmatpush2.bf16.msra.mxu0 %v1784
    %3441 = vmatprep.subr.bf16.mxu0 %v1777
    %3442 = vmatpush2.bf16.msra.mxu0 %v1776
    %3443 = vmatprep.subr.bf16.mxu0 %v1769
    %3444 = vmatpush2.bf16.msra.mxu0 %v1768
    %3445 = vmatprep.subr.bf16.mxu0 %v1761
    %3446 = vmatpush2.bf16.msra.mxu0 %v1760
    %3447 = vmatprep.subr.bf16.mxu0 %v1753
    %3448 = vmatpush2.bf16.msra.mxu0 %v1752
    %3449 = vmatprep.subr.bf16.mxu0 %v1745
    %3450 = vmatpush2.bf16.msra.mxu0 %v1744
    %3451 = vmatprep.subr.bf16.mxu0 %v1737
    %3452 = vmatpush2.bf16.msra.mxu0 %v1736
    %3453 = vmatprep.subr.bf16.mxu0 %v1729
    %3454 = vmatpush2.bf16.msra.mxu0 %v1728
    %3455 = vmatprep.mubr.bf16.mxu0 %v3381
    %3456 = vmatmul.mubr.bf16.gmra.mxu0 %v3380
    %v3457 = vpop.f32.mrf.mxu0
    %v3458 = vadd.f32 0.0, %v3457
    %v3459 = vpop.f32.mrf.mxu0
    %v3460 = vadd.f32 0.0, %v3459
    %v3461 = vpop.f32.mrf.mxu0
    %v3462 = vpop.f32.mrf.mxu0
    %3463 = vdwg.mxu0
    %3464 = vmatprep.subr.bf16.mxu0 %v1723
    %3465 = vmatpush1.bf16.msra.mxu0 %v1722
    %3466 = vmatprep.subr.bf16.mxu0 %v1715
    %3467 = vmatpush1.bf16.msra.mxu0 %v1714
    %3468 = vmatprep.subr.bf16.mxu0 %v1707
    %3469 = vmatpush1.bf16.msra.mxu0 %v1706
    %3470 = vmatprep.subr.bf16.mxu0 %v1699
    %3471 = vmatpush1.bf16.msra.mxu0 %v1698
    %3472 = vmatprep.subr.bf16.mxu0 %v1691
    %3473 = vmatpush1.bf16.msra.mxu0 %v1690
    %3474 = vmatprep.subr.bf16.mxu0 %v1683
    %3475 = vmatpush1.bf16.msra.mxu0 %v1682
    %3476 = vmatprep.subr.bf16.mxu0 %v1675
    %3477 = vmatpush1.bf16.msra.mxu0 %v1674
    %3478 = vmatprep.subr.bf16.mxu0 %v1667
    %3479 = vmatpush1.bf16.msra.mxu0 %v1666
    %3480 = vmatprep.subr.bf16.mxu0 %v1787
    %3481 = vmatpush2.bf16.msra.mxu0 %v1786
    %3482 = vmatprep.subr.bf16.mxu0 %v1779
    %3483 = vmatpush2.bf16.msra.mxu0 %v1778
    %3484 = vmatprep.subr.bf16.mxu0 %v1771
    %3485 = vmatpush2.bf16.msra.mxu0 %v1770
    %3486 = vmatprep.subr.bf16.mxu0 %v1763
    %3487 = vmatpush2.bf16.msra.mxu0 %v1762
    %3488 = vmatprep.subr.bf16.mxu0 %v1755
    %3489 = vmatpush2.bf16.msra.mxu0 %v1754
    %3490 = vmatprep.subr.bf16.mxu0 %v1747
    %3491 = vmatpush2.bf16.msra.mxu0 %v1746
    %3492 = vmatprep.subr.bf16.mxu0 %v1739
    %3493 = vmatpush2.bf16.msra.mxu0 %v1738
    %3494 = vmatprep.subr.bf16.mxu0 %v1731
    %3495 = vmatpush2.bf16.msra.mxu0 %v1730
    %3496 = vmatprep.mubr.bf16.mxu0 %v3381
    %3497 = vmatmul.mubr.bf16.gmra.mxu0 %v3380
    %v3498 = vpop.f32.mrf.mxu0
    %v3499 = vadd.f32 0.0, %v3498
    %v3500 = vpop.f32.mrf.mxu0
    %v3501 = vadd.f32 0.0, %v3500
    %v3502 = vpop.f32.mrf.mxu0
    %v3503 = vpop.f32.mrf.mxu0
    %3504 = vdwg.mxu0
    %3505 = vmatprep.subr.bf16.mxu0 %v1725
    %3506 = vmatpush1.bf16.msra.mxu0 %v1724
    %3507 = vmatprep.subr.bf16.mxu0 %v1717
    %3508 = vmatpush1.bf16.msra.mxu0 %v1716
    %3509 = vmatprep.subr.bf16.mxu0 %v1709
    %3510 = vmatpush1.bf16.msra.mxu0 %v1708
    %3511 = vmatprep.subr.bf16.mxu0 %v1701
    %3512 = vmatpush1.bf16.msra.mxu0 %v1700
    %3513 = vmatprep.subr.bf16.mxu0 %v1693
    %3514 = vmatpush1.bf16.msra.mxu0 %v1692
    %3515 = vmatprep.subr.bf16.mxu0 %v1685
    %3516 = vmatpush1.bf16.msra.mxu0 %v1684
    %3517 = vmatprep.subr.bf16.mxu0 %v1677
    %3518 = vmatpush1.bf16.msra.mxu0 %v1676
    %3519 = vmatprep.subr.bf16.mxu0 %v1669
    %3520 = vmatpush1.bf16.msra.mxu0 %v1668
    %3521 = vmatprep.subr.bf16.mxu0 %v1789
    %3522 = vmatpush2.bf16.msra.mxu0 %v1788
    %3523 = vmatprep.subr.bf16.mxu0 %v1781
    %3524 = vmatpush2.bf16.msra.mxu0 %v1780
    %3525 = vmatprep.subr.bf16.mxu0 %v1773
    %3526 = vmatpush2.bf16.msra.mxu0 %v1772
    %3527 = vmatprep.subr.bf16.mxu0 %v1765
    %3528 = vmatpush2.bf16.msra.mxu0 %v1764
    %3529 = vmatprep.subr.bf16.mxu0 %v1757
    %3530 = vmatpush2.bf16.msra.mxu0 %v1756
    %3531 = vmatprep.subr.bf16.mxu0 %v1749
    %3532 = vmatpush2.bf16.msra.mxu0 %v1748
    %3533 = vmatprep.subr.bf16.mxu0 %v1741
    %3534 = vmatpush2.bf16.msra.mxu0 %v1740
    %3535 = vmatprep.subr.bf16.mxu0 %v1733
    %3536 = vmatpush2.bf16.msra.mxu0 %v1732
    %3537 = vmatprep.mubr.bf16.mxu0 %v3381
    %3538 = vmatmul.mubr.bf16.gmra.mxu0 %v3380
    %v3539 = vpop.f32.mrf.mxu0
    %v3540 = vadd.f32 0.0, %v3539
    %v3541 = vpop.f32.mrf.mxu0
    %v3542 = vadd.f32 0.0, %v3541
    %v3543 = vpop.f32.mrf.mxu0
    %v3544 = vpop.f32.mrf.mxu0
    %3545 = vdwg.mxu0
    %v3546 = vadd.f32 %v3198, %v3417
    %v3547 = vadd.f32 %v3199, %v3419
    %v3548 = vadd.f32 %v3200, %v3458
    %v3549 = vadd.f32 %v3201, %v3460
    %v3550 = vadd.f32 %v3202, %v3499
    %v3551 = vadd.f32 %v3203, %v3501
    %v3552 = vadd.f32 %v3204, %v3540
    %v3553 = vadd.f32 %v3205, %v3542
    %v3554 = vxor.u32 %v3372, 2147483648
    %v3555 = vxor.u32 %v3373, 2147483648
    %v3556 = vmul.f32 %v3554, 1.442695
    %v3557 = vpow.pop %v3556
    %v3558 = vmul.f32 %v3555, 1.442695
    %v3559 = vpow.pop %v3558
    %v3560 = vadd.f32 %v3557, 1.0
    %v3561 = vadd.f32 %v3559, 1.0
    %v3562 = vrcp.pop %v3560
    %v3563 = vmul.f32 1.0, %v3562
    %v3564 = vrcp.pop %v3561
    %v3565 = vmul.f32 1.0, %v3564
    %v3566 = vxor.u32 %v3374, 2147483648
    %v3567 = vxor.u32 %v3375, 2147483648
    %v3568 = vmul.f32 %v3566, 1.442695
    %v3569 = vpow.pop %v3568
    %v3570 = vmul.f32 %v3567, 1.442695
    %v3571 = vpow.pop %v3570
    %v3572 = vadd.f32 %v3569, 1.0
    %v3573 = vadd.f32 %v3571, 1.0
    %v3574 = vrcp.pop %v3572
    %v3575 = vmul.f32 1.0, %v3574
    %v3576 = vrcp.pop %v3573
    %v3577 = vmul.f32 1.0, %v3576
    %v3578 = vtanh.pop %v3376
    %v3579 = vtanh.pop %v3377
    %v3580 = vxor.u32 %v3378, 2147483648
    %v3581 = vxor.u32 %v3379, 2147483648
    %v3582 = vmul.f32 %v3580, 1.442695
    %v3583 = vpow.pop %v3582
    %v3584 = vmul.f32 %v3581, 1.442695
    %v3585 = vpow.pop %v3584
    %v3586 = vadd.f32 %v3583, 1.0
    %v3587 = vadd.f32 %v3585, 1.0
    %v3588 = vrcp.pop %v3586
    %v3589 = vmul.f32 1.0, %v3588
    %v3590 = vrcp.pop %v3587
    %v3591 = vmul.f32 1.0, %v3590
    %v3592 = vmul.f32 %v3575, %v3130
    %v3593 = vmul.f32 %v3577, %v3131
    %v3594 = vmul.f32 %v3563, %v3578
    %v3595 = vmul.f32 %v3565, %v3579
    %v3596 = vadd.f32 %v3592, %v3594
    %v3597 = vadd.f32 %v3593, %v3595
    %v3598 = vtanh.pop %v3596
    %v3599 = vtanh.pop %v3597
    %v3600 = vmul.f32 %v3589, %v3598
    %v3601 = vmul.f32 %v3591, %v3599
    %v3602 = vxor.u32 %v3546, 2147483648
    %v3603 = vxor.u32 %v3547, 2147483648
    %v3604 = vmul.f32 %v3602, 1.442695
    %v3605 = vpow.pop %v3604
    %v3606 = vmul.f32 %v3603, 1.442695
    %v3607 = vpow.pop %v3606
    %v3608 = vadd.f32 %v3605, 1.0
    %v3609 = vadd.f32 %v3607, 1.0
    %v3610 = vrcp.pop %v3608
    %v3611 = vmul.f32 1.0, %v3610
    %v3612 = vrcp.pop %v3609
    %v3613 = vmul.f32 1.0, %v3612
    %v3614 = vxor.u32 %v3548, 2147483648
    %v3615 = vxor.u32 %v3549, 2147483648
    %v3616 = vmul.f32 %v3614, 1.442695
    %v3617 = vpow.pop %v3616
    %v3618 = vmul.f32 %v3615, 1.442695
    %v3619 = vpow.pop %v3618
    %v3620 = vadd.f32 %v3617, 1.0
    %v3621 = vadd.f32 %v3619, 1.0
    %v3622 = vrcp.pop %v3620
    %v3623 = vmul.f32 1.0, %v3622
    %v3624 = vrcp.pop %v3621
    %v3625 = vmul.f32 1.0, %v3624
    %v3626 = vtanh.pop %v3550
    %v3627 = vtanh.pop %v3551
    %v3628 = vxor.u32 %v3552, 2147483648
    %v3629 = vxor.u32 %v3553, 2147483648
    %v3630 = vmul.f32 %v3628, 1.442695
    %v3631 = vpow.pop %v3630
    %v3632 = vmul.f32 %v3629, 1.442695
    %v3633 = vpow.pop %v3632
    %v3634 = vadd.f32 %v3631, 1.0
    %v3635 = vadd.f32 %v3633, 1.0
    %v3636 = vrcp.pop %v3634
    %v3637 = vmul.f32 1.0, %v3636
    %v3638 = vrcp.pop %v3635
    %v3639 = vmul.f32 1.0, %v3638
    %v3640 = vmul.f32 %v3623, %v3178
    %v3641 = vmul.f32 %v3625, %v3179
    %v3642 = vmul.f32 %v3611, %v3626
    %v3643 = vmul.f32 %v3613, %v3627
    %v3644 = vadd.f32 %v3640, %v3642
    %v3645 = vadd.f32 %v3641, %v3643
    %v3646 = vtanh.pop %v3644
    %v3647 = vtanh.pop %v3645
    %v3648 = vmul.f32 %v3637, %v3646
    %v3649 = vmul.f32 %v3639, %v3647
    %v3650 = vld [vmem:[%s3197] sm:$0xff]
    %v3651 = vld [vmem:[%s3197 + $0x8] sm:$0xff]
    %v3652 = vld [vmem:[%s3197 + $0x10] sm:$0xff]
    %v3653 = vld [vmem:[%s3197 + $0x18] sm:$0xff]
    %v3654 = vld [vmem:[%s3197 + $0x20] sm:$0xff]
    %v3655 = vld [vmem:[%s3197 + $0x28] sm:$0xff]
    %v3656 = vld [vmem:[%s3197 + $0x30] sm:$0xff]
    %v3657 = vld [vmem:[%s3197 + $0x38] sm:$0xff]
    %v3658 = vld [vmem:[%s3186 + $0x40] sm:$0xff]
    %v3659 = vld [vmem:[%s3186 + $0x48] sm:$0xff]
    %v3660 = vld [vmem:[%s3186 + $0x50] sm:$0xff]
    %v3661 = vld [vmem:[%s3186 + $0x58] sm:$0xff]
    %v3662 = vld [vmem:[%s3186 + $0x60] sm:$0xff]
    %v3663 = vld [vmem:[%s3186 + $0x68] sm:$0xff]
    %v3664 = vld [vmem:[%s3186 + $0x70] sm:$0xff]
    %v3665 = vld [vmem:[%s3186 + $0x78] sm:$0xff]
    %v3666 = vpack.c.bf16 %v3600, %v3600
    %v3667 = vpack.c.bf16 %v3601, %v3601
    %3668 = vmatprep.subr.bf16.mxu0 %v1335
    %3669 = vmatpush1.bf16.msra.mxu0 %v1334
    %3670 = vmatprep.subr.bf16.mxu0 %v1327
    %3671 = vmatpush1.bf16.msra.mxu0 %v1326
    %3672 = vmatprep.subr.bf16.mxu0 %v1319
    %3673 = vmatpush1.bf16.msra.mxu0 %v1318
    %3674 = vmatprep.subr.bf16.mxu0 %v1311
    %3675 = vmatpush1.bf16.msra.mxu0 %v1310
    %3676 = vmatprep.subr.bf16.mxu0 %v1303
    %3677 = vmatpush1.bf16.msra.mxu0 %v1302
    %3678 = vmatprep.subr.bf16.mxu0 %v1295
    %3679 = vmatpush1.bf16.msra.mxu0 %v1294
    %3680 = vmatprep.subr.bf16.mxu0 %v1287
    %3681 = vmatpush1.bf16.msra.mxu0 %v1286
    %3682 = vmatprep.subr.bf16.mxu0 %v1279
    %3683 = vmatpush1.bf16.msra.mxu0 %v1278
    %3684 = vmatprep.subr.bf16.mxu0 %v1399
    %3685 = vmatpush2.bf16.msra.mxu0 %v1398
    %3686 = vmatprep.subr.bf16.mxu0 %v1391
    %3687 = vmatpush2.bf16.msra.mxu0 %v1390
    %3688 = vmatprep.subr.bf16.mxu0 %v1383
    %3689 = vmatpush2.bf16.msra.mxu0 %v1382
    %3690 = vmatprep.subr.bf16.mxu0 %v1375
    %3691 = vmatpush2.bf16.msra.mxu0 %v1374
    %3692 = vmatprep.subr.bf16.mxu0 %v1367
    %3693 = vmatpush2.bf16.msra.mxu0 %v1366
    %3694 = vmatprep.subr.bf16.mxu0 %v1359
    %3695 = vmatpush2.bf16.msra.mxu0 %v1358
    %3696 = vmatprep.subr.bf16.mxu0 %v1351
    %3697 = vmatpush2.bf16.msra.mxu0 %v1350
    %3698 = vmatprep.subr.bf16.mxu0 %v1343
    %3699 = vmatpush2.bf16.msra.mxu0 %v1342
    %3700 = vmatprep.mubr.bf16.mxu0 %v3667
    %3701 = vmatmul.mubr.bf16.gmra.mxu0 %v3666
    %v3702 = vpop.f32.mrf.mxu0
    %v3703 = vadd.f32 0.0, %v3702
    %v3704 = vpop.f32.mrf.mxu0
    %v3705 = vadd.f32 0.0, %v3704
    %v3706 = vpop.f32.mrf.mxu0
    %v3707 = vpop.f32.mrf.mxu0
    %3708 = vdwg.mxu0
    %3709 = vmatprep.subr.bf16.mxu0 %v1337
    %3710 = vmatpush1.bf16.msra.mxu0 %v1336
    %3711 = vmatprep.subr.bf16.mxu0 %v1329
    %3712 = vmatpush1.bf16.msra.mxu0 %v1328
    %3713 = vmatprep.subr.bf16.mxu0 %v1321
    %3714 = vmatpush1.bf16.msra.mxu0 %v1320
    %3715 = vmatprep.subr.bf16.mxu0 %v1313
    %3716 = vmatpush1.bf16.msra.mxu0 %v1312
    %3717 = vmatprep.subr.bf16.mxu0 %v1305
    %3718 = vmatpush1.bf16.msra.mxu0 %v1304
    %3719 = vmatprep.subr.bf16.mxu0 %v1297
    %3720 = vmatpush1.bf16.msra.mxu0 %v1296
    %3721 = vmatprep.subr.bf16.mxu0 %v1289
    %3722 = vmatpush1.bf16.msra.mxu0 %v1288
    %3723 = vmatprep.subr.bf16.mxu0 %v1281
    %3724 = vmatpush1.bf16.msra.mxu0 %v1280
    %3725 = vmatprep.subr.bf16.mxu0 %v1401
    %3726 = vmatpush2.bf16.msra.mxu0 %v1400
    %3727 = vmatprep.subr.bf16.mxu0 %v1393
    %3728 = vmatpush2.bf16.msra.mxu0 %v1392
    %3729 = vmatprep.subr.bf16.mxu0 %v1385
    %3730 = vmatpush2.bf16.msra.mxu0 %v1384
    %3731 = vmatprep.subr.bf16.mxu0 %v1377
    %3732 = vmatpush2.bf16.msra.mxu0 %v1376
    %3733 = vmatprep.subr.bf16.mxu0 %v1369
    %3734 = vmatpush2.bf16.msra.mxu0 %v1368
    %3735 = vmatprep.subr.bf16.mxu0 %v1361
    %3736 = vmatpush2.bf16.msra.mxu0 %v1360
    %3737 = vmatprep.subr.bf16.mxu0 %v1353
    %3738 = vmatpush2.bf16.msra.mxu0 %v1352
    %3739 = vmatprep.subr.bf16.mxu0 %v1345
    %3740 = vmatpush2.bf16.msra.mxu0 %v1344
    %3741 = vmatprep.mubr.bf16.mxu0 %v3667
    %3742 = vmatmul.mubr.bf16.gmra.mxu0 %v3666
    %v3743 = vpop.f32.mrf.mxu0
    %v3744 = vadd.f32 0.0, %v3743
    %v3745 = vpop.f32.mrf.mxu0
    %v3746 = vadd.f32 0.0, %v3745
    %v3747 = vpop.f32.mrf.mxu0
    %v3748 = vpop.f32.mrf.mxu0
    %3749 = vdwg.mxu0
    %3750 = vmatprep.subr.bf16.mxu0 %v1339
    %3751 = vmatpush1.bf16.msra.mxu0 %v1338
    %3752 = vmatprep.subr.bf16.mxu0 %v1331
    %3753 = vmatpush1.bf16.msra.mxu0 %v1330
    %3754 = vmatprep.subr.bf16.mxu0 %v1323
    %3755 = vmatpush1.bf16.msra.mxu0 %v1322
    %3756 = vmatprep.subr.bf16.mxu0 %v1315
    %3757 = vmatpush1.bf16.msra.mxu0 %v1314
    %3758 = vmatprep.subr.bf16.mxu0 %v1307
    %3759 = vmatpush1.bf16.msra.mxu0 %v1306
    %3760 = vmatprep.subr.bf16.mxu0 %v1299
    %3761 = vmatpush1.bf16.msra.mxu0 %v1298
    %3762 = vmatprep.subr.bf16.mxu0 %v1291
    %3763 = vmatpush1.bf16.msra.mxu0 %v1290
    %3764 = vmatprep.subr.bf16.mxu0 %v1283
    %3765 = vmatpush1.bf16.msra.mxu0 %v1282
    %3766 = vmatprep.subr.bf16.mxu0 %v1403
    %3767 = vmatpush2.bf16.msra.mxu0 %v1402
    %3768 = vmatprep.subr.bf16.mxu0 %v1395
    %3769 = vmatpush2.bf16.msra.mxu0 %v1394
    %3770 = vmatprep.subr.bf16.mxu0 %v1387
    %3771 = vmatpush2.bf16.msra.mxu0 %v1386
    %3772 = vmatprep.subr.bf16.mxu0 %v1379
    %3773 = vmatpush2.bf16.msra.mxu0 %v1378
    %3774 = vmatprep.subr.bf16.mxu0 %v1371
    %3775 = vmatpush2.bf16.msra.mxu0 %v1370
    %3776 = vmatprep.subr.bf16.mxu0 %v1363
    %3777 = vmatpush2.bf16.msra.mxu0 %v1362
    %3778 = vmatprep.subr.bf16.mxu0 %v1355
    %3779 = vmatpush2.bf16.msra.mxu0 %v1354
    %3780 = vmatprep.subr.bf16.mxu0 %v1347
    %3781 = vmatpush2.bf16.msra.mxu0 %v1346
    %3782 = vmatprep.mubr.bf16.mxu0 %v3667
    %3783 = vmatmul.mubr.bf16.gmra.mxu0 %v3666
    %v3784 = vpop.f32.mrf.mxu0
    %v3785 = vadd.f32 0.0, %v3784
    %v3786 = vpop.f32.mrf.mxu0
    %v3787 = vadd.f32 0.0, %v3786
    %v3788 = vpop.f32.mrf.mxu0
    %v3789 = vpop.f32.mrf.mxu0
    %3790 = vdwg.mxu0
    %3791 = vmatprep.subr.bf16.mxu0 %v1341
    %3792 = vmatpush1.bf16.msra.mxu0 %v1340
    %3793 = vmatprep.subr.bf16.mxu0 %v1333
    %3794 = vmatpush1.bf16.msra.mxu0 %v1332
    %3795 = vmatprep.subr.bf16.mxu0 %v1325
    %3796 = vmatpush1.bf16.msra.mxu0 %v1324
    %3797 = vmatprep.subr.bf16.mxu0 %v1317
    %3798 = vmatpush1.bf16.msra.mxu0 %v1316
    %3799 = vmatprep.subr.bf16.mxu0 %v1309
    %3800 = vmatpush1.bf16.msra.mxu0 %v1308
    %3801 = vmatprep.subr.bf16.mxu0 %v1301
    %3802 = vmatpush1.bf16.msra.mxu0 %v1300
    %3803 = vmatprep.subr.bf16.mxu0 %v1293
    %3804 = vmatpush1.bf16.msra.mxu0 %v1292
    %3805 = vmatprep.subr.bf16.mxu0 %v1285
    %3806 = vmatpush1.bf16.msra.mxu0 %v1284
    %3807 = vmatprep.subr.bf16.mxu0 %v1405
    %3808 = vmatpush2.bf16.msra.mxu0 %v1404
    %3809 = vmatprep.subr.bf16.mxu0 %v1397
    %3810 = vmatpush2.bf16.msra.mxu0 %v1396
    %3811 = vmatprep.subr.bf16.mxu0 %v1389
    %3812 = vmatpush2.bf16.msra.mxu0 %v1388
    %3813 = vmatprep.subr.bf16.mxu0 %v1381
    %3814 = vmatpush2.bf16.msra.mxu0 %v1380
    %3815 = vmatprep.subr.bf16.mxu0 %v1373
    %3816 = vmatpush2.bf16.msra.mxu0 %v1372
    %3817 = vmatprep.subr.bf16.mxu0 %v1365
    %3818 = vmatpush2.bf16.msra.mxu0 %v1364
    %3819 = vmatprep.subr.bf16.mxu0 %v1357
    %3820 = vmatpush2.bf16.msra.mxu0 %v1356
    %3821 = vmatprep.subr.bf16.mxu0 %v1349
    %3822 = vmatpush2.bf16.msra.mxu0 %v1348
    %3823 = vmatprep.mubr.bf16.mxu0 %v3667
    %3824 = vmatmul.mubr.bf16.gmra.mxu0 %v3666
    %v3825 = vpop.f32.mrf.mxu0
    %v3826 = vadd.f32 0.0, %v3825
    %v3827 = vpop.f32.mrf.mxu0
    %v3828 = vadd.f32 0.0, %v3827
    %v3829 = vpop.f32.mrf.mxu0
    %v3830 = vpop.f32.mrf.mxu0
    %3831 = vdwg.mxu0
    %v3832 = vadd.f32 %v3650, %v3703
    %v3833 = vadd.f32 %v3651, %v3705
    %v3834 = vadd.f32 %v3652, %v3744
    %v3835 = vadd.f32 %v3653, %v3746
    %v3836 = vadd.f32 %v3654, %v3785
    %v3837 = vadd.f32 %v3655, %v3787
    %v3838 = vadd.f32 %v3656, %v3826
    %v3839 = vadd.f32 %v3657, %v3828
    %v3840 = vpack.c.bf16 %v3648, %v3648
    %v3841 = vpack.c.bf16 %v3649, %v3649
    %3842 = vmatprep.subr.bf16.mxu0 %v1719
    %3843 = vmatpush1.bf16.msra.mxu0 %v1718
    %3844 = vmatprep.subr.bf16.mxu0 %v1711
    %3845 = vmatpush1.bf16.msra.mxu0 %v1710
    %3846 = vmatprep.subr.bf16.mxu0 %v1703
    %3847 = vmatpush1.bf16.msra.mxu0 %v1702
    %3848 = vmatprep.subr.bf16.mxu0 %v1695
    %3849 = vmatpush1.bf16.msra.mxu0 %v1694
    %3850 = vmatprep.subr.bf16.mxu0 %v1687
    %3851 = vmatpush1.bf16.msra.mxu0 %v1686
    %3852 = vmatprep.subr.bf16.mxu0 %v1679
    %3853 = vmatpush1.bf16.msra.mxu0 %v1678
    %3854 = vmatprep.subr.bf16.mxu0 %v1671
    %3855 = vmatpush1.bf16.msra.mxu0 %v1670
    %3856 = vmatprep.subr.bf16.mxu0 %v1663
    %3857 = vmatpush1.bf16.msra.mxu0 %v1662
    %3858 = vmatprep.subr.bf16.mxu0 %v1783
    %3859 = vmatpush2.bf16.msra.mxu0 %v1782
    %3860 = vmatprep.subr.bf16.mxu0 %v1775
    %3861 = vmatpush2.bf16.msra.mxu0 %v1774
    %3862 = vmatprep.subr.bf16.mxu0 %v1767
    %3863 = vmatpush2.bf16.msra.mxu0 %v1766
    %3864 = vmatprep.subr.bf16.mxu0 %v1759
    %3865 = vmatpush2.bf16.msra.mxu0 %v1758
    %3866 = vmatprep.subr.bf16.mxu0 %v1751
    %3867 = vmatpush2.bf16.msra.mxu0 %v1750
    %3868 = vmatprep.subr.bf16.mxu0 %v1743
    %3869 = vmatpush2.bf16.msra.mxu0 %v1742
    %3870 = vmatprep.subr.bf16.mxu0 %v1735
    %3871 = vmatpush2.bf16.msra.mxu0 %v1734
    %3872 = vmatprep.subr.bf16.mxu0 %v1727
    %3873 = vmatpush2.bf16.msra.mxu0 %v1726
    %3874 = vmatprep.mubr.bf16.mxu0 %v3841
    %3875 = vmatmul.mubr.bf16.gmra.mxu0 %v3840
    %v3876 = vpop.f32.mrf.mxu0
    %v3877 = vadd.f32 0.0, %v3876
    %v3878 = vpop.f32.mrf.mxu0
    %v3879 = vadd.f32 0.0, %v3878
    %v3880 = vpop.f32.mrf.mxu0
    %v3881 = vpop.f32.mrf.mxu0
    %3882 = vdwg.mxu0
    %3883 = vmatprep.subr.bf16.mxu0 %v1721
    %3884 = vmatpush1.bf16.msra.mxu0 %v1720
    %3885 = vmatprep.subr.bf16.mxu0 %v1713
    %3886 = vmatpush1.bf16.msra.mxu0 %v1712
    %3887 = vmatprep.subr.bf16.mxu0 %v1705
    %3888 = vmatpush1.bf16.msra.mxu0 %v1704
    %3889 = vmatprep.subr.bf16.mxu0 %v1697
    %3890 = vmatpush1.bf16.msra.mxu0 %v1696
    %3891 = vmatprep.subr.bf16.mxu0 %v1689
    %3892 = vmatpush1.bf16.msra.mxu0 %v1688
    %3893 = vmatprep.subr.bf16.mxu0 %v1681
    %3894 = vmatpush1.bf16.msra.mxu0 %v1680
    %3895 = vmatprep.subr.bf16.mxu0 %v1673
    %3896 = vmatpush1.bf16.msra.mxu0 %v1672
    %3897 = vmatprep.subr.bf16.mxu0 %v1665
    %3898 = vmatpush1.bf16.msra.mxu0 %v1664
    %3899 = vmatprep.subr.bf16.mxu0 %v1785
    %3900 = vmatpush2.bf16.msra.mxu0 %v1784
    %3901 = vmatprep.subr.bf16.mxu0 %v1777
    %3902 = vmatpush2.bf16.msra.mxu0 %v1776
    %3903 = vmatprep.subr.bf16.mxu0 %v1769
    %3904 = vmatpush2.bf16.msra.mxu0 %v1768
    %3905 = vmatprep.subr.bf16.mxu0 %v1761
    %3906 = vmatpush2.bf16.msra.mxu0 %v1760
    %3907 = vmatprep.subr.bf16.mxu0 %v1753
    %3908 = vmatpush2.bf16.msra.mxu0 %v1752
    %3909 = vmatprep.subr.bf16.mxu0 %v1745
    %3910 = vmatpush2.bf16.msra.mxu0 %v1744
    %3911 = vmatprep.subr.bf16.mxu0 %v1737
    %3912 = vmatpush2.bf16.msra.mxu0 %v1736
    %3913 = vmatprep.subr.bf16.mxu0 %v1729
    %3914 = vmatpush2.bf16.msra.mxu0 %v1728
    %3915 = vmatprep.mubr.bf16.mxu0 %v3841
    %3916 = vmatmul.mubr.bf16.gmra.mxu0 %v3840
    %v3917 = vpop.f32.mrf.mxu0
    %v3918 = vadd.f32 0.0, %v3917
    %v3919 = vpop.f32.mrf.mxu0
    %v3920 = vadd.f32 0.0, %v3919
    %v3921 = vpop.f32.mrf.mxu0
    %v3922 = vpop.f32.mrf.mxu0
    %3923 = vdwg.mxu0
    %3924 = vmatprep.subr.bf16.mxu0 %v1723
    %3925 = vmatpush1.bf16.msra.mxu0 %v1722
    %3926 = vmatprep.subr.bf16.mxu0 %v1715
    %3927 = vmatpush1.bf16.msra.mxu0 %v1714
    %3928 = vmatprep.subr.bf16.mxu0 %v1707
    %3929 = vmatpush1.bf16.msra.mxu0 %v1706
    %3930 = vmatprep.subr.bf16.mxu0 %v1699
    %3931 = vmatpush1.bf16.msra.mxu0 %v1698
    %3932 = vmatprep.subr.bf16.mxu0 %v1691
    %3933 = vmatpush1.bf16.msra.mxu0 %v1690
    %3934 = vmatprep.subr.bf16.mxu0 %v1683
    %3935 = vmatpush1.bf16.msra.mxu0 %v1682
    %3936 = vmatprep.subr.bf16.mxu0 %v1675
    %3937 = vmatpush1.bf16.msra.mxu0 %v1674
    %3938 = vmatprep.subr.bf16.mxu0 %v1667
    %3939 = vmatpush1.bf16.msra.mxu0 %v1666
    %3940 = vmatprep.subr.bf16.mxu0 %v1787
    %3941 = vmatpush2.bf16.msra.mxu0 %v1786
    %3942 = vmatprep.subr.bf16.mxu0 %v1779
    %3943 = vmatpush2.bf16.msra.mxu0 %v1778
    %3944 = vmatprep.subr.bf16.mxu0 %v1771
    %3945 = vmatpush2.bf16.msra.mxu0 %v1770
    %3946 = vmatprep.subr.bf16.mxu0 %v1763
    %3947 = vmatpush2.bf16.msra.mxu0 %v1762
    %3948 = vmatprep.subr.bf16.mxu0 %v1755
    %3949 = vmatpush2.bf16.msra.mxu0 %v1754
    %3950 = vmatprep.subr.bf16.mxu0 %v1747
    %3951 = vmatpush2.bf16.msra.mxu0 %v1746
    %3952 = vmatprep.subr.bf16.mxu0 %v1739
    %3953 = vmatpush2.bf16.msra.mxu0 %v1738
    %3954 = vmatprep.subr.bf16.mxu0 %v1731
    %3955 = vmatpush2.bf16.msra.mxu0 %v1730
    %3956 = vmatprep.mubr.bf16.mxu0 %v3841
    %3957 = vmatmul.mubr.bf16.gmra.mxu0 %v3840
    %v3958 = vpop.f32.mrf.mxu0
    %v3959 = vadd.f32 0.0, %v3958
    %v3960 = vpop.f32.mrf.mxu0
    %v3961 = vadd.f32 0.0, %v3960
    %v3962 = vpop.f32.mrf.mxu0
    %v3963 = vpop.f32.mrf.mxu0
    %3964 = vdwg.mxu0
    %3965 = vmatprep.subr.bf16.mxu0 %v1725
    %3966 = vmatpush1.bf16.msra.mxu0 %v1724
    %3967 = vmatprep.subr.bf16.mxu0 %v1717
    %3968 = vmatpush1.bf16.msra.mxu0 %v1716
    %3969 = vmatprep.subr.bf16.mxu0 %v1709
    %3970 = vmatpush1.bf16.msra.mxu0 %v1708
    %3971 = vmatprep.subr.bf16.mxu0 %v1701
    %3972 = vmatpush1.bf16.msra.mxu0 %v1700
    %3973 = vmatprep.subr.bf16.mxu0 %v1693
    %3974 = vmatpush1.bf16.msra.mxu0 %v1692
    %3975 = vmatprep.subr.bf16.mxu0 %v1685
    %3976 = vmatpush1.bf16.msra.mxu0 %v1684
    %3977 = vmatprep.subr.bf16.mxu0 %v1677
    %3978 = vmatpush1.bf16.msra.mxu0 %v1676
    %3979 = vmatprep.subr.bf16.mxu0 %v1669
    %3980 = vmatpush1.bf16.msra.mxu0 %v1668
    %3981 = vmatprep.subr.bf16.mxu0 %v1789
    %3982 = vmatpush2.bf16.msra.mxu0 %v1788
    %3983 = vmatprep.subr.bf16.mxu0 %v1781
    %3984 = vmatpush2.bf16.msra.mxu0 %v1780
    %3985 = vmatprep.subr.bf16.mxu0 %v1773
    %3986 = vmatpush2.bf16.msra.mxu0 %v1772
    %3987 = vmatprep.subr.bf16.mxu0 %v1765
    %3988 = vmatpush2.bf16.msra.mxu0 %v1764
    %3989 = vmatprep.subr.bf16.mxu0 %v1757
    %3990 = vmatpush2.bf16.msra.mxu0 %v1756
    %3991 = vmatprep.subr.bf16.mxu0 %v1749
    %3992 = vmatpush2.bf16.msra.mxu0 %v1748
    %3993 = vmatprep.subr.bf16.mxu0 %v1741
    %3994 = vmatpush2.bf16.msra.mxu0 %v1740
    %3995 = vmatprep.subr.bf16.mxu0 %v1733
    %3996 = vmatpush2.bf16.msra.mxu0 %v1732
    %3997 = vmatprep.mubr.bf16.mxu0 %v3841
    %3998 = vmatmul.mubr.bf16.gmra.mxu0 %v3840
    %v3999 = vpop.f32.mrf.mxu0
    %v4000 = vadd.f32 0.0, %v3999
    %v4001 = vpop.f32.mrf.mxu0
    %v4002 = vadd.f32 0.0, %v4001
    %v4003 = vpop.f32.mrf.mxu0
    %v4004 = vpop.f32.mrf.mxu0
    %4005 = vdwg.mxu0
    %v4006 = vadd.f32 %v3658, %v3877
    %v4007 = vadd.f32 %v3659, %v3879
    %v4008 = vadd.f32 %v3660, %v3918
    %v4009 = vadd.f32 %v3661, %v3920
    %v4010 = vadd.f32 %v3662, %v3959
    %v4011 = vadd.f32 %v3663, %v3961
    %v4012 = vadd.f32 %v3664, %v4000
    %v4013 = vadd.f32 %v3665, %v4002
    %v4014 = vxor.u32 %v3832, 2147483648
    %v4015 = vxor.u32 %v3833, 2147483648
    %v4016 = vmul.f32 %v4014, 1.442695
    %v4017 = vpow.pop %v4016
    %v4018 = vmul.f32 %v4015, 1.442695
    %v4019 = vpow.pop %v4018
    %v4020 = vadd.f32 %v4017, 1.0
    %v4021 = vadd.f32 %v4019, 1.0
    %v4022 = vrcp.pop %v4020
    %v4023 = vmul.f32 1.0, %v4022
    %v4024 = vrcp.pop %v4021
    %v4025 = vmul.f32 1.0, %v4024
    %v4026 = vxor.u32 %v3834, 2147483648
    %v4027 = vxor.u32 %v3835, 2147483648
    %v4028 = vmul.f32 %v4026, 1.442695
    %v4029 = vpow.pop %v4028
    %v4030 = vmul.f32 %v4027, 1.442695
    %v4031 = vpow.pop %v4030
    %v4032 = vadd.f32 %v4029, 1.0
    %v4033 = vadd.f32 %v4031, 1.0
    %v4034 = vrcp.pop %v4032
    %v4035 = vmul.f32 1.0, %v4034
    %v4036 = vrcp.pop %v4033
    %v4037 = vmul.f32 1.0, %v4036
    %v4038 = vtanh.pop %v3836
    %v4039 = vtanh.pop %v3837
    %v4040 = vxor.u32 %v3838, 2147483648
    %v4041 = vxor.u32 %v3839, 2147483648
    %v4042 = vmul.f32 %v4040, 1.442695
    %v4043 = vpow.pop %v4042
    %v4044 = vmul.f32 %v4041, 1.442695
    %v4045 = vpow.pop %v4044
    %v4046 = vadd.f32 %v4043, 1.0
    %v4047 = vadd.f32 %v4045, 1.0
    %v4048 = vrcp.pop %v4046
    %v4049 = vmul.f32 1.0, %v4048
    %v4050 = vrcp.pop %v4047
    %v4051 = vmul.f32 1.0, %v4050
    %v4052 = vmul.f32 %v4035, %v3596
    %v4053 = vmul.f32 %v4037, %v3597
    %v4054 = vmul.f32 %v4023, %v4038
    %v4055 = vmul.f32 %v4025, %v4039
    %v4056 = vadd.f32 %v4052, %v4054
    %v4057 = vadd.f32 %v4053, %v4055
    %v4058 = vtanh.pop %v4056
    %v4059 = vtanh.pop %v4057
    %v4060 = vmul.f32 %v4049, %v4058
    %v4061 = vmul.f32 %v4051, %v4059
    %v4062 = vxor.u32 %v4006, 2147483648
    %v4063 = vxor.u32 %v4007, 2147483648
    %v4064 = vmul.f32 %v4062, 1.442695
    %v4065 = vpow.pop %v4064
    %v4066 = vmul.f32 %v4063, 1.442695
    %v4067 = vpow.pop %v4066
    %v4068 = vadd.f32 %v4065, 1.0
    %v4069 = vadd.f32 %v4067, 1.0
    %v4070 = vrcp.pop %v4068
    %v4071 = vmul.f32 1.0, %v4070
    %v4072 = vrcp.pop %v4069
    %v4073 = vmul.f32 1.0, %v4072
    %v4074 = vxor.u32 %v4008, 2147483648
    %v4075 = vxor.u32 %v4009, 2147483648
    %v4076 = vmul.f32 %v4074, 1.442695
    %v4077 = vpow.pop %v4076
    %v4078 = vmul.f32 %v4075, 1.442695
    %v4079 = vpow.pop %v4078
    %v4080 = vadd.f32 %v4077, 1.0
    %v4081 = vadd.f32 %v4079, 1.0
    %v4082 = vrcp.pop %v4080
    %v4083 = vmul.f32 1.0, %v4082
    %v4084 = vrcp.pop %v4081
    %v4085 = vmul.f32 1.0, %v4084
    %v4086 = vtanh.pop %v4010
    %v4087 = vtanh.pop %v4011
    %v4088 = vxor.u32 %v4012, 2147483648
    %v4089 = vxor.u32 %v4013, 2147483648
    %v4090 = vmul.f32 %v4088, 1.442695
    %v4091 = vpow.pop %v4090
    %v4092 = vmul.f32 %v4089, 1.442695
    %v4093 = vpow.pop %v4092
    %v4094 = vadd.f32 %v4091, 1.0
    %v4095 = vadd.f32 %v4093, 1.0
    %v4096 = vrcp.pop %v4094
    %v4097 = vmul.f32 1.0, %v4096
    %v4098 = vrcp.pop %v4095
    %v4099 = vmul.f32 1.0, %v4098
    %v4100 = vmul.f32 %v4083, %v3644
    %v4101 = vmul.f32 %v4085, %v3645
    %v4102 = vmul.f32 %v4071, %v4086
    %v4103 = vmul.f32 %v4073, %v4087
    %v4104 = vadd.f32 %v4100, %v4102
    %v4105 = vadd.f32 %v4101, %v4103
    %v4106 = vtanh.pop %v4104
    %v4107 = vtanh.pop %v4105
    %v4108 = vmul.f32 %v4097, %v4106
    %v4109 = vmul.f32 %v4099, %v4107
    %v4110 = vld [vmem:[%s2731] sm:$0xff]
    %v4111 = vld [vmem:[%s2731 + $0x8] sm:$0xff]
    %v4112 = vld [vmem:[%s2731 + $0x10] sm:$0xff]
    %v4113 = vld [vmem:[%s2731 + $0x18] sm:$0xff]
    %v4114 = vld [vmem:[%s2731 + $0x20] sm:$0xff]
    %v4115 = vld [vmem:[%s2731 + $0x28] sm:$0xff]
    %v4116 = vld [vmem:[%s2731 + $0x30] sm:$0xff]
    %v4117 = vld [vmem:[%s2731 + $0x38] sm:$0xff]
    %v4118 = vld [vmem:[%s2720 + $0x40] sm:$0xff]
    %v4119 = vld [vmem:[%s2720 + $0x48] sm:$0xff]
    %v4120 = vld [vmem:[%s2720 + $0x50] sm:$0xff]
    %v4121 = vld [vmem:[%s2720 + $0x58] sm:$0xff]
    %v4122 = vld [vmem:[%s2720 + $0x60] sm:$0xff]
    %v4123 = vld [vmem:[%s2720 + $0x68] sm:$0xff]
    %v4124 = vld [vmem:[%s2720 + $0x70] sm:$0xff]
    %v4125 = vld [vmem:[%s2720 + $0x78] sm:$0xff]
    %v4126 = vpack.c.bf16 %v4060, %v4060
    %v4127 = vpack.c.bf16 %v4061, %v4061
    %4128 = vmatprep.subr.bf16.mxu0 %v1335
    %4129 = vmatpush1.bf16.msra.mxu0 %v1334
    %4130 = vmatprep.subr.bf16.mxu0 %v1327
    %4131 = vmatpush1.bf16.msra.mxu0 %v1326
    %4132 = vmatprep.subr.bf16.mxu0 %v1319
    %4133 = vmatpush1.bf16.msra.mxu0 %v1318
    %4134 = vmatprep.subr.bf16.mxu0 %v1311
    %4135 = vmatpush1.bf16.msra.mxu0 %v1310
    %4136 = vmatprep.subr.bf16.mxu0 %v1303
    %4137 = vmatpush1.bf16.msra.mxu0 %v1302
    %4138 = vmatprep.subr.bf16.mxu0 %v1295
    %4139 = vmatpush1.bf16.msra.mxu0 %v1294
    %4140 = vmatprep.subr.bf16.mxu0 %v1287
    %4141 = vmatpush1.bf16.msra.mxu0 %v1286
    %4142 = vmatprep.subr.bf16.mxu0 %v1279
    %4143 = vmatpush1.bf16.msra.mxu0 %v1278
    %4144 = vmatprep.subr.bf16.mxu0 %v1399
    %4145 = vmatpush2.bf16.msra.mxu0 %v1398
    %4146 = vmatprep.subr.bf16.mxu0 %v1391
    %4147 = vmatpush2.bf16.msra.mxu0 %v1390
    %4148 = vmatprep.subr.bf16.mxu0 %v1383
    %4149 = vmatpush2.bf16.msra.mxu0 %v1382
    %4150 = vmatprep.subr.bf16.mxu0 %v1375
    %4151 = vmatpush2.bf16.msra.mxu0 %v1374
    %4152 = vmatprep.subr.bf16.mxu0 %v1367
    %4153 = vmatpush2.bf16.msra.mxu0 %v1366
    %4154 = vmatprep.subr.bf16.mxu0 %v1359
    %4155 = vmatpush2.bf16.msra.mxu0 %v1358
    %4156 = vmatprep.subr.bf16.mxu0 %v1351
    %4157 = vmatpush2.bf16.msra.mxu0 %v1350
    %4158 = vmatprep.subr.bf16.mxu0 %v1343
    %4159 = vmatpush2.bf16.msra.mxu0 %v1342
    %4160 = vmatprep.mubr.bf16.mxu0 %v4127
    %4161 = vmatmul.mubr.bf16.gmra.mxu0 %v4126
    %v4162 = vpop.f32.mrf.mxu0
    %v4163 = vadd.f32 0.0, %v4162
    %v4164 = vpop.f32.mrf.mxu0
    %v4165 = vadd.f32 0.0, %v4164
    %v4166 = vpop.f32.mrf.mxu0
    %v4167 = vpop.f32.mrf.mxu0
    %4168 = vdwg.mxu0
    %4169 = vmatprep.subr.bf16.mxu0 %v1337
    %4170 = vmatpush1.bf16.msra.mxu0 %v1336
    %4171 = vmatprep.subr.bf16.mxu0 %v1329
    %4172 = vmatpush1.bf16.msra.mxu0 %v1328
    %4173 = vmatprep.subr.bf16.mxu0 %v1321
    %4174 = vmatpush1.bf16.msra.mxu0 %v1320
    %4175 = vmatprep.subr.bf16.mxu0 %v1313
    %4176 = vmatpush1.bf16.msra.mxu0 %v1312
    %4177 = vmatprep.subr.bf16.mxu0 %v1305
    %4178 = vmatpush1.bf16.msra.mxu0 %v1304
    %4179 = vmatprep.subr.bf16.mxu0 %v1297
    %4180 = vmatpush1.bf16.msra.mxu0 %v1296
    %4181 = vmatprep.subr.bf16.mxu0 %v1289
    %4182 = vmatpush1.bf16.msra.mxu0 %v1288
    %4183 = vmatprep.subr.bf16.mxu0 %v1281
    %4184 = vmatpush1.bf16.msra.mxu0 %v1280
    %4185 = vmatprep.subr.bf16.mxu0 %v1401
    %4186 = vmatpush2.bf16.msra.mxu0 %v1400
    %4187 = vmatprep.subr.bf16.mxu0 %v1393
    %4188 = vmatpush2.bf16.msra.mxu0 %v1392
    %4189 = vmatprep.subr.bf16.mxu0 %v1385
    %4190 = vmatpush2.bf16.msra.mxu0 %v1384
    %4191 = vmatprep.subr.bf16.mxu0 %v1377
    %4192 = vmatpush2.bf16.msra.mxu0 %v1376
    %4193 = vmatprep.subr.bf16.mxu0 %v1369
    %4194 = vmatpush2.bf16.msra.mxu0 %v1368
    %4195 = vmatprep.subr.bf16.mxu0 %v1361
    %4196 = vmatpush2.bf16.msra.mxu0 %v1360
    %4197 = vmatprep.subr.bf16.mxu0 %v1353
    %4198 = vmatpush2.bf16.msra.mxu0 %v1352
    %4199 = vmatprep.subr.bf16.mxu0 %v1345
    %4200 = vmatpush2.bf16.msra.mxu0 %v1344
    %4201 = vmatprep.mubr.bf16.mxu0 %v4127
    %4202 = vmatmul.mubr.bf16.gmra.mxu0 %v4126
    %v4203 = vpop.f32.mrf.mxu0
    %v4204 = vadd.f32 0.0, %v4203
    %v4205 = vpop.f32.mrf.mxu0
    %v4206 = vadd.f32 0.0, %v4205
    %v4207 = vpop.f32.mrf.mxu0
    %v4208 = vpop.f32.mrf.mxu0
    %4209 = vdwg.mxu0
    %4210 = vmatprep.subr.bf16.mxu0 %v1339
    %4211 = vmatpush1.bf16.msra.mxu0 %v1338
    %4212 = vmatprep.subr.bf16.mxu0 %v1331
    %4213 = vmatpush1.bf16.msra.mxu0 %v1330
    %4214 = vmatprep.subr.bf16.mxu0 %v1323
    %4215 = vmatpush1.bf16.msra.mxu0 %v1322
    %4216 = vmatprep.subr.bf16.mxu0 %v1315
    %4217 = vmatpush1.bf16.msra.mxu0 %v1314
    %4218 = vmatprep.subr.bf16.mxu0 %v1307
    %4219 = vmatpush1.bf16.msra.mxu0 %v1306
    %4220 = vmatprep.subr.bf16.mxu0 %v1299
    %4221 = vmatpush1.bf16.msra.mxu0 %v1298
    %4222 = vmatprep.subr.bf16.mxu0 %v1291
    %4223 = vmatpush1.bf16.msra.mxu0 %v1290
    %4224 = vmatprep.subr.bf16.mxu0 %v1283
    %4225 = vmatpush1.bf16.msra.mxu0 %v1282
    %4226 = vmatprep.subr.bf16.mxu0 %v1403
    %4227 = vmatpush2.bf16.msra.mxu0 %v1402
    %4228 = vmatprep.subr.bf16.mxu0 %v1395
    %4229 = vmatpush2.bf16.msra.mxu0 %v1394
    %4230 = vmatprep.subr.bf16.mxu0 %v1387
    %4231 = vmatpush2.bf16.msra.mxu0 %v1386
    %4232 = vmatprep.subr.bf16.mxu0 %v1379
    %4233 = vmatpush2.bf16.msra.mxu0 %v1378
    %4234 = vmatprep.subr.bf16.mxu0 %v1371
    %4235 = vmatpush2.bf16.msra.mxu0 %v1370
    %4236 = vmatprep.subr.bf16.mxu0 %v1363
    %4237 = vmatpush2.bf16.msra.mxu0 %v1362
    %4238 = vmatprep.subr.bf16.mxu0 %v1355
    %4239 = vmatpush2.bf16.msra.mxu0 %v1354
    %4240 = vmatprep.subr.bf16.mxu0 %v1347
    %4241 = vmatpush2.bf16.msra.mxu0 %v1346
    %4242 = vmatprep.mubr.bf16.mxu0 %v4127
    %4243 = vmatmul.mubr.bf16.gmra.mxu0 %v4126
    %v4244 = vpop.f32.mrf.mxu0
    %v4245 = vadd.f32 0.0, %v4244
    %v4246 = vpop.f32.mrf.mxu0
    %v4247 = vadd.f32 0.0, %v4246
    %v4248 = vpop.f32.mrf.mxu0
    %v4249 = vpop.f32.mrf.mxu0
    %4250 = vdwg.mxu0
    %4251 = vmatprep.subr.bf16.mxu0 %v1341
    %4252 = vmatpush1.bf16.msra.mxu0 %v1340
    %4253 = vmatprep.subr.bf16.mxu0 %v1333
    %4254 = vmatpush1.bf16.msra.mxu0 %v1332
    %4255 = vmatprep.subr.bf16.mxu0 %v1325
    %4256 = vmatpush1.bf16.msra.mxu0 %v1324
    %4257 = vmatprep.subr.bf16.mxu0 %v1317
    %4258 = vmatpush1.bf16.msra.mxu0 %v1316
    %4259 = vmatprep.subr.bf16.mxu0 %v1309
    %4260 = vmatpush1.bf16.msra.mxu0 %v1308
    %4261 = vmatprep.subr.bf16.mxu0 %v1301
    %4262 = vmatpush1.bf16.msra.mxu0 %v1300
    %4263 = vmatprep.subr.bf16.mxu0 %v1293
    %4264 = vmatpush1.bf16.msra.mxu0 %v1292
    %4265 = vmatprep.subr.bf16.mxu0 %v1285
    %4266 = vmatpush1.bf16.msra.mxu0 %v1284
    %4267 = vmatprep.subr.bf16.mxu0 %v1405
    %4268 = vmatpush2.bf16.msra.mxu0 %v1404
    %4269 = vmatprep.subr.bf16.mxu0 %v1397
    %4270 = vmatpush2.bf16.msra.mxu0 %v1396
    %4271 = vmatprep.subr.bf16.mxu0 %v1389
    %4272 = vmatpush2.bf16.msra.mxu0 %v1388
    %4273 = vmatprep.subr.bf16.mxu0 %v1381
    %4274 = vmatpush2.bf16.msra.mxu0 %v1380
    %4275 = vmatprep.subr.bf16.mxu0 %v1373
    %4276 = vmatpush2.bf16.msra.mxu0 %v1372
    %4277 = vmatprep.subr.bf16.mxu0 %v1365
    %4278 = vmatpush2.bf16.msra.mxu0 %v1364
    %4279 = vmatprep.subr.bf16.mxu0 %v1357
    %4280 = vmatpush2.bf16.msra.mxu0 %v1356
    %4281 = vmatprep.subr.bf16.mxu0 %v1349
    %4282 = vmatpush2.bf16.msra.mxu0 %v1348
    %4283 = vmatprep.mubr.bf16.mxu0 %v4127
    %4284 = vmatmul.mubr.bf16.gmra.mxu0 %v4126
    %v4285 = vpop.f32.mrf.mxu0
    %v4286 = vadd.f32 0.0, %v4285
    %v4287 = vpop.f32.mrf.mxu0
    %v4288 = vadd.f32 0.0, %v4287
    %v4289 = vpop.f32.mrf.mxu0
    %v4290 = vpop.f32.mrf.mxu0
    %4291 = vdwg.mxu0
    %v4292 = vadd.f32 %v4110, %v4163
    %v4293 = vadd.f32 %v4111, %v4165
    %v4294 = vadd.f32 %v4112, %v4204
    %v4295 = vadd.f32 %v4113, %v4206
    %v4296 = vadd.f32 %v4114, %v4245
    %v4297 = vadd.f32 %v4115, %v4247
    %v4298 = vadd.f32 %v4116, %v4286
    %v4299 = vadd.f32 %v4117, %v4288
    %v4300 = vpack.c.bf16 %v4108, %v4108
    %v4301 = vpack.c.bf16 %v4109, %v4109
    %4302 = vmatprep.subr.bf16.mxu0 %v1719
    %4303 = vmatpush1.bf16.msra.mxu0 %v1718
    %4304 = vmatprep.subr.bf16.mxu0 %v1711
    %4305 = vmatpush1.bf16.msra.mxu0 %v1710
    %4306 = vmatprep.subr.bf16.mxu0 %v1703
    %4307 = vmatpush1.bf16.msra.mxu0 %v1702
    %4308 = vmatprep.subr.bf16.mxu0 %v1695
    %4309 = vmatpush1.bf16.msra.mxu0 %v1694
    %4310 = vmatprep.subr.bf16.mxu0 %v1687
    %4311 = vmatpush1.bf16.msra.mxu0 %v1686
    %4312 = vmatprep.subr.bf16.mxu0 %v1679
    %4313 = vmatpush1.bf16.msra.mxu0 %v1678
    %4314 = vmatprep.subr.bf16.mxu0 %v1671
    %4315 = vmatpush1.bf16.msra.mxu0 %v1670
    %4316 = vmatprep.subr.bf16.mxu0 %v1663
    %4317 = vmatpush1.bf16.msra.mxu0 %v1662
    %4318 = vmatprep.subr.bf16.mxu0 %v1783
    %4319 = vmatpush2.bf16.msra.mxu0 %v1782
    %4320 = vmatprep.subr.bf16.mxu0 %v1775
    %4321 = vmatpush2.bf16.msra.mxu0 %v1774
    %4322 = vmatprep.subr.bf16.mxu0 %v1767
    %4323 = vmatpush2.bf16.msra.mxu0 %v1766
    %4324 = vmatprep.subr.bf16.mxu0 %v1759
    %4325 = vmatpush2.bf16.msra.mxu0 %v1758
    %4326 = vmatprep.subr.bf16.mxu0 %v1751
    %4327 = vmatpush2.bf16.msra.mxu0 %v1750
    %4328 = vmatprep.subr.bf16.mxu0 %v1743
    %4329 = vmatpush2.bf16.msra.mxu0 %v1742
    %4330 = vmatprep.subr.bf16.mxu0 %v1735
    %4331 = vmatpush2.bf16.msra.mxu0 %v1734
    %4332 = vmatprep.subr.bf16.mxu0 %v1727
    %4333 = vmatpush2.bf16.msra.mxu0 %v1726
    %4334 = vmatprep.mubr.bf16.mxu0 %v4301
    %4335 = vmatmul.mubr.bf16.gmra.mxu0 %v4300
    %v4336 = vpop.f32.mrf.mxu0
    %v4337 = vadd.f32 0.0, %v4336
    %v4338 = vpop.f32.mrf.mxu0
    %v4339 = vadd.f32 0.0, %v4338
    %v4340 = vpop.f32.mrf.mxu0
    %v4341 = vpop.f32.mrf.mxu0
    %4342 = vdwg.mxu0
    %4343 = vmatprep.subr.bf16.mxu0 %v1721
    %4344 = vmatpush1.bf16.msra.mxu0 %v1720
    %4345 = vmatprep.subr.bf16.mxu0 %v1713
    %4346 = vmatpush1.bf16.msra.mxu0 %v1712
    %4347 = vmatprep.subr.bf16.mxu0 %v1705
    %4348 = vmatpush1.bf16.msra.mxu0 %v1704
    %4349 = vmatprep.subr.bf16.mxu0 %v1697
    %4350 = vmatpush1.bf16.msra.mxu0 %v1696
    %4351 = vmatprep.subr.bf16.mxu0 %v1689
    %4352 = vmatpush1.bf16.msra.mxu0 %v1688
    %4353 = vmatprep.subr.bf16.mxu0 %v1681
    %4354 = vmatpush1.bf16.msra.mxu0 %v1680
    %4355 = vmatprep.subr.bf16.mxu0 %v1673
    %4356 = vmatpush1.bf16.msra.mxu0 %v1672
    %4357 = vmatprep.subr.bf16.mxu0 %v1665
    %4358 = vmatpush1.bf16.msra.mxu0 %v1664
    %4359 = vmatprep.subr.bf16.mxu0 %v1785
    %4360 = vmatpush2.bf16.msra.mxu0 %v1784
    %4361 = vmatprep.subr.bf16.mxu0 %v1777
    %4362 = vmatpush2.bf16.msra.mxu0 %v1776
    %4363 = vmatprep.subr.bf16.mxu0 %v1769
    %4364 = vmatpush2.bf16.msra.mxu0 %v1768
    %4365 = vmatprep.subr.bf16.mxu0 %v1761
    %4366 = vmatpush2.bf16.msra.mxu0 %v1760
    %4367 = vmatprep.subr.bf16.mxu0 %v1753
    %4368 = vmatpush2.bf16.msra.mxu0 %v1752
    %4369 = vmatprep.subr.bf16.mxu0 %v1745
    %4370 = vmatpush2.bf16.msra.mxu0 %v1744
    %4371 = vmatprep.subr.bf16.mxu0 %v1737
    %4372 = vmatpush2.bf16.msra.mxu0 %v1736
    %4373 = vmatprep.subr.bf16.mxu0 %v1729
    %4374 = vmatpush2.bf16.msra.mxu0 %v1728
    %4375 = vmatprep.mubr.bf16.mxu0 %v4301
    %4376 = vmatmul.mubr.bf16.gmra.mxu0 %v4300
    %v4377 = vpop.f32.mrf.mxu0
    %v4378 = vadd.f32 0.0, %v4377
    %v4379 = vpop.f32.mrf.mxu0
    %v4380 = vadd.f32 0.0, %v4379
    %v4381 = vpop.f32.mrf.mxu0
    %v4382 = vpop.f32.mrf.mxu0
    %4383 = vdwg.mxu0
    %4384 = vmatprep.subr.bf16.mxu0 %v1723
    %4385 = vmatpush1.bf16.msra.mxu0 %v1722
    %4386 = vmatprep.subr.bf16.mxu0 %v1715
    %4387 = vmatpush1.bf16.msra.mxu0 %v1714
    %4388 = vmatprep.subr.bf16.mxu0 %v1707
    %4389 = vmatpush1.bf16.msra.mxu0 %v1706
    %4390 = vmatprep.subr.bf16.mxu0 %v1699
    %4391 = vmatpush1.bf16.msra.mxu0 %v1698
    %4392 = vmatprep.subr.bf16.mxu0 %v1691
    %4393 = vmatpush1.bf16.msra.mxu0 %v1690
    %4394 = vmatprep.subr.bf16.mxu0 %v1683
    %4395 = vmatpush1.bf16.msra.mxu0 %v1682
    %4396 = vmatprep.subr.bf16.mxu0 %v1675
    %4397 = vmatpush1.bf16.msra.mxu0 %v1674
    %4398 = vmatprep.subr.bf16.mxu0 %v1667
    %4399 = vmatpush1.bf16.msra.mxu0 %v1666
    %4400 = vmatprep.subr.bf16.mxu0 %v1787
    %4401 = vmatpush2.bf16.msra.mxu0 %v1786
    %4402 = vmatprep.subr.bf16.mxu0 %v1779
    %4403 = vmatpush2.bf16.msra.mxu0 %v1778
    %4404 = vmatprep.subr.bf16.mxu0 %v1771
    %4405 = vmatpush2.bf16.msra.mxu0 %v1770
    %4406 = vmatprep.subr.bf16.mxu0 %v1763
    %4407 = vmatpush2.bf16.msra.mxu0 %v1762
    %4408 = vmatprep.subr.bf16.mxu0 %v1755
    %4409 = vmatpush2.bf16.msra.mxu0 %v1754
    %4410 = vmatprep.subr.bf16.mxu0 %v1747
    %4411 = vmatpush2.bf16.msra.mxu0 %v1746
    %4412 = vmatprep.subr.bf16.mxu0 %v1739
    %4413 = vmatpush2.bf16.msra.mxu0 %v1738
    %4414 = vmatprep.subr.bf16.mxu0 %v1731
    %4415 = vmatpush2.bf16.msra.mxu0 %v1730
    %4416 = vmatprep.mubr.bf16.mxu0 %v4301
    %4417 = vmatmul.mubr.bf16.gmra.mxu0 %v4300
    %v4418 = vpop.f32.mrf.mxu0
    %v4419 = vadd.f32 0.0, %v4418
    %v4420 = vpop.f32.mrf.mxu0
    %v4421 = vadd.f32 0.0, %v4420
    %v4422 = vpop.f32.mrf.mxu0
    %v4423 = vpop.f32.mrf.mxu0
    %4424 = vdwg.mxu0
    %4425 = vmatprep.subr.bf16.mxu0 %v1725
    %4426 = vmatpush1.bf16.msra.mxu0 %v1724
    %4427 = vmatprep.subr.bf16.mxu0 %v1717
    %4428 = vmatpush1.bf16.msra.mxu0 %v1716
    %4429 = vmatprep.subr.bf16.mxu0 %v1709
    %4430 = vmatpush1.bf16.msra.mxu0 %v1708
    %4431 = vmatprep.subr.bf16.mxu0 %v1701
    %4432 = vmatpush1.bf16.msra.mxu0 %v1700
    %4433 = vmatprep.subr.bf16.mxu0 %v1693
    %4434 = vmatpush1.bf16.msra.mxu0 %v1692
    %4435 = vmatprep.subr.bf16.mxu0 %v1685
    %4436 = vmatpush1.bf16.msra.mxu0 %v1684
    %4437 = vmatprep.subr.bf16.mxu0 %v1677
    %4438 = vmatpush1.bf16.msra.mxu0 %v1676
    %4439 = vmatprep.subr.bf16.mxu0 %v1669
    %4440 = vmatpush1.bf16.msra.mxu0 %v1668
    %4441 = vmatprep.subr.bf16.mxu0 %v1789
    %4442 = vmatpush2.bf16.msra.mxu0 %v1788
    %4443 = vmatprep.subr.bf16.mxu0 %v1781
    %4444 = vmatpush2.bf16.msra.mxu0 %v1780
    %4445 = vmatprep.subr.bf16.mxu0 %v1773
    %4446 = vmatpush2.bf16.msra.mxu0 %v1772
    %4447 = vmatprep.subr.bf16.mxu0 %v1765
    %4448 = vmatpush2.bf16.msra.mxu0 %v1764
    %4449 = vmatprep.subr.bf16.mxu0 %v1757
    %4450 = vmatpush2.bf16.msra.mxu0 %v1756
    %4451 = vmatprep.subr.bf16.mxu0 %v1749
    %4452 = vmatpush2.bf16.msra.mxu0 %v1748
    %4453 = vmatprep.subr.bf16.mxu0 %v1741
    %4454 = vmatpush2.bf16.msra.mxu0 %v1740
    %4455 = vmatprep.subr.bf16.mxu0 %v1733
    %4456 = vmatpush2.bf16.msra.mxu0 %v1732
    %4457 = vmatprep.mubr.bf16.mxu0 %v4301
    %4458 = vmatmul.mubr.bf16.gmra.mxu0 %v4300
    %v4459 = vpop.f32.mrf.mxu0
    %v4460 = vadd.f32 0.0, %v4459
    %v4461 = vpop.f32.mrf.mxu0
    %v4462 = vadd.f32 0.0, %v4461
    %v4463 = vpop.f32.mrf.mxu0
    %v4464 = vpop.f32.mrf.mxu0
    %4465 = vdwg.mxu0
    %v4466 = vadd.f32 %v4118, %v4337
    %v4467 = vadd.f32 %v4119, %v4339
    %v4468 = vadd.f32 %v4120, %v4378
    %v4469 = vadd.f32 %v4121, %v4380
    %v4470 = vadd.f32 %v4122, %v4419
    %v4471 = vadd.f32 %v4123, %v4421
    %v4472 = vadd.f32 %v4124, %v4460
    %v4473 = vadd.f32 %v4125, %v4462
    %v4474 = vxor.u32 %v4292, 2147483648
    %v4475 = vxor.u32 %v4293, 2147483648
    %v4476 = vmul.f32 %v4474, 1.442695
    %v4477 = vpow.pop %v4476
    %v4478 = vmul.f32 %v4475, 1.442695
    %v4479 = vpow.pop %v4478
    %v4480 = vadd.f32 %v4477, 1.0
    %v4481 = vadd.f32 %v4479, 1.0
    %v4482 = vrcp.pop %v4480
    %v4483 = vmul.f32 1.0, %v4482
    %v4484 = vrcp.pop %v4481
    %v4485 = vmul.f32 1.0, %v4484
    %v4486 = vxor.u32 %v4294, 2147483648
    %v4487 = vxor.u32 %v4295, 2147483648
    %v4488 = vmul.f32 %v4486, 1.442695
    %v4489 = vpow.pop %v4488
    %v4490 = vmul.f32 %v4487, 1.442695
    %v4491 = vpow.pop %v4490
    %v4492 = vadd.f32 %v4489, 1.0
    %v4493 = vadd.f32 %v4491, 1.0
    %v4494 = vrcp.pop %v4492
    %v4495 = vmul.f32 1.0, %v4494
    %v4496 = vrcp.pop %v4493
    %v4497 = vmul.f32 1.0, %v4496
    %v4498 = vtanh.pop %v4296
    %v4499 = vtanh.pop %v4297
    %v4500 = vxor.u32 %v4298, 2147483648
    %v4501 = vxor.u32 %v4299, 2147483648
    %v4502 = vmul.f32 %v4500, 1.442695
    %v4503 = vpow.pop %v4502
    %v4504 = vmul.f32 %v4501, 1.442695
    %v4505 = vpow.pop %v4504
    %v4506 = vadd.f32 %v4503, 1.0
    %v4507 = vadd.f32 %v4505, 1.0
    %v4508 = vrcp.pop %v4506
    %v4509 = vmul.f32 1.0, %v4508
    %v4510 = vrcp.pop %v4507
    %v4511 = vmul.f32 1.0, %v4510
    %v4512 = vmul.f32 %v4495, %v4056
    %v4513 = vmul.f32 %v4497, %v4057
    %v4514 = vmul.f32 %v4483, %v4498
    %v4515 = vmul.f32 %v4485, %v4499
    %v4516 = vadd.f32 %v4512, %v4514
    %v4517 = vadd.f32 %v4513, %v4515
    %v4518 = vtanh.pop %v4516
    %v4519 = vtanh.pop %v4517
    %v4520 = vmul.f32 %v4509, %v4518
    %v4521 = vmul.f32 %v4511, %v4519
    %v4522 = vxor.u32 %v4466, 2147483648
    %v4523 = vxor.u32 %v4467, 2147483648
    %v4524 = vmul.f32 %v4522, 1.442695
    %v4525 = vpow.pop %v4524
    %v4526 = vmul.f32 %v4523, 1.442695
    %v4527 = vpow.pop %v4526
    %v4528 = vadd.f32 %v4525, 1.0
    %v4529 = vadd.f32 %v4527, 1.0
    %v4530 = vrcp.pop %v4528
    %v4531 = vmul.f32 1.0, %v4530
    %v4532 = vrcp.pop %v4529
    %v4533 = vmul.f32 1.0, %v4532
    %v4534 = vxor.u32 %v4468, 2147483648
    %v4535 = vxor.u32 %v4469, 2147483648
    %v4536 = vmul.f32 %v4534, 1.442695
    %v4537 = vpow.pop %v4536
    %v4538 = vmul.f32 %v4535, 1.442695
    %v4539 = vpow.pop %v4538
    %v4540 = vadd.f32 %v4537, 1.0
    %v4541 = vadd.f32 %v4539, 1.0
    %v4542 = vrcp.pop %v4540
    %v4543 = vmul.f32 1.0, %v4542
    %v4544 = vrcp.pop %v4541
    %v4545 = vmul.f32 1.0, %v4544
    %v4546 = vtanh.pop %v4470
    %v4547 = vtanh.pop %v4471
    %v4548 = vxor.u32 %v4472, 2147483648
    %v4549 = vxor.u32 %v4473, 2147483648
    %v4550 = vmul.f32 %v4548, 1.442695
    %v4551 = vpow.pop %v4550
    %v4552 = vmul.f32 %v4549, 1.442695
    %v4553 = vpow.pop %v4552
    %v4554 = vadd.f32 %v4551, 1.0
    %v4555 = vadd.f32 %v4553, 1.0
    %v4556 = vrcp.pop %v4554
    %v4557 = vmul.f32 1.0, %v4556
    %v4558 = vrcp.pop %v4555
    %v4559 = vmul.f32 1.0, %v4558
    %v4560 = vmul.f32 %v4543, %v4104
    %v4561 = vmul.f32 %v4545, %v4105
    %v4562 = vmul.f32 %v4531, %v4546
    %v4563 = vmul.f32 %v4533, %v4547
    %v4564 = vadd.f32 %v4560, %v4562
    %v4565 = vadd.f32 %v4561, %v4563
    %v4566 = vtanh.pop %v4564
    %v4567 = vtanh.pop %v4565
    %v4568 = vmul.f32 %v4557, %v4566
    %v4569 = vmul.f32 %v4559, %v4567
    %v4570 = vld [vmem:[%s2265] sm:$0xff]
    %v4571 = vld [vmem:[%s2265 + $0x8] sm:$0xff]
    %v4572 = vld [vmem:[%s2265 + $0x10] sm:$0xff]
    %v4573 = vld [vmem:[%s2265 + $0x18] sm:$0xff]
    %v4574 = vld [vmem:[%s2265 + $0x20] sm:$0xff]
    %v4575 = vld [vmem:[%s2265 + $0x28] sm:$0xff]
    %v4576 = vld [vmem:[%s2265 + $0x30] sm:$0xff]
    %v4577 = vld [vmem:[%s2265 + $0x38] sm:$0xff]
    %v4578 = vld [vmem:[%s2254 + $0x40] sm:$0xff]
    %v4579 = vld [vmem:[%s2254 + $0x48] sm:$0xff]
    %v4580 = vld [vmem:[%s2254 + $0x50] sm:$0xff]
    %v4581 = vld [vmem:[%s2254 + $0x58] sm:$0xff]
    %v4582 = vld [vmem:[%s2254 + $0x60] sm:$0xff]
    %v4583 = vld [vmem:[%s2254 + $0x68] sm:$0xff]
    %v4584 = vld [vmem:[%s2254 + $0x70] sm:$0xff]
    %v4585 = vld [vmem:[%s2254 + $0x78] sm:$0xff]
    %v4586 = vpack.c.bf16 %v4520, %v4520
    %v4587 = vpack.c.bf16 %v4521, %v4521
    %4588 = vmatprep.subr.bf16.mxu0 %v1335
    %4589 = vmatpush1.bf16.msra.mxu0 %v1334
    %4590 = vmatprep.subr.bf16.mxu0 %v1327
    %4591 = vmatpush1.bf16.msra.mxu0 %v1326
    %4592 = vmatprep.subr.bf16.mxu0 %v1319
    %4593 = vmatpush1.bf16.msra.mxu0 %v1318
    %4594 = vmatprep.subr.bf16.mxu0 %v1311
    %4595 = vmatpush1.bf16.msra.mxu0 %v1310
    %4596 = vmatprep.subr.bf16.mxu0 %v1303
    %4597 = vmatpush1.bf16.msra.mxu0 %v1302
    %4598 = vmatprep.subr.bf16.mxu0 %v1295
    %4599 = vmatpush1.bf16.msra.mxu0 %v1294
    %4600 = vmatprep.subr.bf16.mxu0 %v1287
    %4601 = vmatpush1.bf16.msra.mxu0 %v1286
    %4602 = vmatprep.subr.bf16.mxu0 %v1279
    %4603 = vmatpush1.bf16.msra.mxu0 %v1278
    %4604 = vmatprep.subr.bf16.mxu0 %v1399
    %4605 = vmatpush2.bf16.msra.mxu0 %v1398
    %4606 = vmatprep.subr.bf16.mxu0 %v1391
    %4607 = vmatpush2.bf16.msra.mxu0 %v1390
    %4608 = vmatprep.subr.bf16.mxu0 %v1383
    %4609 = vmatpush2.bf16.msra.mxu0 %v1382
    %4610 = vmatprep.subr.bf16.mxu0 %v1375
    %4611 = vmatpush2.bf16.msra.mxu0 %v1374
    %4612 = vmatprep.subr.bf16.mxu0 %v1367
    %4613 = vmatpush2.bf16.msra.mxu0 %v1366
    %4614 = vmatprep.subr.bf16.mxu0 %v1359
    %4615 = vmatpush2.bf16.msra.mxu0 %v1358
    %4616 = vmatprep.subr.bf16.mxu0 %v1351
    %4617 = vmatpush2.bf16.msra.mxu0 %v1350
    %4618 = vmatprep.subr.bf16.mxu0 %v1343
    %4619 = vmatpush2.bf16.msra.mxu0 %v1342
    %4620 = vmatprep.mubr.bf16.mxu0 %v4587
    %4621 = vmatmul.mubr.bf16.gmra.mxu0 %v4586
    %v4622 = vpop.f32.mrf.mxu0
    %v4623 = vadd.f32 0.0, %v4622
    %v4624 = vpop.f32.mrf.mxu0
    %v4625 = vadd.f32 0.0, %v4624
    %v4626 = vpop.f32.mrf.mxu0
    %v4627 = vpop.f32.mrf.mxu0
    %4628 = vdwg.mxu0
    %4629 = vmatprep.subr.bf16.mxu0 %v1337
    %4630 = vmatpush1.bf16.msra.mxu0 %v1336
    %4631 = vmatprep.subr.bf16.mxu0 %v1329
    %4632 = vmatpush1.bf16.msra.mxu0 %v1328
    %4633 = vmatprep.subr.bf16.mxu0 %v1321
    %4634 = vmatpush1.bf16.msra.mxu0 %v1320
    %4635 = vmatprep.subr.bf16.mxu0 %v1313
    %4636 = vmatpush1.bf16.msra.mxu0 %v1312
    %4637 = vmatprep.subr.bf16.mxu0 %v1305
    %4638 = vmatpush1.bf16.msra.mxu0 %v1304
    %4639 = vmatprep.subr.bf16.mxu0 %v1297
    %4640 = vmatpush1.bf16.msra.mxu0 %v1296
    %4641 = vmatprep.subr.bf16.mxu0 %v1289
    %4642 = vmatpush1.bf16.msra.mxu0 %v1288
    %4643 = vmatprep.subr.bf16.mxu0 %v1281
    %4644 = vmatpush1.bf16.msra.mxu0 %v1280
    %4645 = vmatprep.subr.bf16.mxu0 %v1401
    %4646 = vmatpush2.bf16.msra.mxu0 %v1400
    %4647 = vmatprep.subr.bf16.mxu0 %v1393
    %4648 = vmatpush2.bf16.msra.mxu0 %v1392
    %4649 = vmatprep.subr.bf16.mxu0 %v1385
    %4650 = vmatpush2.bf16.msra.mxu0 %v1384
    %4651 = vmatprep.subr.bf16.mxu0 %v1377
    %4652 = vmatpush2.bf16.msra.mxu0 %v1376
    %4653 = vmatprep.subr.bf16.mxu0 %v1369
    %4654 = vmatpush2.bf16.msra.mxu0 %v1368
    %4655 = vmatprep.subr.bf16.mxu0 %v1361
    %4656 = vmatpush2.bf16.msra.mxu0 %v1360
    %4657 = vmatprep.subr.bf16.mxu0 %v1353
    %4658 = vmatpush2.bf16.msra.mxu0 %v1352
    %4659 = vmatprep.subr.bf16.mxu0 %v1345
    %4660 = vmatpush2.bf16.msra.mxu0 %v1344
    %4661 = vmatprep.mubr.bf16.mxu0 %v4587
    %4662 = vmatmul.mubr.bf16.gmra.mxu0 %v4586
    %v4663 = vpop.f32.mrf.mxu0
    %v4664 = vadd.f32 0.0, %v4663
    %v4665 = vpop.f32.mrf.mxu0
    %v4666 = vadd.f32 0.0, %v4665
    %v4667 = vpop.f32.mrf.mxu0
    %v4668 = vpop.f32.mrf.mxu0
    %4669 = vdwg.mxu0
    %4670 = vmatprep.subr.bf16.mxu0 %v1339
    %4671 = vmatpush1.bf16.msra.mxu0 %v1338
    %4672 = vmatprep.subr.bf16.mxu0 %v1331
    %4673 = vmatpush1.bf16.msra.mxu0 %v1330
    %4674 = vmatprep.subr.bf16.mxu0 %v1323
    %4675 = vmatpush1.bf16.msra.mxu0 %v1322
    %4676 = vmatprep.subr.bf16.mxu0 %v1315
    %4677 = vmatpush1.bf16.msra.mxu0 %v1314
    %4678 = vmatprep.subr.bf16.mxu0 %v1307
    %4679 = vmatpush1.bf16.msra.mxu0 %v1306
    %4680 = vmatprep.subr.bf16.mxu0 %v1299
    %4681 = vmatpush1.bf16.msra.mxu0 %v1298
    %4682 = vmatprep.subr.bf16.mxu0 %v1291
    %4683 = vmatpush1.bf16.msra.mxu0 %v1290
    %4684 = vmatprep.subr.bf16.mxu0 %v1283
    %4685 = vmatpush1.bf16.msra.mxu0 %v1282
    %4686 = vmatprep.subr.bf16.mxu0 %v1403
    %4687 = vmatpush2.bf16.msra.mxu0 %v1402
    %4688 = vmatprep.subr.bf16.mxu0 %v1395
    %4689 = vmatpush2.bf16.msra.mxu0 %v1394
    %4690 = vmatprep.subr.bf16.mxu0 %v1387
    %4691 = vmatpush2.bf16.msra.mxu0 %v1386
    %4692 = vmatprep.subr.bf16.mxu0 %v1379
    %4693 = vmatpush2.bf16.msra.mxu0 %v1378
    %4694 = vmatprep.subr.bf16.mxu0 %v1371
    %4695 = vmatpush2.bf16.msra.mxu0 %v1370
    %4696 = vmatprep.subr.bf16.mxu0 %v1363
    %4697 = vmatpush2.bf16.msra.mxu0 %v1362
    %4698 = vmatprep.subr.bf16.mxu0 %v1355
    %4699 = vmatpush2.bf16.msra.mxu0 %v1354
    %4700 = vmatprep.subr.bf16.mxu0 %v1347
    %4701 = vmatpush2.bf16.msra.mxu0 %v1346
    %4702 = vmatprep.mubr.bf16.mxu0 %v4587
    %4703 = vmatmul.mubr.bf16.gmra.mxu0 %v4586
    %v4704 = vpop.f32.mrf.mxu0
    %v4705 = vadd.f32 0.0, %v4704
    %v4706 = vpop.f32.mrf.mxu0
    %v4707 = vadd.f32 0.0, %v4706
    %v4708 = vpop.f32.mrf.mxu0
    %v4709 = vpop.f32.mrf.mxu0
    %4710 = vdwg.mxu0
    %4711 = vmatprep.subr.bf16.mxu0 %v1341
    %4712 = vmatpush1.bf16.msra.mxu0 %v1340
    %4713 = vmatprep.subr.bf16.mxu0 %v1333
    %4714 = vmatpush1.bf16.msra.mxu0 %v1332
    %4715 = vmatprep.subr.bf16.mxu0 %v1325
    %4716 = vmatpush1.bf16.msra.mxu0 %v1324
    %4717 = vmatprep.subr.bf16.mxu0 %v1317
    %4718 = vmatpush1.bf16.msra.mxu0 %v1316
    %4719 = vmatprep.subr.bf16.mxu0 %v1309
    %4720 = vmatpush1.bf16.msra.mxu0 %v1308
    %4721 = vmatprep.subr.bf16.mxu0 %v1301
    %4722 = vmatpush1.bf16.msra.mxu0 %v1300
    %4723 = vmatprep.subr.bf16.mxu0 %v1293
    %4724 = vmatpush1.bf16.msra.mxu0 %v1292
    %4725 = vmatprep.subr.bf16.mxu0 %v1285
    %4726 = vmatpush1.bf16.msra.mxu0 %v1284
    %4727 = vmatprep.subr.bf16.mxu0 %v1405
    %4728 = vmatpush2.bf16.msra.mxu0 %v1404
    %4729 = vmatprep.subr.bf16.mxu0 %v1397
    %4730 = vmatpush2.bf16.msra.mxu0 %v1396
    %4731 = vmatprep.subr.bf16.mxu0 %v1389
    %4732 = vmatpush2.bf16.msra.mxu0 %v1388
    %4733 = vmatprep.subr.bf16.mxu0 %v1381
    %4734 = vmatpush2.bf16.msra.mxu0 %v1380
    %4735 = vmatprep.subr.bf16.mxu0 %v1373
    %4736 = vmatpush2.bf16.msra.mxu0 %v1372
    %4737 = vmatprep.subr.bf16.mxu0 %v1365
    %4738 = vmatpush2.bf16.msra.mxu0 %v1364
    %4739 = vmatprep.subr.bf16.mxu0 %v1357
    %4740 = vmatpush2.bf16.msra.mxu0 %v1356
    %4741 = vmatprep.subr.bf16.mxu0 %v1349
    %4742 = vmatpush2.bf16.msra.mxu0 %v1348
    %4743 = vmatprep.mubr.bf16.mxu0 %v4587
    %4744 = vmatmul.mubr.bf16.gmra.mxu0 %v4586
    %v4745 = vpop.f32.mrf.mxu0
    %v4746 = vadd.f32 0.0, %v4745
    %v4747 = vpop.f32.mrf.mxu0
    %v4748 = vadd.f32 0.0, %v4747
    %v4749 = vpop.f32.mrf.mxu0
    %v4750 = vpop.f32.mrf.mxu0
    %4751 = vdwg.mxu0
    %v4752 = vadd.f32 %v4570, %v4623
    %v4753 = vadd.f32 %v4571, %v4625
    %v4754 = vadd.f32 %v4572, %v4664
    %v4755 = vadd.f32 %v4573, %v4666
    %v4756 = vadd.f32 %v4574, %v4705
    %v4757 = vadd.f32 %v4575, %v4707
    %v4758 = vadd.f32 %v4576, %v4746
    %v4759 = vadd.f32 %v4577, %v4748
    %v4760 = vpack.c.bf16 %v4568, %v4568
    %v4761 = vpack.c.bf16 %v4569, %v4569
    %4762 = vmatprep.subr.bf16.mxu0 %v1719
    %4763 = vmatpush1.bf16.msra.mxu0 %v1718
    %4764 = vmatprep.subr.bf16.mxu0 %v1711
    %4765 = vmatpush1.bf16.msra.mxu0 %v1710
    %4766 = vmatprep.subr.bf16.mxu0 %v1703
    %4767 = vmatpush1.bf16.msra.mxu0 %v1702
    %4768 = vmatprep.subr.bf16.mxu0 %v1695
    %4769 = vmatpush1.bf16.msra.mxu0 %v1694
    %4770 = vmatprep.subr.bf16.mxu0 %v1687
    %4771 = vmatpush1.bf16.msra.mxu0 %v1686
    %4772 = vmatprep.subr.bf16.mxu0 %v1679
    %4773 = vmatpush1.bf16.msra.mxu0 %v1678
    %4774 = vmatprep.subr.bf16.mxu0 %v1671
    %4775 = vmatpush1.bf16.msra.mxu0 %v1670
    %4776 = vmatprep.subr.bf16.mxu0 %v1663
    %4777 = vmatpush1.bf16.msra.mxu0 %v1662
    %4778 = vmatprep.subr.bf16.mxu0 %v1783
    %4779 = vmatpush2.bf16.msra.mxu0 %v1782
    %4780 = vmatprep.subr.bf16.mxu0 %v1775
    %4781 = vmatpush2.bf16.msra.mxu0 %v1774
    %4782 = vmatprep.subr.bf16.mxu0 %v1767
    %4783 = vmatpush2.bf16.msra.mxu0 %v1766
    %4784 = vmatprep.subr.bf16.mxu0 %v1759
    %4785 = vmatpush2.bf16.msra.mxu0 %v1758
    %4786 = vmatprep.subr.bf16.mxu0 %v1751
    %4787 = vmatpush2.bf16.msra.mxu0 %v1750
    %4788 = vmatprep.subr.bf16.mxu0 %v1743
    %4789 = vmatpush2.bf16.msra.mxu0 %v1742
    %4790 = vmatprep.subr.bf16.mxu0 %v1735
    %4791 = vmatpush2.bf16.msra.mxu0 %v1734
    %4792 = vmatprep.subr.bf16.mxu0 %v1727
    %4793 = vmatpush2.bf16.msra.mxu0 %v1726
    %4794 = vmatprep.mubr.bf16.mxu0 %v4761
    %4795 = vmatmul.mubr.bf16.gmra.mxu0 %v4760
    %v4796 = vpop.f32.mrf.mxu0
    %v4797 = vadd.f32 0.0, %v4796
    %v4798 = vpop.f32.mrf.mxu0
    %v4799 = vadd.f32 0.0, %v4798
    %v4800 = vpop.f32.mrf.mxu0
    %v4801 = vpop.f32.mrf.mxu0
    %4802 = vdwg.mxu0
    %4803 = vmatprep.subr.bf16.mxu0 %v1721
    %4804 = vmatpush1.bf16.msra.mxu0 %v1720
    %4805 = vmatprep.subr.bf16.mxu0 %v1713
    %4806 = vmatpush1.bf16.msra.mxu0 %v1712
    %4807 = vmatprep.subr.bf16.mxu0 %v1705
    %4808 = vmatpush1.bf16.msra.mxu0 %v1704
    %4809 = vmatprep.subr.bf16.mxu0 %v1697
    %4810 = vmatpush1.bf16.msra.mxu0 %v1696
    %4811 = vmatprep.subr.bf16.mxu0 %v1689
    %4812 = vmatpush1.bf16.msra.mxu0 %v1688
    %4813 = vmatprep.subr.bf16.mxu0 %v1681
    %4814 = vmatpush1.bf16.msra.mxu0 %v1680
    %4815 = vmatprep.subr.bf16.mxu0 %v1673
    %4816 = vmatpush1.bf16.msra.mxu0 %v1672
    %4817 = vmatprep.subr.bf16.mxu0 %v1665
    %4818 = vmatpush1.bf16.msra.mxu0 %v1664
    %4819 = vmatprep.subr.bf16.mxu0 %v1785
    %4820 = vmatpush2.bf16.msra.mxu0 %v1784
    %4821 = vmatprep.subr.bf16.mxu0 %v1777
    %4822 = vmatpush2.bf16.msra.mxu0 %v1776
    %4823 = vmatprep.subr.bf16.mxu0 %v1769
    %4824 = vmatpush2.bf16.msra.mxu0 %v1768
    %4825 = vmatprep.subr.bf16.mxu0 %v1761
    %4826 = vmatpush2.bf16.msra.mxu0 %v1760
    %4827 = vmatprep.subr.bf16.mxu0 %v1753
    %4828 = vmatpush2.bf16.msra.mxu0 %v1752
    %4829 = vmatprep.subr.bf16.mxu0 %v1745
    %4830 = vmatpush2.bf16.msra.mxu0 %v1744
    %4831 = vmatprep.subr.bf16.mxu0 %v1737
    %4832 = vmatpush2.bf16.msra.mxu0 %v1736
    %4833 = vmatprep.subr.bf16.mxu0 %v1729
    %4834 = vmatpush2.bf16.msra.mxu0 %v1728
    %4835 = vmatprep.mubr.bf16.mxu0 %v4761
    %4836 = vmatmul.mubr.bf16.gmra.mxu0 %v4760
    %v4837 = vpop.f32.mrf.mxu0
    %v4838 = vadd.f32 0.0, %v4837
    %v4839 = vpop.f32.mrf.mxu0
    %v4840 = vadd.f32 0.0, %v4839
    %v4841 = vpop.f32.mrf.mxu0
    %v4842 = vpop.f32.mrf.mxu0
    %4843 = vdwg.mxu0
    %4844 = vmatprep.subr.bf16.mxu0 %v1723
    %4845 = vmatpush1.bf16.msra.mxu0 %v1722
    %4846 = vmatprep.subr.bf16.mxu0 %v1715
    %4847 = vmatpush1.bf16.msra.mxu0 %v1714
    %4848 = vmatprep.subr.bf16.mxu0 %v1707
    %4849 = vmatpush1.bf16.msra.mxu0 %v1706
    %4850 = vmatprep.subr.bf16.mxu0 %v1699
    %4851 = vmatpush1.bf16.msra.mxu0 %v1698
    %4852 = vmatprep.subr.bf16.mxu0 %v1691
    %4853 = vmatpush1.bf16.msra.mxu0 %v1690
    %4854 = vmatprep.subr.bf16.mxu0 %v1683
    %4855 = vmatpush1.bf16.msra.mxu0 %v1682
    %4856 = vmatprep.subr.bf16.mxu0 %v1675
    %4857 = vmatpush1.bf16.msra.mxu0 %v1674
    %4858 = vmatprep.subr.bf16.mxu0 %v1667
    %4859 = vmatpush1.bf16.msra.mxu0 %v1666
    %4860 = vmatprep.subr.bf16.mxu0 %v1787
    %4861 = vmatpush2.bf16.msra.mxu0 %v1786
    %4862 = vmatprep.subr.bf16.mxu0 %v1779
    %4863 = vmatpush2.bf16.msra.mxu0 %v1778
    %4864 = vmatprep.subr.bf16.mxu0 %v1771
    %4865 = vmatpush2.bf16.msra.mxu0 %v1770
    %4866 = vmatprep.subr.bf16.mxu0 %v1763
    %4867 = vmatpush2.bf16.msra.mxu0 %v1762
    %4868 = vmatprep.subr.bf16.mxu0 %v1755
    %4869 = vmatpush2.bf16.msra.mxu0 %v1754
    %4870 = vmatprep.subr.bf16.mxu0 %v1747
    %4871 = vmatpush2.bf16.msra.mxu0 %v1746
    %4872 = vmatprep.subr.bf16.mxu0 %v1739
    %4873 = vmatpush2.bf16.msra.mxu0 %v1738
    %4874 = vmatprep.subr.bf16.mxu0 %v1731
    %4875 = vmatpush2.bf16.msra.mxu0 %v1730
    %4876 = vmatprep.mubr.bf16.mxu0 %v4761
    %4877 = vmatmul.mubr.bf16.gmra.mxu0 %v4760
    %v4878 = vpop.f32.mrf.mxu0
    %v4879 = vadd.f32 0.0, %v4878
    %v4880 = vpop.f32.mrf.mxu0
    %v4881 = vadd.f32 0.0, %v4880
    %v4882 = vpop.f32.mrf.mxu0
    %v4883 = vpop.f32.mrf.mxu0
    %4884 = vdwg.mxu0
    %4885 = vmatprep.subr.bf16.mxu0 %v1725
    %4886 = vmatpush1.bf16.msra.mxu0 %v1724
    %4887 = vmatprep.subr.bf16.mxu0 %v1717
    %4888 = vmatpush1.bf16.msra.mxu0 %v1716
    %4889 = vmatprep.subr.bf16.mxu0 %v1709
    %4890 = vmatpush1.bf16.msra.mxu0 %v1708
    %4891 = vmatprep.subr.bf16.mxu0 %v1701
    %4892 = vmatpush1.bf16.msra.mxu0 %v1700
    %4893 = vmatprep.subr.bf16.mxu0 %v1693
    %4894 = vmatpush1.bf16.msra.mxu0 %v1692
    %4895 = vmatprep.subr.bf16.mxu0 %v1685
    %4896 = vmatpush1.bf16.msra.mxu0 %v1684
    %4897 = vmatprep.subr.bf16.mxu0 %v1677
    %4898 = vmatpush1.bf16.msra.mxu0 %v1676
    %4899 = vmatprep.subr.bf16.mxu0 %v1669
    %4900 = vmatpush1.bf16.msra.mxu0 %v1668
    %4901 = vmatprep.subr.bf16.mxu0 %v1789
    %4902 = vmatpush2.bf16.msra.mxu0 %v1788
    %4903 = vmatprep.subr.bf16.mxu0 %v1781
    %4904 = vmatpush2.bf16.msra.mxu0 %v1780
    %4905 = vmatprep.subr.bf16.mxu0 %v1773
    %4906 = vmatpush2.bf16.msra.mxu0 %v1772
    %4907 = vmatprep.subr.bf16.mxu0 %v1765
    %4908 = vmatpush2.bf16.msra.mxu0 %v1764
    %4909 = vmatprep.subr.bf16.mxu0 %v1757
    %4910 = vmatpush2.bf16.msra.mxu0 %v1756
    %4911 = vmatprep.subr.bf16.mxu0 %v1749
    %4912 = vmatpush2.bf16.msra.mxu0 %v1748
    %4913 = vmatprep.subr.bf16.mxu0 %v1741
    %4914 = vmatpush2.bf16.msra.mxu0 %v1740
    %4915 = vmatprep.subr.bf16.mxu0 %v1733
    %4916 = vmatpush2.bf16.msra.mxu0 %v1732
    %4917 = vmatprep.mubr.bf16.mxu0 %v4761
    %4918 = vmatmul.mubr.bf16.gmra.mxu0 %v4760
    %v4919 = vpop.f32.mrf.mxu0
    %v4920 = vadd.f32 0.0, %v4919
    %v4921 = vpop.f32.mrf.mxu0
    %v4922 = vadd.f32 0.0, %v4921
    %v4923 = vpop.f32.mrf.mxu0
    %v4924 = vpop.f32.mrf.mxu0
    %4925 = vdwg.mxu0
    %v4926 = vadd.f32 %v4578, %v4797
    %v4927 = vadd.f32 %v4579, %v4799
    %v4928 = vadd.f32 %v4580, %v4838
    %v4929 = vadd.f32 %v4581, %v4840
    %v4930 = vadd.f32 %v4582, %v4879
    %v4931 = vadd.f32 %v4583, %v4881
    %v4932 = vadd.f32 %v4584, %v4920
    %v4933 = vadd.f32 %v4585, %v4922
    %v4934 = vxor.u32 %v4752, 2147483648
    %v4935 = vxor.u32 %v4753, 2147483648
    %v4936 = vmul.f32 %v4934, 1.442695
    %v4937 = vpow.pop %v4936
    %v4938 = vmul.f32 %v4935, 1.442695
    %v4939 = vpow.pop %v4938
    %v4940 = vadd.f32 %v4937, 1.0
    %v4941 = vadd.f32 %v4939, 1.0
    %v4942 = vrcp.pop %v4940
    %v4943 = vmul.f32 1.0, %v4942
    %v4944 = vrcp.pop %v4941
    %v4945 = vmul.f32 1.0, %v4944
    %v4946 = vxor.u32 %v4754, 2147483648
    %v4947 = vxor.u32 %v4755, 2147483648
    %v4948 = vmul.f32 %v4946, 1.442695
    %v4949 = vpow.pop %v4948
    %v4950 = vmul.f32 %v4947, 1.442695
    %v4951 = vpow.pop %v4950
    %v4952 = vadd.f32 %v4949, 1.0
    %v4953 = vadd.f32 %v4951, 1.0
    %v4954 = vrcp.pop %v4952
    %v4955 = vmul.f32 1.0, %v4954
    %v4956 = vrcp.pop %v4953
    %v4957 = vmul.f32 1.0, %v4956
    %v4958 = vtanh.pop %v4756
    %v4959 = vtanh.pop %v4757
    %v4960 = vxor.u32 %v4758, 2147483648
    %v4961 = vxor.u32 %v4759, 2147483648
    %v4962 = vmul.f32 %v4960, 1.442695
    %v4963 = vpow.pop %v4962
    %v4964 = vmul.f32 %v4961, 1.442695
    %v4965 = vpow.pop %v4964
    %v4966 = vadd.f32 %v4963, 1.0
    %v4967 = vadd.f32 %v4965, 1.0
    %v4968 = vrcp.pop %v4966
    %v4969 = vmul.f32 1.0, %v4968
    %v4970 = vrcp.pop %v4967
    %v4971 = vmul.f32 1.0, %v4970
    %v4972 = vmul.f32 %v4955, %v4516
    %v4973 = vmul.f32 %v4957, %v4517
    %v4974 = vmul.f32 %v4943, %v4958
    %v4975 = vmul.f32 %v4945, %v4959
    %v4976 = vadd.f32 %v4972, %v4974
    %v4977 = vadd.f32 %v4973, %v4975
    %v4978 = vtanh.pop %v4976
    %v4979 = vtanh.pop %v4977
    %v4980 = vmul.f32 %v4969, %v4978
    %v4981 = vmul.f32 %v4971, %v4979
    %v4982 = vxor.u32 %v4926, 2147483648
    %v4983 = vxor.u32 %v4927, 2147483648
    %v4984 = vmul.f32 %v4982, 1.442695
    %v4985 = vpow.pop %v4984
    %v4986 = vmul.f32 %v4983, 1.442695
    %v4987 = vpow.pop %v4986
    %v4988 = vadd.f32 %v4985, 1.0
    %v4989 = vadd.f32 %v4987, 1.0
    %v4990 = vrcp.pop %v4988
    %v4991 = vmul.f32 1.0, %v4990
    %v4992 = vrcp.pop %v4989
    %v4993 = vmul.f32 1.0, %v4992
    %v4994 = vxor.u32 %v4928, 2147483648
    %v4995 = vxor.u32 %v4929, 2147483648
    %v4996 = vmul.f32 %v4994, 1.442695
    %v4997 = vpow.pop %v4996
    %v4998 = vmul.f32 %v4995, 1.442695
    %v4999 = vpow.pop %v4998
    %v5000 = vadd.f32 %v4997, 1.0
    %v5001 = vadd.f32 %v4999, 1.0
    %v5002 = vrcp.pop %v5000
    %v5003 = vmul.f32 1.0, %v5002
    %v5004 = vrcp.pop %v5001
    %v5005 = vmul.f32 1.0, %v5004
    %v5006 = vtanh.pop %v4930
    %v5007 = vtanh.pop %v4931
    %v5008 = vxor.u32 %v4932, 2147483648
    %v5009 = vxor.u32 %v4933, 2147483648
    %v5010 = vmul.f32 %v5008, 1.442695
    %v5011 = vpow.pop %v5010
    %v5012 = vmul.f32 %v5009, 1.442695
    %v5013 = vpow.pop %v5012
    %v5014 = vadd.f32 %v5011, 1.0
    %v5015 = vadd.f32 %v5013, 1.0
    %v5016 = vrcp.pop %v5014
    %v5017 = vmul.f32 1.0, %v5016
    %v5018 = vrcp.pop %v5015
    %v5019 = vmul.f32 1.0, %v5018
    %v5020 = vmul.f32 %v5003, %v4564
    %v5021 = vmul.f32 %v5005, %v4565
    %v5022 = vmul.f32 %v4991, %v5006
    %v5023 = vmul.f32 %v4993, %v5007
    %v5024 = vadd.f32 %v5020, %v5022
    %v5025 = vadd.f32 %v5021, %v5023
    %v5026 = vtanh.pop %v5024
    %v5027 = vtanh.pop %v5025
    %v5028 = vmul.f32 %v5017, %v5026
    %v5029 = vmul.f32 %v5019, %v5027
    %v5030 = vld [vmem:[%s1803] sm:$0xff]
    %v5031 = vld [vmem:[%s1803 + $0x8] sm:$0xff]
    %v5032 = vld [vmem:[%s1803 + $0x10] sm:$0xff]
    %v5033 = vld [vmem:[%s1803 + $0x18] sm:$0xff]
    %v5034 = vld [vmem:[%s1803 + $0x20] sm:$0xff]
    %v5035 = vld [vmem:[%s1803 + $0x28] sm:$0xff]
    %v5036 = vld [vmem:[%s1803 + $0x30] sm:$0xff]
    %v5037 = vld [vmem:[%s1803 + $0x38] sm:$0xff]
    %v5038 = vld [vmem:[%s1792 + $0x40] sm:$0xff]
    %v5039 = vld [vmem:[%s1792 + $0x48] sm:$0xff]
    %v5040 = vld [vmem:[%s1792 + $0x50] sm:$0xff]
    %v5041 = vld [vmem:[%s1792 + $0x58] sm:$0xff]
    %v5042 = vld [vmem:[%s1792 + $0x60] sm:$0xff]
    %v5043 = vld [vmem:[%s1792 + $0x68] sm:$0xff]
    %v5044 = vld [vmem:[%s1792 + $0x70] sm:$0xff]
    %v5045 = vld [vmem:[%s1792 + $0x78] sm:$0xff]
    %v5046 = vpack.c.bf16 %v4980, %v4980
    %v5047 = vpack.c.bf16 %v4981, %v4981
    %5048 = vmatprep.subr.bf16.mxu0 %v1335
    %5049 = vmatpush1.bf16.msra.mxu0 %v1334
    %5050 = vmatprep.subr.bf16.mxu0 %v1327
    %5051 = vmatpush1.bf16.msra.mxu0 %v1326
    %5052 = vmatprep.subr.bf16.mxu0 %v1319
    %5053 = vmatpush1.bf16.msra.mxu0 %v1318
    %5054 = vmatprep.subr.bf16.mxu0 %v1311
    %5055 = vmatpush1.bf16.msra.mxu0 %v1310
    %5056 = vmatprep.subr.bf16.mxu0 %v1303
    %5057 = vmatpush1.bf16.msra.mxu0 %v1302
    %5058 = vmatprep.subr.bf16.mxu0 %v1295
    %5059 = vmatpush1.bf16.msra.mxu0 %v1294
    %5060 = vmatprep.subr.bf16.mxu0 %v1287
    %5061 = vmatpush1.bf16.msra.mxu0 %v1286
    %5062 = vmatprep.subr.bf16.mxu0 %v1279
    %5063 = vmatpush1.bf16.msra.mxu0 %v1278
    %5064 = vmatprep.subr.bf16.mxu0 %v1399
    %5065 = vmatpush2.bf16.msra.mxu0 %v1398
    %5066 = vmatprep.subr.bf16.mxu0 %v1391
    %5067 = vmatpush2.bf16.msra.mxu0 %v1390
    %5068 = vmatprep.subr.bf16.mxu0 %v1383
    %5069 = vmatpush2.bf16.msra.mxu0 %v1382
    %5070 = vmatprep.subr.bf16.mxu0 %v1375
    %5071 = vmatpush2.bf16.msra.mxu0 %v1374
    %5072 = vmatprep.subr.bf16.mxu0 %v1367
    %5073 = vmatpush2.bf16.msra.mxu0 %v1366
    %5074 = vmatprep.subr.bf16.mxu0 %v1359
    %5075 = vmatpush2.bf16.msra.mxu0 %v1358
    %5076 = vmatprep.subr.bf16.mxu0 %v1351
    %5077 = vmatpush2.bf16.msra.mxu0 %v1350
    %5078 = vmatprep.subr.bf16.mxu0 %v1343
    %5079 = vmatpush2.bf16.msra.mxu0 %v1342
    %5080 = vmatprep.mubr.bf16.mxu0 %v5047
    %5081 = vmatmul.mubr.bf16.gmra.mxu0 %v5046
    %v5082 = vpop.f32.mrf.mxu0
    %v5083 = vadd.f32 0.0, %v5082
    %v5084 = vpop.f32.mrf.mxu0
    %v5085 = vadd.f32 0.0, %v5084
    %v5086 = vpop.f32.mrf.mxu0
    %v5087 = vpop.f32.mrf.mxu0
    %5088 = vdwg.mxu0
    %5089 = vmatprep.subr.bf16.mxu0 %v1337
    %5090 = vmatpush1.bf16.msra.mxu0 %v1336
    %5091 = vmatprep.subr.bf16.mxu0 %v1329
    %5092 = vmatpush1.bf16.msra.mxu0 %v1328
    %5093 = vmatprep.subr.bf16.mxu0 %v1321
    %5094 = vmatpush1.bf16.msra.mxu0 %v1320
    %5095 = vmatprep.subr.bf16.mxu0 %v1313
    %5096 = vmatpush1.bf16.msra.mxu0 %v1312
    %5097 = vmatprep.subr.bf16.mxu0 %v1305
    %5098 = vmatpush1.bf16.msra.mxu0 %v1304
    %5099 = vmatprep.subr.bf16.mxu0 %v1297
    %5100 = vmatpush1.bf16.msra.mxu0 %v1296
    %5101 = vmatprep.subr.bf16.mxu0 %v1289
    %5102 = vmatpush1.bf16.msra.mxu0 %v1288
    %5103 = vmatprep.subr.bf16.mxu0 %v1281
    %5104 = vmatpush1.bf16.msra.mxu0 %v1280
    %5105 = vmatprep.subr.bf16.mxu0 %v1401
    %5106 = vmatpush2.bf16.msra.mxu0 %v1400
    %5107 = vmatprep.subr.bf16.mxu0 %v1393
    %5108 = vmatpush2.bf16.msra.mxu0 %v1392
    %5109 = vmatprep.subr.bf16.mxu0 %v1385
    %5110 = vmatpush2.bf16.msra.mxu0 %v1384
    %5111 = vmatprep.subr.bf16.mxu0 %v1377
    %5112 = vmatpush2.bf16.msra.mxu0 %v1376
    %5113 = vmatprep.subr.bf16.mxu0 %v1369
    %5114 = vmatpush2.bf16.msra.mxu0 %v1368
    %5115 = vmatprep.subr.bf16.mxu0 %v1361
    %5116 = vmatpush2.bf16.msra.mxu0 %v1360
    %5117 = vmatprep.subr.bf16.mxu0 %v1353
    %5118 = vmatpush2.bf16.msra.mxu0 %v1352
    %5119 = vmatprep.subr.bf16.mxu0 %v1345
    %5120 = vmatpush2.bf16.msra.mxu0 %v1344
    %5121 = vmatprep.mubr.bf16.mxu0 %v5047
    %5122 = vmatmul.mubr.bf16.gmra.mxu0 %v5046
    %v5123 = vpop.f32.mrf.mxu0
    %v5124 = vadd.f32 0.0, %v5123
    %v5125 = vpop.f32.mrf.mxu0
    %v5126 = vadd.f32 0.0, %v5125
    %v5127 = vpop.f32.mrf.mxu0
    %v5128 = vpop.f32.mrf.mxu0
    %5129 = vdwg.mxu0
    %5130 = vmatprep.subr.bf16.mxu0 %v1339
    %5131 = vmatpush1.bf16.msra.mxu0 %v1338
    %5132 = vmatprep.subr.bf16.mxu0 %v1331
    %5133 = vmatpush1.bf16.msra.mxu0 %v1330
    %5134 = vmatprep.subr.bf16.mxu0 %v1323
    %5135 = vmatpush1.bf16.msra.mxu0 %v1322
    %5136 = vmatprep.subr.bf16.mxu0 %v1315
    %5137 = vmatpush1.bf16.msra.mxu0 %v1314
    %5138 = vmatprep.subr.bf16.mxu0 %v1307
    %5139 = vmatpush1.bf16.msra.mxu0 %v1306
    %5140 = vmatprep.subr.bf16.mxu0 %v1299
    %5141 = vmatpush1.bf16.msra.mxu0 %v1298
    %5142 = vmatprep.subr.bf16.mxu0 %v1291
    %5143 = vmatpush1.bf16.msra.mxu0 %v1290
    %5144 = vmatprep.subr.bf16.mxu0 %v1283
    %5145 = vmatpush1.bf16.msra.mxu0 %v1282
    %5146 = vmatprep.subr.bf16.mxu0 %v1403
    %5147 = vmatpush2.bf16.msra.mxu0 %v1402
    %5148 = vmatprep.subr.bf16.mxu0 %v1395
    %5149 = vmatpush2.bf16.msra.mxu0 %v1394
    %5150 = vmatprep.subr.bf16.mxu0 %v1387
    %5151 = vmatpush2.bf16.msra.mxu0 %v1386
    %5152 = vmatprep.subr.bf16.mxu0 %v1379
    %5153 = vmatpush2.bf16.msra.mxu0 %v1378
    %5154 = vmatprep.subr.bf16.mxu0 %v1371
    %5155 = vmatpush2.bf16.msra.mxu0 %v1370
    %5156 = vmatprep.subr.bf16.mxu0 %v1363
    %5157 = vmatpush2.bf16.msra.mxu0 %v1362
    %5158 = vmatprep.subr.bf16.mxu0 %v1355
    %5159 = vmatpush2.bf16.msra.mxu0 %v1354
    %5160 = vmatprep.subr.bf16.mxu0 %v1347
    %5161 = vmatpush2.bf16.msra.mxu0 %v1346
    %5162 = vmatprep.mubr.bf16.mxu0 %v5047
    %5163 = vmatmul.mubr.bf16.gmra.mxu0 %v5046
    %v5164 = vpop.f32.mrf.mxu0
    %v5165 = vadd.f32 0.0, %v5164
    %v5166 = vpop.f32.mrf.mxu0
    %v5167 = vadd.f32 0.0, %v5166
    %v5168 = vpop.f32.mrf.mxu0
    %v5169 = vpop.f32.mrf.mxu0
    %5170 = vdwg.mxu0
    %5171 = vmatprep.subr.bf16.mxu0 %v1341
    %5172 = vmatpush1.bf16.msra.mxu0 %v1340
    %5173 = vmatprep.subr.bf16.mxu0 %v1333
    %5174 = vmatpush1.bf16.msra.mxu0 %v1332
    %5175 = vmatprep.subr.bf16.mxu0 %v1325
    %5176 = vmatpush1.bf16.msra.mxu0 %v1324
    %5177 = vmatprep.subr.bf16.mxu0 %v1317
    %5178 = vmatpush1.bf16.msra.mxu0 %v1316
    %5179 = vmatprep.subr.bf16.mxu0 %v1309
    %5180 = vmatpush1.bf16.msra.mxu0 %v1308
    %5181 = vmatprep.subr.bf16.mxu0 %v1301
    %5182 = vmatpush1.bf16.msra.mxu0 %v1300
    %5183 = vmatprep.subr.bf16.mxu0 %v1293
    %5184 = vmatpush1.bf16.msra.mxu0 %v1292
    %5185 = vmatprep.subr.bf16.mxu0 %v1285
    %5186 = vmatpush1.bf16.msra.mxu0 %v1284
    %5187 = vmatprep.subr.bf16.mxu0 %v1405
    %5188 = vmatpush2.bf16.msra.mxu0 %v1404
    %5189 = vmatprep.subr.bf16.mxu0 %v1397
    %5190 = vmatpush2.bf16.msra.mxu0 %v1396
    %5191 = vmatprep.subr.bf16.mxu0 %v1389
    %5192 = vmatpush2.bf16.msra.mxu0 %v1388
    %5193 = vmatprep.subr.bf16.mxu0 %v1381
    %5194 = vmatpush2.bf16.msra.mxu0 %v1380
    %5195 = vmatprep.subr.bf16.mxu0 %v1373
    %5196 = vmatpush2.bf16.msra.mxu0 %v1372
    %5197 = vmatprep.subr.bf16.mxu0 %v1365
    %5198 = vmatpush2.bf16.msra.mxu0 %v1364
    %5199 = vmatprep.subr.bf16.mxu0 %v1357
    %5200 = vmatpush2.bf16.msra.mxu0 %v1356
    %5201 = vmatprep.subr.bf16.mxu0 %v1349
    %5202 = vmatpush2.bf16.msra.mxu0 %v1348
    %5203 = vmatprep.mubr.bf16.mxu0 %v5047
    %5204 = vmatmul.mubr.bf16.gmra.mxu0 %v5046
    %v5205 = vpop.f32.mrf.mxu0
    %v5206 = vadd.f32 0.0, %v5205
    %v5207 = vpop.f32.mrf.mxu0
    %v5208 = vadd.f32 0.0, %v5207
    %v5209 = vpop.f32.mrf.mxu0
    %v5210 = vpop.f32.mrf.mxu0
    %5211 = vdwg.mxu0
    %v5212 = vadd.f32 %v5030, %v5083
    %v5213 = vadd.f32 %v5031, %v5085
    %v5214 = vadd.f32 %v5032, %v5124
    %v5215 = vadd.f32 %v5033, %v5126
    %v5216 = vadd.f32 %v5034, %v5165
    %v5217 = vadd.f32 %v5035, %v5167
    %v5218 = vadd.f32 %v5036, %v5206
    %v5219 = vadd.f32 %v5037, %v5208
    %v5220 = vpack.c.bf16 %v5028, %v5028
    %v5221 = vpack.c.bf16 %v5029, %v5029
    %5222 = vmatprep.subr.bf16.mxu0 %v1719
    %5223 = vmatpush1.bf16.msra.mxu0 %v1718
    %5224 = vmatprep.subr.bf16.mxu0 %v1711
    %5225 = vmatpush1.bf16.msra.mxu0 %v1710
    %5226 = vmatprep.subr.bf16.mxu0 %v1703
    %5227 = vmatpush1.bf16.msra.mxu0 %v1702
    %5228 = vmatprep.subr.bf16.mxu0 %v1695
    %5229 = vmatpush1.bf16.msra.mxu0 %v1694
    %5230 = vmatprep.subr.bf16.mxu0 %v1687
    %5231 = vmatpush1.bf16.msra.mxu0 %v1686
    %5232 = vmatprep.subr.bf16.mxu0 %v1679
    %5233 = vmatpush1.bf16.msra.mxu0 %v1678
    %5234 = vmatprep.subr.bf16.mxu0 %v1671
    %5235 = vmatpush1.bf16.msra.mxu0 %v1670
    %5236 = vmatprep.subr.bf16.mxu0 %v1663
    %5237 = vmatpush1.bf16.msra.mxu0 %v1662
    %5238 = vmatprep.subr.bf16.mxu0 %v1783
    %5239 = vmatpush2.bf16.msra.mxu0 %v1782
    %5240 = vmatprep.subr.bf16.mxu0 %v1775
    %5241 = vmatpush2.bf16.msra.mxu0 %v1774
    %5242 = vmatprep.subr.bf16.mxu0 %v1767
    %5243 = vmatpush2.bf16.msra.mxu0 %v1766
    %5244 = vmatprep.subr.bf16.mxu0 %v1759
    %5245 = vmatpush2.bf16.msra.mxu0 %v1758
    %5246 = vmatprep.subr.bf16.mxu0 %v1751
    %5247 = vmatpush2.bf16.msra.mxu0 %v1750
    %5248 = vmatprep.subr.bf16.mxu0 %v1743
    %5249 = vmatpush2.bf16.msra.mxu0 %v1742
    %5250 = vmatprep.subr.bf16.mxu0 %v1735
    %5251 = vmatpush2.bf16.msra.mxu0 %v1734
    %5252 = vmatprep.subr.bf16.mxu0 %v1727
    %5253 = vmatpush2.bf16.msra.mxu0 %v1726
    %5254 = vmatprep.mubr.bf16.mxu0 %v5221
    %5255 = vmatmul.mubr.bf16.gmra.mxu0 %v5220
    %v5256 = vpop.f32.mrf.mxu0
    %v5257 = vadd.f32 0.0, %v5256
    %v5258 = vpop.f32.mrf.mxu0
    %v5259 = vadd.f32 0.0, %v5258
    %v5260 = vpop.f32.mrf.mxu0
    %v5261 = vpop.f32.mrf.mxu0
    %5262 = vdwg.mxu0
    %5263 = vmatprep.subr.bf16.mxu0 %v1721
    %5264 = vmatpush1.bf16.msra.mxu0 %v1720
    %5265 = vmatprep.subr.bf16.mxu0 %v1713
    %5266 = vmatpush1.bf16.msra.mxu0 %v1712
    %5267 = vmatprep.subr.bf16.mxu0 %v1705
    %5268 = vmatpush1.bf16.msra.mxu0 %v1704
    %5269 = vmatprep.subr.bf16.mxu0 %v1697
    %5270 = vmatpush1.bf16.msra.mxu0 %v1696
    %5271 = vmatprep.subr.bf16.mxu0 %v1689
    %5272 = vmatpush1.bf16.msra.mxu0 %v1688
    %5273 = vmatprep.subr.bf16.mxu0 %v1681
    %5274 = vmatpush1.bf16.msra.mxu0 %v1680
    %5275 = vmatprep.subr.bf16.mxu0 %v1673
    %5276 = vmatpush1.bf16.msra.mxu0 %v1672
    %5277 = vmatprep.subr.bf16.mxu0 %v1665
    %5278 = vmatpush1.bf16.msra.mxu0 %v1664
    %5279 = vmatprep.subr.bf16.mxu0 %v1785
    %5280 = vmatpush2.bf16.msra.mxu0 %v1784
    %5281 = vmatprep.subr.bf16.mxu0 %v1777
    %5282 = vmatpush2.bf16.msra.mxu0 %v1776
    %5283 = vmatprep.subr.bf16.mxu0 %v1769
    %5284 = vmatpush2.bf16.msra.mxu0 %v1768
    %5285 = vmatprep.subr.bf16.mxu0 %v1761
    %5286 = vmatpush2.bf16.msra.mxu0 %v1760
    %5287 = vmatprep.subr.bf16.mxu0 %v1753
    %5288 = vmatpush2.bf16.msra.mxu0 %v1752
    %5289 = vmatprep.subr.bf16.mxu0 %v1745
    %5290 = vmatpush2.bf16.msra.mxu0 %v1744
    %5291 = vmatprep.subr.bf16.mxu0 %v1737
    %5292 = vmatpush2.bf16.msra.mxu0 %v1736
    %5293 = vmatprep.subr.bf16.mxu0 %v1729
    %5294 = vmatpush2.bf16.msra.mxu0 %v1728
    %5295 = vmatprep.mubr.bf16.mxu0 %v5221
    %5296 = vmatmul.mubr.bf16.gmra.mxu0 %v5220
    %v5297 = vpop.f32.mrf.mxu0
    %v5298 = vadd.f32 0.0, %v5297
    %v5299 = vpop.f32.mrf.mxu0
    %v5300 = vadd.f32 0.0, %v5299
    %v5301 = vpop.f32.mrf.mxu0
    %v5302 = vpop.f32.mrf.mxu0
    %5303 = vdwg.mxu0
    %5304 = vmatprep.subr.bf16.mxu0 %v1723
    %5305 = vmatpush1.bf16.msra.mxu0 %v1722
    %5306 = vmatprep.subr.bf16.mxu0 %v1715
    %5307 = vmatpush1.bf16.msra.mxu0 %v1714
    %5308 = vmatprep.subr.bf16.mxu0 %v1707
    %5309 = vmatpush1.bf16.msra.mxu0 %v1706
    %5310 = vmatprep.subr.bf16.mxu0 %v1699
    %5311 = vmatpush1.bf16.msra.mxu0 %v1698
    %5312 = vmatprep.subr.bf16.mxu0 %v1691
    %5313 = vmatpush1.bf16.msra.mxu0 %v1690
    %5314 = vmatprep.subr.bf16.mxu0 %v1683
    %5315 = vmatpush1.bf16.msra.mxu0 %v1682
    %5316 = vmatprep.subr.bf16.mxu0 %v1675
    %5317 = vmatpush1.bf16.msra.mxu0 %v1674
    %5318 = vmatprep.subr.bf16.mxu0 %v1667
    %5319 = vmatpush1.bf16.msra.mxu0 %v1666
    %5320 = vmatprep.subr.bf16.mxu0 %v1787
    %5321 = vmatpush2.bf16.msra.mxu0 %v1786
    %5322 = vmatprep.subr.bf16.mxu0 %v1779
    %5323 = vmatpush2.bf16.msra.mxu0 %v1778
    %5324 = vmatprep.subr.bf16.mxu0 %v1771
    %5325 = vmatpush2.bf16.msra.mxu0 %v1770
    %5326 = vmatprep.subr.bf16.mxu0 %v1763
    %5327 = vmatpush2.bf16.msra.mxu0 %v1762
    %5328 = vmatprep.subr.bf16.mxu0 %v1755
    %5329 = vmatpush2.bf16.msra.mxu0 %v1754
    %5330 = vmatprep.subr.bf16.mxu0 %v1747
    %5331 = vmatpush2.bf16.msra.mxu0 %v1746
    %5332 = vmatprep.subr.bf16.mxu0 %v1739
    %5333 = vmatpush2.bf16.msra.mxu0 %v1738
    %5334 = vmatprep.subr.bf16.mxu0 %v1731
    %5335 = vmatpush2.bf16.msra.mxu0 %v1730
    %5336 = vmatprep.mubr.bf16.mxu0 %v5221
    %5337 = vmatmul.mubr.bf16.gmra.mxu0 %v5220
    %v5338 = vpop.f32.mrf.mxu0
    %v5339 = vadd.f32 0.0, %v5338
    %v5340 = vpop.f32.mrf.mxu0
    %v5341 = vadd.f32 0.0, %v5340
    %v5342 = vpop.f32.mrf.mxu0
    %v5343 = vpop.f32.mrf.mxu0
    %5344 = vdwg.mxu0
    %5345 = vmatprep.subr.bf16.mxu0 %v1725
    %5346 = vmatpush1.bf16.msra.mxu0 %v1724
    %5347 = vmatprep.subr.bf16.mxu0 %v1717
    %5348 = vmatpush1.bf16.msra.mxu0 %v1716
    %5349 = vmatprep.subr.bf16.mxu0 %v1709
    %5350 = vmatpush1.bf16.msra.mxu0 %v1708
    %5351 = vmatprep.subr.bf16.mxu0 %v1701
    %5352 = vmatpush1.bf16.msra.mxu0 %v1700
    %5353 = vmatprep.subr.bf16.mxu0 %v1693
    %5354 = vmatpush1.bf16.msra.mxu0 %v1692
    %5355 = vmatprep.subr.bf16.mxu0 %v1685
    %5356 = vmatpush1.bf16.msra.mxu0 %v1684
    %5357 = vmatprep.subr.bf16.mxu0 %v1677
    %5358 = vmatpush1.bf16.msra.mxu0 %v1676
    %5359 = vmatprep.subr.bf16.mxu0 %v1669
    %5360 = vmatpush1.bf16.msra.mxu0 %v1668
    %5361 = vmatprep.subr.bf16.mxu0 %v1789
    %5362 = vmatpush2.bf16.msra.mxu0 %v1788
    %5363 = vmatprep.subr.bf16.mxu0 %v1781
    %5364 = vmatpush2.bf16.msra.mxu0 %v1780
    %5365 = vmatprep.subr.bf16.mxu0 %v1773
    %5366 = vmatpush2.bf16.msra.mxu0 %v1772
    %5367 = vmatprep.subr.bf16.mxu0 %v1765
    %5368 = vmatpush2.bf16.msra.mxu0 %v1764
    %5369 = vmatprep.subr.bf16.mxu0 %v1757
    %5370 = vmatpush2.bf16.msra.mxu0 %v1756
    %5371 = vmatprep.subr.bf16.mxu0 %v1749
    %5372 = vmatpush2.bf16.msra.mxu0 %v1748
    %5373 = vmatprep.subr.bf16.mxu0 %v1741
    %5374 = vmatpush2.bf16.msra.mxu0 %v1740
    %5375 = vmatprep.subr.bf16.mxu0 %v1733
    %5376 = vmatpush2.bf16.msra.mxu0 %v1732
    %5377 = vmatprep.mubr.bf16.mxu0 %v5221
    %5378 = vmatmul.mubr.bf16.gmra.mxu0 %v5220
    %v5379 = vpop.f32.mrf.mxu0
    %v5380 = vadd.f32 0.0, %v5379
    %v5381 = vpop.f32.mrf.mxu0
    %v5382 = vadd.f32 0.0, %v5381
    %v5383 = vpop.f32.mrf.mxu0
    %v5384 = vpop.f32.mrf.mxu0
    %5385 = vdwg.mxu0
    %v5386 = vadd.f32 %v5038, %v5257
    %v5387 = vadd.f32 %v5039, %v5259
    %v5388 = vadd.f32 %v5040, %v5298
    %v5389 = vadd.f32 %v5041, %v5300
    %v5390 = vadd.f32 %v5042, %v5339
    %v5391 = vadd.f32 %v5043, %v5341
    %v5392 = vadd.f32 %v5044, %v5380
    %v5393 = vadd.f32 %v5045, %v5382
    %v5394 = vxor.u32 %v5212, 2147483648
    %v5395 = vxor.u32 %v5213, 2147483648
    %v5396 = vmul.f32 %v5394, 1.442695
    %v5397 = vpow.pop %v5396
    %v5398 = vmul.f32 %v5395, 1.442695
    %v5399 = vpow.pop %v5398
    %v5400 = vadd.f32 %v5397, 1.0
    %v5401 = vadd.f32 %v5399, 1.0
    %v5402 = vrcp.pop %v5400
    %v5403 = vmul.f32 1.0, %v5402
    %v5404 = vrcp.pop %v5401
    %v5405 = vmul.f32 1.0, %v5404
    %v5406 = vxor.u32 %v5214, 2147483648
    %v5407 = vxor.u32 %v5215, 2147483648
    %v5408 = vmul.f32 %v5406, 1.442695
    %v5409 = vpow.pop %v5408
    %v5410 = vmul.f32 %v5407, 1.442695
    %v5411 = vpow.pop %v5410
    %v5412 = vadd.f32 %v5409, 1.0
    %v5413 = vadd.f32 %v5411, 1.0
    %v5414 = vrcp.pop %v5412
    %v5415 = vmul.f32 1.0, %v5414
    %v5416 = vrcp.pop %v5413
    %v5417 = vmul.f32 1.0, %v5416
    %v5418 = vtanh.pop %v5216
    %v5419 = vtanh.pop %v5217
    %v5420 = vxor.u32 %v5218, 2147483648
    %v5421 = vxor.u32 %v5219, 2147483648
    %v5422 = vmul.f32 %v5420, 1.442695
    %v5423 = vpow.pop %v5422
    %v5424 = vmul.f32 %v5421, 1.442695
    %v5425 = vpow.pop %v5424
    %v5426 = vadd.f32 %v5423, 1.0
    %v5427 = vadd.f32 %v5425, 1.0
    %v5428 = vrcp.pop %v5426
    %v5429 = vmul.f32 1.0, %v5428
    %v5430 = vrcp.pop %v5427
    %v5431 = vmul.f32 1.0, %v5430
    %v5432 = vmul.f32 %v5415, %v4976
    %v5433 = vmul.f32 %v5417, %v4977
    %v5434 = vmul.f32 %v5403, %v5418
    %v5435 = vmul.f32 %v5405, %v5419
    %v5436 = vadd.f32 %v5432, %v5434
    %v5437 = vadd.f32 %v5433, %v5435
    %v5438 = vtanh.pop %v5436
    %v5439 = vtanh.pop %v5437
    %v5440 = vmul.f32 %v5429, %v5438
    %v5441 = vmul.f32 %v5431, %v5439
    %v5442 = vxor.u32 %v5386, 2147483648
    %v5443 = vxor.u32 %v5387, 2147483648
    %v5444 = vmul.f32 %v5442, 1.442695
    %v5445 = vpow.pop %v5444
    %v5446 = vmul.f32 %v5443, 1.442695
    %v5447 = vpow.pop %v5446
    %v5448 = vadd.f32 %v5445, 1.0
    %v5449 = vadd.f32 %v5447, 1.0
    %v5450 = vrcp.pop %v5448
    %v5451 = vmul.f32 1.0, %v5450
    %v5452 = vrcp.pop %v5449
    %v5453 = vmul.f32 1.0, %v5452
    %v5454 = vxor.u32 %v5388, 2147483648
    %v5455 = vxor.u32 %v5389, 2147483648
    %v5456 = vmul.f32 %v5454, 1.442695
    %v5457 = vpow.pop %v5456
    %v5458 = vmul.f32 %v5455, 1.442695
    %v5459 = vpow.pop %v5458
    %v5460 = vadd.f32 %v5457, 1.0
    %v5461 = vadd.f32 %v5459, 1.0
    %v5462 = vrcp.pop %v5460
    %v5463 = vmul.f32 1.0, %v5462
    %v5464 = vrcp.pop %v5461
    %v5465 = vmul.f32 1.0, %v5464
    %v5466 = vtanh.pop %v5390
    %v5467 = vtanh.pop %v5391
    %v5468 = vxor.u32 %v5392, 2147483648
    %v5469 = vxor.u32 %v5393, 2147483648
    %v5470 = vmul.f32 %v5468, 1.442695
    %v5471 = vpow.pop %v5470
    %v5472 = vmul.f32 %v5469, 1.442695
    %v5473 = vpow.pop %v5472
    %v5474 = vadd.f32 %v5471, 1.0
    %v5475 = vadd.f32 %v5473, 1.0
    %v5476 = vrcp.pop %v5474
    %v5477 = vmul.f32 1.0, %v5476
    %v5478 = vrcp.pop %v5475
    %v5479 = vmul.f32 1.0, %v5478
    %v5480 = vmul.f32 %v5463, %v5024
    %v5481 = vmul.f32 %v5465, %v5025
    %v5482 = vmul.f32 %v5451, %v5466
    %v5483 = vmul.f32 %v5453, %v5467
    %v5484 = vadd.f32 %v5480, %v5482
    %v5485 = vadd.f32 %v5481, %v5483
    %v5486 = vtanh.pop %v5484
    %v5487 = vtanh.pop %v5485
    %v5488 = vmul.f32 %v5477, %v5486
    %v5489 = vmul.f32 %v5479, %v5487
    %v5490 = vpack.c.bf16 %v5440, %v5440
    %v5491 = vpack.c.bf16 %v5441, %v5441
    %v5492 = vpack.c.bf16 %v5488, %v5488
    %v5493 = vpack.c.bf16 %v5489, %v5489
    %v5494 = vld [vmem:[#allocation9] sm:$0xff]
    %v5495 = vld [vmem:[#allocation9 + $0x8] sm:$0xff]
    %v5496 = vld [vmem:[#allocation9 + $0x10] sm:$0xff]
    %v5497 = vld [vmem:[#allocation9 + $0x18] sm:$0xff]
    %v5498 = vld [vmem:[#allocation9 + $0x20] sm:$0xff]
    %v5499 = vld [vmem:[#allocation9 + $0x28] sm:$0xff]
    %v5500 = vld [vmem:[#allocation9 + $0x30] sm:$0xff]
    %v5501 = vld [vmem:[#allocation9 + $0x38] sm:$0xff]
    %v5502 = vld [vmem:[#allocation9 + $0x40] sm:$0xff]
    %v5503 = vld [vmem:[#allocation9 + $0x48] sm:$0xff]
    %v5504 = vld [vmem:[#allocation9 + $0x50] sm:$0xff]
    %v5505 = vld [vmem:[#allocation9 + $0x58] sm:$0xff]
    %v5506 = vld [vmem:[#allocation9 + $0x60] sm:$0xff]
    %v5507 = vld [vmem:[#allocation9 + $0x68] sm:$0xff]
    %v5508 = vld [vmem:[#allocation9 + $0x70] sm:$0xff]
    %v5509 = vld [vmem:[#allocation9 + $0x78] sm:$0xff]
    %v5510 = vld [vmem:[#allocation9 + $0x80] sm:$0xff]
    %v5511 = vld [vmem:[#allocation9 + $0x88] sm:$0xff]
    %v5512 = vld [vmem:[#allocation9 + $0x90] sm:$0xff]
    %v5513 = vld [vmem:[#allocation9 + $0x98] sm:$0xff]
    %v5514 = vld [vmem:[#allocation9 + $0xa0] sm:$0xff]
    %v5515 = vld [vmem:[#allocation9 + $0xa8] sm:$0xff]
    %v5516 = vld [vmem:[#allocation9 + $0xb0] sm:$0xff]
    %v5517 = vld [vmem:[#allocation9 + $0xb8] sm:$0xff]
    %v5518 = vld [vmem:[#allocation9 + $0xc0] sm:$0xff]
    %v5519 = vld [vmem:[#allocation9 + $0xc8] sm:$0xff]
    %v5520 = vld [vmem:[#allocation9 + $0xd0] sm:$0xff]
    %v5521 = vld [vmem:[#allocation9 + $0xd8] sm:$0xff]
    %v5522 = vld [vmem:[#allocation9 + $0xe0] sm:$0xff]
    %v5523 = vld [vmem:[#allocation9 + $0xe8] sm:$0xff]
    %v5524 = vld [vmem:[#allocation9 + $0xf0] sm:$0xff]
    %v5525 = vld [vmem:[#allocation9 + $0xf8] sm:$0xff]
    %v5526 = vld [vmem:[#allocation9 + $0x100] sm:$0xff]
    %v5527 = vld [vmem:[#allocation9 + $0x108] sm:$0xff]
    %v5528 = vld [vmem:[#allocation9 + $0x110] sm:$0xff]
    %v5529 = vld [vmem:[#allocation9 + $0x118] sm:$0xff]
    %v5530 = vld [vmem:[#allocation9 + $0x120] sm:$0xff]
    %v5531 = vld [vmem:[#allocation9 + $0x128] sm:$0xff]
    %v5532 = vld [vmem:[#allocation9 + $0x130] sm:$0xff]
    %v5533 = vld [vmem:[#allocation9 + $0x138] sm:$0xff]
    %v5534 = vld [vmem:[#allocation9 + $0x140] sm:$0xff]
    %v5535 = vld [vmem:[#allocation9 + $0x148] sm:$0xff]
    %v5536 = vld [vmem:[#allocation9 + $0x150] sm:$0xff]
    %v5537 = vld [vmem:[#allocation9 + $0x158] sm:$0xff]
    %v5538 = vld [vmem:[#allocation9 + $0x160] sm:$0xff]
    %v5539 = vld [vmem:[#allocation9 + $0x168] sm:$0xff]
    %v5540 = vld [vmem:[#allocation9 + $0x170] sm:$0xff]
    %v5541 = vld [vmem:[#allocation9 + $0x178] sm:$0xff]
    %v5542 = vld [vmem:[#allocation9 + $0x180] sm:$0xff]
    %v5543 = vld [vmem:[#allocation9 + $0x188] sm:$0xff]
    %v5544 = vld [vmem:[#allocation9 + $0x190] sm:$0xff]
    %v5545 = vld [vmem:[#allocation9 + $0x198] sm:$0xff]
    %v5546 = vld [vmem:[#allocation9 + $0x1a0] sm:$0xff]
    %v5547 = vld [vmem:[#allocation9 + $0x1a8] sm:$0xff]
    %v5548 = vld [vmem:[#allocation9 + $0x1b0] sm:$0xff]
    %v5549 = vld [vmem:[#allocation9 + $0x1b8] sm:$0xff]
    %v5550 = vld [vmem:[#allocation9 + $0x1c0] sm:$0xff]
    %v5551 = vld [vmem:[#allocation9 + $0x1c8] sm:$0xff]
    %v5552 = vld [vmem:[#allocation9 + $0x1d0] sm:$0xff]
    %v5553 = vld [vmem:[#allocation9 + $0x1d8] sm:$0xff]
    %v5554 = vld [vmem:[#allocation9 + $0x1e0] sm:$0xff]
    %v5555 = vld [vmem:[#allocation9 + $0x1e8] sm:$0xff]
    %v5556 = vld [vmem:[#allocation9 + $0x1f0] sm:$0xff]
    %v5557 = vld [vmem:[#allocation9 + $0x1f8] sm:$0xff]
    %v5558 = vld [vmem:[#allocation9 + $0x200] sm:$0xff]
    %v5559 = vld [vmem:[#allocation9 + $0x208] sm:$0xff]
    %v5560 = vld [vmem:[#allocation9 + $0x210] sm:$0xff]
    %v5561 = vld [vmem:[#allocation9 + $0x218] sm:$0xff]
    %v5562 = vld [vmem:[#allocation9 + $0x220] sm:$0xff]
    %v5563 = vld [vmem:[#allocation9 + $0x228] sm:$0xff]
    %v5564 = vld [vmem:[#allocation9 + $0x230] sm:$0xff]
    %v5565 = vld [vmem:[#allocation9 + $0x238] sm:$0xff]
    %v5566 = vld [vmem:[#allocation9 + $0x240] sm:$0xff]
    %v5567 = vld [vmem:[#allocation9 + $0x248] sm:$0xff]
    %v5568 = vld [vmem:[#allocation9 + $0x250] sm:$0xff]
    %v5569 = vld [vmem:[#allocation9 + $0x258] sm:$0xff]
    %v5570 = vld [vmem:[#allocation9 + $0x260] sm:$0xff]
    %v5571 = vld [vmem:[#allocation9 + $0x268] sm:$0xff]
    %v5572 = vld [vmem:[#allocation9 + $0x270] sm:$0xff]
    %v5573 = vld [vmem:[#allocation9 + $0x278] sm:$0xff]
    %v5574 = vld [vmem:[#allocation9 + $0x280] sm:$0xff]
    %v5575 = vld [vmem:[#allocation9 + $0x288] sm:$0xff]
    %v5576 = vld [vmem:[#allocation9 + $0x290] sm:$0xff]
    %v5577 = vld [vmem:[#allocation9 + $0x298] sm:$0xff]
    %v5578 = vld [vmem:[#allocation9 + $0x2a0] sm:$0xff]
    %v5579 = vld [vmem:[#allocation9 + $0x2a8] sm:$0xff]
    %v5580 = vld [vmem:[#allocation9 + $0x2b0] sm:$0xff]
    %v5581 = vld [vmem:[#allocation9 + $0x2b8] sm:$0xff]
    %v5582 = vld [vmem:[#allocation9 + $0x2c0] sm:$0xff]
    %v5583 = vld [vmem:[#allocation9 + $0x2c8] sm:$0xff]
    %v5584 = vld [vmem:[#allocation9 + $0x2d0] sm:$0xff]
    %v5585 = vld [vmem:[#allocation9 + $0x2d8] sm:$0xff]
    %v5586 = vld [vmem:[#allocation9 + $0x2e0] sm:$0xff]
    %v5587 = vld [vmem:[#allocation9 + $0x2e8] sm:$0xff]
    %v5588 = vld [vmem:[#allocation9 + $0x2f0] sm:$0xff]
    %v5589 = vld [vmem:[#allocation9 + $0x2f8] sm:$0xff]
    %v5590 = vld [vmem:[#allocation9 + $0x300] sm:$0xff]
    %v5591 = vld [vmem:[#allocation9 + $0x308] sm:$0xff]
    %v5592 = vld [vmem:[#allocation9 + $0x310] sm:$0xff]
    %v5593 = vld [vmem:[#allocation9 + $0x318] sm:$0xff]
    %v5594 = vld [vmem:[#allocation9 + $0x320] sm:$0xff]
    %v5595 = vld [vmem:[#allocation9 + $0x328] sm:$0xff]
    %v5596 = vld [vmem:[#allocation9 + $0x330] sm:$0xff]
    %v5597 = vld [vmem:[#allocation9 + $0x338] sm:$0xff]
    %v5598 = vld [vmem:[#allocation9 + $0x340] sm:$0xff]
    %v5599 = vld [vmem:[#allocation9 + $0x348] sm:$0xff]
    %v5600 = vld [vmem:[#allocation9 + $0x350] sm:$0xff]
    %v5601 = vld [vmem:[#allocation9 + $0x358] sm:$0xff]
    %v5602 = vld [vmem:[#allocation9 + $0x360] sm:$0xff]
    %v5603 = vld [vmem:[#allocation9 + $0x368] sm:$0xff]
    %v5604 = vld [vmem:[#allocation9 + $0x370] sm:$0xff]
    %v5605 = vld [vmem:[#allocation9 + $0x378] sm:$0xff]
    %v5606 = vld [vmem:[#allocation9 + $0x380] sm:$0xff]
    %v5607 = vld [vmem:[#allocation9 + $0x388] sm:$0xff]
    %v5608 = vld [vmem:[#allocation9 + $0x390] sm:$0xff]
    %v5609 = vld [vmem:[#allocation9 + $0x398] sm:$0xff]
    %v5610 = vld [vmem:[#allocation9 + $0x3a0] sm:$0xff]
    %v5611 = vld [vmem:[#allocation9 + $0x3a8] sm:$0xff]
    %v5612 = vld [vmem:[#allocation9 + $0x3b0] sm:$0xff]
    %v5613 = vld [vmem:[#allocation9 + $0x3b8] sm:$0xff]
    %v5614 = vld [vmem:[#allocation9 + $0x3c0] sm:$0xff]
    %v5615 = vld [vmem:[#allocation9 + $0x3c8] sm:$0xff]
    %v5616 = vld [vmem:[#allocation9 + $0x3d0] sm:$0xff]
    %v5617 = vld [vmem:[#allocation9 + $0x3d8] sm:$0xff]
    %v5618 = vld [vmem:[#allocation9 + $0x3e0] sm:$0xff]
    %v5619 = vld [vmem:[#allocation9 + $0x3e8] sm:$0xff]
    %v5620 = vld [vmem:[#allocation9 + $0x3f0] sm:$0xff]
    %v5621 = vld [vmem:[#allocation9 + $0x3f8] sm:$0xff]
    %v5622 = vpack.c.bf16 %v5496, %v5494
    %v5623 = vpack.c.bf16 %v5497, %v5495
    %v5624 = vpack.c.bf16 %v5500, %v5498
    %v5625 = vpack.c.bf16 %v5501, %v5499
    %v5626 = vpack.c.bf16 %v5504, %v5502
    %v5627 = vpack.c.bf16 %v5505, %v5503
    %v5628 = vpack.c.bf16 %v5508, %v5506
    %v5629 = vpack.c.bf16 %v5509, %v5507
    %v5630 = vpack.c.bf16 %v5512, %v5510
    %v5631 = vpack.c.bf16 %v5513, %v5511
    %v5632 = vpack.c.bf16 %v5516, %v5514
    %v5633 = vpack.c.bf16 %v5517, %v5515
    %v5634 = vpack.c.bf16 %v5520, %v5518
    %v5635 = vpack.c.bf16 %v5521, %v5519
    %v5636 = vpack.c.bf16 %v5524, %v5522
    %v5637 = vpack.c.bf16 %v5525, %v5523
    %v5638 = vpack.c.bf16 %v5528, %v5526
    %v5639 = vpack.c.bf16 %v5529, %v5527
    %v5640 = vpack.c.bf16 %v5532, %v5530
    %v5641 = vpack.c.bf16 %v5533, %v5531
    %v5642 = vpack.c.bf16 %v5536, %v5534
    %v5643 = vpack.c.bf16 %v5537, %v5535
    %v5644 = vpack.c.bf16 %v5540, %v5538
    %v5645 = vpack.c.bf16 %v5541, %v5539
    %v5646 = vpack.c.bf16 %v5544, %v5542
    %v5647 = vpack.c.bf16 %v5545, %v5543
    %v5648 = vpack.c.bf16 %v5548, %v5546
    %v5649 = vpack.c.bf16 %v5549, %v5547
    %v5650 = vpack.c.bf16 %v5552, %v5550
    %v5651 = vpack.c.bf16 %v5553, %v5551
    %v5652 = vpack.c.bf16 %v5556, %v5554
    %v5653 = vpack.c.bf16 %v5557, %v5555
    %v5654 = vpack.c.bf16 %v5560, %v5558
    %v5655 = vpack.c.bf16 %v5561, %v5559
    %v5656 = vpack.c.bf16 %v5564, %v5562
    %v5657 = vpack.c.bf16 %v5565, %v5563
    %v5658 = vpack.c.bf16 %v5568, %v5566
    %v5659 = vpack.c.bf16 %v5569, %v5567
    %v5660 = vpack.c.bf16 %v5572, %v5570
    %v5661 = vpack.c.bf16 %v5573, %v5571
    %v5662 = vpack.c.bf16 %v5576, %v5574
    %v5663 = vpack.c.bf16 %v5577, %v5575
    %v5664 = vpack.c.bf16 %v5580, %v5578
    %v5665 = vpack.c.bf16 %v5581, %v5579
    %v5666 = vpack.c.bf16 %v5584, %v5582
    %v5667 = vpack.c.bf16 %v5585, %v5583
    %v5668 = vpack.c.bf16 %v5588, %v5586
    %v5669 = vpack.c.bf16 %v5589, %v5587
    %v5670 = vpack.c.bf16 %v5592, %v5590
    %v5671 = vpack.c.bf16 %v5593, %v5591
    %v5672 = vpack.c.bf16 %v5596, %v5594
    %v5673 = vpack.c.bf16 %v5597, %v5595
    %v5674 = vpack.c.bf16 %v5600, %v5598
    %v5675 = vpack.c.bf16 %v5601, %v5599
    %v5676 = vpack.c.bf16 %v5604, %v5602
    %v5677 = vpack.c.bf16 %v5605, %v5603
    %v5678 = vpack.c.bf16 %v5608, %v5606
    %v5679 = vpack.c.bf16 %v5609, %v5607
    %v5680 = vpack.c.bf16 %v5612, %v5610
    %v5681 = vpack.c.bf16 %v5613, %v5611
    %v5682 = vpack.c.bf16 %v5616, %v5614
    %v5683 = vpack.c.bf16 %v5617, %v5615
    %v5684 = vpack.c.bf16 %v5620, %v5618
    %v5685 = vpack.c.bf16 %v5621, %v5619
    %v5686 = vld [vmem:[%s6] sm:$0x3]
    %v5688 = vlaneseq
    %v5689 = vshrl.u32 %v5688, 7
    %v5690 = vsub.s32 0, %v5689
    %v5691 = vrot.slane %v5686, %v5690
    %v5692 = vlaneseq
    %v5693 = vshrl.u32 %v5692, 7
    %v5694 = vsub.s32 1, %v5693
    %v5695 = vrot.slane %v5686, %v5694
    %5698 = vmatprep.subr.bf16.mxu0 %v5637
    %5699 = vmatpush1.bf16.msra.mxu0 %v5636
    %5700 = vmatprep.subr.bf16.mxu0 %v5635
    %5701 = vmatpush1.bf16.msra.mxu0 %v5634
    %5702 = vmatprep.subr.bf16.mxu0 %v5633
    %5703 = vmatpush1.bf16.msra.mxu0 %v5632
    %5704 = vmatprep.subr.bf16.mxu0 %v5631
    %5705 = vmatpush1.bf16.msra.mxu0 %v5630
    %5706 = vmatprep.subr.bf16.mxu0 %v5629
    %5707 = vmatpush1.bf16.msra.mxu0 %v5628
    %5708 = vmatprep.subr.bf16.mxu0 %v5627
    %5709 = vmatpush1.bf16.msra.mxu0 %v5626
    %5710 = vmatprep.subr.bf16.mxu0 %v5625
    %5711 = vmatpush1.bf16.msra.mxu0 %v5624
    %5712 = vmatprep.subr.bf16.mxu0 %v5623
    %5713 = vmatpush1.bf16.msra.mxu0 %v5622
    %5714 = vmatprep.subr.bf16.mxu0 %v5653
    %5715 = vmatpush2.bf16.msra.mxu0 %v5652
    %5716 = vmatprep.subr.bf16.mxu0 %v5651
    %5717 = vmatpush2.bf16.msra.mxu0 %v5650
    %5718 = vmatprep.subr.bf16.mxu0 %v5649
    %5719 = vmatpush2.bf16.msra.mxu0 %v5648
    %5720 = vmatprep.subr.bf16.mxu0 %v5647
    %5721 = vmatpush2.bf16.msra.mxu0 %v5646
    %5722 = vmatprep.subr.bf16.mxu0 %v5645
    %5723 = vmatpush2.bf16.msra.mxu0 %v5644
    %5724 = vmatprep.subr.bf16.mxu0 %v5643
    %5725 = vmatpush2.bf16.msra.mxu0 %v5642
    %5726 = vmatprep.subr.bf16.mxu0 %v5641
    %5727 = vmatpush2.bf16.msra.mxu0 %v5640
    %5728 = vmatprep.subr.bf16.mxu0 %v5639
    %5729 = vmatpush2.bf16.msra.mxu0 %v5638
    %5730 = vmatprep.mubr.bf16.mxu0 %v5491
    %5731 = vmatmul.mubr.bf16.gmra.mxu0 %v5490
    %v5732 = vpop.f32.mrf.mxu0
    %v5733 = vadd.f32 %v5691, %v5732
    %v5734 = vpop.f32.mrf.mxu0
    %v5735 = vadd.f32 %v5695, %v5734
    %v5736 = vpop.f32.mrf.mxu0
    %v5737 = vpop.f32.mrf.mxu0
    %5738 = vdwg.mxu0
    %5739 = vmatprep.subr.bf16.mxu0 %v5669
    %5740 = vmatpush1.bf16.msra.mxu0 %v5668
    %5741 = vmatprep.subr.bf16.mxu0 %v5667
    %5742 = vmatpush1.bf16.msra.mxu0 %v5666
    %5743 = vmatprep.subr.bf16.mxu0 %v5665
    %5744 = vmatpush1.bf16.msra.mxu0 %v5664
    %5745 = vmatprep.subr.bf16.mxu0 %v5663
    %5746 = vmatpush1.bf16.msra.mxu0 %v5662
    %5747 = vmatprep.subr.bf16.mxu0 %v5661
    %5748 = vmatpush1.bf16.msra.mxu0 %v5660
    %5749 = vmatprep.subr.bf16.mxu0 %v5659
    %5750 = vmatpush1.bf16.msra.mxu0 %v5658
    %5751 = vmatprep.subr.bf16.mxu0 %v5657
    %5752 = vmatpush1.bf16.msra.mxu0 %v5656
    %5753 = vmatprep.subr.bf16.mxu0 %v5655
    %5754 = vmatpush1.bf16.msra.mxu0 %v5654
    %5755 = vmatprep.subr.bf16.mxu0 %v5685
    %5756 = vmatpush2.bf16.msra.mxu0 %v5684
    %5757 = vmatprep.subr.bf16.mxu0 %v5683
    %5758 = vmatpush2.bf16.msra.mxu0 %v5682
    %5759 = vmatprep.subr.bf16.mxu0 %v5681
    %5760 = vmatpush2.bf16.msra.mxu0 %v5680
    %5761 = vmatprep.subr.bf16.mxu0 %v5679
    %5762 = vmatpush2.bf16.msra.mxu0 %v5678
    %5763 = vmatprep.subr.bf16.mxu0 %v5677
    %5764 = vmatpush2.bf16.msra.mxu0 %v5676
    %5765 = vmatprep.subr.bf16.mxu0 %v5675
    %5766 = vmatpush2.bf16.msra.mxu0 %v5674
    %5767 = vmatprep.subr.bf16.mxu0 %v5673
    %5768 = vmatpush2.bf16.msra.mxu0 %v5672
    %5769 = vmatprep.subr.bf16.mxu0 %v5671
    %5770 = vmatpush2.bf16.msra.mxu0 %v5670
    %5771 = vmatprep.mubr.bf16.mxu0 %v5493
    %5772 = vmatmul.mubr.bf16.gmra.mxu0 %v5492
    %v5773 = vpop.f32.mrf.mxu0
    %v5774 = vadd.f32 %v5733, %v5773
    %v5775 = vpop.f32.mrf.mxu0
    %v5776 = vadd.f32 %v5735, %v5775
    %v5777 = vpop.f32.mrf.mxu0
    %v5778 = vpop.f32.mrf.mxu0
    %5779 = vdwg.mxu0
    %vm5780 = vcmp.gt.f32.partialorder %v5774, 0.0
    %vm5781 = vcmp.gt.f32.partialorder %v5776, 0.0
    %v5782 = vmin.f32 %v5774, 0.0
    %v5783 = vmin.f32 %v5776, 0.0
    %v5784 = vmul.f32 %v5782, 1.442695
    %v5785 = vpow.pop %v5784
    %v5786 = vmul.f32 %v5783, 1.442695
    %v5787 = vpow.pop %v5786
    %v5788 = vsub.f32 %v5785, 1.0
    %v5789 = vsub.f32 %v5787, 1.0
    %v5790 = vsel %vm5780, %v5774, %v5788
    %v5791 = vsel %vm5781, %v5776, %v5789
    %v5792 = vpack.c.bf16 %v5790, %v5790
    %v5793 = vpack.c.bf16 %v5791, %v5791
    %v5794 = vld [vmem:[#allocation11] sm:$0xff]
    %v5795 = vld [vmem:[#allocation11 + $0x8] sm:$0xff]
    %v5796 = vld [vmem:[#allocation11 + $0x10] sm:$0xff]
    %v5797 = vld [vmem:[#allocation11 + $0x18] sm:$0xff]
    %v5798 = vld [vmem:[#allocation11 + $0x20] sm:$0xff]
    %v5799 = vld [vmem:[#allocation11 + $0x28] sm:$0xff]
    %v5800 = vld [vmem:[#allocation11 + $0x30] sm:$0xff]
    %v5801 = vld [vmem:[#allocation11 + $0x38] sm:$0xff]
    %v5802 = vld [vmem:[#allocation11 + $0x40] sm:$0xff]
    %v5803 = vld [vmem:[#allocation11 + $0x48] sm:$0xff]
    %v5804 = vld [vmem:[#allocation11 + $0x50] sm:$0xff]
    %v5805 = vld [vmem:[#allocation11 + $0x58] sm:$0xff]
    %v5806 = vld [vmem:[#allocation11 + $0x60] sm:$0xff]
    %v5807 = vld [vmem:[#allocation11 + $0x68] sm:$0xff]
    %v5808 = vld [vmem:[#allocation11 + $0x70] sm:$0xff]
    %v5809 = vld [vmem:[#allocation11 + $0x78] sm:$0xff]
    %v5810 = vld [vmem:[#allocation11 + $0x80] sm:$0xff]
    %v5811 = vld [vmem:[#allocation11 + $0x88] sm:$0xff]
    %v5812 = vld [vmem:[#allocation11 + $0x90] sm:$0xff]
    %v5813 = vld [vmem:[#allocation11 + $0x98] sm:$0xff]
    %v5814 = vld [vmem:[#allocation11 + $0xa0] sm:$0xff]
    %v5815 = vld [vmem:[#allocation11 + $0xa8] sm:$0xff]
    %v5816 = vld [vmem:[#allocation11 + $0xb0] sm:$0xff]
    %v5817 = vld [vmem:[#allocation11 + $0xb8] sm:$0xff]
    %v5818 = vld [vmem:[#allocation11 + $0xc0] sm:$0xff]
    %v5819 = vld [vmem:[#allocation11 + $0xc8] sm:$0xff]
    %v5820 = vld [vmem:[#allocation11 + $0xd0] sm:$0xff]
    %v5821 = vld [vmem:[#allocation11 + $0xd8] sm:$0xff]
    %v5822 = vld [vmem:[#allocation11 + $0xe0] sm:$0xff]
    %v5823 = vld [vmem:[#allocation11 + $0xe8] sm:$0xff]
    %v5824 = vld [vmem:[#allocation11 + $0xf0] sm:$0xff]
    %v5825 = vld [vmem:[#allocation11 + $0xf8] sm:$0xff]
    %v5826 = vpack.c.bf16 %v5795, %v5794
    %v5827 = vpack.c.bf16 %v5797, %v5796
    %v5828 = vpack.c.bf16 %v5799, %v5798
    %v5829 = vpack.c.bf16 %v5801, %v5800
    %v5830 = vpack.c.bf16 %v5803, %v5802
    %v5831 = vpack.c.bf16 %v5805, %v5804
    %v5832 = vpack.c.bf16 %v5807, %v5806
    %v5833 = vpack.c.bf16 %v5809, %v5808
    %v5834 = vpack.c.bf16 %v5811, %v5810
    %v5835 = vpack.c.bf16 %v5813, %v5812
    %v5836 = vpack.c.bf16 %v5815, %v5814
    %v5837 = vpack.c.bf16 %v5817, %v5816
    %v5838 = vpack.c.bf16 %v5819, %v5818
    %v5839 = vpack.c.bf16 %v5821, %v5820
    %v5840 = vpack.c.bf16 %v5823, %v5822
    %v5841 = vpack.c.bf16 %v5825, %v5824
    %v5842 = vld [vmem:[%s8] sm:$0x1]
    %v5844 = vlaneseq
    %v5845 = vshrl.u32 %v5844, 7
    %v5846 = vsub.s32 0, %v5845
    %v5847 = vrot.slane %v5842, %v5846
    %5849 = vmatprep.subr.bf16.mxu0 0
    %5850 = vmatpush1.bf16.msra.mxu0 %v5833
    %5851 = vmatprep.subr.bf16.mxu0 0
    %5852 = vmatpush1.bf16.msra.mxu0 %v5832
    %5853 = vmatprep.subr.bf16.mxu0 0
    %5854 = vmatpush1.bf16.msra.mxu0 %v5831
    %5855 = vmatprep.subr.bf16.mxu0 0
    %5856 = vmatpush1.bf16.msra.mxu0 %v5830
    %5857 = vmatprep.subr.bf16.mxu0 0
    %5858 = vmatpush1.bf16.msra.mxu0 %v5829
    %5859 = vmatprep.subr.bf16.mxu0 0
    %5860 = vmatpush1.bf16.msra.mxu0 %v5828
    %5861 = vmatprep.subr.bf16.mxu0 0
    %5862 = vmatpush1.bf16.msra.mxu0 %v5827
    %5863 = vmatprep.subr.bf16.mxu0 0
    %5864 = vmatpush1.bf16.msra.mxu0 %v5826
    %5865 = vmatprep.subr.bf16.mxu0 0
    %5866 = vmatpush2.bf16.msra.mxu0 %v5841
    %5867 = vmatprep.subr.bf16.mxu0 0
    %5868 = vmatpush2.bf16.msra.mxu0 %v5840
    %5869 = vmatprep.subr.bf16.mxu0 0
    %5870 = vmatpush2.bf16.msra.mxu0 %v5839
    %5871 = vmatprep.subr.bf16.mxu0 0
    %5872 = vmatpush2.bf16.msra.mxu0 %v5838
    %5873 = vmatprep.subr.bf16.mxu0 0
    %5874 = vmatpush2.bf16.msra.mxu0 %v5837
    %5875 = vmatprep.subr.bf16.mxu0 0
    %5876 = vmatpush2.bf16.msra.mxu0 %v5836
    %5877 = vmatprep.subr.bf16.mxu0 0
    %5878 = vmatpush2.bf16.msra.mxu0 %v5835
    %5879 = vmatprep.subr.bf16.mxu0 0
    %5880 = vmatpush2.bf16.msra.mxu0 %v5834
    %5881 = vmatprep.mubr.bf16.mxu0 %v5793
    %5882 = vmatmul.mubr.bf16.gmra.mxu0 %v5792
    %v5883 = vpop.f32.mrf.mxu0
    %v5884 = vadd.f32 %v5847, %v5883
    %v5885 = vpop.f32.mrf.mxu0
    %v5886 = vpop.f32.mrf.mxu0
    %v5887 = vpop.f32.mrf.mxu0
    %5888 = vdwg.mxu0
    %vm5889 = vcmp.gt.f32.partialorder %v5884, 0.0
    %v5890 = vmin.f32 %v5884, 0.0
    %v5891 = vmul.f32 %v5890, 1.442695
    %v5892 = vpow.pop %v5891
    %v5893 = vsub.f32 %v5892, 1.0
    %v5894 = vsel %vm5889, %v5884, %v5893
    %v5895 = vpack.c.bf16 %v5894, %v5894
    %v5896 = vld [vmem:[#allocation12] sm:$0xff]
    %v5897 = vld [vmem:[#allocation12 + $0x8] sm:$0xff]
    %v5898 = vld [vmem:[#allocation12 + $0x10] sm:$0xff]
    %v5899 = vld [vmem:[#allocation12 + $0x18] sm:$0xff]
    %v5900 = vld [vmem:[#allocation12 + $0x20] sm:$0xff]
    %v5901 = vld [vmem:[#allocation12 + $0x28] sm:$0xff]
    %v5902 = vld [vmem:[#allocation12 + $0x30] sm:$0xff]
    %v5903 = vld [vmem:[#allocation12 + $0x38] sm:$0xff]
    %v5904 = vld [vmem:[#allocation12 + $0x40] sm:$0xff]
    %v5905 = vld [vmem:[#allocation12 + $0x48] sm:$0xff]
    %v5906 = vld [vmem:[#allocation12 + $0x50] sm:$0xff]
    %v5907 = vld [vmem:[#allocation12 + $0x58] sm:$0xff]
    %v5908 = vld [vmem:[#allocation12 + $0x60] sm:$0xff]
    %v5909 = vld [vmem:[#allocation12 + $0x68] sm:$0xff]
    %v5910 = vld [vmem:[#allocation12 + $0x70] sm:$0xff]
    %v5911 = vld [vmem:[#allocation12 + $0x78] sm:$0xff]
    %v5912 = vpack.c.bf16 %v5897, %v5896
    %v5913 = vpack.c.bf16 %v5899, %v5898
    %v5914 = vpack.c.bf16 %v5901, %v5900
    %v5915 = vpack.c.bf16 %v5903, %v5902
    %v5916 = vpack.c.bf16 %v5905, %v5904
    %v5917 = vpack.c.bf16 %v5907, %v5906
    %v5918 = vpack.c.bf16 %v5909, %v5908
    %v5919 = vpack.c.bf16 %v5911, %v5910
    %v5920 = vld [vmem:[%s10] sm:$0x1]
    %v5922 = vlaneseq
    %v5923 = vshrl.u32 %v5922, 7
    %v5924 = vsub.s32 0, %v5923
    %v5925 = vrot.slane %v5920, %v5924
    %5927 = vmatprep.subr.bf16.mxu0 0
    %5928 = vmatpush1.bf16.msra.mxu0 %v5919
    %5929 = vmatprep.subr.bf16.mxu0 0
    %5930 = vmatpush1.bf16.msra.mxu0 %v5918
    %5931 = vmatprep.subr.bf16.mxu0 0
    %5932 = vmatpush1.bf16.msra.mxu0 %v5917
    %5933 = vmatprep.subr.bf16.mxu0 0
    %5934 = vmatpush1.bf16.msra.mxu0 %v5916
    %5935 = vmatprep.subr.bf16.mxu0 0
    %5936 = vmatpush1.bf16.msra.mxu0 %v5915
    %5937 = vmatprep.subr.bf16.mxu0 0
    %5938 = vmatpush1.bf16.msra.mxu0 %v5914
    %5939 = vmatprep.subr.bf16.mxu0 0
    %5940 = vmatpush1.bf16.msra.mxu0 %v5913
    %5941 = vmatprep.subr.bf16.mxu0 0
    %5942 = vmatpush1.bf16.msra.mxu0 %v5912
    %5943 = vmatprep.subr.bf16.mxu0 0
    %5944 = vmatpush2.bf16.msra.mxu0 0
    %5945 = vmatprep.subr.bf16.mxu0 0
    %5946 = vmatpush2.bf16.msra.mxu0 0
    %5947 = vmatprep.subr.bf16.mxu0 0
    %5948 = vmatpush2.bf16.msra.mxu0 0
    %5949 = vmatprep.subr.bf16.mxu0 0
    %5950 = vmatpush2.bf16.msra.mxu0 0
    %5951 = vmatprep.subr.bf16.mxu0 0
    %5952 = vmatpush2.bf16.msra.mxu0 0
    %5953 = vmatprep.subr.bf16.mxu0 0
    %5954 = vmatpush2.bf16.msra.mxu0 0
    %5955 = vmatprep.subr.bf16.mxu0 0
    %5956 = vmatpush2.bf16.msra.mxu0 0
    %5957 = vmatprep.subr.bf16.mxu0 0
    %5958 = vmatpush2.bf16.msra.mxu0 0
    %5959 = vmatprep.mubr.bf16.mxu0 0
    %5960 = vmatmul.mubr.bf16.gmra.mxu0 %v5895
    %v5961 = vpop.f32.mrf.mxu0
    %v5962 = vadd.f32 %v5925, %v5961
    %v5963 = vpop.f32.mrf.mxu0
    %v5964 = vpop.f32.mrf.mxu0
    %v5965 = vpop.f32.mrf.mxu0
    %5966 = vdwg.mxu0
    %5967 = vst [vmem:[#allocation14] sm:$0xff] %v5962
    // Predicated region
    $region70: #{tpu_custom_call.1} parent=1 // pred_check
      _
    $region71: #{tpu_custom_call.1} parent=1 // pred_check_branch
      %5969 = sbr.rel (0) target = $region73
    $region72: #{tpu_custom_call.1} parent=1 // pred_region
      %s5971 = ssub.s32 128, 128
      %5972 = vsyncadd [#allocation5], %s5971
      %s5974 = sshll.u32 [#allocation14], 4
      %s5975 = int_to_ptr.vmem [resolvable:$true] %s5974
      %5977 = dma.vmem_to_hbm [thread:$0]  %s5975, 128, %s11, [#allocation5]
    $region73: #{tpu_custom_call.1} parent=1 // pred_fallthru
      _
    // Predicated region
    $region74: #{tpu_custom_call.1} parent=1 // pred_check
      _
    $region75: #{tpu_custom_call.1} parent=1 // pred_check_branch
      %5979 = sbr.rel (0) target = $region77
    $region76: #{tpu_custom_call.1} parent=1 // pred_region
      %5980 = dma.done [#allocation5], 128
    $region77: #{tpu_custom_call.1} parent=1 // pred_fallthru
      _
    %5981 = vsyncpa [#allocation4], 1
    %5982 = vsyncpa [#allocation7], 1
    %5983 = vsyncpa [#allocation10], 1
    %5984 = vsyncpa [#allocation13], 1
    %5985 = vsyncpa [#allocation5], 1

</llo_original>
